<compile_context>
chip_gen: v6e
topology: v6e:2x2x1
jax: 0.10.0
libtpu: 0.0.40
codegen_flags: <defaults>
</compile_context>

<pallas_src>
import math
import functools

import jax
import jax.numpy as jnp
from jax.experimental import pallas as pl
from jax.experimental.pallas import tpu as pltpu


# ----------------------------------------------------------------------------
# Fully fused kernel: num_layers x [MHA(x,A)+AddNorm, MHA(.,B)+AddNorm, FF+AddNorm]
# ----------------------------------------------------------------------------

def _multiattn_kernel(
    x_ref, a_ref, b_ref,
    qkvw_ref,   # (L*2*3*H, E, Dh)  per-head Q/K/V projection weights (q pre-scaled)
    qkvb_ref,   # (L*2*3*H, 1, Dh)  per-head Q/K/V projection biases  (q pre-scaled)
    wo_ref,     # (L*2, E, E)       out-projection weights
    vec_ref,    # (L*9, 1, E)       bo1, ln1_g, ln1_b, bo2, ln2_g, ln2_b, ln3_g, ln3_b, ff_b2
    ffw1_ref,   # (L, E, Hd)
    ffb1_ref,   # (L, 1, Hd)
    ffw2_ref,   # (L, Hd, E)
    o_ref,
    *, num_layers, num_heads,
):
    x = x_ref[0]          # (Lq, E)   query-modality tokens for this batch element
    A = a_ref[0]          # (La, E)
    B = b_ref[0]          # (Lb, E)
    E = x.shape[-1]
    H = num_heads
    Dh = E // H

    def mha(q_in, kv, layer, which):
        # Per-head projections use pre-split weights (leading-axis indexed, no
        # lane slicing of activations or weights).  Per-head out-projection
        # contributions are summed, equivalent to concat(heads) @ Wo.
        base = (layer * 2 + which) * 3
        wo = wo_ref[layer * 2 + which]                       # (E, E)
        ctx = None
        for h in range(H):                                   # H static -> unrolled
            wq = qkvw_ref[(base + 0) * H + h]                # (E, Dh)
            wk = qkvw_ref[(base + 1) * H + h]
            wv = qkvw_ref[(base + 2) * H + h]
            bq = qkvb_ref[(base + 0) * H + h]                # (1, Dh)
            bk = qkvb_ref[(base + 1) * H + h]
            bv = qkvb_ref[(base + 2) * H + h]

            qh = jnp.dot(q_in, wq, preferred_element_type=jnp.float32) + bq  # (Lq,Dh)
            kh = jnp.dot(kv, wk, preferred_element_type=jnp.float32) + bk    # (Lk,Dh)
            vh = jnp.dot(kv, wv, preferred_element_type=jnp.float32) + bv    # (Lk,Dh)

            # scores: contract on Dh without materializing K^T
            s = jax.lax.dot_general(
                qh, kh, (((1,), (1,)), ((), ())),
                preferred_element_type=jnp.float32)                          # (Lq,Lk)
            m = jnp.max(s, axis=-1, keepdims=True)
            p = jnp.exp(s - m)
            p = p / jnp.sum(p, axis=-1, keepdims=True)       # exact division
            oh = jnp.dot(p, vh, preferred_element_type=jnp.float32)          # (Lq,Dh)
            # wo row slice is sublane-aligned (Dh == 8)
            contrib = jnp.dot(oh, wo[h * Dh:(h + 1) * Dh, :],
                              preferred_element_type=jnp.float32)            # (Lq,E)
            ctx = contrib if ctx is None else ctx + contrib
        return ctx

    def add_norm(residual, sublayer_out, g, b):
        # LayerNorm(residual + sublayer_out), eps=1e-5, biased variance (PyTorch).
        z = residual + sublayer_out
        mu = jnp.mean(z, axis=-1, keepdims=True)
        c = z - mu
        var = jnp.mean(c * c, axis=-1, keepdims=True)
        return c * jax.lax.rsqrt(var + 1e-5) * g + b

    for layer in range(num_layers):                          # static -> unrolled
        v = layer * 9
        bo1   = vec_ref[v + 0]
        ln1_g = vec_ref[v + 1]
        ln1_b = vec_ref[v + 2]
        bo2   = vec_ref[v + 3]
        ln2_g = vec_ref[v + 4]
        ln2_b = vec_ref[v + 5]
        ln3_g = vec_ref[v + 6]
        ln3_b = vec_ref[v + 7]
        ffb2  = vec_ref[v + 8]

        # --- attn_1(x, A, A) + Add&Norm ---
        att1 = mha(x, A, layer, 0) + bo1
        x = add_norm(x, att1, ln1_g, ln1_b)

        # --- attn_2(x, B, B) + Add&Norm ---
        att2 = mha(x, B, layer, 1) + bo2
        x = add_norm(x, att2, ln2_g, ln2_b)

        # --- Feedforward + Add&Norm ---  (dropout is identity in eval mode)
        hdn = jnp.maximum(
            jnp.dot(x, ffw1_ref[layer], preferred_element_type=jnp.float32)
            + ffb1_ref[layer], 0.0)
        ff = jnp.dot(hdn, ffw2_ref[layer],
                     preferred_element_type=jnp.float32) + ffb2
        x = add_norm(x, ff, ln3_g, ln3_b)

    o_ref[0] = x


# ----------------------------------------------------------------------------
# Host-side weight packing (one-time, free): per-head splits, scale folding,
# stacked slabs so the kernel gets a handful of inputs instead of ~56.
# ----------------------------------------------------------------------------

def pack_params(params, num_heads):
    E = params[0]["attn1"]["wq"].shape[0]
    Dh = E // num_heads
    scale = 1.0 / math.sqrt(Dh)

    qkvw, qkvb, wo_l, vec_l, ffw1, ffb1, ffw2 = [], [], [], [], [], [], []
    for p in params:
        for attn_key in ("attn1", "attn2"):
            a = p[attn_key]
            for w, b, s in ((a["wq"], a["bq"], scale),   # fold 1/sqrt(Dh) into q
                            (a["wk"], a["bk"], 1.0),
                            (a["wv"], a["bv"], 1.0)):
                for h in range(num_heads):
                    qkvw.append(w[:, h * Dh:(h + 1) * Dh] * s)   # (E, Dh)
                    qkvb.append(b[:, h * Dh:(h + 1) * Dh] * s)   # (1, Dh)
            wo_l.append(a["wo"])
        vec_l += [p["attn1"]["bo"], p["ln1_g"], p["ln1_b"],
                  p["attn2"]["bo"], p["ln2_g"], p["ln2_b"],
                  p["ln3_g"], p["ln3_b"], p["ff_b2"]]
        ffw1.append(p["ff_w1"])
        ffb1.append(p["ff_b1"])
        ffw2.append(p["ff_w2"])

    return {
        "qkvw": jnp.stack(qkvw),   # (L*2*3*H, E, Dh)
        "qkvb": jnp.stack(qkvb),   # (L*2*3*H, 1, Dh)
        "wo":   jnp.stack(wo_l),   # (L*2, E, E)
        "vec":  jnp.stack(vec_l),  # (L*9, 1, E)
        "ffw1": jnp.stack(ffw1),   # (L, E, hidden)
        "ffb1": jnp.stack(ffb1),   # (L, 1, hidden)
        "ffw2": jnp.stack(ffw2),   # (L, hidden, E)
    }


# ----------------------------------------------------------------------------
# Wrapper: one fused pallas_call for the whole model
# ----------------------------------------------------------------------------

def multiattn_forward(query_modality, modality_A, modality_B, packed,
                      num_layers, num_heads):
    """Inputs in PyTorch nn.MultiheadAttention layout (L, N, E); returns (Lq, N, E)."""
    # Batch-major once at entry; the kernel works on (L, E) tiles per batch element.
    x = jnp.transpose(query_modality, (1, 0, 2))
    A = jnp.transpose(modality_A, (1, 0, 2))
    B = jnp.transpose(modality_B, (1, 0, 2))
    N, Lq, E = x.shape
    La = A.shape[1]
    Lb = B.shape[1]

    weights = [packed["qkvw"], packed["qkvb"], packed["wo"], packed["vec"],
               packed["ffw1"], packed["ffb1"], packed["ffw2"]]

    in_specs = [
        pl.BlockSpec((1, Lq, E), lambda n: (n, 0, 0)),
        pl.BlockSpec((1, La, E), lambda n: (n, 0, 0)),
        pl.BlockSpec((1, Lb, E), lambda n: (n, 0, 0)),
    ] + [pl.BlockSpec(w.shape, lambda n: (0, 0, 0)) for w in weights]  # full-array, resident

    out = pl.pallas_call(
        functools.partial(_multiattn_kernel,
                          num_layers=num_layers, num_heads=num_heads),
        out_shape=jax.ShapeDtypeStruct((N, Lq, E), jnp.float32),
        grid=(N,),
        in_specs=in_specs,
        out_specs=pl.BlockSpec((1, Lq, E), lambda n: (n, 0, 0)),
        compiler_params=pltpu.CompilerParams(
            dimension_semantics=("parallel",)),   # batch shards across v7x's 2 TCs
    )(x, A, B, *weights)

    return jnp.transpose(out, (1, 0, 2))


# ----------------------------------------------------------------------------
# Deterministic synthetic parameters (same shapes/roles as the PyTorch module)
# ----------------------------------------------------------------------------

def init_mha_params(key, model_dim):
    # wq/wk/wv correspond to in_proj_weight[:E].T, [E:2E].T, [2E:].T; wo = out_proj.weight.T
    kq, kk, kv, ko = jax.random.split(key, 4)
    s = 0.05
    return {
        "wq": jax.random.normal(kq, (model_dim, model_dim), jnp.float32) * s,
        "wk": jax.random.normal(kk, (model_dim, model_dim), jnp.float32) * s,
        "wv": jax.random.normal(kv, (model_dim, model_dim), jnp.float32) * s,
        "wo": jax.random.normal(ko, (model_dim, model_dim), jnp.float32) * s,
        "bq": jnp.zeros((1, model_dim), jnp.float32),
        "bk": jnp.zeros((1, model_dim), jnp.float32),
        "bv": jnp.zeros((1, model_dim), jnp.float32),
        "bo": jnp.zeros((1, model_dim), jnp.float32),
    }


def init_layer_params(key, model_dim, hidden_dim):
    keys = jax.random.split(key, 4)
    return {
        "attn1": init_mha_params(keys[0], model_dim),
        "attn2": init_mha_params(keys[1], model_dim),
        "ln1_g": jnp.ones((1, model_dim), jnp.float32),
        "ln1_b": jnp.zeros((1, model_dim), jnp.float32),
        "ln2_g": jnp.ones((1, model_dim), jnp.float32),
        "ln2_b": jnp.zeros((1, model_dim), jnp.float32),
        "ln3_g": jnp.ones((1, model_dim), jnp.float32),
        "ln3_b": jnp.zeros((1, model_dim), jnp.float32),
        "ff_w1": jax.random.normal(keys[2], (model_dim, hidden_dim), jnp.float32) * 0.05,
        "ff_b1": jnp.zeros((1, hidden_dim), jnp.float32),
        "ff_w2": jax.random.normal(keys[3], (hidden_dim, model_dim), jnp.float32) * 0.05,
        "ff_b2": jnp.zeros((1, model_dim), jnp.float32),
    }


def init_multiattn_params(key, num_layers, model_dim, hidden_dim):
    keys = jax.random.split(key, num_layers)
    return [init_layer_params(k, model_dim, hidden_dim) for k in keys]


# ----------------------------------------------------------------------------
# Main
# ----------------------------------------------------------------------------

if __name__ == "__main__":
    num_layers = 2
    model_dim = 32
    num_heads = 4
    hidden_dim = 64
    dropout_rate = 0.1   # identity in eval-mode forward (unused)

    Lq, La, Lb, batch = 8, 12, 10, 2

    root = jax.random.PRNGKey(0)
    k_q, k_a, k_b, k_p = jax.random.split(root, 4)

    query_modality = jax.random.normal(k_q, (Lq, batch, model_dim), jnp.float32)
    modality_A = jax.random.normal(k_a, (La, batch, model_dim), jnp.float32)
    modality_B = jax.random.normal(k_b, (Lb, batch, model_dim), jnp.float32)

    params = init_multiattn_params(k_p, num_layers, model_dim, hidden_dim)
    packed = pack_params(params, num_heads)   # one-time host-side packing

    fwd = jax.jit(functools.partial(multiattn_forward,
                                    num_layers=num_layers, num_heads=num_heads))
    out = fwd(query_modality, modality_A, modality_B, packed)
    out = jax.block_until_ready(out)

    assert out.shape == (Lq, batch, model_dim)
    assert bool(jnp.all(jnp.isfinite(out)))
    print("KERNEL_OK")
</pallas_src>

<mosaic_0001>
module attributes {stable_mosaic.version = 11 : i64} {
  func.func @_multiattn_kernel(%arg0: i32, %arg1: memref<1x8x32xf32, #tpu.memory_space<vmem>>, %arg2: memref<1x12x32xf32, #tpu.memory_space<vmem>>, %arg3: memref<1x10x32xf32, #tpu.memory_space<vmem>>, %arg4: memref<48x32x8xf32, #tpu.memory_space<vmem>>, %arg5: memref<48x1x8xf32, #tpu.memory_space<vmem>>, %arg6: memref<4x32x32xf32, #tpu.memory_space<vmem>>, %arg7: memref<18x1x32xf32, #tpu.memory_space<vmem>>, %arg8: memref<2x32x64xf32, #tpu.memory_space<vmem>>, %arg9: memref<2x1x64xf32, #tpu.memory_space<vmem>>, %arg10: memref<2x64x32xf32, #tpu.memory_space<vmem>>, %arg11: memref<1x8x32xf32, #tpu.memory_space<vmem>>) attributes {dimension_semantics = [#tpu.dimension_semantics<parallel>], iteration_bounds = array<i64: 2>, scalar_prefetch = 0 : i64, scratch_operands = 0 : i64, tpu.core_type = #tpu.core_type<tc>, window_params = [{transform_indices = @transform_0, window_bounds = array<i64: 1, 8, 32>}, {transform_indices = @transform_1, window_bounds = array<i64: 1, 12, 32>}, {transform_indices = @transform_2, window_bounds = array<i64: 1, 10, 32>}, {pipeline_mode = #tpu.pipeline_mode<synchronous>, transform_indices = @transform_3, window_bounds = array<i64: 48, 32, 8>}, {pipeline_mode = #tpu.pipeline_mode<synchronous>, transform_indices = @transform_4, window_bounds = array<i64: 48, 1, 8>}, {pipeline_mode = #tpu.pipeline_mode<synchronous>, transform_indices = @transform_5, window_bounds = array<i64: 4, 32, 32>}, {pipeline_mode = #tpu.pipeline_mode<synchronous>, transform_indices = @transform_6, window_bounds = array<i64: 18, 1, 32>}, {pipeline_mode = #tpu.pipeline_mode<synchronous>, transform_indices = @transform_7, window_bounds = array<i64: 2, 32, 64>}, {pipeline_mode = #tpu.pipeline_mode<synchronous>, transform_indices = @transform_8, window_bounds = array<i64: 2, 1, 64>}, {pipeline_mode = #tpu.pipeline_mode<synchronous>, transform_indices = @transform_9, window_bounds = array<i64: 2, 64, 32>}, {transform_indices = @transform_10, window_bounds = array<i64: 1, 8, 32>}]} {
    %c0 = arith.constant 0 : index
    %c0_0 = arith.constant 0 : index
    %c0_1 = arith.constant 0 : index
    %0 = vector.load %arg1[%c0, %c0_0, %c0_1] : memref<1x8x32xf32, #tpu.memory_space<vmem>>, vector<1x8x32xf32>
    %1 = vector.shape_cast %0 : vector<1x8x32xf32> to vector<8x32xf32>
    %c0_2 = arith.constant 0 : index
    %c0_3 = arith.constant 0 : index
    %c0_4 = arith.constant 0 : index
    %2 = vector.load %arg2[%c0_2, %c0_3, %c0_4] : memref<1x12x32xf32, #tpu.memory_space<vmem>>, vector<1x12x32xf32>
    %3 = vector.shape_cast %2 : vector<1x12x32xf32> to vector<12x32xf32>
    %c0_5 = arith.constant 0 : index
    %c0_6 = arith.constant 0 : index
    %c0_7 = arith.constant 0 : index
    %4 = vector.load %arg3[%c0_5, %c0_6, %c0_7] : memref<1x10x32xf32, #tpu.memory_space<vmem>>, vector<1x10x32xf32>
    %5 = vector.shape_cast %4 : vector<1x10x32xf32> to vector<10x32xf32>
    %c0_8 = arith.constant 0 : index
    %c0_9 = arith.constant 0 : index
    %c0_10 = arith.constant 0 : index
    %6 = vector.load %arg7[%c0_8, %c0_9, %c0_10] : memref<18x1x32xf32, #tpu.memory_space<vmem>>, vector<1x1x32xf32>
    %7 = vector.shape_cast %6 : vector<1x1x32xf32> to vector<1x32xf32>
    %c1 = arith.constant 1 : index
    %c0_11 = arith.constant 0 : index
    %c0_12 = arith.constant 0 : index
    %8 = vector.load %arg7[%c1, %c0_11, %c0_12] : memref<18x1x32xf32, #tpu.memory_space<vmem>>, vector<1x1x32xf32>
    %9 = vector.shape_cast %8 : vector<1x1x32xf32> to vector<1x32xf32>
    %c2 = arith.constant 2 : index
    %c0_13 = arith.constant 0 : index
    %c0_14 = arith.constant 0 : index
    %10 = vector.load %arg7[%c2, %c0_13, %c0_14] : memref<18x1x32xf32, #tpu.memory_space<vmem>>, vector<1x1x32xf32>
    %11 = vector.shape_cast %10 : vector<1x1x32xf32> to vector<1x32xf32>
    %c3 = arith.constant 3 : index
    %c0_15 = arith.constant 0 : index
    %c0_16 = arith.constant 0 : index
    %12 = vector.load %arg7[%c3, %c0_15, %c0_16] : memref<18x1x32xf32, #tpu.memory_space<vmem>>, vector<1x1x32xf32>
    %13 = vector.shape_cast %12 : vector<1x1x32xf32> to vector<1x32xf32>
    %c4 = arith.constant 4 : index
    %c0_17 = arith.constant 0 : index
    %c0_18 = arith.constant 0 : index
    %14 = vector.load %arg7[%c4, %c0_17, %c0_18] : memref<18x1x32xf32, #tpu.memory_space<vmem>>, vector<1x1x32xf32>
    %15 = vector.shape_cast %14 : vector<1x1x32xf32> to vector<1x32xf32>
    %c5 = arith.constant 5 : index
    %c0_19 = arith.constant 0 : index
    %c0_20 = arith.constant 0 : index
    %16 = vector.load %arg7[%c5, %c0_19, %c0_20] : memref<18x1x32xf32, #tpu.memory_space<vmem>>, vector<1x1x32xf32>
    %17 = vector.shape_cast %16 : vector<1x1x32xf32> to vector<1x32xf32>
    %c6 = arith.constant 6 : index
    %c0_21 = arith.constant 0 : index
    %c0_22 = arith.constant 0 : index
    %18 = vector.load %arg7[%c6, %c0_21, %c0_22] : memref<18x1x32xf32, #tpu.memory_space<vmem>>, vector<1x1x32xf32>
    %19 = vector.shape_cast %18 : vector<1x1x32xf32> to vector<1x32xf32>
    %c7 = arith.constant 7 : index
    %c0_23 = arith.constant 0 : index
    %c0_24 = arith.constant 0 : index
    %20 = vector.load %arg7[%c7, %c0_23, %c0_24] : memref<18x1x32xf32, #tpu.memory_space<vmem>>, vector<1x1x32xf32>
    %21 = vector.shape_cast %20 : vector<1x1x32xf32> to vector<1x32xf32>
    %c8 = arith.constant 8 : index
    %c0_25 = arith.constant 0 : index
    %c0_26 = arith.constant 0 : index
    %22 = vector.load %arg7[%c8, %c0_25, %c0_26] : memref<18x1x32xf32, #tpu.memory_space<vmem>>, vector<1x1x32xf32>
    %23 = vector.shape_cast %22 : vector<1x1x32xf32> to vector<1x32xf32>
    %c0_27 = arith.constant 0 : index
    %c0_28 = arith.constant 0 : index
    %c0_29 = arith.constant 0 : index
    %24 = vector.load %arg6[%c0_27, %c0_28, %c0_29] : memref<4x32x32xf32, #tpu.memory_space<vmem>>, vector<1x32x32xf32>
    %25 = vector.shape_cast %24 : vector<1x32x32xf32> to vector<32x32xf32>
    %c0_30 = arith.constant 0 : index
    %c0_31 = arith.constant 0 : index
    %c0_32 = arith.constant 0 : index
    %26 = vector.load %arg4[%c0_30, %c0_31, %c0_32] : memref<48x32x8xf32, #tpu.memory_space<vmem>>, vector<1x32x8xf32>
    %27 = vector.shape_cast %26 : vector<1x32x8xf32> to vector<32x8xf32>
    %c4_33 = arith.constant 4 : index
    %c0_34 = arith.constant 0 : index
    %c0_35 = arith.constant 0 : index
    %28 = vector.load %arg4[%c4_33, %c0_34, %c0_35] : memref<48x32x8xf32, #tpu.memory_space<vmem>>, vector<1x32x8xf32>
    %29 = vector.shape_cast %28 : vector<1x32x8xf32> to vector<32x8xf32>
    %c8_36 = arith.constant 8 : index
    %c0_37 = arith.constant 0 : index
    %c0_38 = arith.constant 0 : index
    %30 = vector.load %arg4[%c8_36, %c0_37, %c0_38] : memref<48x32x8xf32, #tpu.memory_space<vmem>>, vector<1x32x8xf32>
    %31 = vector.shape_cast %30 : vector<1x32x8xf32> to vector<32x8xf32>
    %c0_39 = arith.constant 0 : index
    %c0_40 = arith.constant 0 : index
    %c0_41 = arith.constant 0 : index
    %32 = vector.load %arg5[%c0_39, %c0_40, %c0_41] : memref<48x1x8xf32, #tpu.memory_space<vmem>>, vector<1x1x8xf32>
    %33 = vector.shape_cast %32 : vector<1x1x8xf32> to vector<1x8xf32>
    %c4_42 = arith.constant 4 : index
    %c0_43 = arith.constant 0 : index
    %c0_44 = arith.constant 0 : index
    %34 = vector.load %arg5[%c4_42, %c0_43, %c0_44] : memref<48x1x8xf32, #tpu.memory_space<vmem>>, vector<1x1x8xf32>
    %35 = vector.shape_cast %34 : vector<1x1x8xf32> to vector<1x8xf32>
    %c8_45 = arith.constant 8 : index
    %c0_46 = arith.constant 0 : index
    %c0_47 = arith.constant 0 : index
    %36 = vector.load %arg5[%c8_45, %c0_46, %c0_47] : memref<48x1x8xf32, #tpu.memory_space<vmem>>, vector<1x1x8xf32>
    %37 = vector.shape_cast %36 : vector<1x1x8xf32> to vector<1x8xf32>
    %cst = arith.constant dense<0.000000e+00> : vector<8x8xf32>
    %38 = tpu.matmul %1, %27, %cst {dimension_numbers = #tpu.dot_dimension_numbers<[1], [0], [0], [1], [0, 0, 1, 1], [], []>} : vector<8x32xf32>, vector<32x8xf32>, vector<8x8xf32> -> vector<8x8xf32>
    %39 = vector.broadcast %33 : vector<1x8xf32> to vector<8x8xf32>
    %40 = arith.addf %38, %39 : vector<8x8xf32>
    %cst_48 = arith.constant dense<0.000000e+00> : vector<12x8xf32>
    %41 = tpu.matmul %3, %29, %cst_48 {dimension_numbers = #tpu.dot_dimension_numbers<[1], [0], [0], [1], [0, 0, 1, 1], [], []>} : vector<12x32xf32>, vector<32x8xf32>, vector<12x8xf32> -> vector<12x8xf32>
    %42 = vector.broadcast %35 : vector<1x8xf32> to vector<12x8xf32>
    %43 = arith.addf %41, %42 : vector<12x8xf32>
    %cst_49 = arith.constant dense<0.000000e+00> : vector<12x8xf32>
    %44 = tpu.matmul %3, %31, %cst_49 {dimension_numbers = #tpu.dot_dimension_numbers<[1], [0], [0], [1], [0, 0, 1, 1], [], []>} : vector<12x32xf32>, vector<32x8xf32>, vector<12x8xf32> -> vector<12x8xf32>
    %45 = vector.broadcast %37 : vector<1x8xf32> to vector<12x8xf32>
    %46 = arith.addf %44, %45 : vector<12x8xf32>
    %cst_50 = arith.constant dense<0.000000e+00> : vector<8x12xf32>
    %47 = tpu.matmul %40, %43, %cst_50 {dimension_numbers = #tpu.dot_dimension_numbers<[1], [1], [0], [0], [0, 0, 1, 0], [], []>} : vector<8x8xf32>, vector<12x8xf32>, vector<8x12xf32> -> vector<8x12xf32>
    %cst_51 = arith.constant dense<0xFF800000> : vector<8xf32>
    %48 = vector.multi_reduction <maximumf>, %47, %cst_51 [1] : vector<8x12xf32> to vector<8xf32>
    %49 = vector.shape_cast %48 : vector<8xf32> to vector<8x1xf32>
    %50 = vector.broadcast %49 : vector<8x1xf32> to vector<8x12xf32>
    %51 = arith.subf %47, %50 : vector<8x12xf32>
    %52 = math.exp %51 : vector<8x12xf32>
    %cst_52 = arith.constant dense<0.000000e+00> : vector<8xf32>
    %53 = vector.multi_reduction <add>, %52, %cst_52 [1] : vector<8x12xf32> to vector<8xf32>
    %54 = vector.shape_cast %53 : vector<8xf32> to vector<8x1xf32>
    %55 = vector.broadcast %54 : vector<8x1xf32> to vector<8x12xf32>
    %56 = arith.divf %52, %55 : vector<8x12xf32>
    %cst_53 = arith.constant dense<0.000000e+00> : vector<8x8xf32>
    %57 = tpu.matmul %56, %46, %cst_53 {dimension_numbers = #tpu.dot_dimension_numbers<[1], [0], [0], [1], [0, 0, 1, 1], [], []>} : vector<8x12xf32>, vector<12x8xf32>, vector<8x8xf32> -> vector<8x8xf32>
    %58 = vector.extract_strided_slice %25 {offsets = [0, 0], sizes = [8, 32], strides = [1, 1]} : vector<32x32xf32> to vector<8x32xf32>
    %cst_54 = arith.constant dense<0.000000e+00> : vector<8x32xf32>
    %59 = tpu.matmul %57, %58, %cst_54 {dimension_numbers = #tpu.dot_dimension_numbers<[1], [0], [0], [1], [0, 0, 1, 1], [], []>} : vector<8x8xf32>, vector<8x32xf32>, vector<8x32xf32> -> vector<8x32xf32>
    %c1_55 = arith.constant 1 : index
    %c0_56 = arith.constant 0 : index
    %c0_57 = arith.constant 0 : index
    %60 = vector.load %arg4[%c1_55, %c0_56, %c0_57] : memref<48x32x8xf32, #tpu.memory_space<vmem>>, vector<1x32x8xf32>
    %61 = vector.shape_cast %60 : vector<1x32x8xf32> to vector<32x8xf32>
    %c5_58 = arith.constant 5 : index
    %c0_59 = arith.constant 0 : index
    %c0_60 = arith.constant 0 : index
    %62 = vector.load %arg4[%c5_58, %c0_59, %c0_60] : memref<48x32x8xf32, #tpu.memory_space<vmem>>, vector<1x32x8xf32>
    %63 = vector.shape_cast %62 : vector<1x32x8xf32> to vector<32x8xf32>
    %c9 = arith.constant 9 : index
    %c0_61 = arith.constant 0 : index
    %c0_62 = arith.constant 0 : index
    %64 = vector.load %arg4[%c9, %c0_61, %c0_62] : memref<48x32x8xf32, #tpu.memory_space<vmem>>, vector<1x32x8xf32>
    %65 = vector.shape_cast %64 : vector<1x32x8xf32> to vector<32x8xf32>
    %c1_63 = arith.constant 1 : index
    %c0_64 = arith.constant 0 : index
    %c0_65 = arith.constant 0 : index
    %66 = vector.load %arg5[%c1_63, %c0_64, %c0_65] : memref<48x1x8xf32, #tpu.memory_space<vmem>>, vector<1x1x8xf32>
    %67 = vector.shape_cast %66 : vector<1x1x8xf32> to vector<1x8xf32>
    %c5_66 = arith.constant 5 : index
    %c0_67 = arith.constant 0 : index
    %c0_68 = arith.constant 0 : index
    %68 = vector.load %arg5[%c5_66, %c0_67, %c0_68] : memref<48x1x8xf32, #tpu.memory_space<vmem>>, vector<1x1x8xf32>
    %69 = vector.shape_cast %68 : vector<1x1x8xf32> to vector<1x8xf32>
    %c9_69 = arith.constant 9 : index
    %c0_70 = arith.constant 0 : index
    %c0_71 = arith.constant 0 : index
    %70 = vector.load %arg5[%c9_69, %c0_70, %c0_71] : memref<48x1x8xf32, #tpu.memory_space<vmem>>, vector<1x1x8xf32>
    %71 = vector.shape_cast %70 : vector<1x1x8xf32> to vector<1x8xf32>
    %cst_72 = arith.constant dense<0.000000e+00> : vector<8x8xf32>
    %72 = tpu.matmul %1, %61, %cst_72 {dimension_numbers = #tpu.dot_dimension_numbers<[1], [0], [0], [1], [0, 0, 1, 1], [], []>} : vector<8x32xf32>, vector<32x8xf32>, vector<8x8xf32> -> vector<8x8xf32>
    %73 = vector.broadcast %67 : vector<1x8xf32> to vector<8x8xf32>
    %74 = arith.addf %72, %73 : vector<8x8xf32>
    %cst_73 = arith.constant dense<0.000000e+00> : vector<12x8xf32>
    %75 = tpu.matmul %3, %63, %cst_73 {dimension_numbers = #tpu.dot_dimension_numbers<[1], [0], [0], [1], [0, 0, 1, 1], [], []>} : vector<12x32xf32>, vector<32x8xf32>, vector<12x8xf32> -> vector<12x8xf32>
    %76 = vector.broadcast %69 : vector<1x8xf32> to vector<12x8xf32>
    %77 = arith.addf %75, %76 : vector<12x8xf32>
    %cst_74 = arith.constant dense<0.000000e+00> : vector<12x8xf32>
    %78 = tpu.matmul %3, %65, %cst_74 {dimension_numbers = #tpu.dot_dimension_numbers<[1], [0], [0], [1], [0, 0, 1, 1], [], []>} : vector<12x32xf32>, vector<32x8xf32>, vector<12x8xf32> -> vector<12x8xf32>
    %79 = vector.broadcast %71 : vector<1x8xf32> to vector<12x8xf32>
    %80 = arith.addf %78, %79 : vector<12x8xf32>
    %cst_75 = arith.constant dense<0.000000e+00> : vector<8x12xf32>
    %81 = tpu.matmul %74, %77, %cst_75 {dimension_numbers = #tpu.dot_dimension_numbers<[1], [1], [0], [0], [0, 0, 1, 0], [], []>} : vector<8x8xf32>, vector<12x8xf32>, vector<8x12xf32> -> vector<8x12xf32>
    %cst_76 = arith.constant dense<0xFF800000> : vector<8xf32>
    %82 = vector.multi_reduction <maximumf>, %81, %cst_76 [1] : vector<8x12xf32> to vector<8xf32>
    %83 = vector.shape_cast %82 : vector<8xf32> to vector<8x1xf32>
    %84 = vector.broadcast %83 : vector<8x1xf32> to vector<8x12xf32>
    %85 = arith.subf %81, %84 : vector<8x12xf32>
    %86 = math.exp %85 : vector<8x12xf32>
    %cst_77 = arith.constant dense<0.000000e+00> : vector<8xf32>
    %87 = vector.multi_reduction <add>, %86, %cst_77 [1] : vector<8x12xf32> to vector<8xf32>
    %88 = vector.shape_cast %87 : vector<8xf32> to vector<8x1xf32>
    %89 = vector.broadcast %88 : vector<8x1xf32> to vector<8x12xf32>
    %90 = arith.divf %86, %89 : vector<8x12xf32>
    %cst_78 = arith.constant dense<0.000000e+00> : vector<8x8xf32>
    %91 = tpu.matmul %90, %80, %cst_78 {dimension_numbers = #tpu.dot_dimension_numbers<[1], [0], [0], [1], [0, 0, 1, 1], [], []>} : vector<8x12xf32>, vector<12x8xf32>, vector<8x8xf32> -> vector<8x8xf32>
    %92 = vector.extract_strided_slice %25 {offsets = [8, 0], sizes = [8, 32], strides = [1, 1]} : vector<32x32xf32> to vector<8x32xf32>
    %cst_79 = arith.constant dense<0.000000e+00> : vector<8x32xf32>
    %93 = tpu.matmul %91, %92, %cst_79 {dimension_numbers = #tpu.dot_dimension_numbers<[1], [0], [0], [1], [0, 0, 1, 1], [], []>} : vector<8x8xf32>, vector<8x32xf32>, vector<8x32xf32> -> vector<8x32xf32>
    %94 = arith.addf %59, %93 : vector<8x32xf32>
    %c2_80 = arith.constant 2 : index
    %c0_81 = arith.constant 0 : index
    %c0_82 = arith.constant 0 : index
    %95 = vector.load %arg4[%c2_80, %c0_81, %c0_82] : memref<48x32x8xf32, #tpu.memory_space<vmem>>, vector<1x32x8xf32>
    %96 = vector.shape_cast %95 : vector<1x32x8xf32> to vector<32x8xf32>
    %c6_83 = arith.constant 6 : index
    %c0_84 = arith.constant 0 : index
    %c0_85 = arith.constant 0 : index
    %97 = vector.load %arg4[%c6_83, %c0_84, %c0_85] : memref<48x32x8xf32, #tpu.memory_space<vmem>>, vector<1x32x8xf32>
    %98 = vector.shape_cast %97 : vector<1x32x8xf32> to vector<32x8xf32>
    %c10 = arith.constant 10 : index
    %c0_86 = arith.constant 0 : index
    %c0_87 = arith.constant 0 : index
    %99 = vector.load %arg4[%c10, %c0_86, %c0_87] : memref<48x32x8xf32, #tpu.memory_space<vmem>>, vector<1x32x8xf32>
    %100 = vector.shape_cast %99 : vector<1x32x8xf32> to vector<32x8xf32>
    %c2_88 = arith.constant 2 : index
    %c0_89 = arith.constant 0 : index
    %c0_90 = arith.constant 0 : index
    %101 = vector.load %arg5[%c2_88, %c0_89, %c0_90] : memref<48x1x8xf32, #tpu.memory_space<vmem>>, vector<1x1x8xf32>
    %102 = vector.shape_cast %101 : vector<1x1x8xf32> to vector<1x8xf32>
    %c6_91 = arith.constant 6 : index
    %c0_92 = arith.constant 0 : index
    %c0_93 = arith.constant 0 : index
    %103 = vector.load %arg5[%c6_91, %c0_92, %c0_93] : memref<48x1x8xf32, #tpu.memory_space<vmem>>, vector<1x1x8xf32>
    %104 = vector.shape_cast %103 : vector<1x1x8xf32> to vector<1x8xf32>
    %c10_94 = arith.constant 10 : index
    %c0_95 = arith.constant 0 : index
    %c0_96 = arith.constant 0 : index
    %105 = vector.load %arg5[%c10_94, %c0_95, %c0_96] : memref<48x1x8xf32, #tpu.memory_space<vmem>>, vector<1x1x8xf32>
    %106 = vector.shape_cast %105 : vector<1x1x8xf32> to vector<1x8xf32>
    %cst_97 = arith.constant dense<0.000000e+00> : vector<8x8xf32>
    %107 = tpu.matmul %1, %96, %cst_97 {dimension_numbers = #tpu.dot_dimension_numbers<[1], [0], [0], [1], [0, 0, 1, 1], [], []>} : vector<8x32xf32>, vector<32x8xf32>, vector<8x8xf32> -> vector<8x8xf32>
    %108 = vector.broadcast %102 : vector<1x8xf32> to vector<8x8xf32>
    %109 = arith.addf %107, %108 : vector<8x8xf32>
    %cst_98 = arith.constant dense<0.000000e+00> : vector<12x8xf32>
    %110 = tpu.matmul %3, %98, %cst_98 {dimension_numbers = #tpu.dot_dimension_numbers<[1], [0], [0], [1], [0, 0, 1, 1], [], []>} : vector<12x32xf32>, vector<32x8xf32>, vector<12x8xf32> -> vector<12x8xf32>
    %111 = vector.broadcast %104 : vector<1x8xf32> to vector<12x8xf32>
    %112 = arith.addf %110, %111 : vector<12x8xf32>
    %cst_99 = arith.constant dense<0.000000e+00> : vector<12x8xf32>
    %113 = tpu.matmul %3, %100, %cst_99 {dimension_numbers = #tpu.dot_dimension_numbers<[1], [0], [0], [1], [0, 0, 1, 1], [], []>} : vector<12x32xf32>, vector<32x8xf32>, vector<12x8xf32> -> vector<12x8xf32>
    %114 = vector.broadcast %106 : vector<1x8xf32> to vector<12x8xf32>
    %115 = arith.addf %113, %114 : vector<12x8xf32>
    %cst_100 = arith.constant dense<0.000000e+00> : vector<8x12xf32>
    %116 = tpu.matmul %109, %112, %cst_100 {dimension_numbers = #tpu.dot_dimension_numbers<[1], [1], [0], [0], [0, 0, 1, 0], [], []>} : vector<8x8xf32>, vector<12x8xf32>, vector<8x12xf32> -> vector<8x12xf32>
    %cst_101 = arith.constant dense<0xFF800000> : vector<8xf32>
    %117 = vector.multi_reduction <maximumf>, %116, %cst_101 [1] : vector<8x12xf32> to vector<8xf32>
    %118 = vector.shape_cast %117 : vector<8xf32> to vector<8x1xf32>
    %119 = vector.broadcast %118 : vector<8x1xf32> to vector<8x12xf32>
    %120 = arith.subf %116, %119 : vector<8x12xf32>
    %121 = math.exp %120 : vector<8x12xf32>
    %cst_102 = arith.constant dense<0.000000e+00> : vector<8xf32>
    %122 = vector.multi_reduction <add>, %121, %cst_102 [1] : vector<8x12xf32> to vector<8xf32>
    %123 = vector.shape_cast %122 : vector<8xf32> to vector<8x1xf32>
    %124 = vector.broadcast %123 : vector<8x1xf32> to vector<8x12xf32>
    %125 = arith.divf %121, %124 : vector<8x12xf32>
    %cst_103 = arith.constant dense<0.000000e+00> : vector<8x8xf32>
    %126 = tpu.matmul %125, %115, %cst_103 {dimension_numbers = #tpu.dot_dimension_numbers<[1], [0], [0], [1], [0, 0, 1, 1], [], []>} : vector<8x12xf32>, vector<12x8xf32>, vector<8x8xf32> -> vector<8x8xf32>
    %127 = vector.extract_strided_slice %25 {offsets = [16, 0], sizes = [8, 32], strides = [1, 1]} : vector<32x32xf32> to vector<8x32xf32>
    %cst_104 = arith.constant dense<0.000000e+00> : vector<8x32xf32>
    %128 = tpu.matmul %126, %127, %cst_104 {dimension_numbers = #tpu.dot_dimension_numbers<[1], [0], [0], [1], [0, 0, 1, 1], [], []>} : vector<8x8xf32>, vector<8x32xf32>, vector<8x32xf32> -> vector<8x32xf32>
    %129 = arith.addf %94, %128 : vector<8x32xf32>
    %c3_105 = arith.constant 3 : index
    %c0_106 = arith.constant 0 : index
    %c0_107 = arith.constant 0 : index
    %130 = vector.load %arg4[%c3_105, %c0_106, %c0_107] : memref<48x32x8xf32, #tpu.memory_space<vmem>>, vector<1x32x8xf32>
    %131 = vector.shape_cast %130 : vector<1x32x8xf32> to vector<32x8xf32>
    %c7_108 = arith.constant 7 : index
    %c0_109 = arith.constant 0 : index
    %c0_110 = arith.constant 0 : index
    %132 = vector.load %arg4[%c7_108, %c0_109, %c0_110] : memref<48x32x8xf32, #tpu.memory_space<vmem>>, vector<1x32x8xf32>
    %133 = vector.shape_cast %132 : vector<1x32x8xf32> to vector<32x8xf32>
    %c11 = arith.constant 11 : index
    %c0_111 = arith.constant 0 : index
    %c0_112 = arith.constant 0 : index
    %134 = vector.load %arg4[%c11, %c0_111, %c0_112] : memref<48x32x8xf32, #tpu.memory_space<vmem>>, vector<1x32x8xf32>
    %135 = vector.shape_cast %134 : vector<1x32x8xf32> to vector<32x8xf32>
    %c3_113 = arith.constant 3 : index
    %c0_114 = arith.constant 0 : index
    %c0_115 = arith.constant 0 : index
    %136 = vector.load %arg5[%c3_113, %c0_114, %c0_115] : memref<48x1x8xf32, #tpu.memory_space<vmem>>, vector<1x1x8xf32>
    %137 = vector.shape_cast %136 : vector<1x1x8xf32> to vector<1x8xf32>
    %c7_116 = arith.constant 7 : index
    %c0_117 = arith.constant 0 : index
    %c0_118 = arith.constant 0 : index
    %138 = vector.load %arg5[%c7_116, %c0_117, %c0_118] : memref<48x1x8xf32, #tpu.memory_space<vmem>>, vector<1x1x8xf32>
    %139 = vector.shape_cast %138 : vector<1x1x8xf32> to vector<1x8xf32>
    %c11_119 = arith.constant 11 : index
    %c0_120 = arith.constant 0 : index
    %c0_121 = arith.constant 0 : index
    %140 = vector.load %arg5[%c11_119, %c0_120, %c0_121] : memref<48x1x8xf32, #tpu.memory_space<vmem>>, vector<1x1x8xf32>
    %141 = vector.shape_cast %140 : vector<1x1x8xf32> to vector<1x8xf32>
    %cst_122 = arith.constant dense<0.000000e+00> : vector<8x8xf32>
    %142 = tpu.matmul %1, %131, %cst_122 {dimension_numbers = #tpu.dot_dimension_numbers<[1], [0], [0], [1], [0, 0, 1, 1], [], []>} : vector<8x32xf32>, vector<32x8xf32>, vector<8x8xf32> -> vector<8x8xf32>
    %143 = vector.broadcast %137 : vector<1x8xf32> to vector<8x8xf32>
    %144 = arith.addf %142, %143 : vector<8x8xf32>
    %cst_123 = arith.constant dense<0.000000e+00> : vector<12x8xf32>
    %145 = tpu.matmul %3, %133, %cst_123 {dimension_numbers = #tpu.dot_dimension_numbers<[1], [0], [0], [1], [0, 0, 1, 1], [], []>} : vector<12x32xf32>, vector<32x8xf32>, vector<12x8xf32> -> vector<12x8xf32>
    %146 = vector.broadcast %139 : vector<1x8xf32> to vector<12x8xf32>
    %147 = arith.addf %145, %146 : vector<12x8xf32>
    %cst_124 = arith.constant dense<0.000000e+00> : vector<12x8xf32>
    %148 = tpu.matmul %3, %135, %cst_124 {dimension_numbers = #tpu.dot_dimension_numbers<[1], [0], [0], [1], [0, 0, 1, 1], [], []>} : vector<12x32xf32>, vector<32x8xf32>, vector<12x8xf32> -> vector<12x8xf32>
    %149 = vector.broadcast %141 : vector<1x8xf32> to vector<12x8xf32>
    %150 = arith.addf %148, %149 : vector<12x8xf32>
    %cst_125 = arith.constant dense<0.000000e+00> : vector<8x12xf32>
    %151 = tpu.matmul %144, %147, %cst_125 {dimension_numbers = #tpu.dot_dimension_numbers<[1], [1], [0], [0], [0, 0, 1, 0], [], []>} : vector<8x8xf32>, vector<12x8xf32>, vector<8x12xf32> -> vector<8x12xf32>
    %cst_126 = arith.constant dense<0xFF800000> : vector<8xf32>
    %152 = vector.multi_reduction <maximumf>, %151, %cst_126 [1] : vector<8x12xf32> to vector<8xf32>
    %153 = vector.shape_cast %152 : vector<8xf32> to vector<8x1xf32>
    %154 = vector.broadcast %153 : vector<8x1xf32> to vector<8x12xf32>
    %155 = arith.subf %151, %154 : vector<8x12xf32>
    %156 = math.exp %155 : vector<8x12xf32>
    %cst_127 = arith.constant dense<0.000000e+00> : vector<8xf32>
    %157 = vector.multi_reduction <add>, %156, %cst_127 [1] : vector<8x12xf32> to vector<8xf32>
    %158 = vector.shape_cast %157 : vector<8xf32> to vector<8x1xf32>
    %159 = vector.broadcast %158 : vector<8x1xf32> to vector<8x12xf32>
    %160 = arith.divf %156, %159 : vector<8x12xf32>
    %cst_128 = arith.constant dense<0.000000e+00> : vector<8x8xf32>
    %161 = tpu.matmul %160, %150, %cst_128 {dimension_numbers = #tpu.dot_dimension_numbers<[1], [0], [0], [1], [0, 0, 1, 1], [], []>} : vector<8x12xf32>, vector<12x8xf32>, vector<8x8xf32> -> vector<8x8xf32>
    %162 = vector.extract_strided_slice %25 {offsets = [24, 0], sizes = [8, 32], strides = [1, 1]} : vector<32x32xf32> to vector<8x32xf32>
    %cst_129 = arith.constant dense<0.000000e+00> : vector<8x32xf32>
    %163 = tpu.matmul %161, %162, %cst_129 {dimension_numbers = #tpu.dot_dimension_numbers<[1], [0], [0], [1], [0, 0, 1, 1], [], []>} : vector<8x8xf32>, vector<8x32xf32>, vector<8x32xf32> -> vector<8x32xf32>
    %164 = arith.addf %129, %163 : vector<8x32xf32>
    %165 = vector.broadcast %7 : vector<1x32xf32> to vector<8x32xf32>
    %166 = arith.addf %164, %165 : vector<8x32xf32>
    %167 = arith.addf %1, %166 : vector<8x32xf32>
    %cst_130 = arith.constant dense<0.000000e+00> : vector<8xf32>
    %168 = vector.multi_reduction <add>, %167, %cst_130 [1] : vector<8x32xf32> to vector<8xf32>
    %169 = vector.shape_cast %168 : vector<8xf32> to vector<8x1xf32>
    %cst_131 = arith.constant 3.200000e+01 : f32
    %170 = vector.broadcast %cst_131 : f32 to vector<8x1xf32>
    %171 = arith.divf %169, %170 : vector<8x1xf32>
    %172 = vector.broadcast %171 : vector<8x1xf32> to vector<8x32xf32>
    %173 = arith.subf %167, %172 : vector<8x32xf32>
    %174 = arith.mulf %173, %173 : vector<8x32xf32>
    %cst_132 = arith.constant dense<0.000000e+00> : vector<8xf32>
    %175 = vector.multi_reduction <add>, %174, %cst_132 [1] : vector<8x32xf32> to vector<8xf32>
    %176 = vector.shape_cast %175 : vector<8xf32> to vector<8x1xf32>
    %cst_133 = arith.constant 3.200000e+01 : f32
    %177 = vector.broadcast %cst_133 : f32 to vector<8x1xf32>
    %178 = arith.divf %176, %177 : vector<8x1xf32>
    %cst_134 = arith.constant 9.99999974E-6 : f32
    %179 = vector.broadcast %cst_134 : f32 to vector<8x1xf32>
    %180 = arith.addf %178, %179 : vector<8x1xf32>
    %181 = math.rsqrt %180 : vector<8x1xf32>
    %182 = vector.broadcast %181 : vector<8x1xf32> to vector<8x32xf32>
    %183 = arith.mulf %173, %182 : vector<8x32xf32>
    %184 = vector.broadcast %9 : vector<1x32xf32> to vector<8x32xf32>
    %185 = arith.mulf %183, %184 : vector<8x32xf32>
    %186 = vector.broadcast %11 : vector<1x32xf32> to vector<8x32xf32>
    %187 = arith.addf %185, %186 : vector<8x32xf32>
    %c1_135 = arith.constant 1 : index
    %c0_136 = arith.constant 0 : index
    %c0_137 = arith.constant 0 : index
    %188 = vector.load %arg6[%c1_135, %c0_136, %c0_137] : memref<4x32x32xf32, #tpu.memory_space<vmem>>, vector<1x32x32xf32>
    %189 = vector.shape_cast %188 : vector<1x32x32xf32> to vector<32x32xf32>
    %c12 = arith.constant 12 : index
    %c0_138 = arith.constant 0 : index
    %c0_139 = arith.constant 0 : index
    %190 = vector.load %arg4[%c12, %c0_138, %c0_139] : memref<48x32x8xf32, #tpu.memory_space<vmem>>, vector<1x32x8xf32>
    %191 = vector.shape_cast %190 : vector<1x32x8xf32> to vector<32x8xf32>
    %c16 = arith.constant 16 : index
    %c0_140 = arith.constant 0 : index
    %c0_141 = arith.constant 0 : index
    %192 = vector.load %arg4[%c16, %c0_140, %c0_141] : memref<48x32x8xf32, #tpu.memory_space<vmem>>, vector<1x32x8xf32>
    %193 = vector.shape_cast %192 : vector<1x32x8xf32> to vector<32x8xf32>
    %c20 = arith.constant 20 : index
    %c0_142 = arith.constant 0 : index
    %c0_143 = arith.constant 0 : index
    %194 = vector.load %arg4[%c20, %c0_142, %c0_143] : memref<48x32x8xf32, #tpu.memory_space<vmem>>, vector<1x32x8xf32>
    %195 = vector.shape_cast %194 : vector<1x32x8xf32> to vector<32x8xf32>
    %c12_144 = arith.constant 12 : index
    %c0_145 = arith.constant 0 : index
    %c0_146 = arith.constant 0 : index
    %196 = vector.load %arg5[%c12_144, %c0_145, %c0_146] : memref<48x1x8xf32, #tpu.memory_space<vmem>>, vector<1x1x8xf32>
    %197 = vector.shape_cast %196 : vector<1x1x8xf32> to vector<1x8xf32>
    %c16_147 = arith.constant 16 : index
    %c0_148 = arith.constant 0 : index
    %c0_149 = arith.constant 0 : index
    %198 = vector.load %arg5[%c16_147, %c0_148, %c0_149] : memref<48x1x8xf32, #tpu.memory_space<vmem>>, vector<1x1x8xf32>
    %199 = vector.shape_cast %198 : vector<1x1x8xf32> to vector<1x8xf32>
    %c20_150 = arith.constant 20 : index
    %c0_151 = arith.constant 0 : index
    %c0_152 = arith.constant 0 : index
    %200 = vector.load %arg5[%c20_150, %c0_151, %c0_152] : memref<48x1x8xf32, #tpu.memory_space<vmem>>, vector<1x1x8xf32>
    %201 = vector.shape_cast %200 : vector<1x1x8xf32> to vector<1x8xf32>
    %cst_153 = arith.constant dense<0.000000e+00> : vector<8x8xf32>
    %202 = tpu.matmul %187, %191, %cst_153 {dimension_numbers = #tpu.dot_dimension_numbers<[1], [0], [0], [1], [0, 0, 1, 1], [], []>} : vector<8x32xf32>, vector<32x8xf32>, vector<8x8xf32> -> vector<8x8xf32>
    %203 = vector.broadcast %197 : vector<1x8xf32> to vector<8x8xf32>
    %204 = arith.addf %202, %203 : vector<8x8xf32>
    %cst_154 = arith.constant dense<0.000000e+00> : vector<10x8xf32>
    %205 = tpu.matmul %5, %193, %cst_154 {dimension_numbers = #tpu.dot_dimension_numbers<[1], [0], [0], [1], [0, 0, 1, 1], [], []>} : vector<10x32xf32>, vector<32x8xf32>, vector<10x8xf32> -> vector<10x8xf32>
    %206 = vector.broadcast %199 : vector<1x8xf32> to vector<10x8xf32>
    %207 = arith.addf %205, %206 : vector<10x8xf32>
    %cst_155 = arith.constant dense<0.000000e+00> : vector<10x8xf32>
    %208 = tpu.matmul %5, %195, %cst_155 {dimension_numbers = #tpu.dot_dimension_numbers<[1], [0], [0], [1], [0, 0, 1, 1], [], []>} : vector<10x32xf32>, vector<32x8xf32>, vector<10x8xf32> -> vector<10x8xf32>
    %209 = vector.broadcast %201 : vector<1x8xf32> to vector<10x8xf32>
    %210 = arith.addf %208, %209 : vector<10x8xf32>
    %cst_156 = arith.constant dense<0.000000e+00> : vector<8x10xf32>
    %211 = tpu.matmul %204, %207, %cst_156 {dimension_numbers = #tpu.dot_dimension_numbers<[1], [1], [0], [0], [0, 0, 1, 0], [], []>} : vector<8x8xf32>, vector<10x8xf32>, vector<8x10xf32> -> vector<8x10xf32>
    %cst_157 = arith.constant dense<0xFF800000> : vector<8xf32>
    %212 = vector.multi_reduction <maximumf>, %211, %cst_157 [1] : vector<8x10xf32> to vector<8xf32>
    %213 = vector.shape_cast %212 : vector<8xf32> to vector<8x1xf32>
    %214 = vector.broadcast %213 : vector<8x1xf32> to vector<8x10xf32>
    %215 = arith.subf %211, %214 : vector<8x10xf32>
    %216 = math.exp %215 : vector<8x10xf32>
    %cst_158 = arith.constant dense<0.000000e+00> : vector<8xf32>
    %217 = vector.multi_reduction <add>, %216, %cst_158 [1] : vector<8x10xf32> to vector<8xf32>
    %218 = vector.shape_cast %217 : vector<8xf32> to vector<8x1xf32>
    %219 = vector.broadcast %218 : vector<8x1xf32> to vector<8x10xf32>
    %220 = arith.divf %216, %219 : vector<8x10xf32>
    %cst_159 = arith.constant dense<0.000000e+00> : vector<8x8xf32>
    %221 = tpu.matmul %220, %210, %cst_159 {dimension_numbers = #tpu.dot_dimension_numbers<[1], [0], [0], [1], [0, 0, 1, 1], [], []>} : vector<8x10xf32>, vector<10x8xf32>, vector<8x8xf32> -> vector<8x8xf32>
    %222 = vector.extract_strided_slice %189 {offsets = [0, 0], sizes = [8, 32], strides = [1, 1]} : vector<32x32xf32> to vector<8x32xf32>
    %cst_160 = arith.constant dense<0.000000e+00> : vector<8x32xf32>
    %223 = tpu.matmul %221, %222, %cst_160 {dimension_numbers = #tpu.dot_dimension_numbers<[1], [0], [0], [1], [0, 0, 1, 1], [], []>} : vector<8x8xf32>, vector<8x32xf32>, vector<8x32xf32> -> vector<8x32xf32>
    %c13 = arith.constant 13 : index
    %c0_161 = arith.constant 0 : index
    %c0_162 = arith.constant 0 : index
    %224 = vector.load %arg4[%c13, %c0_161, %c0_162] : memref<48x32x8xf32, #tpu.memory_space<vmem>>, vector<1x32x8xf32>
    %225 = vector.shape_cast %224 : vector<1x32x8xf32> to vector<32x8xf32>
    %c17 = arith.constant 17 : index
    %c0_163 = arith.constant 0 : index
    %c0_164 = arith.constant 0 : index
    %226 = vector.load %arg4[%c17, %c0_163, %c0_164] : memref<48x32x8xf32, #tpu.memory_space<vmem>>, vector<1x32x8xf32>
    %227 = vector.shape_cast %226 : vector<1x32x8xf32> to vector<32x8xf32>
    %c21 = arith.constant 21 : index
    %c0_165 = arith.constant 0 : index
    %c0_166 = arith.constant 0 : index
    %228 = vector.load %arg4[%c21, %c0_165, %c0_166] : memref<48x32x8xf32, #tpu.memory_space<vmem>>, vector<1x32x8xf32>
    %229 = vector.shape_cast %228 : vector<1x32x8xf32> to vector<32x8xf32>
    %c13_167 = arith.constant 13 : index
    %c0_168 = arith.constant 0 : index
    %c0_169 = arith.constant 0 : index
    %230 = vector.load %arg5[%c13_167, %c0_168, %c0_169] : memref<48x1x8xf32, #tpu.memory_space<vmem>>, vector<1x1x8xf32>
    %231 = vector.shape_cast %230 : vector<1x1x8xf32> to vector<1x8xf32>
    %c17_170 = arith.constant 17 : index
    %c0_171 = arith.constant 0 : index
    %c0_172 = arith.constant 0 : index
    %232 = vector.load %arg5[%c17_170, %c0_171, %c0_172] : memref<48x1x8xf32, #tpu.memory_space<vmem>>, vector<1x1x8xf32>
    %233 = vector.shape_cast %232 : vector<1x1x8xf32> to vector<1x8xf32>
    %c21_173 = arith.constant 21 : index
    %c0_174 = arith.constant 0 : index
    %c0_175 = arith.constant 0 : index
    %234 = vector.load %arg5[%c21_173, %c0_174, %c0_175] : memref<48x1x8xf32, #tpu.memory_space<vmem>>, vector<1x1x8xf32>
    %235 = vector.shape_cast %234 : vector<1x1x8xf32> to vector<1x8xf32>
    %cst_176 = arith.constant dense<0.000000e+00> : vector<8x8xf32>
    %236 = tpu.matmul %187, %225, %cst_176 {dimension_numbers = #tpu.dot_dimension_numbers<[1], [0], [0], [1], [0, 0, 1, 1], [], []>} : vector<8x32xf32>, vector<32x8xf32>, vector<8x8xf32> -> vector<8x8xf32>
    %237 = vector.broadcast %231 : vector<1x8xf32> to vector<8x8xf32>
    %238 = arith.addf %236, %237 : vector<8x8xf32>
    %cst_177 = arith.constant dense<0.000000e+00> : vector<10x8xf32>
    %239 = tpu.matmul %5, %227, %cst_177 {dimension_numbers = #tpu.dot_dimension_numbers<[1], [0], [0], [1], [0, 0, 1, 1], [], []>} : vector<10x32xf32>, vector<32x8xf32>, vector<10x8xf32> -> vector<10x8xf32>
    %240 = vector.broadcast %233 : vector<1x8xf32> to vector<10x8xf32>
    %241 = arith.addf %239, %240 : vector<10x8xf32>
    %cst_178 = arith.constant dense<0.000000e+00> : vector<10x8xf32>
    %242 = tpu.matmul %5, %229, %cst_178 {dimension_numbers = #tpu.dot_dimension_numbers<[1], [0], [0], [1], [0, 0, 1, 1], [], []>} : vector<10x32xf32>, vector<32x8xf32>, vector<10x8xf32> -> vector<10x8xf32>
    %243 = vector.broadcast %235 : vector<1x8xf32> to vector<10x8xf32>
    %244 = arith.addf %242, %243 : vector<10x8xf32>
    %cst_179 = arith.constant dense<0.000000e+00> : vector<8x10xf32>
    %245 = tpu.matmul %238, %241, %cst_179 {dimension_numbers = #tpu.dot_dimension_numbers<[1], [1], [0], [0], [0, 0, 1, 0], [], []>} : vector<8x8xf32>, vector<10x8xf32>, vector<8x10xf32> -> vector<8x10xf32>
    %cst_180 = arith.constant dense<0xFF800000> : vector<8xf32>
    %246 = vector.multi_reduction <maximumf>, %245, %cst_180 [1] : vector<8x10xf32> to vector<8xf32>
    %247 = vector.shape_cast %246 : vector<8xf32> to vector<8x1xf32>
    %248 = vector.broadcast %247 : vector<8x1xf32> to vector<8x10xf32>
    %249 = arith.subf %245, %248 : vector<8x10xf32>
    %250 = math.exp %249 : vector<8x10xf32>
    %cst_181 = arith.constant dense<0.000000e+00> : vector<8xf32>
    %251 = vector.multi_reduction <add>, %250, %cst_181 [1] : vector<8x10xf32> to vector<8xf32>
    %252 = vector.shape_cast %251 : vector<8xf32> to vector<8x1xf32>
    %253 = vector.broadcast %252 : vector<8x1xf32> to vector<8x10xf32>
    %254 = arith.divf %250, %253 : vector<8x10xf32>
    %cst_182 = arith.constant dense<0.000000e+00> : vector<8x8xf32>
    %255 = tpu.matmul %254, %244, %cst_182 {dimension_numbers = #tpu.dot_dimension_numbers<[1], [0], [0], [1], [0, 0, 1, 1], [], []>} : vector<8x10xf32>, vector<10x8xf32>, vector<8x8xf32> -> vector<8x8xf32>
    %256 = vector.extract_strided_slice %189 {offsets = [8, 0], sizes = [8, 32], strides = [1, 1]} : vector<32x32xf32> to vector<8x32xf32>
    %cst_183 = arith.constant dense<0.000000e+00> : vector<8x32xf32>
    %257 = tpu.matmul %255, %256, %cst_183 {dimension_numbers = #tpu.dot_dimension_numbers<[1], [0], [0], [1], [0, 0, 1, 1], [], []>} : vector<8x8xf32>, vector<8x32xf32>, vector<8x32xf32> -> vector<8x32xf32>
    %258 = arith.addf %223, %257 : vector<8x32xf32>
    %c14 = arith.constant 14 : index
    %c0_184 = arith.constant 0 : index
    %c0_185 = arith.constant 0 : index
    %259 = vector.load %arg4[%c14, %c0_184, %c0_185] : memref<48x32x8xf32, #tpu.memory_space<vmem>>, vector<1x32x8xf32>
    %260 = vector.shape_cast %259 : vector<1x32x8xf32> to vector<32x8xf32>
    %c18 = arith.constant 18 : index
    %c0_186 = arith.constant 0 : index
    %c0_187 = arith.constant 0 : index
    %261 = vector.load %arg4[%c18, %c0_186, %c0_187] : memref<48x32x8xf32, #tpu.memory_space<vmem>>, vector<1x32x8xf32>
    %262 = vector.shape_cast %261 : vector<1x32x8xf32> to vector<32x8xf32>
    %c22 = arith.constant 22 : index
    %c0_188 = arith.constant 0 : index
    %c0_189 = arith.constant 0 : index
    %263 = vector.load %arg4[%c22, %c0_188, %c0_189] : memref<48x32x8xf32, #tpu.memory_space<vmem>>, vector<1x32x8xf32>
    %264 = vector.shape_cast %263 : vector<1x32x8xf32> to vector<32x8xf32>
    %c14_190 = arith.constant 14 : index
    %c0_191 = arith.constant 0 : index
    %c0_192 = arith.constant 0 : index
    %265 = vector.load %arg5[%c14_190, %c0_191, %c0_192] : memref<48x1x8xf32, #tpu.memory_space<vmem>>, vector<1x1x8xf32>
    %266 = vector.shape_cast %265 : vector<1x1x8xf32> to vector<1x8xf32>
    %c18_193 = arith.constant 18 : index
    %c0_194 = arith.constant 0 : index
    %c0_195 = arith.constant 0 : index
    %267 = vector.load %arg5[%c18_193, %c0_194, %c0_195] : memref<48x1x8xf32, #tpu.memory_space<vmem>>, vector<1x1x8xf32>
    %268 = vector.shape_cast %267 : vector<1x1x8xf32> to vector<1x8xf32>
    %c22_196 = arith.constant 22 : index
    %c0_197 = arith.constant 0 : index
    %c0_198 = arith.constant 0 : index
    %269 = vector.load %arg5[%c22_196, %c0_197, %c0_198] : memref<48x1x8xf32, #tpu.memory_space<vmem>>, vector<1x1x8xf32>
    %270 = vector.shape_cast %269 : vector<1x1x8xf32> to vector<1x8xf32>
    %cst_199 = arith.constant dense<0.000000e+00> : vector<8x8xf32>
    %271 = tpu.matmul %187, %260, %cst_199 {dimension_numbers = #tpu.dot_dimension_numbers<[1], [0], [0], [1], [0, 0, 1, 1], [], []>} : vector<8x32xf32>, vector<32x8xf32>, vector<8x8xf32> -> vector<8x8xf32>
    %272 = vector.broadcast %266 : vector<1x8xf32> to vector<8x8xf32>
    %273 = arith.addf %271, %272 : vector<8x8xf32>
    %cst_200 = arith.constant dense<0.000000e+00> : vector<10x8xf32>
    %274 = tpu.matmul %5, %262, %cst_200 {dimension_numbers = #tpu.dot_dimension_numbers<[1], [0], [0], [1], [0, 0, 1, 1], [], []>} : vector<10x32xf32>, vector<32x8xf32>, vector<10x8xf32> -> vector<10x8xf32>
    %275 = vector.broadcast %268 : vector<1x8xf32> to vector<10x8xf32>
    %276 = arith.addf %274, %275 : vector<10x8xf32>
    %cst_201 = arith.constant dense<0.000000e+00> : vector<10x8xf32>
    %277 = tpu.matmul %5, %264, %cst_201 {dimension_numbers = #tpu.dot_dimension_numbers<[1], [0], [0], [1], [0, 0, 1, 1], [], []>} : vector<10x32xf32>, vector<32x8xf32>, vector<10x8xf32> -> vector<10x8xf32>
    %278 = vector.broadcast %270 : vector<1x8xf32> to vector<10x8xf32>
    %279 = arith.addf %277, %278 : vector<10x8xf32>
    %cst_202 = arith.constant dense<0.000000e+00> : vector<8x10xf32>
    %280 = tpu.matmul %273, %276, %cst_202 {dimension_numbers = #tpu.dot_dimension_numbers<[1], [1], [0], [0], [0, 0, 1, 0], [], []>} : vector<8x8xf32>, vector<10x8xf32>, vector<8x10xf32> -> vector<8x10xf32>
    %cst_203 = arith.constant dense<0xFF800000> : vector<8xf32>
    %281 = vector.multi_reduction <maximumf>, %280, %cst_203 [1] : vector<8x10xf32> to vector<8xf32>
    %282 = vector.shape_cast %281 : vector<8xf32> to vector<8x1xf32>
    %283 = vector.broadcast %282 : vector<8x1xf32> to vector<8x10xf32>
    %284 = arith.subf %280, %283 : vector<8x10xf32>
    %285 = math.exp %284 : vector<8x10xf32>
    %cst_204 = arith.constant dense<0.000000e+00> : vector<8xf32>
    %286 = vector.multi_reduction <add>, %285, %cst_204 [1] : vector<8x10xf32> to vector<8xf32>
    %287 = vector.shape_cast %286 : vector<8xf32> to vector<8x1xf32>
    %288 = vector.broadcast %287 : vector<8x1xf32> to vector<8x10xf32>
    %289 = arith.divf %285, %288 : vector<8x10xf32>
    %cst_205 = arith.constant dense<0.000000e+00> : vector<8x8xf32>
    %290 = tpu.matmul %289, %279, %cst_205 {dimension_numbers = #tpu.dot_dimension_numbers<[1], [0], [0], [1], [0, 0, 1, 1], [], []>} : vector<8x10xf32>, vector<10x8xf32>, vector<8x8xf32> -> vector<8x8xf32>
    %291 = vector.extract_strided_slice %189 {offsets = [16, 0], sizes = [8, 32], strides = [1, 1]} : vector<32x32xf32> to vector<8x32xf32>
    %cst_206 = arith.constant dense<0.000000e+00> : vector<8x32xf32>
    %292 = tpu.matmul %290, %291, %cst_206 {dimension_numbers = #tpu.dot_dimension_numbers<[1], [0], [0], [1], [0, 0, 1, 1], [], []>} : vector<8x8xf32>, vector<8x32xf32>, vector<8x32xf32> -> vector<8x32xf32>
    %293 = arith.addf %258, %292 : vector<8x32xf32>
    %c15 = arith.constant 15 : index
    %c0_207 = arith.constant 0 : index
    %c0_208 = arith.constant 0 : index
    %294 = vector.load %arg4[%c15, %c0_207, %c0_208] : memref<48x32x8xf32, #tpu.memory_space<vmem>>, vector<1x32x8xf32>
    %295 = vector.shape_cast %294 : vector<1x32x8xf32> to vector<32x8xf32>
    %c19 = arith.constant 19 : index
    %c0_209 = arith.constant 0 : index
    %c0_210 = arith.constant 0 : index
    %296 = vector.load %arg4[%c19, %c0_209, %c0_210] : memref<48x32x8xf32, #tpu.memory_space<vmem>>, vector<1x32x8xf32>
    %297 = vector.shape_cast %296 : vector<1x32x8xf32> to vector<32x8xf32>
    %c23 = arith.constant 23 : index
    %c0_211 = arith.constant 0 : index
    %c0_212 = arith.constant 0 : index
    %298 = vector.load %arg4[%c23, %c0_211, %c0_212] : memref<48x32x8xf32, #tpu.memory_space<vmem>>, vector<1x32x8xf32>
    %299 = vector.shape_cast %298 : vector<1x32x8xf32> to vector<32x8xf32>
    %c15_213 = arith.constant 15 : index
    %c0_214 = arith.constant 0 : index
    %c0_215 = arith.constant 0 : index
    %300 = vector.load %arg5[%c15_213, %c0_214, %c0_215] : memref<48x1x8xf32, #tpu.memory_space<vmem>>, vector<1x1x8xf32>
    %301 = vector.shape_cast %300 : vector<1x1x8xf32> to vector<1x8xf32>
    %c19_216 = arith.constant 19 : index
    %c0_217 = arith.constant 0 : index
    %c0_218 = arith.constant 0 : index
    %302 = vector.load %arg5[%c19_216, %c0_217, %c0_218] : memref<48x1x8xf32, #tpu.memory_space<vmem>>, vector<1x1x8xf32>
    %303 = vector.shape_cast %302 : vector<1x1x8xf32> to vector<1x8xf32>
    %c23_219 = arith.constant 23 : index
    %c0_220 = arith.constant 0 : index
    %c0_221 = arith.constant 0 : index
    %304 = vector.load %arg5[%c23_219, %c0_220, %c0_221] : memref<48x1x8xf32, #tpu.memory_space<vmem>>, vector<1x1x8xf32>
    %305 = vector.shape_cast %304 : vector<1x1x8xf32> to vector<1x8xf32>
    %cst_222 = arith.constant dense<0.000000e+00> : vector<8x8xf32>
    %306 = tpu.matmul %187, %295, %cst_222 {dimension_numbers = #tpu.dot_dimension_numbers<[1], [0], [0], [1], [0, 0, 1, 1], [], []>} : vector<8x32xf32>, vector<32x8xf32>, vector<8x8xf32> -> vector<8x8xf32>
    %307 = vector.broadcast %301 : vector<1x8xf32> to vector<8x8xf32>
    %308 = arith.addf %306, %307 : vector<8x8xf32>
    %cst_223 = arith.constant dense<0.000000e+00> : vector<10x8xf32>
    %309 = tpu.matmul %5, %297, %cst_223 {dimension_numbers = #tpu.dot_dimension_numbers<[1], [0], [0], [1], [0, 0, 1, 1], [], []>} : vector<10x32xf32>, vector<32x8xf32>, vector<10x8xf32> -> vector<10x8xf32>
    %310 = vector.broadcast %303 : vector<1x8xf32> to vector<10x8xf32>
    %311 = arith.addf %309, %310 : vector<10x8xf32>
    %cst_224 = arith.constant dense<0.000000e+00> : vector<10x8xf32>
    %312 = tpu.matmul %5, %299, %cst_224 {dimension_numbers = #tpu.dot_dimension_numbers<[1], [0], [0], [1], [0, 0, 1, 1], [], []>} : vector<10x32xf32>, vector<32x8xf32>, vector<10x8xf32> -> vector<10x8xf32>
    %313 = vector.broadcast %305 : vector<1x8xf32> to vector<10x8xf32>
    %314 = arith.addf %312, %313 : vector<10x8xf32>
    %cst_225 = arith.constant dense<0.000000e+00> : vector<8x10xf32>
    %315 = tpu.matmul %308, %311, %cst_225 {dimension_numbers = #tpu.dot_dimension_numbers<[1], [1], [0], [0], [0, 0, 1, 0], [], []>} : vector<8x8xf32>, vector<10x8xf32>, vector<8x10xf32> -> vector<8x10xf32>
    %cst_226 = arith.constant dense<0xFF800000> : vector<8xf32>
    %316 = vector.multi_reduction <maximumf>, %315, %cst_226 [1] : vector<8x10xf32> to vector<8xf32>
    %317 = vector.shape_cast %316 : vector<8xf32> to vector<8x1xf32>
    %318 = vector.broadcast %317 : vector<8x1xf32> to vector<8x10xf32>
    %319 = arith.subf %315, %318 : vector<8x10xf32>
    %320 = math.exp %319 : vector<8x10xf32>
    %cst_227 = arith.constant dense<0.000000e+00> : vector<8xf32>
    %321 = vector.multi_reduction <add>, %320, %cst_227 [1] : vector<8x10xf32> to vector<8xf32>
    %322 = vector.shape_cast %321 : vector<8xf32> to vector<8x1xf32>
    %323 = vector.broadcast %322 : vector<8x1xf32> to vector<8x10xf32>
    %324 = arith.divf %320, %323 : vector<8x10xf32>
    %cst_228 = arith.constant dense<0.000000e+00> : vector<8x8xf32>
    %325 = tpu.matmul %324, %314, %cst_228 {dimension_numbers = #tpu.dot_dimension_numbers<[1], [0], [0], [1], [0, 0, 1, 1], [], []>} : vector<8x10xf32>, vector<10x8xf32>, vector<8x8xf32> -> vector<8x8xf32>
    %326 = vector.extract_strided_slice %189 {offsets = [24, 0], sizes = [8, 32], strides = [1, 1]} : vector<32x32xf32> to vector<8x32xf32>
    %cst_229 = arith.constant dense<0.000000e+00> : vector<8x32xf32>
    %327 = tpu.matmul %325, %326, %cst_229 {dimension_numbers = #tpu.dot_dimension_numbers<[1], [0], [0], [1], [0, 0, 1, 1], [], []>} : vector<8x8xf32>, vector<8x32xf32>, vector<8x32xf32> -> vector<8x32xf32>
    %328 = arith.addf %293, %327 : vector<8x32xf32>
    %329 = vector.broadcast %13 : vector<1x32xf32> to vector<8x32xf32>
    %330 = arith.addf %328, %329 : vector<8x32xf32>
    %331 = arith.addf %187, %330 : vector<8x32xf32>
    %cst_230 = arith.constant dense<0.000000e+00> : vector<8xf32>
    %332 = vector.multi_reduction <add>, %331, %cst_230 [1] : vector<8x32xf32> to vector<8xf32>
    %333 = vector.shape_cast %332 : vector<8xf32> to vector<8x1xf32>
    %cst_231 = arith.constant 3.200000e+01 : f32
    %334 = vector.broadcast %cst_231 : f32 to vector<8x1xf32>
    %335 = arith.divf %333, %334 : vector<8x1xf32>
    %336 = vector.broadcast %335 : vector<8x1xf32> to vector<8x32xf32>
    %337 = arith.subf %331, %336 : vector<8x32xf32>
    %338 = arith.mulf %337, %337 : vector<8x32xf32>
    %cst_232 = arith.constant dense<0.000000e+00> : vector<8xf32>
    %339 = vector.multi_reduction <add>, %338, %cst_232 [1] : vector<8x32xf32> to vector<8xf32>
    %340 = vector.shape_cast %339 : vector<8xf32> to vector<8x1xf32>
    %cst_233 = arith.constant 3.200000e+01 : f32
    %341 = vector.broadcast %cst_233 : f32 to vector<8x1xf32>
    %342 = arith.divf %340, %341 : vector<8x1xf32>
    %cst_234 = arith.constant 9.99999974E-6 : f32
    %343 = vector.broadcast %cst_234 : f32 to vector<8x1xf32>
    %344 = arith.addf %342, %343 : vector<8x1xf32>
    %345 = math.rsqrt %344 : vector<8x1xf32>
    %346 = vector.broadcast %345 : vector<8x1xf32> to vector<8x32xf32>
    %347 = arith.mulf %337, %346 : vector<8x32xf32>
    %348 = vector.broadcast %15 : vector<1x32xf32> to vector<8x32xf32>
    %349 = arith.mulf %347, %348 : vector<8x32xf32>
    %350 = vector.broadcast %17 : vector<1x32xf32> to vector<8x32xf32>
    %351 = arith.addf %349, %350 : vector<8x32xf32>
    %c0_235 = arith.constant 0 : index
    %c0_236 = arith.constant 0 : index
    %c0_237 = arith.constant 0 : index
    %352 = vector.load %arg8[%c0_235, %c0_236, %c0_237] : memref<2x32x64xf32, #tpu.memory_space<vmem>>, vector<1x32x64xf32>
    %353 = vector.shape_cast %352 : vector<1x32x64xf32> to vector<32x64xf32>
    %cst_238 = arith.constant dense<0.000000e+00> : vector<8x64xf32>
    %354 = tpu.matmul %351, %353, %cst_238 {dimension_numbers = #tpu.dot_dimension_numbers<[1], [0], [0], [1], [0, 0, 1, 1], [], []>} : vector<8x32xf32>, vector<32x64xf32>, vector<8x64xf32> -> vector<8x64xf32>
    %c0_239 = arith.constant 0 : index
    %c0_240 = arith.constant 0 : index
    %c0_241 = arith.constant 0 : index
    %355 = vector.load %arg9[%c0_239, %c0_240, %c0_241] : memref<2x1x64xf32, #tpu.memory_space<vmem>>, vector<1x1x64xf32>
    %356 = vector.shape_cast %355 : vector<1x1x64xf32> to vector<1x64xf32>
    %357 = vector.broadcast %356 : vector<1x64xf32> to vector<8x64xf32>
    %358 = arith.addf %354, %357 : vector<8x64xf32>
    %cst_242 = arith.constant 0.000000e+00 : f32
    %359 = vector.broadcast %cst_242 : f32 to vector<8x64xf32>
    %360 = arith.maximumf %358, %359 : vector<8x64xf32>
    %c0_243 = arith.constant 0 : index
    %c0_244 = arith.constant 0 : index
    %c0_245 = arith.constant 0 : index
    %361 = vector.load %arg10[%c0_243, %c0_244, %c0_245] : memref<2x64x32xf32, #tpu.memory_space<vmem>>, vector<1x64x32xf32>
    %362 = vector.shape_cast %361 : vector<1x64x32xf32> to vector<64x32xf32>
    %cst_246 = arith.constant dense<0.000000e+00> : vector<8x32xf32>
    %363 = tpu.matmul %360, %362, %cst_246 {dimension_numbers = #tpu.dot_dimension_numbers<[1], [0], [0], [1], [0, 0, 1, 1], [], []>} : vector<8x64xf32>, vector<64x32xf32>, vector<8x32xf32> -> vector<8x32xf32>
    %364 = vector.broadcast %23 : vector<1x32xf32> to vector<8x32xf32>
    %365 = arith.addf %363, %364 : vector<8x32xf32>
    %366 = arith.addf %351, %365 : vector<8x32xf32>
    %cst_247 = arith.constant dense<0.000000e+00> : vector<8xf32>
    %367 = vector.multi_reduction <add>, %366, %cst_247 [1] : vector<8x32xf32> to vector<8xf32>
    %368 = vector.shape_cast %367 : vector<8xf32> to vector<8x1xf32>
    %cst_248 = arith.constant 3.200000e+01 : f32
    %369 = vector.broadcast %cst_248 : f32 to vector<8x1xf32>
    %370 = arith.divf %368, %369 : vector<8x1xf32>
    %371 = vector.broadcast %370 : vector<8x1xf32> to vector<8x32xf32>
    %372 = arith.subf %366, %371 : vector<8x32xf32>
    %373 = arith.mulf %372, %372 : vector<8x32xf32>
    %cst_249 = arith.constant dense<0.000000e+00> : vector<8xf32>
    %374 = vector.multi_reduction <add>, %373, %cst_249 [1] : vector<8x32xf32> to vector<8xf32>
    %375 = vector.shape_cast %374 : vector<8xf32> to vector<8x1xf32>
    %cst_250 = arith.constant 3.200000e+01 : f32
    %376 = vector.broadcast %cst_250 : f32 to vector<8x1xf32>
    %377 = arith.divf %375, %376 : vector<8x1xf32>
    %cst_251 = arith.constant 9.99999974E-6 : f32
    %378 = vector.broadcast %cst_251 : f32 to vector<8x1xf32>
    %379 = arith.addf %377, %378 : vector<8x1xf32>
    %380 = math.rsqrt %379 : vector<8x1xf32>
    %381 = vector.broadcast %380 : vector<8x1xf32> to vector<8x32xf32>
    %382 = arith.mulf %372, %381 : vector<8x32xf32>
    %383 = vector.broadcast %19 : vector<1x32xf32> to vector<8x32xf32>
    %384 = arith.mulf %382, %383 : vector<8x32xf32>
    %385 = vector.broadcast %21 : vector<1x32xf32> to vector<8x32xf32>
    %386 = arith.addf %384, %385 : vector<8x32xf32>
    %c9_252 = arith.constant 9 : index
    %c0_253 = arith.constant 0 : index
    %c0_254 = arith.constant 0 : index
    %387 = vector.load %arg7[%c9_252, %c0_253, %c0_254] : memref<18x1x32xf32, #tpu.memory_space<vmem>>, vector<1x1x32xf32>
    %388 = vector.shape_cast %387 : vector<1x1x32xf32> to vector<1x32xf32>
    %c10_255 = arith.constant 10 : index
    %c0_256 = arith.constant 0 : index
    %c0_257 = arith.constant 0 : index
    %389 = vector.load %arg7[%c10_255, %c0_256, %c0_257] : memref<18x1x32xf32, #tpu.memory_space<vmem>>, vector<1x1x32xf32>
    %390 = vector.shape_cast %389 : vector<1x1x32xf32> to vector<1x32xf32>
    %c11_258 = arith.constant 11 : index
    %c0_259 = arith.constant 0 : index
    %c0_260 = arith.constant 0 : index
    %391 = vector.load %arg7[%c11_258, %c0_259, %c0_260] : memref<18x1x32xf32, #tpu.memory_space<vmem>>, vector<1x1x32xf32>
    %392 = vector.shape_cast %391 : vector<1x1x32xf32> to vector<1x32xf32>
    %c12_261 = arith.constant 12 : index
    %c0_262 = arith.constant 0 : index
    %c0_263 = arith.constant 0 : index
    %393 = vector.load %arg7[%c12_261, %c0_262, %c0_263] : memref<18x1x32xf32, #tpu.memory_space<vmem>>, vector<1x1x32xf32>
    %394 = vector.shape_cast %393 : vector<1x1x32xf32> to vector<1x32xf32>
    %c13_264 = arith.constant 13 : index
    %c0_265 = arith.constant 0 : index
    %c0_266 = arith.constant 0 : index
    %395 = vector.load %arg7[%c13_264, %c0_265, %c0_266] : memref<18x1x32xf32, #tpu.memory_space<vmem>>, vector<1x1x32xf32>
    %396 = vector.shape_cast %395 : vector<1x1x32xf32> to vector<1x32xf32>
    %c14_267 = arith.constant 14 : index
    %c0_268 = arith.constant 0 : index
    %c0_269 = arith.constant 0 : index
    %397 = vector.load %arg7[%c14_267, %c0_268, %c0_269] : memref<18x1x32xf32, #tpu.memory_space<vmem>>, vector<1x1x32xf32>
    %398 = vector.shape_cast %397 : vector<1x1x32xf32> to vector<1x32xf32>
    %c15_270 = arith.constant 15 : index
    %c0_271 = arith.constant 0 : index
    %c0_272 = arith.constant 0 : index
    %399 = vector.load %arg7[%c15_270, %c0_271, %c0_272] : memref<18x1x32xf32, #tpu.memory_space<vmem>>, vector<1x1x32xf32>
    %400 = vector.shape_cast %399 : vector<1x1x32xf32> to vector<1x32xf32>
    %c16_273 = arith.constant 16 : index
    %c0_274 = arith.constant 0 : index
    %c0_275 = arith.constant 0 : index
    %401 = vector.load %arg7[%c16_273, %c0_274, %c0_275] : memref<18x1x32xf32, #tpu.memory_space<vmem>>, vector<1x1x32xf32>
    %402 = vector.shape_cast %401 : vector<1x1x32xf32> to vector<1x32xf32>
    %c17_276 = arith.constant 17 : index
    %c0_277 = arith.constant 0 : index
    %c0_278 = arith.constant 0 : index
    %403 = vector.load %arg7[%c17_276, %c0_277, %c0_278] : memref<18x1x32xf32, #tpu.memory_space<vmem>>, vector<1x1x32xf32>
    %404 = vector.shape_cast %403 : vector<1x1x32xf32> to vector<1x32xf32>
    %c2_279 = arith.constant 2 : index
    %c0_280 = arith.constant 0 : index
    %c0_281 = arith.constant 0 : index
    %405 = vector.load %arg6[%c2_279, %c0_280, %c0_281] : memref<4x32x32xf32, #tpu.memory_space<vmem>>, vector<1x32x32xf32>
    %406 = vector.shape_cast %405 : vector<1x32x32xf32> to vector<32x32xf32>
    %c24 = arith.constant 24 : index
    %c0_282 = arith.constant 0 : index
    %c0_283 = arith.constant 0 : index
    %407 = vector.load %arg4[%c24, %c0_282, %c0_283] : memref<48x32x8xf32, #tpu.memory_space<vmem>>, vector<1x32x8xf32>
    %408 = vector.shape_cast %407 : vector<1x32x8xf32> to vector<32x8xf32>
    %c28 = arith.constant 28 : index
    %c0_284 = arith.constant 0 : index
    %c0_285 = arith.constant 0 : index
    %409 = vector.load %arg4[%c28, %c0_284, %c0_285] : memref<48x32x8xf32, #tpu.memory_space<vmem>>, vector<1x32x8xf32>
    %410 = vector.shape_cast %409 : vector<1x32x8xf32> to vector<32x8xf32>
    %c32 = arith.constant 32 : index
    %c0_286 = arith.constant 0 : index
    %c0_287 = arith.constant 0 : index
    %411 = vector.load %arg4[%c32, %c0_286, %c0_287] : memref<48x32x8xf32, #tpu.memory_space<vmem>>, vector<1x32x8xf32>
    %412 = vector.shape_cast %411 : vector<1x32x8xf32> to vector<32x8xf32>
    %c24_288 = arith.constant 24 : index
    %c0_289 = arith.constant 0 : index
    %c0_290 = arith.constant 0 : index
    %413 = vector.load %arg5[%c24_288, %c0_289, %c0_290] : memref<48x1x8xf32, #tpu.memory_space<vmem>>, vector<1x1x8xf32>
    %414 = vector.shape_cast %413 : vector<1x1x8xf32> to vector<1x8xf32>
    %c28_291 = arith.constant 28 : index
    %c0_292 = arith.constant 0 : index
    %c0_293 = arith.constant 0 : index
    %415 = vector.load %arg5[%c28_291, %c0_292, %c0_293] : memref<48x1x8xf32, #tpu.memory_space<vmem>>, vector<1x1x8xf32>
    %416 = vector.shape_cast %415 : vector<1x1x8xf32> to vector<1x8xf32>
    %c32_294 = arith.constant 32 : index
    %c0_295 = arith.constant 0 : index
    %c0_296 = arith.constant 0 : index
    %417 = vector.load %arg5[%c32_294, %c0_295, %c0_296] : memref<48x1x8xf32, #tpu.memory_space<vmem>>, vector<1x1x8xf32>
    %418 = vector.shape_cast %417 : vector<1x1x8xf32> to vector<1x8xf32>
    %cst_297 = arith.constant dense<0.000000e+00> : vector<8x8xf32>
    %419 = tpu.matmul %386, %408, %cst_297 {dimension_numbers = #tpu.dot_dimension_numbers<[1], [0], [0], [1], [0, 0, 1, 1], [], []>} : vector<8x32xf32>, vector<32x8xf32>, vector<8x8xf32> -> vector<8x8xf32>
    %420 = vector.broadcast %414 : vector<1x8xf32> to vector<8x8xf32>
    %421 = arith.addf %419, %420 : vector<8x8xf32>
    %cst_298 = arith.constant dense<0.000000e+00> : vector<12x8xf32>
    %422 = tpu.matmul %3, %410, %cst_298 {dimension_numbers = #tpu.dot_dimension_numbers<[1], [0], [0], [1], [0, 0, 1, 1], [], []>} : vector<12x32xf32>, vector<32x8xf32>, vector<12x8xf32> -> vector<12x8xf32>
    %423 = vector.broadcast %416 : vector<1x8xf32> to vector<12x8xf32>
    %424 = arith.addf %422, %423 : vector<12x8xf32>
    %cst_299 = arith.constant dense<0.000000e+00> : vector<12x8xf32>
    %425 = tpu.matmul %3, %412, %cst_299 {dimension_numbers = #tpu.dot_dimension_numbers<[1], [0], [0], [1], [0, 0, 1, 1], [], []>} : vector<12x32xf32>, vector<32x8xf32>, vector<12x8xf32> -> vector<12x8xf32>
    %426 = vector.broadcast %418 : vector<1x8xf32> to vector<12x8xf32>
    %427 = arith.addf %425, %426 : vector<12x8xf32>
    %cst_300 = arith.constant dense<0.000000e+00> : vector<8x12xf32>
    %428 = tpu.matmul %421, %424, %cst_300 {dimension_numbers = #tpu.dot_dimension_numbers<[1], [1], [0], [0], [0, 0, 1, 0], [], []>} : vector<8x8xf32>, vector<12x8xf32>, vector<8x12xf32> -> vector<8x12xf32>
    %cst_301 = arith.constant dense<0xFF800000> : vector<8xf32>
    %429 = vector.multi_reduction <maximumf>, %428, %cst_301 [1] : vector<8x12xf32> to vector<8xf32>
    %430 = vector.shape_cast %429 : vector<8xf32> to vector<8x1xf32>
    %431 = vector.broadcast %430 : vector<8x1xf32> to vector<8x12xf32>
    %432 = arith.subf %428, %431 : vector<8x12xf32>
    %433 = math.exp %432 : vector<8x12xf32>
    %cst_302 = arith.constant dense<0.000000e+00> : vector<8xf32>
    %434 = vector.multi_reduction <add>, %433, %cst_302 [1] : vector<8x12xf32> to vector<8xf32>
    %435 = vector.shape_cast %434 : vector<8xf32> to vector<8x1xf32>
    %436 = vector.broadcast %435 : vector<8x1xf32> to vector<8x12xf32>
    %437 = arith.divf %433, %436 : vector<8x12xf32>
    %cst_303 = arith.constant dense<0.000000e+00> : vector<8x8xf32>
    %438 = tpu.matmul %437, %427, %cst_303 {dimension_numbers = #tpu.dot_dimension_numbers<[1], [0], [0], [1], [0, 0, 1, 1], [], []>} : vector<8x12xf32>, vector<12x8xf32>, vector<8x8xf32> -> vector<8x8xf32>
    %439 = vector.extract_strided_slice %406 {offsets = [0, 0], sizes = [8, 32], strides = [1, 1]} : vector<32x32xf32> to vector<8x32xf32>
    %cst_304 = arith.constant dense<0.000000e+00> : vector<8x32xf32>
    %440 = tpu.matmul %438, %439, %cst_304 {dimension_numbers = #tpu.dot_dimension_numbers<[1], [0], [0], [1], [0, 0, 1, 1], [], []>} : vector<8x8xf32>, vector<8x32xf32>, vector<8x32xf32> -> vector<8x32xf32>
    %c25 = arith.constant 25 : index
    %c0_305 = arith.constant 0 : index
    %c0_306 = arith.constant 0 : index
    %441 = vector.load %arg4[%c25, %c0_305, %c0_306] : memref<48x32x8xf32, #tpu.memory_space<vmem>>, vector<1x32x8xf32>
    %442 = vector.shape_cast %441 : vector<1x32x8xf32> to vector<32x8xf32>
    %c29 = arith.constant 29 : index
    %c0_307 = arith.constant 0 : index
    %c0_308 = arith.constant 0 : index
    %443 = vector.load %arg4[%c29, %c0_307, %c0_308] : memref<48x32x8xf32, #tpu.memory_space<vmem>>, vector<1x32x8xf32>
    %444 = vector.shape_cast %443 : vector<1x32x8xf32> to vector<32x8xf32>
    %c33 = arith.constant 33 : index
    %c0_309 = arith.constant 0 : index
    %c0_310 = arith.constant 0 : index
    %445 = vector.load %arg4[%c33, %c0_309, %c0_310] : memref<48x32x8xf32, #tpu.memory_space<vmem>>, vector<1x32x8xf32>
    %446 = vector.shape_cast %445 : vector<1x32x8xf32> to vector<32x8xf32>
    %c25_311 = arith.constant 25 : index
    %c0_312 = arith.constant 0 : index
    %c0_313 = arith.constant 0 : index
    %447 = vector.load %arg5[%c25_311, %c0_312, %c0_313] : memref<48x1x8xf32, #tpu.memory_space<vmem>>, vector<1x1x8xf32>
    %448 = vector.shape_cast %447 : vector<1x1x8xf32> to vector<1x8xf32>
    %c29_314 = arith.constant 29 : index
    %c0_315 = arith.constant 0 : index
    %c0_316 = arith.constant 0 : index
    %449 = vector.load %arg5[%c29_314, %c0_315, %c0_316] : memref<48x1x8xf32, #tpu.memory_space<vmem>>, vector<1x1x8xf32>
    %450 = vector.shape_cast %449 : vector<1x1x8xf32> to vector<1x8xf32>
    %c33_317 = arith.constant 33 : index
    %c0_318 = arith.constant 0 : index
    %c0_319 = arith.constant 0 : index
    %451 = vector.load %arg5[%c33_317, %c0_318, %c0_319] : memref<48x1x8xf32, #tpu.memory_space<vmem>>, vector<1x1x8xf32>
    %452 = vector.shape_cast %451 : vector<1x1x8xf32> to vector<1x8xf32>
    %cst_320 = arith.constant dense<0.000000e+00> : vector<8x8xf32>
    %453 = tpu.matmul %386, %442, %cst_320 {dimension_numbers = #tpu.dot_dimension_numbers<[1], [0], [0], [1], [0, 0, 1, 1], [], []>} : vector<8x32xf32>, vector<32x8xf32>, vector<8x8xf32> -> vector<8x8xf32>
    %454 = vector.broadcast %448 : vector<1x8xf32> to vector<8x8xf32>
    %455 = arith.addf %453, %454 : vector<8x8xf32>
    %cst_321 = arith.constant dense<0.000000e+00> : vector<12x8xf32>
    %456 = tpu.matmul %3, %444, %cst_321 {dimension_numbers = #tpu.dot_dimension_numbers<[1], [0], [0], [1], [0, 0, 1, 1], [], []>} : vector<12x32xf32>, vector<32x8xf32>, vector<12x8xf32> -> vector<12x8xf32>
    %457 = vector.broadcast %450 : vector<1x8xf32> to vector<12x8xf32>
    %458 = arith.addf %456, %457 : vector<12x8xf32>
    %cst_322 = arith.constant dense<0.000000e+00> : vector<12x8xf32>
    %459 = tpu.matmul %3, %446, %cst_322 {dimension_numbers = #tpu.dot_dimension_numbers<[1], [0], [0], [1], [0, 0, 1, 1], [], []>} : vector<12x32xf32>, vector<32x8xf32>, vector<12x8xf32> -> vector<12x8xf32>
    %460 = vector.broadcast %452 : vector<1x8xf32> to vector<12x8xf32>
    %461 = arith.addf %459, %460 : vector<12x8xf32>
    %cst_323 = arith.constant dense<0.000000e+00> : vector<8x12xf32>
    %462 = tpu.matmul %455, %458, %cst_323 {dimension_numbers = #tpu.dot_dimension_numbers<[1], [1], [0], [0], [0, 0, 1, 0], [], []>} : vector<8x8xf32>, vector<12x8xf32>, vector<8x12xf32> -> vector<8x12xf32>
    %cst_324 = arith.constant dense<0xFF800000> : vector<8xf32>
    %463 = vector.multi_reduction <maximumf>, %462, %cst_324 [1] : vector<8x12xf32> to vector<8xf32>
    %464 = vector.shape_cast %463 : vector<8xf32> to vector<8x1xf32>
    %465 = vector.broadcast %464 : vector<8x1xf32> to vector<8x12xf32>
    %466 = arith.subf %462, %465 : vector<8x12xf32>
    %467 = math.exp %466 : vector<8x12xf32>
    %cst_325 = arith.constant dense<0.000000e+00> : vector<8xf32>
    %468 = vector.multi_reduction <add>, %467, %cst_325 [1] : vector<8x12xf32> to vector<8xf32>
    %469 = vector.shape_cast %468 : vector<8xf32> to vector<8x1xf32>
    %470 = vector.broadcast %469 : vector<8x1xf32> to vector<8x12xf32>
    %471 = arith.divf %467, %470 : vector<8x12xf32>
    %cst_326 = arith.constant dense<0.000000e+00> : vector<8x8xf32>
    %472 = tpu.matmul %471, %461, %cst_326 {dimension_numbers = #tpu.dot_dimension_numbers<[1], [0], [0], [1], [0, 0, 1, 1], [], []>} : vector<8x12xf32>, vector<12x8xf32>, vector<8x8xf32> -> vector<8x8xf32>
    %473 = vector.extract_strided_slice %406 {offsets = [8, 0], sizes = [8, 32], strides = [1, 1]} : vector<32x32xf32> to vector<8x32xf32>
    %cst_327 = arith.constant dense<0.000000e+00> : vector<8x32xf32>
    %474 = tpu.matmul %472, %473, %cst_327 {dimension_numbers = #tpu.dot_dimension_numbers<[1], [0], [0], [1], [0, 0, 1, 1], [], []>} : vector<8x8xf32>, vector<8x32xf32>, vector<8x32xf32> -> vector<8x32xf32>
    %475 = arith.addf %440, %474 : vector<8x32xf32>
    %c26 = arith.constant 26 : index
    %c0_328 = arith.constant 0 : index
    %c0_329 = arith.constant 0 : index
    %476 = vector.load %arg4[%c26, %c0_328, %c0_329] : memref<48x32x8xf32, #tpu.memory_space<vmem>>, vector<1x32x8xf32>
    %477 = vector.shape_cast %476 : vector<1x32x8xf32> to vector<32x8xf32>
    %c30 = arith.constant 30 : index
    %c0_330 = arith.constant 0 : index
    %c0_331 = arith.constant 0 : index
    %478 = vector.load %arg4[%c30, %c0_330, %c0_331] : memref<48x32x8xf32, #tpu.memory_space<vmem>>, vector<1x32x8xf32>
    %479 = vector.shape_cast %478 : vector<1x32x8xf32> to vector<32x8xf32>
    %c34 = arith.constant 34 : index
    %c0_332 = arith.constant 0 : index
    %c0_333 = arith.constant 0 : index
    %480 = vector.load %arg4[%c34, %c0_332, %c0_333] : memref<48x32x8xf32, #tpu.memory_space<vmem>>, vector<1x32x8xf32>
    %481 = vector.shape_cast %480 : vector<1x32x8xf32> to vector<32x8xf32>
    %c26_334 = arith.constant 26 : index
    %c0_335 = arith.constant 0 : index
    %c0_336 = arith.constant 0 : index
    %482 = vector.load %arg5[%c26_334, %c0_335, %c0_336] : memref<48x1x8xf32, #tpu.memory_space<vmem>>, vector<1x1x8xf32>
    %483 = vector.shape_cast %482 : vector<1x1x8xf32> to vector<1x8xf32>
    %c30_337 = arith.constant 30 : index
    %c0_338 = arith.constant 0 : index
    %c0_339 = arith.constant 0 : index
    %484 = vector.load %arg5[%c30_337, %c0_338, %c0_339] : memref<48x1x8xf32, #tpu.memory_space<vmem>>, vector<1x1x8xf32>
    %485 = vector.shape_cast %484 : vector<1x1x8xf32> to vector<1x8xf32>
    %c34_340 = arith.constant 34 : index
    %c0_341 = arith.constant 0 : index
    %c0_342 = arith.constant 0 : index
    %486 = vector.load %arg5[%c34_340, %c0_341, %c0_342] : memref<48x1x8xf32, #tpu.memory_space<vmem>>, vector<1x1x8xf32>
    %487 = vector.shape_cast %486 : vector<1x1x8xf32> to vector<1x8xf32>
    %cst_343 = arith.constant dense<0.000000e+00> : vector<8x8xf32>
    %488 = tpu.matmul %386, %477, %cst_343 {dimension_numbers = #tpu.dot_dimension_numbers<[1], [0], [0], [1], [0, 0, 1, 1], [], []>} : vector<8x32xf32>, vector<32x8xf32>, vector<8x8xf32> -> vector<8x8xf32>
    %489 = vector.broadcast %483 : vector<1x8xf32> to vector<8x8xf32>
    %490 = arith.addf %488, %489 : vector<8x8xf32>
    %cst_344 = arith.constant dense<0.000000e+00> : vector<12x8xf32>
    %491 = tpu.matmul %3, %479, %cst_344 {dimension_numbers = #tpu.dot_dimension_numbers<[1], [0], [0], [1], [0, 0, 1, 1], [], []>} : vector<12x32xf32>, vector<32x8xf32>, vector<12x8xf32> -> vector<12x8xf32>
    %492 = vector.broadcast %485 : vector<1x8xf32> to vector<12x8xf32>
    %493 = arith.addf %491, %492 : vector<12x8xf32>
    %cst_345 = arith.constant dense<0.000000e+00> : vector<12x8xf32>
    %494 = tpu.matmul %3, %481, %cst_345 {dimension_numbers = #tpu.dot_dimension_numbers<[1], [0], [0], [1], [0, 0, 1, 1], [], []>} : vector<12x32xf32>, vector<32x8xf32>, vector<12x8xf32> -> vector<12x8xf32>
    %495 = vector.broadcast %487 : vector<1x8xf32> to vector<12x8xf32>
    %496 = arith.addf %494, %495 : vector<12x8xf32>
    %cst_346 = arith.constant dense<0.000000e+00> : vector<8x12xf32>
    %497 = tpu.matmul %490, %493, %cst_346 {dimension_numbers = #tpu.dot_dimension_numbers<[1], [1], [0], [0], [0, 0, 1, 0], [], []>} : vector<8x8xf32>, vector<12x8xf32>, vector<8x12xf32> -> vector<8x12xf32>
    %cst_347 = arith.constant dense<0xFF800000> : vector<8xf32>
    %498 = vector.multi_reduction <maximumf>, %497, %cst_347 [1] : vector<8x12xf32> to vector<8xf32>
    %499 = vector.shape_cast %498 : vector<8xf32> to vector<8x1xf32>
    %500 = vector.broadcast %499 : vector<8x1xf32> to vector<8x12xf32>
    %501 = arith.subf %497, %500 : vector<8x12xf32>
    %502 = math.exp %501 : vector<8x12xf32>
    %cst_348 = arith.constant dense<0.000000e+00> : vector<8xf32>
    %503 = vector.multi_reduction <add>, %502, %cst_348 [1] : vector<8x12xf32> to vector<8xf32>
    %504 = vector.shape_cast %503 : vector<8xf32> to vector<8x1xf32>
    %505 = vector.broadcast %504 : vector<8x1xf32> to vector<8x12xf32>
    %506 = arith.divf %502, %505 : vector<8x12xf32>
    %cst_349 = arith.constant dense<0.000000e+00> : vector<8x8xf32>
    %507 = tpu.matmul %506, %496, %cst_349 {dimension_numbers = #tpu.dot_dimension_numbers<[1], [0], [0], [1], [0, 0, 1, 1], [], []>} : vector<8x12xf32>, vector<12x8xf32>, vector<8x8xf32> -> vector<8x8xf32>
    %508 = vector.extract_strided_slice %406 {offsets = [16, 0], sizes = [8, 32], strides = [1, 1]} : vector<32x32xf32> to vector<8x32xf32>
    %cst_350 = arith.constant dense<0.000000e+00> : vector<8x32xf32>
    %509 = tpu.matmul %507, %508, %cst_350 {dimension_numbers = #tpu.dot_dimension_numbers<[1], [0], [0], [1], [0, 0, 1, 1], [], []>} : vector<8x8xf32>, vector<8x32xf32>, vector<8x32xf32> -> vector<8x32xf32>
    %510 = arith.addf %475, %509 : vector<8x32xf32>
    %c27 = arith.constant 27 : index
    %c0_351 = arith.constant 0 : index
    %c0_352 = arith.constant 0 : index
    %511 = vector.load %arg4[%c27, %c0_351, %c0_352] : memref<48x32x8xf32, #tpu.memory_space<vmem>>, vector<1x32x8xf32>
    %512 = vector.shape_cast %511 : vector<1x32x8xf32> to vector<32x8xf32>
    %c31 = arith.constant 31 : index
    %c0_353 = arith.constant 0 : index
    %c0_354 = arith.constant 0 : index
    %513 = vector.load %arg4[%c31, %c0_353, %c0_354] : memref<48x32x8xf32, #tpu.memory_space<vmem>>, vector<1x32x8xf32>
    %514 = vector.shape_cast %513 : vector<1x32x8xf32> to vector<32x8xf32>
    %c35 = arith.constant 35 : index
    %c0_355 = arith.constant 0 : index
    %c0_356 = arith.constant 0 : index
    %515 = vector.load %arg4[%c35, %c0_355, %c0_356] : memref<48x32x8xf32, #tpu.memory_space<vmem>>, vector<1x32x8xf32>
    %516 = vector.shape_cast %515 : vector<1x32x8xf32> to vector<32x8xf32>
    %c27_357 = arith.constant 27 : index
    %c0_358 = arith.constant 0 : index
    %c0_359 = arith.constant 0 : index
    %517 = vector.load %arg5[%c27_357, %c0_358, %c0_359] : memref<48x1x8xf32, #tpu.memory_space<vmem>>, vector<1x1x8xf32>
    %518 = vector.shape_cast %517 : vector<1x1x8xf32> to vector<1x8xf32>
    %c31_360 = arith.constant 31 : index
    %c0_361 = arith.constant 0 : index
    %c0_362 = arith.constant 0 : index
    %519 = vector.load %arg5[%c31_360, %c0_361, %c0_362] : memref<48x1x8xf32, #tpu.memory_space<vmem>>, vector<1x1x8xf32>
    %520 = vector.shape_cast %519 : vector<1x1x8xf32> to vector<1x8xf32>
    %c35_363 = arith.constant 35 : index
    %c0_364 = arith.constant 0 : index
    %c0_365 = arith.constant 0 : index
    %521 = vector.load %arg5[%c35_363, %c0_364, %c0_365] : memref<48x1x8xf32, #tpu.memory_space<vmem>>, vector<1x1x8xf32>
    %522 = vector.shape_cast %521 : vector<1x1x8xf32> to vector<1x8xf32>
    %cst_366 = arith.constant dense<0.000000e+00> : vector<8x8xf32>
    %523 = tpu.matmul %386, %512, %cst_366 {dimension_numbers = #tpu.dot_dimension_numbers<[1], [0], [0], [1], [0, 0, 1, 1], [], []>} : vector<8x32xf32>, vector<32x8xf32>, vector<8x8xf32> -> vector<8x8xf32>
    %524 = vector.broadcast %518 : vector<1x8xf32> to vector<8x8xf32>
    %525 = arith.addf %523, %524 : vector<8x8xf32>
    %cst_367 = arith.constant dense<0.000000e+00> : vector<12x8xf32>
    %526 = tpu.matmul %3, %514, %cst_367 {dimension_numbers = #tpu.dot_dimension_numbers<[1], [0], [0], [1], [0, 0, 1, 1], [], []>} : vector<12x32xf32>, vector<32x8xf32>, vector<12x8xf32> -> vector<12x8xf32>
    %527 = vector.broadcast %520 : vector<1x8xf32> to vector<12x8xf32>
    %528 = arith.addf %526, %527 : vector<12x8xf32>
    %cst_368 = arith.constant dense<0.000000e+00> : vector<12x8xf32>
    %529 = tpu.matmul %3, %516, %cst_368 {dimension_numbers = #tpu.dot_dimension_numbers<[1], [0], [0], [1], [0, 0, 1, 1], [], []>} : vector<12x32xf32>, vector<32x8xf32>, vector<12x8xf32> -> vector<12x8xf32>
    %530 = vector.broadcast %522 : vector<1x8xf32> to vector<12x8xf32>
    %531 = arith.addf %529, %530 : vector<12x8xf32>
    %cst_369 = arith.constant dense<0.000000e+00> : vector<8x12xf32>
    %532 = tpu.matmul %525, %528, %cst_369 {dimension_numbers = #tpu.dot_dimension_numbers<[1], [1], [0], [0], [0, 0, 1, 0], [], []>} : vector<8x8xf32>, vector<12x8xf32>, vector<8x12xf32> -> vector<8x12xf32>
    %cst_370 = arith.constant dense<0xFF800000> : vector<8xf32>
    %533 = vector.multi_reduction <maximumf>, %532, %cst_370 [1] : vector<8x12xf32> to vector<8xf32>
    %534 = vector.shape_cast %533 : vector<8xf32> to vector<8x1xf32>
    %535 = vector.broadcast %534 : vector<8x1xf32> to vector<8x12xf32>
    %536 = arith.subf %532, %535 : vector<8x12xf32>
    %537 = math.exp %536 : vector<8x12xf32>
    %cst_371 = arith.constant dense<0.000000e+00> : vector<8xf32>
    %538 = vector.multi_reduction <add>, %537, %cst_371 [1] : vector<8x12xf32> to vector<8xf32>
    %539 = vector.shape_cast %538 : vector<8xf32> to vector<8x1xf32>
    %540 = vector.broadcast %539 : vector<8x1xf32> to vector<8x12xf32>
    %541 = arith.divf %537, %540 : vector<8x12xf32>
    %cst_372 = arith.constant dense<0.000000e+00> : vector<8x8xf32>
    %542 = tpu.matmul %541, %531, %cst_372 {dimension_numbers = #tpu.dot_dimension_numbers<[1], [0], [0], [1], [0, 0, 1, 1], [], []>} : vector<8x12xf32>, vector<12x8xf32>, vector<8x8xf32> -> vector<8x8xf32>
    %543 = vector.extract_strided_slice %406 {offsets = [24, 0], sizes = [8, 32], strides = [1, 1]} : vector<32x32xf32> to vector<8x32xf32>
    %cst_373 = arith.constant dense<0.000000e+00> : vector<8x32xf32>
    %544 = tpu.matmul %542, %543, %cst_373 {dimension_numbers = #tpu.dot_dimension_numbers<[1], [0], [0], [1], [0, 0, 1, 1], [], []>} : vector<8x8xf32>, vector<8x32xf32>, vector<8x32xf32> -> vector<8x32xf32>
    %545 = arith.addf %510, %544 : vector<8x32xf32>
    %546 = vector.broadcast %388 : vector<1x32xf32> to vector<8x32xf32>
    %547 = arith.addf %545, %546 : vector<8x32xf32>
    %548 = arith.addf %386, %547 : vector<8x32xf32>
    %cst_374 = arith.constant dense<0.000000e+00> : vector<8xf32>
    %549 = vector.multi_reduction <add>, %548, %cst_374 [1] : vector<8x32xf32> to vector<8xf32>
    %550 = vector.shape_cast %549 : vector<8xf32> to vector<8x1xf32>
    %cst_375 = arith.constant 3.200000e+01 : f32
    %551 = vector.broadcast %cst_375 : f32 to vector<8x1xf32>
    %552 = arith.divf %550, %551 : vector<8x1xf32>
    %553 = vector.broadcast %552 : vector<8x1xf32> to vector<8x32xf32>
    %554 = arith.subf %548, %553 : vector<8x32xf32>
    %555 = arith.mulf %554, %554 : vector<8x32xf32>
    %cst_376 = arith.constant dense<0.000000e+00> : vector<8xf32>
    %556 = vector.multi_reduction <add>, %555, %cst_376 [1] : vector<8x32xf32> to vector<8xf32>
    %557 = vector.shape_cast %556 : vector<8xf32> to vector<8x1xf32>
    %cst_377 = arith.constant 3.200000e+01 : f32
    %558 = vector.broadcast %cst_377 : f32 to vector<8x1xf32>
    %559 = arith.divf %557, %558 : vector<8x1xf32>
    %cst_378 = arith.constant 9.99999974E-6 : f32
    %560 = vector.broadcast %cst_378 : f32 to vector<8x1xf32>
    %561 = arith.addf %559, %560 : vector<8x1xf32>
    %562 = math.rsqrt %561 : vector<8x1xf32>
    %563 = vector.broadcast %562 : vector<8x1xf32> to vector<8x32xf32>
    %564 = arith.mulf %554, %563 : vector<8x32xf32>
    %565 = vector.broadcast %390 : vector<1x32xf32> to vector<8x32xf32>
    %566 = arith.mulf %564, %565 : vector<8x32xf32>
    %567 = vector.broadcast %392 : vector<1x32xf32> to vector<8x32xf32>
    %568 = arith.addf %566, %567 : vector<8x32xf32>
    %c3_379 = arith.constant 3 : index
    %c0_380 = arith.constant 0 : index
    %c0_381 = arith.constant 0 : index
    %569 = vector.load %arg6[%c3_379, %c0_380, %c0_381] : memref<4x32x32xf32, #tpu.memory_space<vmem>>, vector<1x32x32xf32>
    %570 = vector.shape_cast %569 : vector<1x32x32xf32> to vector<32x32xf32>
    %c36 = arith.constant 36 : index
    %c0_382 = arith.constant 0 : index
    %c0_383 = arith.constant 0 : index
    %571 = vector.load %arg4[%c36, %c0_382, %c0_383] : memref<48x32x8xf32, #tpu.memory_space<vmem>>, vector<1x32x8xf32>
    %572 = vector.shape_cast %571 : vector<1x32x8xf32> to vector<32x8xf32>
    %c40 = arith.constant 40 : index
    %c0_384 = arith.constant 0 : index
    %c0_385 = arith.constant 0 : index
    %573 = vector.load %arg4[%c40, %c0_384, %c0_385] : memref<48x32x8xf32, #tpu.memory_space<vmem>>, vector<1x32x8xf32>
    %574 = vector.shape_cast %573 : vector<1x32x8xf32> to vector<32x8xf32>
    %c44 = arith.constant 44 : index
    %c0_386 = arith.constant 0 : index
    %c0_387 = arith.constant 0 : index
    %575 = vector.load %arg4[%c44, %c0_386, %c0_387] : memref<48x32x8xf32, #tpu.memory_space<vmem>>, vector<1x32x8xf32>
    %576 = vector.shape_cast %575 : vector<1x32x8xf32> to vector<32x8xf32>
    %c36_388 = arith.constant 36 : index
    %c0_389 = arith.constant 0 : index
    %c0_390 = arith.constant 0 : index
    %577 = vector.load %arg5[%c36_388, %c0_389, %c0_390] : memref<48x1x8xf32, #tpu.memory_space<vmem>>, vector<1x1x8xf32>
    %578 = vector.shape_cast %577 : vector<1x1x8xf32> to vector<1x8xf32>
    %c40_391 = arith.constant 40 : index
    %c0_392 = arith.constant 0 : index
    %c0_393 = arith.constant 0 : index
    %579 = vector.load %arg5[%c40_391, %c0_392, %c0_393] : memref<48x1x8xf32, #tpu.memory_space<vmem>>, vector<1x1x8xf32>
    %580 = vector.shape_cast %579 : vector<1x1x8xf32> to vector<1x8xf32>
    %c44_394 = arith.constant 44 : index
    %c0_395 = arith.constant 0 : index
    %c0_396 = arith.constant 0 : index
    %581 = vector.load %arg5[%c44_394, %c0_395, %c0_396] : memref<48x1x8xf32, #tpu.memory_space<vmem>>, vector<1x1x8xf32>
    %582 = vector.shape_cast %581 : vector<1x1x8xf32> to vector<1x8xf32>
    %cst_397 = arith.constant dense<0.000000e+00> : vector<8x8xf32>
    %583 = tpu.matmul %568, %572, %cst_397 {dimension_numbers = #tpu.dot_dimension_numbers<[1], [0], [0], [1], [0, 0, 1, 1], [], []>} : vector<8x32xf32>, vector<32x8xf32>, vector<8x8xf32> -> vector<8x8xf32>
    %584 = vector.broadcast %578 : vector<1x8xf32> to vector<8x8xf32>
    %585 = arith.addf %583, %584 : vector<8x8xf32>
    %cst_398 = arith.constant dense<0.000000e+00> : vector<10x8xf32>
    %586 = tpu.matmul %5, %574, %cst_398 {dimension_numbers = #tpu.dot_dimension_numbers<[1], [0], [0], [1], [0, 0, 1, 1], [], []>} : vector<10x32xf32>, vector<32x8xf32>, vector<10x8xf32> -> vector<10x8xf32>
    %587 = vector.broadcast %580 : vector<1x8xf32> to vector<10x8xf32>
    %588 = arith.addf %586, %587 : vector<10x8xf32>
    %cst_399 = arith.constant dense<0.000000e+00> : vector<10x8xf32>
    %589 = tpu.matmul %5, %576, %cst_399 {dimension_numbers = #tpu.dot_dimension_numbers<[1], [0], [0], [1], [0, 0, 1, 1], [], []>} : vector<10x32xf32>, vector<32x8xf32>, vector<10x8xf32> -> vector<10x8xf32>
    %590 = vector.broadcast %582 : vector<1x8xf32> to vector<10x8xf32>
    %591 = arith.addf %589, %590 : vector<10x8xf32>
    %cst_400 = arith.constant dense<0.000000e+00> : vector<8x10xf32>
    %592 = tpu.matmul %585, %588, %cst_400 {dimension_numbers = #tpu.dot_dimension_numbers<[1], [1], [0], [0], [0, 0, 1, 0], [], []>} : vector<8x8xf32>, vector<10x8xf32>, vector<8x10xf32> -> vector<8x10xf32>
    %cst_401 = arith.constant dense<0xFF800000> : vector<8xf32>
    %593 = vector.multi_reduction <maximumf>, %592, %cst_401 [1] : vector<8x10xf32> to vector<8xf32>
    %594 = vector.shape_cast %593 : vector<8xf32> to vector<8x1xf32>
    %595 = vector.broadcast %594 : vector<8x1xf32> to vector<8x10xf32>
    %596 = arith.subf %592, %595 : vector<8x10xf32>
    %597 = math.exp %596 : vector<8x10xf32>
    %cst_402 = arith.constant dense<0.000000e+00> : vector<8xf32>
    %598 = vector.multi_reduction <add>, %597, %cst_402 [1] : vector<8x10xf32> to vector<8xf32>
    %599 = vector.shape_cast %598 : vector<8xf32> to vector<8x1xf32>
    %600 = vector.broadcast %599 : vector<8x1xf32> to vector<8x10xf32>
    %601 = arith.divf %597, %600 : vector<8x10xf32>
    %cst_403 = arith.constant dense<0.000000e+00> : vector<8x8xf32>
    %602 = tpu.matmul %601, %591, %cst_403 {dimension_numbers = #tpu.dot_dimension_numbers<[1], [0], [0], [1], [0, 0, 1, 1], [], []>} : vector<8x10xf32>, vector<10x8xf32>, vector<8x8xf32> -> vector<8x8xf32>
    %603 = vector.extract_strided_slice %570 {offsets = [0, 0], sizes = [8, 32], strides = [1, 1]} : vector<32x32xf32> to vector<8x32xf32>
    %cst_404 = arith.constant dense<0.000000e+00> : vector<8x32xf32>
    %604 = tpu.matmul %602, %603, %cst_404 {dimension_numbers = #tpu.dot_dimension_numbers<[1], [0], [0], [1], [0, 0, 1, 1], [], []>} : vector<8x8xf32>, vector<8x32xf32>, vector<8x32xf32> -> vector<8x32xf32>
    %c37 = arith.constant 37 : index
    %c0_405 = arith.constant 0 : index
    %c0_406 = arith.constant 0 : index
    %605 = vector.load %arg4[%c37, %c0_405, %c0_406] : memref<48x32x8xf32, #tpu.memory_space<vmem>>, vector<1x32x8xf32>
    %606 = vector.shape_cast %605 : vector<1x32x8xf32> to vector<32x8xf32>
    %c41 = arith.constant 41 : index
    %c0_407 = arith.constant 0 : index
    %c0_408 = arith.constant 0 : index
    %607 = vector.load %arg4[%c41, %c0_407, %c0_408] : memref<48x32x8xf32, #tpu.memory_space<vmem>>, vector<1x32x8xf32>
    %608 = vector.shape_cast %607 : vector<1x32x8xf32> to vector<32x8xf32>
    %c45 = arith.constant 45 : index
    %c0_409 = arith.constant 0 : index
    %c0_410 = arith.constant 0 : index
    %609 = vector.load %arg4[%c45, %c0_409, %c0_410] : memref<48x32x8xf32, #tpu.memory_space<vmem>>, vector<1x32x8xf32>
    %610 = vector.shape_cast %609 : vector<1x32x8xf32> to vector<32x8xf32>
    %c37_411 = arith.constant 37 : index
    %c0_412 = arith.constant 0 : index
    %c0_413 = arith.constant 0 : index
    %611 = vector.load %arg5[%c37_411, %c0_412, %c0_413] : memref<48x1x8xf32, #tpu.memory_space<vmem>>, vector<1x1x8xf32>
    %612 = vector.shape_cast %611 : vector<1x1x8xf32> to vector<1x8xf32>
    %c41_414 = arith.constant 41 : index
    %c0_415 = arith.constant 0 : index
    %c0_416 = arith.constant 0 : index
    %613 = vector.load %arg5[%c41_414, %c0_415, %c0_416] : memref<48x1x8xf32, #tpu.memory_space<vmem>>, vector<1x1x8xf32>
    %614 = vector.shape_cast %613 : vector<1x1x8xf32> to vector<1x8xf32>
    %c45_417 = arith.constant 45 : index
    %c0_418 = arith.constant 0 : index
    %c0_419 = arith.constant 0 : index
    %615 = vector.load %arg5[%c45_417, %c0_418, %c0_419] : memref<48x1x8xf32, #tpu.memory_space<vmem>>, vector<1x1x8xf32>
    %616 = vector.shape_cast %615 : vector<1x1x8xf32> to vector<1x8xf32>
    %cst_420 = arith.constant dense<0.000000e+00> : vector<8x8xf32>
    %617 = tpu.matmul %568, %606, %cst_420 {dimension_numbers = #tpu.dot_dimension_numbers<[1], [0], [0], [1], [0, 0, 1, 1], [], []>} : vector<8x32xf32>, vector<32x8xf32>, vector<8x8xf32> -> vector<8x8xf32>
    %618 = vector.broadcast %612 : vector<1x8xf32> to vector<8x8xf32>
    %619 = arith.addf %617, %618 : vector<8x8xf32>
    %cst_421 = arith.constant dense<0.000000e+00> : vector<10x8xf32>
    %620 = tpu.matmul %5, %608, %cst_421 {dimension_numbers = #tpu.dot_dimension_numbers<[1], [0], [0], [1], [0, 0, 1, 1], [], []>} : vector<10x32xf32>, vector<32x8xf32>, vector<10x8xf32> -> vector<10x8xf32>
    %621 = vector.broadcast %614 : vector<1x8xf32> to vector<10x8xf32>
    %622 = arith.addf %620, %621 : vector<10x8xf32>
    %cst_422 = arith.constant dense<0.000000e+00> : vector<10x8xf32>
    %623 = tpu.matmul %5, %610, %cst_422 {dimension_numbers = #tpu.dot_dimension_numbers<[1], [0], [0], [1], [0, 0, 1, 1], [], []>} : vector<10x32xf32>, vector<32x8xf32>, vector<10x8xf32> -> vector<10x8xf32>
    %624 = vector.broadcast %616 : vector<1x8xf32> to vector<10x8xf32>
    %625 = arith.addf %623, %624 : vector<10x8xf32>
    %cst_423 = arith.constant dense<0.000000e+00> : vector<8x10xf32>
    %626 = tpu.matmul %619, %622, %cst_423 {dimension_numbers = #tpu.dot_dimension_numbers<[1], [1], [0], [0], [0, 0, 1, 0], [], []>} : vector<8x8xf32>, vector<10x8xf32>, vector<8x10xf32> -> vector<8x10xf32>
    %cst_424 = arith.constant dense<0xFF800000> : vector<8xf32>
    %627 = vector.multi_reduction <maximumf>, %626, %cst_424 [1] : vector<8x10xf32> to vector<8xf32>
    %628 = vector.shape_cast %627 : vector<8xf32> to vector<8x1xf32>
    %629 = vector.broadcast %628 : vector<8x1xf32> to vector<8x10xf32>
    %630 = arith.subf %626, %629 : vector<8x10xf32>
    %631 = math.exp %630 : vector<8x10xf32>
    %cst_425 = arith.constant dense<0.000000e+00> : vector<8xf32>
    %632 = vector.multi_reduction <add>, %631, %cst_425 [1] : vector<8x10xf32> to vector<8xf32>
    %633 = vector.shape_cast %632 : vector<8xf32> to vector<8x1xf32>
    %634 = vector.broadcast %633 : vector<8x1xf32> to vector<8x10xf32>
    %635 = arith.divf %631, %634 : vector<8x10xf32>
    %cst_426 = arith.constant dense<0.000000e+00> : vector<8x8xf32>
    %636 = tpu.matmul %635, %625, %cst_426 {dimension_numbers = #tpu.dot_dimension_numbers<[1], [0], [0], [1], [0, 0, 1, 1], [], []>} : vector<8x10xf32>, vector<10x8xf32>, vector<8x8xf32> -> vector<8x8xf32>
    %637 = vector.extract_strided_slice %570 {offsets = [8, 0], sizes = [8, 32], strides = [1, 1]} : vector<32x32xf32> to vector<8x32xf32>
    %cst_427 = arith.constant dense<0.000000e+00> : vector<8x32xf32>
    %638 = tpu.matmul %636, %637, %cst_427 {dimension_numbers = #tpu.dot_dimension_numbers<[1], [0], [0], [1], [0, 0, 1, 1], [], []>} : vector<8x8xf32>, vector<8x32xf32>, vector<8x32xf32> -> vector<8x32xf32>
    %639 = arith.addf %604, %638 : vector<8x32xf32>
    %c38 = arith.constant 38 : index
    %c0_428 = arith.constant 0 : index
    %c0_429 = arith.constant 0 : index
    %640 = vector.load %arg4[%c38, %c0_428, %c0_429] : memref<48x32x8xf32, #tpu.memory_space<vmem>>, vector<1x32x8xf32>
    %641 = vector.shape_cast %640 : vector<1x32x8xf32> to vector<32x8xf32>
    %c42 = arith.constant 42 : index
    %c0_430 = arith.constant 0 : index
    %c0_431 = arith.constant 0 : index
    %642 = vector.load %arg4[%c42, %c0_430, %c0_431] : memref<48x32x8xf32, #tpu.memory_space<vmem>>, vector<1x32x8xf32>
    %643 = vector.shape_cast %642 : vector<1x32x8xf32> to vector<32x8xf32>
    %c46 = arith.constant 46 : index
    %c0_432 = arith.constant 0 : index
    %c0_433 = arith.constant 0 : index
    %644 = vector.load %arg4[%c46, %c0_432, %c0_433] : memref<48x32x8xf32, #tpu.memory_space<vmem>>, vector<1x32x8xf32>
    %645 = vector.shape_cast %644 : vector<1x32x8xf32> to vector<32x8xf32>
    %c38_434 = arith.constant 38 : index
    %c0_435 = arith.constant 0 : index
    %c0_436 = arith.constant 0 : index
    %646 = vector.load %arg5[%c38_434, %c0_435, %c0_436] : memref<48x1x8xf32, #tpu.memory_space<vmem>>, vector<1x1x8xf32>
    %647 = vector.shape_cast %646 : vector<1x1x8xf32> to vector<1x8xf32>
    %c42_437 = arith.constant 42 : index
    %c0_438 = arith.constant 0 : index
    %c0_439 = arith.constant 0 : index
    %648 = vector.load %arg5[%c42_437, %c0_438, %c0_439] : memref<48x1x8xf32, #tpu.memory_space<vmem>>, vector<1x1x8xf32>
    %649 = vector.shape_cast %648 : vector<1x1x8xf32> to vector<1x8xf32>
    %c46_440 = arith.constant 46 : index
    %c0_441 = arith.constant 0 : index
    %c0_442 = arith.constant 0 : index
    %650 = vector.load %arg5[%c46_440, %c0_441, %c0_442] : memref<48x1x8xf32, #tpu.memory_space<vmem>>, vector<1x1x8xf32>
    %651 = vector.shape_cast %650 : vector<1x1x8xf32> to vector<1x8xf32>
    %cst_443 = arith.constant dense<0.000000e+00> : vector<8x8xf32>
    %652 = tpu.matmul %568, %641, %cst_443 {dimension_numbers = #tpu.dot_dimension_numbers<[1], [0], [0], [1], [0, 0, 1, 1], [], []>} : vector<8x32xf32>, vector<32x8xf32>, vector<8x8xf32> -> vector<8x8xf32>
    %653 = vector.broadcast %647 : vector<1x8xf32> to vector<8x8xf32>
    %654 = arith.addf %652, %653 : vector<8x8xf32>
    %cst_444 = arith.constant dense<0.000000e+00> : vector<10x8xf32>
    %655 = tpu.matmul %5, %643, %cst_444 {dimension_numbers = #tpu.dot_dimension_numbers<[1], [0], [0], [1], [0, 0, 1, 1], [], []>} : vector<10x32xf32>, vector<32x8xf32>, vector<10x8xf32> -> vector<10x8xf32>
    %656 = vector.broadcast %649 : vector<1x8xf32> to vector<10x8xf32>
    %657 = arith.addf %655, %656 : vector<10x8xf32>
    %cst_445 = arith.constant dense<0.000000e+00> : vector<10x8xf32>
    %658 = tpu.matmul %5, %645, %cst_445 {dimension_numbers = #tpu.dot_dimension_numbers<[1], [0], [0], [1], [0, 0, 1, 1], [], []>} : vector<10x32xf32>, vector<32x8xf32>, vector<10x8xf32> -> vector<10x8xf32>
    %659 = vector.broadcast %651 : vector<1x8xf32> to vector<10x8xf32>
    %660 = arith.addf %658, %659 : vector<10x8xf32>
    %cst_446 = arith.constant dense<0.000000e+00> : vector<8x10xf32>
    %661 = tpu.matmul %654, %657, %cst_446 {dimension_numbers = #tpu.dot_dimension_numbers<[1], [1], [0], [0], [0, 0, 1, 0], [], []>} : vector<8x8xf32>, vector<10x8xf32>, vector<8x10xf32> -> vector<8x10xf32>
    %cst_447 = arith.constant dense<0xFF800000> : vector<8xf32>
    %662 = vector.multi_reduction <maximumf>, %661, %cst_447 [1] : vector<8x10xf32> to vector<8xf32>
    %663 = vector.shape_cast %662 : vector<8xf32> to vector<8x1xf32>
    %664 = vector.broadcast %663 : vector<8x1xf32> to vector<8x10xf32>
    %665 = arith.subf %661, %664 : vector<8x10xf32>
    %666 = math.exp %665 : vector<8x10xf32>
    %cst_448 = arith.constant dense<0.000000e+00> : vector<8xf32>
    %667 = vector.multi_reduction <add>, %666, %cst_448 [1] : vector<8x10xf32> to vector<8xf32>
    %668 = vector.shape_cast %667 : vector<8xf32> to vector<8x1xf32>
    %669 = vector.broadcast %668 : vector<8x1xf32> to vector<8x10xf32>
    %670 = arith.divf %666, %669 : vector<8x10xf32>
    %cst_449 = arith.constant dense<0.000000e+00> : vector<8x8xf32>
    %671 = tpu.matmul %670, %660, %cst_449 {dimension_numbers = #tpu.dot_dimension_numbers<[1], [0], [0], [1], [0, 0, 1, 1], [], []>} : vector<8x10xf32>, vector<10x8xf32>, vector<8x8xf32> -> vector<8x8xf32>
    %672 = vector.extract_strided_slice %570 {offsets = [16, 0], sizes = [8, 32], strides = [1, 1]} : vector<32x32xf32> to vector<8x32xf32>
    %cst_450 = arith.constant dense<0.000000e+00> : vector<8x32xf32>
    %673 = tpu.matmul %671, %672, %cst_450 {dimension_numbers = #tpu.dot_dimension_numbers<[1], [0], [0], [1], [0, 0, 1, 1], [], []>} : vector<8x8xf32>, vector<8x32xf32>, vector<8x32xf32> -> vector<8x32xf32>
    %674 = arith.addf %639, %673 : vector<8x32xf32>
    %c39 = arith.constant 39 : index
    %c0_451 = arith.constant 0 : index
    %c0_452 = arith.constant 0 : index
    %675 = vector.load %arg4[%c39, %c0_451, %c0_452] : memref<48x32x8xf32, #tpu.memory_space<vmem>>, vector<1x32x8xf32>
    %676 = vector.shape_cast %675 : vector<1x32x8xf32> to vector<32x8xf32>
    %c43 = arith.constant 43 : index
    %c0_453 = arith.constant 0 : index
    %c0_454 = arith.constant 0 : index
    %677 = vector.load %arg4[%c43, %c0_453, %c0_454] : memref<48x32x8xf32, #tpu.memory_space<vmem>>, vector<1x32x8xf32>
    %678 = vector.shape_cast %677 : vector<1x32x8xf32> to vector<32x8xf32>
    %c47 = arith.constant 47 : index
    %c0_455 = arith.constant 0 : index
    %c0_456 = arith.constant 0 : index
    %679 = vector.load %arg4[%c47, %c0_455, %c0_456] : memref<48x32x8xf32, #tpu.memory_space<vmem>>, vector<1x32x8xf32>
    %680 = vector.shape_cast %679 : vector<1x32x8xf32> to vector<32x8xf32>
    %c39_457 = arith.constant 39 : index
    %c0_458 = arith.constant 0 : index
    %c0_459 = arith.constant 0 : index
    %681 = vector.load %arg5[%c39_457, %c0_458, %c0_459] : memref<48x1x8xf32, #tpu.memory_space<vmem>>, vector<1x1x8xf32>
    %682 = vector.shape_cast %681 : vector<1x1x8xf32> to vector<1x8xf32>
    %c43_460 = arith.constant 43 : index
    %c0_461 = arith.constant 0 : index
    %c0_462 = arith.constant 0 : index
    %683 = vector.load %arg5[%c43_460, %c0_461, %c0_462] : memref<48x1x8xf32, #tpu.memory_space<vmem>>, vector<1x1x8xf32>
    %684 = vector.shape_cast %683 : vector<1x1x8xf32> to vector<1x8xf32>
    %c47_463 = arith.constant 47 : index
    %c0_464 = arith.constant 0 : index
    %c0_465 = arith.constant 0 : index
    %685 = vector.load %arg5[%c47_463, %c0_464, %c0_465] : memref<48x1x8xf32, #tpu.memory_space<vmem>>, vector<1x1x8xf32>
    %686 = vector.shape_cast %685 : vector<1x1x8xf32> to vector<1x8xf32>
    %cst_466 = arith.constant dense<0.000000e+00> : vector<8x8xf32>
    %687 = tpu.matmul %568, %676, %cst_466 {dimension_numbers = #tpu.dot_dimension_numbers<[1], [0], [0], [1], [0, 0, 1, 1], [], []>} : vector<8x32xf32>, vector<32x8xf32>, vector<8x8xf32> -> vector<8x8xf32>
    %688 = vector.broadcast %682 : vector<1x8xf32> to vector<8x8xf32>
    %689 = arith.addf %687, %688 : vector<8x8xf32>
    %cst_467 = arith.constant dense<0.000000e+00> : vector<10x8xf32>
    %690 = tpu.matmul %5, %678, %cst_467 {dimension_numbers = #tpu.dot_dimension_numbers<[1], [0], [0], [1], [0, 0, 1, 1], [], []>} : vector<10x32xf32>, vector<32x8xf32>, vector<10x8xf32> -> vector<10x8xf32>
    %691 = vector.broadcast %684 : vector<1x8xf32> to vector<10x8xf32>
    %692 = arith.addf %690, %691 : vector<10x8xf32>
    %cst_468 = arith.constant dense<0.000000e+00> : vector<10x8xf32>
    %693 = tpu.matmul %5, %680, %cst_468 {dimension_numbers = #tpu.dot_dimension_numbers<[1], [0], [0], [1], [0, 0, 1, 1], [], []>} : vector<10x32xf32>, vector<32x8xf32>, vector<10x8xf32> -> vector<10x8xf32>
    %694 = vector.broadcast %686 : vector<1x8xf32> to vector<10x8xf32>
    %695 = arith.addf %693, %694 : vector<10x8xf32>
    %cst_469 = arith.constant dense<0.000000e+00> : vector<8x10xf32>
    %696 = tpu.matmul %689, %692, %cst_469 {dimension_numbers = #tpu.dot_dimension_numbers<[1], [1], [0], [0], [0, 0, 1, 0], [], []>} : vector<8x8xf32>, vector<10x8xf32>, vector<8x10xf32> -> vector<8x10xf32>
    %cst_470 = arith.constant dense<0xFF800000> : vector<8xf32>
    %697 = vector.multi_reduction <maximumf>, %696, %cst_470 [1] : vector<8x10xf32> to vector<8xf32>
    %698 = vector.shape_cast %697 : vector<8xf32> to vector<8x1xf32>
    %699 = vector.broadcast %698 : vector<8x1xf32> to vector<8x10xf32>
    %700 = arith.subf %696, %699 : vector<8x10xf32>
    %701 = math.exp %700 : vector<8x10xf32>
    %cst_471 = arith.constant dense<0.000000e+00> : vector<8xf32>
    %702 = vector.multi_reduction <add>, %701, %cst_471 [1] : vector<8x10xf32> to vector<8xf32>
    %703 = vector.shape_cast %702 : vector<8xf32> to vector<8x1xf32>
    %704 = vector.broadcast %703 : vector<8x1xf32> to vector<8x10xf32>
    %705 = arith.divf %701, %704 : vector<8x10xf32>
    %cst_472 = arith.constant dense<0.000000e+00> : vector<8x8xf32>
    %706 = tpu.matmul %705, %695, %cst_472 {dimension_numbers = #tpu.dot_dimension_numbers<[1], [0], [0], [1], [0, 0, 1, 1], [], []>} : vector<8x10xf32>, vector<10x8xf32>, vector<8x8xf32> -> vector<8x8xf32>
    %707 = vector.extract_strided_slice %570 {offsets = [24, 0], sizes = [8, 32], strides = [1, 1]} : vector<32x32xf32> to vector<8x32xf32>
    %cst_473 = arith.constant dense<0.000000e+00> : vector<8x32xf32>
    %708 = tpu.matmul %706, %707, %cst_473 {dimension_numbers = #tpu.dot_dimension_numbers<[1], [0], [0], [1], [0, 0, 1, 1], [], []>} : vector<8x8xf32>, vector<8x32xf32>, vector<8x32xf32> -> vector<8x32xf32>
    %709 = arith.addf %674, %708 : vector<8x32xf32>
    %710 = vector.broadcast %394 : vector<1x32xf32> to vector<8x32xf32>
    %711 = arith.addf %709, %710 : vector<8x32xf32>
    %712 = arith.addf %568, %711 : vector<8x32xf32>
    %cst_474 = arith.constant dense<0.000000e+00> : vector<8xf32>
    %713 = vector.multi_reduction <add>, %712, %cst_474 [1] : vector<8x32xf32> to vector<8xf32>
    %714 = vector.shape_cast %713 : vector<8xf32> to vector<8x1xf32>
    %cst_475 = arith.constant 3.200000e+01 : f32
    %715 = vector.broadcast %cst_475 : f32 to vector<8x1xf32>
    %716 = arith.divf %714, %715 : vector<8x1xf32>
    %717 = vector.broadcast %716 : vector<8x1xf32> to vector<8x32xf32>
    %718 = arith.subf %712, %717 : vector<8x32xf32>
    %719 = arith.mulf %718, %718 : vector<8x32xf32>
    %cst_476 = arith.constant dense<0.000000e+00> : vector<8xf32>
    %720 = vector.multi_reduction <add>, %719, %cst_476 [1] : vector<8x32xf32> to vector<8xf32>
    %721 = vector.shape_cast %720 : vector<8xf32> to vector<8x1xf32>
    %cst_477 = arith.constant 3.200000e+01 : f32
    %722 = vector.broadcast %cst_477 : f32 to vector<8x1xf32>
    %723 = arith.divf %721, %722 : vector<8x1xf32>
    %cst_478 = arith.constant 9.99999974E-6 : f32
    %724 = vector.broadcast %cst_478 : f32 to vector<8x1xf32>
    %725 = arith.addf %723, %724 : vector<8x1xf32>
    %726 = math.rsqrt %725 : vector<8x1xf32>
    %727 = vector.broadcast %726 : vector<8x1xf32> to vector<8x32xf32>
    %728 = arith.mulf %718, %727 : vector<8x32xf32>
    %729 = vector.broadcast %396 : vector<1x32xf32> to vector<8x32xf32>
    %730 = arith.mulf %728, %729 : vector<8x32xf32>
    %731 = vector.broadcast %398 : vector<1x32xf32> to vector<8x32xf32>
    %732 = arith.addf %730, %731 : vector<8x32xf32>
    %c1_479 = arith.constant 1 : index
    %c0_480 = arith.constant 0 : index
    %c0_481 = arith.constant 0 : index
    %733 = vector.load %arg8[%c1_479, %c0_480, %c0_481] : memref<2x32x64xf32, #tpu.memory_space<vmem>>, vector<1x32x64xf32>
    %734 = vector.shape_cast %733 : vector<1x32x64xf32> to vector<32x64xf32>
    %cst_482 = arith.constant dense<0.000000e+00> : vector<8x64xf32>
    %735 = tpu.matmul %732, %734, %cst_482 {dimension_numbers = #tpu.dot_dimension_numbers<[1], [0], [0], [1], [0, 0, 1, 1], [], []>} : vector<8x32xf32>, vector<32x64xf32>, vector<8x64xf32> -> vector<8x64xf32>
    %c1_483 = arith.constant 1 : index
    %c0_484 = arith.constant 0 : index
    %c0_485 = arith.constant 0 : index
    %736 = vector.load %arg9[%c1_483, %c0_484, %c0_485] : memref<2x1x64xf32, #tpu.memory_space<vmem>>, vector<1x1x64xf32>
    %737 = vector.shape_cast %736 : vector<1x1x64xf32> to vector<1x64xf32>
    %738 = vector.broadcast %737 : vector<1x64xf32> to vector<8x64xf32>
    %739 = arith.addf %735, %738 : vector<8x64xf32>
    %cst_486 = arith.constant 0.000000e+00 : f32
    %740 = vector.broadcast %cst_486 : f32 to vector<8x64xf32>
    %741 = arith.maximumf %739, %740 : vector<8x64xf32>
    %c1_487 = arith.constant 1 : index
    %c0_488 = arith.constant 0 : index
    %c0_489 = arith.constant 0 : index
    %742 = vector.load %arg10[%c1_487, %c0_488, %c0_489] : memref<2x64x32xf32, #tpu.memory_space<vmem>>, vector<1x64x32xf32>
    %743 = vector.shape_cast %742 : vector<1x64x32xf32> to vector<64x32xf32>
    %cst_490 = arith.constant dense<0.000000e+00> : vector<8x32xf32>
    %744 = tpu.matmul %741, %743, %cst_490 {dimension_numbers = #tpu.dot_dimension_numbers<[1], [0], [0], [1], [0, 0, 1, 1], [], []>} : vector<8x64xf32>, vector<64x32xf32>, vector<8x32xf32> -> vector<8x32xf32>
    %745 = vector.broadcast %404 : vector<1x32xf32> to vector<8x32xf32>
    %746 = arith.addf %744, %745 : vector<8x32xf32>
    %747 = arith.addf %732, %746 : vector<8x32xf32>
    %cst_491 = arith.constant dense<0.000000e+00> : vector<8xf32>
    %748 = vector.multi_reduction <add>, %747, %cst_491 [1] : vector<8x32xf32> to vector<8xf32>
    %749 = vector.shape_cast %748 : vector<8xf32> to vector<8x1xf32>
    %cst_492 = arith.constant 3.200000e+01 : f32
    %750 = vector.broadcast %cst_492 : f32 to vector<8x1xf32>
    %751 = arith.divf %749, %750 : vector<8x1xf32>
    %752 = vector.broadcast %751 : vector<8x1xf32> to vector<8x32xf32>
    %753 = arith.subf %747, %752 : vector<8x32xf32>
    %754 = arith.mulf %753, %753 : vector<8x32xf32>
    %cst_493 = arith.constant dense<0.000000e+00> : vector<8xf32>
    %755 = vector.multi_reduction <add>, %754, %cst_493 [1] : vector<8x32xf32> to vector<8xf32>
    %756 = vector.shape_cast %755 : vector<8xf32> to vector<8x1xf32>
    %cst_494 = arith.constant 3.200000e+01 : f32
    %757 = vector.broadcast %cst_494 : f32 to vector<8x1xf32>
    %758 = arith.divf %756, %757 : vector<8x1xf32>
    %cst_495 = arith.constant 9.99999974E-6 : f32
    %759 = vector.broadcast %cst_495 : f32 to vector<8x1xf32>
    %760 = arith.addf %758, %759 : vector<8x1xf32>
    %761 = math.rsqrt %760 : vector<8x1xf32>
    %762 = vector.broadcast %761 : vector<8x1xf32> to vector<8x32xf32>
    %763 = arith.mulf %753, %762 : vector<8x32xf32>
    %764 = vector.broadcast %400 : vector<1x32xf32> to vector<8x32xf32>
    %765 = arith.mulf %763, %764 : vector<8x32xf32>
    %766 = vector.broadcast %402 : vector<1x32xf32> to vector<8x32xf32>
    %767 = arith.addf %765, %766 : vector<8x32xf32>
    %c0_496 = arith.constant 0 : index
    %c0_497 = arith.constant 0 : index
    %c0_498 = arith.constant 0 : index
    %768 = vector.load %arg11[%c0_496, %c0_497, %c0_498] : memref<1x8x32xf32, #tpu.memory_space<vmem>>, vector<1x8x32xf32>
    %769 = vector.shape_cast %768 : vector<1x8x32xf32> to vector<8x32xf32>
    %770 = vector.shape_cast %767 : vector<8x32xf32> to vector<1x8x32xf32>
    tpu.vector_store %arg11[%c0_496, %c0_497, %c0_498], %770 {strides = array<i32>} : memref<1x8x32xf32, #tpu.memory_space<vmem>>, vector<1x8x32xf32>,
    return
  }
  func.func @transform_0(%arg0: i32) -> (i32, i32, i32) {
    %c0_i32 = arith.constant 0 : i32
    %c0_i32_0 = arith.constant 0 : i32
    %c0_i32_1 = arith.constant 0 : i32
    return %arg0, %c0_i32, %c0_i32_0 : i32, i32, i32
  }
  func.func @transform_1(%arg0: i32) -> (i32, i32, i32) {
    %c0_i32 = arith.constant 0 : i32
    %c0_i32_0 = arith.constant 0 : i32
    %c0_i32_1 = arith.constant 0 : i32
    return %arg0, %c0_i32, %c0_i32_0 : i32, i32, i32
  }
  func.func @transform_2(%arg0: i32) -> (i32, i32, i32) {
    %c0_i32 = arith.constant 0 : i32
    %c0_i32_0 = arith.constant 0 : i32
    %c0_i32_1 = arith.constant 0 : i32
    return %arg0, %c0_i32, %c0_i32_0 : i32, i32, i32
  }
  func.func @transform_3(%arg0: i32) -> (i32, i32, i32) {
    %c0_i32 = arith.constant 0 : i32
    %c0_i32_0 = arith.constant 0 : i32
    %c0_i32_1 = arith.constant 0 : i32
    %c0_i32_2 = arith.constant 0 : i32
    return %c0_i32, %c0_i32_0, %c0_i32_1 : i32, i32, i32
  }
  func.func @transform_4(%arg0: i32) -> (i32, i32, i32) {
    %c0_i32 = arith.constant 0 : i32
    %c0_i32_0 = arith.constant 0 : i32
    %c0_i32_1 = arith.constant 0 : i32
    %c0_i32_2 = arith.constant 0 : i32
    return %c0_i32, %c0_i32_0, %c0_i32_1 : i32, i32, i32
  }
  func.func @transform_5(%arg0: i32) -> (i32, i32, i32) {
    %c0_i32 = arith.constant 0 : i32
    %c0_i32_0 = arith.constant 0 : i32
    %c0_i32_1 = arith.constant 0 : i32
    %c0_i32_2 = arith.constant 0 : i32
    return %c0_i32, %c0_i32_0, %c0_i32_1 : i32, i32, i32
  }
  func.func @transform_6(%arg0: i32) -> (i32, i32, i32) {
    %c0_i32 = arith.constant 0 : i32
    %c0_i32_0 = arith.constant 0 : i32
    %c0_i32_1 = arith.constant 0 : i32
    %c0_i32_2 = arith.constant 0 : i32
    return %c0_i32, %c0_i32_0, %c0_i32_1 : i32, i32, i32
  }
  func.func @transform_7(%arg0: i32) -> (i32, i32, i32) {
    %c0_i32 = arith.constant 0 : i32
    %c0_i32_0 = arith.constant 0 : i32
    %c0_i32_1 = arith.constant 0 : i32
    %c0_i32_2 = arith.constant 0 : i32
    return %c0_i32, %c0_i32_0, %c0_i32_1 : i32, i32, i32
  }
  func.func @transform_8(%arg0: i32) -> (i32, i32, i32) {
    %c0_i32 = arith.constant 0 : i32
    %c0_i32_0 = arith.constant 0 : i32
    %c0_i32_1 = arith.constant 0 : i32
    %c0_i32_2 = arith.constant 0 : i32
    return %c0_i32, %c0_i32_0, %c0_i32_1 : i32, i32, i32
  }
  func.func @transform_9(%arg0: i32) -> (i32, i32, i32) {
    %c0_i32 = arith.constant 0 : i32
    %c0_i32_0 = arith.constant 0 : i32
    %c0_i32_1 = arith.constant 0 : i32
    %c0_i32_2 = arith.constant 0 : i32
    return %c0_i32, %c0_i32_0, %c0_i32_1 : i32, i32, i32
  }
  func.func @transform_10(%arg0: i32) -> (i32, i32, i32) {
    %c0_i32 = arith.constant 0 : i32
    %c0_i32_0 = arith.constant 0 : i32
    %c0_i32_1 = arith.constant 0 : i32
    return %arg0, %c0_i32, %c0_i32_0 : i32, i32, i32
  }
}

</mosaic_0001>

<llo_original>
// kernel: multiattn_forward.1
$region0: #{multiattn_forward.1}
  #allocation0 [shape = 'u32[]', space=smem, size = 0x4, offset = 0x4, fixed_abs, tag = 'smem constant byte address 0x4 - core index']
  #allocation1 [shape = 'u32[144,128]{1,0:T(1,128)}', space=vmem, size = 0x12000, scoped, tag = 'internal scratch']
  %s0 = inlined_call_operand.vmem [shape: f32[2,8,32], index: 0, kind: input, shape index: {}]
  %s1 = inlined_call_operand.vmem [shape: f32[2,12,32], index: 1, kind: input, shape index: {}]
  %s2 = inlined_call_operand.vmem [shape: f32[2,10,32], index: 2, kind: input, shape index: {}]
  %s3 = inlined_call_operand.vmem [shape: f32[48,32,8], index: 3, kind: input, shape index: {}]
  %s4 = inlined_call_operand.vmem [shape: f32[48,1,8], index: 4, kind: input, shape index: {}]
  %s5 = inlined_call_operand.vmem [shape: f32[4,32,32], index: 5, kind: input, shape index: {}]
  %s6 = inlined_call_operand.vmem [shape: f32[18,1,32], index: 6, kind: input, shape index: {}]
  %s7 = inlined_call_operand.vmem [shape: f32[2,32,64], index: 7, kind: input, shape index: {}]
  %s8 = inlined_call_operand.vmem [shape: f32[2,1,64], index: 8, kind: input, shape index: {}]
  %s9 = inlined_call_operand.vmem [shape: f32[2,64,32], index: 9, kind: input, shape index: {}]
  %s10 = inlined_call_operand.vmem [shape: f32[2,8,32], index: 10, kind: output, shape index: {}]
  %s11 = sld [smem:[#allocation0]]
  $region73: #{multiattn_forward.1} parent=0
    _
  %s13 = ssub.s32 1, %s11
  %s14 = scalar_select 0, %s13, %s11
  loop: start=0, step=1, limit=4
  $region2: #{multiattn_forward.1} parent=0 // loop_pre_header
    _
  $region3: #{multiattn_forward.1} parent=0 // loop_header
    %s16 = sphi 0, %s20
    %p17 = scmp.ge.s32.totalorder %s16, 4
    %s26 = sphi 0, %s28
    %s29 = sphi 0, %s26
    %s30 = sphi 0, %s29
    %s46 = sphi 0, %s30
    %s52 = sphi 0, %s54
    %s55 = sphi 0, %s52
    %s56 = sphi 0, %s55
    %s72 = sphi 0, %s56
    %s78 = sphi 0, %s80
    %s81 = sphi 0, %s78
    %s82 = sphi 0, %s81
    %s98 = sphi 0, %s82
    %s102 = sphi 0, %s102
    %s104 = sphi 0, %s102
    %s105 = sphi 0, %s104
    %s119 = sphi 0, %s105
    %s123 = sphi 0, %s123
    %s125 = sphi 0, %s123
    %s126 = sphi 0, %s125
    %s140 = sphi 0, %s126
    %s144 = sphi 0, %s144
    %s146 = sphi 0, %s144
    %s147 = sphi 0, %s146
    %s161 = sphi 0, %s147
    %s165 = sphi 0, %s165
    %s167 = sphi 0, %s165
    %s168 = sphi 0, %s167
    %s182 = sphi 0, %s168
    %s186 = sphi 0, %s186
    %s188 = sphi 0, %s186
    %s189 = sphi 0, %s188
    %s203 = sphi 0, %s189
    %s207 = sphi 0, %s207
    %s209 = sphi 0, %s207
    %s210 = sphi 0, %s209
    %s224 = sphi 0, %s210
    %s228 = sphi 0, %s228
    %s230 = sphi 0, %s228
    %s231 = sphi 0, %s230
    %s245 = sphi 0, %s231
    %s251 = sphi 0, %s253
    %s254 = sphi 0, %s251
    %s255 = sphi 0, %s254
    %s271 = sphi 0, %s255
  $region4: #{multiattn_forward.1} parent=0 // loop_header_branch
    %19 = sbr.rel (%p17) target = $region8
  $region5: #{multiattn_forward.1} parent=0 // loop_body
    %s21 = ssub.s32 %s16, 1
    %s22 = ssub.s32 %s16, 2
    %s23 = sadd.s32 %s16, 1
    %s24 = ssub.s32 %s16, %s23
    %p25 = scmp.eq.s32.totalorder %s24, 0
    %s27 = sadd.s32 %s26, 1
    %s28 = scalar_select %p25, %s26, %s27
    %p31 = pneg %p25
    %p32 = scmp.eq.s32.totalorder %s16, 1
    %p33 = por %p31, %p32
    %p34 = scmp.ne.s32.totalorder %s26, %s29
    %p35 = scmp.eq.s32.totalorder %s16, 0
    %p36 = por %p34, %p35
    %p37 = scmp.ne.s32.totalorder %s26, %s29
    %p38 = scmp.eq.s32.totalorder %s21, 1
    %p39 = por %p37, %p38
    %p40 = scmp.ne.s32.totalorder %s29, %s30
    %p41 = scmp.eq.s32.totalorder %s21, 0
    %p42 = por %p40, %p41
    %p43 = scmp.ne.s32.totalorder %s29, %s30
    %p44 = scmp.eq.s32.totalorder %s22, 1
    %p45 = por %p43, %p44
    %p47 = scmp.ne.s32.totalorder %s30, %s46
    %p48 = scmp.eq.s32.totalorder %s22, 0
    %p49 = por %p47, %p48
    %s50 = ssub.s32 %s16, %s23
    %p51 = scmp.eq.s32.totalorder %s50, 0
    %s53 = sadd.s32 %s52, 1
    %s54 = scalar_select %p51, %s52, %s53
    %p57 = pneg %p51
    %p58 = scmp.eq.s32.totalorder %s16, 1
    %p59 = por %p57, %p58
    %p60 = scmp.ne.s32.totalorder %s52, %s55
    %p61 = scmp.eq.s32.totalorder %s16, 0
    %p62 = por %p60, %p61
    %p63 = scmp.ne.s32.totalorder %s52, %s55
    %p64 = scmp.eq.s32.totalorder %s21, 1
    %p65 = por %p63, %p64
    %p66 = scmp.ne.s32.totalorder %s55, %s56
    %p67 = scmp.eq.s32.totalorder %s21, 0
    %p68 = por %p66, %p67
    %p69 = scmp.ne.s32.totalorder %s55, %s56
    %p70 = scmp.eq.s32.totalorder %s22, 1
    %p71 = por %p69, %p70
    %p73 = scmp.ne.s32.totalorder %s56, %s72
    %p74 = scmp.eq.s32.totalorder %s22, 0
    %p75 = por %p73, %p74
    %s76 = ssub.s32 %s16, %s23
    %p77 = scmp.eq.s32.totalorder %s76, 0
    %s79 = sadd.s32 %s78, 1
    %s80 = scalar_select %p77, %s78, %s79
    %p83 = pneg %p77
    %p84 = scmp.eq.s32.totalorder %s16, 1
    %p85 = por %p83, %p84
    %p86 = scmp.ne.s32.totalorder %s78, %s81
    %p87 = scmp.eq.s32.totalorder %s16, 0
    %p88 = por %p86, %p87
    %p89 = scmp.ne.s32.totalorder %s78, %s81
    %p90 = scmp.eq.s32.totalorder %s21, 1
    %p91 = por %p89, %p90
    %p92 = scmp.ne.s32.totalorder %s81, %s82
    %p93 = scmp.eq.s32.totalorder %s21, 0
    %p94 = por %p92, %p93
    %p95 = scmp.ne.s32.totalorder %s81, %s82
    %p96 = scmp.eq.s32.totalorder %s22, 1
    %p97 = por %p95, %p96
    %p99 = scmp.ne.s32.totalorder %s82, %s98
    %p100 = scmp.eq.s32.totalorder %s22, 0
    %p101 = por %p99, %p100
    %s103 = sadd.s32 %s102, 1
    %p106 = scmp.eq.s32.totalorder %s16, 1
    %p107 = scmp.ne.s32.totalorder %s102, %s104
    %p108 = scmp.eq.s32.totalorder %s16, 0
    %p109 = por %p107, %p108
    %p110 = scmp.ne.s32.totalorder %s102, %s104
    %p111 = scmp.eq.s32.totalorder %s21, 1
    %p112 = por %p110, %p111
    %p113 = scmp.ne.s32.totalorder %s104, %s105
    %p114 = scmp.eq.s32.totalorder %s21, 0
    %p115 = por %p113, %p114
    %p116 = scmp.ne.s32.totalorder %s104, %s105
    %p117 = scmp.eq.s32.totalorder %s22, 1
    %p118 = por %p116, %p117
    %p120 = scmp.ne.s32.totalorder %s105, %s119
    %p121 = scmp.eq.s32.totalorder %s22, 0
    %p122 = por %p120, %p121
    %s124 = sadd.s32 %s123, 1
    %p127 = scmp.eq.s32.totalorder %s16, 1
    %p128 = scmp.ne.s32.totalorder %s123, %s125
    %p129 = scmp.eq.s32.totalorder %s16, 0
    %p130 = por %p128, %p129
    %p131 = scmp.ne.s32.totalorder %s123, %s125
    %p132 = scmp.eq.s32.totalorder %s21, 1
    %p133 = por %p131, %p132
    %p134 = scmp.ne.s32.totalorder %s125, %s126
    %p135 = scmp.eq.s32.totalorder %s21, 0
    %p136 = por %p134, %p135
    %p137 = scmp.ne.s32.totalorder %s125, %s126
    %p138 = scmp.eq.s32.totalorder %s22, 1
    %p139 = por %p137, %p138
    %p141 = scmp.ne.s32.totalorder %s126, %s140
    %p142 = scmp.eq.s32.totalorder %s22, 0
    %p143 = por %p141, %p142
    %s145 = sadd.s32 %s144, 1
    %p148 = scmp.eq.s32.totalorder %s16, 1
    %p149 = scmp.ne.s32.totalorder %s144, %s146
    %p150 = scmp.eq.s32.totalorder %s16, 0
    %p151 = por %p149, %p150
    %p152 = scmp.ne.s32.totalorder %s144, %s146
    %p153 = scmp.eq.s32.totalorder %s21, 1
    %p154 = por %p152, %p153
    %p155 = scmp.ne.s32.totalorder %s146, %s147
    %p156 = scmp.eq.s32.totalorder %s21, 0
    %p157 = por %p155, %p156
    %p158 = scmp.ne.s32.totalorder %s146, %s147
    %p159 = scmp.eq.s32.totalorder %s22, 1
    %p160 = por %p158, %p159
    %p162 = scmp.ne.s32.totalorder %s147, %s161
    %p163 = scmp.eq.s32.totalorder %s22, 0
    %p164 = por %p162, %p163
    %s166 = sadd.s32 %s165, 1
    %p169 = scmp.eq.s32.totalorder %s16, 1
    %p170 = scmp.ne.s32.totalorder %s165, %s167
    %p171 = scmp.eq.s32.totalorder %s16, 0
    %p172 = por %p170, %p171
    %p173 = scmp.ne.s32.totalorder %s165, %s167
    %p174 = scmp.eq.s32.totalorder %s21, 1
    %p175 = por %p173, %p174
    %p176 = scmp.ne.s32.totalorder %s167, %s168
    %p177 = scmp.eq.s32.totalorder %s21, 0
    %p178 = por %p176, %p177
    %p179 = scmp.ne.s32.totalorder %s167, %s168
    %p180 = scmp.eq.s32.totalorder %s22, 1
    %p181 = por %p179, %p180
    %p183 = scmp.ne.s32.totalorder %s168, %s182
    %p184 = scmp.eq.s32.totalorder %s22, 0
    %p185 = por %p183, %p184
    %s187 = sadd.s32 %s186, 1
    %p190 = scmp.eq.s32.totalorder %s16, 1
    %p191 = scmp.ne.s32.totalorder %s186, %s188
    %p192 = scmp.eq.s32.totalorder %s16, 0
    %p193 = por %p191, %p192
    %p194 = scmp.ne.s32.totalorder %s186, %s188
    %p195 = scmp.eq.s32.totalorder %s21, 1
    %p196 = por %p194, %p195
    %p197 = scmp.ne.s32.totalorder %s188, %s189
    %p198 = scmp.eq.s32.totalorder %s21, 0
    %p199 = por %p197, %p198
    %p200 = scmp.ne.s32.totalorder %s188, %s189
    %p201 = scmp.eq.s32.totalorder %s22, 1
    %p202 = por %p200, %p201
    %p204 = scmp.ne.s32.totalorder %s189, %s203
    %p205 = scmp.eq.s32.totalorder %s22, 0
    %p206 = por %p204, %p205
    %s208 = sadd.s32 %s207, 1
    %p211 = scmp.eq.s32.totalorder %s16, 1
    %p212 = scmp.ne.s32.totalorder %s207, %s209
    %p213 = scmp.eq.s32.totalorder %s16, 0
    %p214 = por %p212, %p213
    %p215 = scmp.ne.s32.totalorder %s207, %s209
    %p216 = scmp.eq.s32.totalorder %s21, 1
    %p217 = por %p215, %p216
    %p218 = scmp.ne.s32.totalorder %s209, %s210
    %p219 = scmp.eq.s32.totalorder %s21, 0
    %p220 = por %p218, %p219
    %p221 = scmp.ne.s32.totalorder %s209, %s210
    %p222 = scmp.eq.s32.totalorder %s22, 1
    %p223 = por %p221, %p222
    %p225 = scmp.ne.s32.totalorder %s210, %s224
    %p226 = scmp.eq.s32.totalorder %s22, 0
    %p227 = por %p225, %p226
    %s229 = sadd.s32 %s228, 1
    %p232 = scmp.eq.s32.totalorder %s16, 1
    %p233 = scmp.ne.s32.totalorder %s228, %s230
    %p234 = scmp.eq.s32.totalorder %s16, 0
    %p235 = por %p233, %p234
    %p236 = scmp.ne.s32.totalorder %s228, %s230
    %p237 = scmp.eq.s32.totalorder %s21, 1
    %p238 = por %p236, %p237
    %p239 = scmp.ne.s32.totalorder %s230, %s231
    %p240 = scmp.eq.s32.totalorder %s21, 0
    %p241 = por %p239, %p240
    %p242 = scmp.ne.s32.totalorder %s230, %s231
    %p243 = scmp.eq.s32.totalorder %s22, 1
    %p244 = por %p242, %p243
    %p246 = scmp.ne.s32.totalorder %s231, %s245
    %p247 = scmp.eq.s32.totalorder %s22, 0
    %p248 = por %p246, %p247
    %s249 = ssub.s32 %s16, %s23
    %p250 = scmp.eq.s32.totalorder %s249, 0
    %s252 = sadd.s32 %s251, 1
    %s253 = scalar_select %p250, %s251, %s252
    %p256 = pneg %p250
    %p257 = scmp.eq.s32.totalorder %s16, 1
    %p258 = por %p256, %p257
    %p259 = scmp.ne.s32.totalorder %s251, %s254
    %p260 = scmp.eq.s32.totalorder %s16, 0
    %p261 = por %p259, %p260
    %p262 = scmp.ne.s32.totalorder %s251, %s254
    %p263 = scmp.eq.s32.totalorder %s21, 1
    %p264 = por %p262, %p263
    %p265 = scmp.ne.s32.totalorder %s254, %s255
    %p266 = scmp.eq.s32.totalorder %s21, 0
    %p267 = por %p265, %p266
    %p268 = scmp.ne.s32.totalorder %s254, %s255
    %p269 = scmp.eq.s32.totalorder %s22, 1
    %p270 = por %p268, %p269
    %p272 = scmp.ne.s32.totalorder %s255, %s271
    %p273 = scmp.eq.s32.totalorder %s22, 0
    %p274 = por %p272, %p273
    %p275 = scmp.le.s32.totalorder 1, %s16
    %p276 = scmp.lt.s32.totalorder %s16, 3
    %p277 = pnand %p275, %p276
    %p278 = pneg %p277
    // Predicated region
    $region9: #{multiattn_forward.1} parent=5 // pred_check
      _
    $region10: #{multiattn_forward.1} parent=5 // pred_check_branch
      %280 = sbr.rel (%p277) target = $region12
    $region11: #{multiattn_forward.1} parent=5 // pred_region
      %s281 = ssub.s32 %s16, 1
      // Predicated region
      $region13: #{multiattn_forward.1} parent=11 // pred_check
        %p282 = pneg %p115
      $region14: #{multiattn_forward.1} parent=11 // pred_check_branch
        %284 = sbr.rel (%p282) target = $region16
      $region15: #{multiattn_forward.1} parent=11 // pred_region
        _
      $region16: #{multiattn_forward.1} parent=11 // pred_fallthru
        _
      // Predicated region
      $region17: #{multiattn_forward.1} parent=11 // pred_check
        %p285 = pneg %p136
      $region18: #{multiattn_forward.1} parent=11 // pred_check_branch
        %287 = sbr.rel (%p285) target = $region20
      $region19: #{multiattn_forward.1} parent=11 // pred_region
        _
      $region20: #{multiattn_forward.1} parent=11 // pred_fallthru
        _
      // Predicated region
      $region21: #{multiattn_forward.1} parent=11 // pred_check
        %p288 = pneg %p157
      $region22: #{multiattn_forward.1} parent=11 // pred_check_branch
        %290 = sbr.rel (%p288) target = $region24
      $region23: #{multiattn_forward.1} parent=11 // pred_region
        _
      $region24: #{multiattn_forward.1} parent=11 // pred_fallthru
        _
      // Predicated region
      $region25: #{multiattn_forward.1} parent=11 // pred_check
        %p291 = pneg %p178
      $region26: #{multiattn_forward.1} parent=11 // pred_check_branch
        %293 = sbr.rel (%p291) target = $region28
      $region27: #{multiattn_forward.1} parent=11 // pred_region
        _
      $region28: #{multiattn_forward.1} parent=11 // pred_fallthru
        _
      // Predicated region
      $region29: #{multiattn_forward.1} parent=11 // pred_check
        %p294 = pneg %p199
      $region30: #{multiattn_forward.1} parent=11 // pred_check_branch
        %296 = sbr.rel (%p294) target = $region32
      $region31: #{multiattn_forward.1} parent=11 // pred_region
        _
      $region32: #{multiattn_forward.1} parent=11 // pred_fallthru
        _
      // Predicated region
      $region33: #{multiattn_forward.1} parent=11 // pred_check
        %p297 = pneg %p220
      $region34: #{multiattn_forward.1} parent=11 // pred_check_branch
        %299 = sbr.rel (%p297) target = $region36
      $region35: #{multiattn_forward.1} parent=11 // pred_region
        _
      $region36: #{multiattn_forward.1} parent=11 // pred_fallthru
        _
      // Predicated region
      $region37: #{multiattn_forward.1} parent=11 // pred_check
        %p300 = pneg %p241
      $region38: #{multiattn_forward.1} parent=11 // pred_check_branch
        %302 = sbr.rel (%p300) target = $region40
      $region39: #{multiattn_forward.1} parent=11 // pred_region
        _
      $region40: #{multiattn_forward.1} parent=11 // pred_fallthru
        _
    $region12: #{multiattn_forward.1} parent=5 // pred_fallthru
      _
    %p303 = scmp.lt.s32.totalorder %s16, 2
    // Predicated region
    $region41: #{multiattn_forward.1} parent=5 // pred_check
      %p304 = pneg %p303
    $region42: #{multiattn_forward.1} parent=5 // pred_check_branch
      %306 = sbr.rel (%p304) target = $region44
    $region43: #{multiattn_forward.1} parent=5 // pred_region
      // Predicated region
      $region45: #{multiattn_forward.1} parent=43 // pred_check
        %p307 = pneg %p36
      $region46: #{multiattn_forward.1} parent=43 // pred_check_branch
        %309 = sbr.rel (%p307) target = $region48
      $region47: #{multiattn_forward.1} parent=43 // pred_region
        %p310 = scmp.lt.s32.totalorder %s16, 1
        %s311 = scalar_select %p310, %s16, 1
        %s312 = smul.addr %s311, 8
        %s313 = scalar_lea.vmem %s0, %s312
      $region48: #{multiattn_forward.1} parent=43 // pred_fallthru
        _
      // Predicated region
      $region49: #{multiattn_forward.1} parent=43 // pred_check
        %p314 = pneg %p62
      $region50: #{multiattn_forward.1} parent=43 // pred_check_branch
        %316 = sbr.rel (%p314) target = $region52
      $region51: #{multiattn_forward.1} parent=43 // pred_region
        %p317 = scmp.lt.s32.totalorder %s16, 1
        %s318 = scalar_select %p317, %s16, 1
        %s319 = smul.addr %s318, 2
        %s320 = smul.addr %s319, 8
        %s321 = scalar_lea.vmem %s1, %s320
      $region52: #{multiattn_forward.1} parent=43 // pred_fallthru
        _
      // Predicated region
      $region53: #{multiattn_forward.1} parent=43 // pred_check
        %p322 = pneg %p88
      $region54: #{multiattn_forward.1} parent=43 // pred_check_branch
        %324 = sbr.rel (%p322) target = $region56
      $region55: #{multiattn_forward.1} parent=43 // pred_region
        %p325 = scmp.lt.s32.totalorder %s16, 1
        %s326 = scalar_select %p325, %s16, 1
        %s327 = smul.addr %s326, 2
        %s328 = smul.addr %s327, 8
        %s329 = scalar_lea.vmem %s2, %s328
      $region56: #{multiattn_forward.1} parent=43 // pred_fallthru
        _
    $region44: #{multiattn_forward.1} parent=5 // pred_fallthru
      _
    %p330 = scmp.le.s32.totalorder 1, %s16
    %p331 = scmp.lt.s32.totalorder %s16, 3
    %p332 = pnand %p330, %p331
    %p333 = pneg %p332
    // Predicated region
    $region57: #{multiattn_forward.1} parent=5 // pred_check
      _
    $region58: #{multiattn_forward.1} parent=5 // pred_check_branch
      %335 = sbr.rel (%p332) target = $region60
    $region59: #{multiattn_forward.1} parent=5 // pred_region
      %s336 = ssub.s32 %s16, 1
      %p337 = scmp.lt.s32.totalorder %s21, 1
      %s338 = scalar_select %p337, %s21, 1
      %s339 = smul.addr %s338, 8
      %s340 = scalar_lea.vmem %s0, %s339
      %p341 = pneg %p42
      %p342 = pneg %p39
      %p343 = scmp.lt.s32.totalorder %s21, 1
      %s344 = scalar_select %p343, %s21, 1
      %s345 = smul.addr %s344, 2
      %s346 = smul.addr %s345, 8
      %s347 = scalar_lea.vmem %s1, %s346
      %p348 = pneg %p68
      %p349 = pneg %p65
      %p350 = scmp.lt.s32.totalorder %s21, 1
      %s351 = scalar_select %p350, %s21, 1
      %s352 = smul.addr %s351, 2
      %s353 = smul.addr %s352, 8
      %s354 = scalar_lea.vmem %s2, %s353
      %p355 = pneg %p94
      %p356 = pneg %p91
      %p357 = pneg %p115
      %p358 = pneg %p112
      %p359 = pneg %p136
      %p360 = pneg %p133
      %p361 = pneg %p157
      %p362 = pneg %p154
      %p363 = pneg %p178
      %p364 = pneg %p175
      %p365 = pneg %p199
      %p366 = pneg %p196
      %p367 = pneg %p220
      %p368 = pneg %p217
      %p369 = pneg %p241
      %p370 = pneg %p238
      %p371 = pneg %p267
      %p372 = pneg %p264
      %p373 = scmp.lt.s32.totalorder %s21, 1
      %s374 = scalar_select %p373, %s21, 1
      %s375 = smul.addr %s374, 8
      %s376 = scalar_lea.vmem %s10, %s375
      %p377 = scmp.lt.s32.totalorder %s21, 1
      %s378 = scalar_select %p377, %s21, 1
      %s379 = smul.addr %s378, 8
      %s380 = scalar_lea.vmem %s0, %s379
      %p381 = scmp.lt.s32.totalorder %s21, 1
      %s382 = scalar_select %p381, %s21, 1
      %s383 = smul.addr %s382, 2
      %s384 = smul.addr %s383, 8
      %s385 = scalar_lea.vmem %s1, %s384
      %p386 = scmp.lt.s32.totalorder %s21, 1
      %s387 = scalar_select %p386, %s21, 1
      %s388 = smul.addr %s387, 2
      %s389 = smul.addr %s388, 8
      %s390 = scalar_lea.vmem %s2, %s389
      %p391 = scmp.lt.s32.totalorder %s21, 1
      %s392 = scalar_select %p391, %s21, 1
      %s393 = smul.addr %s392, 8
      %s394 = scalar_lea.vmem %s10, %s393
      %v395 = vld [vmem:[%s380] sm:$0xff]
      %v396 = vld [vmem:[%s385] sm:$0xff]
      %v397 = vld [vmem:[%s385 + $0x8] sm:$0xf]
      %v398 = vld [vmem:[%s390] sm:$0xff]
      %v399 = vld [vmem:[%s390 + $0x8] sm:$0x3]
      %v400 = vld [vmem:[%s6] sm:$0x1]
      %s401 = scalar_lea.vmem %s6, 1
      %v402 = vld [vmem:[%s401] sm:$0x1]
      %s403 = scalar_lea.vmem %s6, 2
      %v404 = vld [vmem:[%s403] sm:$0x1]
      %s405 = scalar_lea.vmem %s6, 3
      %v406 = vld [vmem:[%s405] sm:$0x1]
      %s407 = scalar_lea.vmem %s6, 4
      %v408 = vld [vmem:[%s407] sm:$0x1]
      %s409 = scalar_lea.vmem %s6, 5
      %v410 = vld [vmem:[%s409] sm:$0x1]
      %s411 = scalar_lea.vmem %s6, 6
      %v412 = vld [vmem:[%s411] sm:$0x1]
      %s413 = scalar_lea.vmem %s6, 7
      %v414 = vld [vmem:[%s413] sm:$0x1]
      %s415 = scalar_lea.vmem %s6, 8
      %v416 = vld [vmem:[%s415] sm:$0x1]
      %v417 = vld [vmem:[%s5] sm:$0xff]
      %v418 = vld [vmem:[%s5 + $0x8] sm:$0xff]
      %v419 = vld [vmem:[%s5 + $0x10] sm:$0xff]
      %v420 = vld [vmem:[%s5 + $0x18] sm:$0xff]
      %v421 = vld [vmem:[%s3] sm:$0xff]
      %v422 = vld [vmem:[%s3 + $0x8] sm:$0xff]
      %v423 = vld [vmem:[%s3 + $0x10] sm:$0xff]
      %v424 = vld [vmem:[%s3 + $0x18] sm:$0xff]
      %s425 = scalar_lea.vmem %s3, 128
      %v426 = vld [vmem:[%s425] sm:$0xff]
      %v427 = vld [vmem:[%s425 + $0x8] sm:$0xff]
      %v428 = vld [vmem:[%s425 + $0x10] sm:$0xff]
      %v429 = vld [vmem:[%s425 + $0x18] sm:$0xff]
      %s430 = scalar_lea.vmem %s3, 256
      %v431 = vld [vmem:[%s430] sm:$0xff]
      %v432 = vld [vmem:[%s430 + $0x8] sm:$0xff]
      %v433 = vld [vmem:[%s430 + $0x10] sm:$0xff]
      %v434 = vld [vmem:[%s430 + $0x18] sm:$0xff]
      %v435 = vld [vmem:[%s4] sm:$0x1]
      %s436 = scalar_lea.vmem %s4, 4
      %v437 = vld [vmem:[%s436] sm:$0x1]
      %s438 = scalar_lea.vmem %s4, 8
      %v439 = vld [vmem:[%s438] sm:$0x1]
      %v441 = vlaneseq
      %v442 = vshrl.u32 %v441, 7
      %v443 = vsub.s32 0, %v442
      %v444 = vrot.slane %v435, %v443
      %vm446 = vcmask 261120
      %v448 = vsel %vm446, %v395, 0
      %450 = vmatprep.subr.mxu0 0.0
      %451 = vmatpush1.msra.mxu0 0.0
      %452 = vmatprep.subr.mxu0 0.0
      %453 = vmatpush1.msra.mxu0 0.0
      %454 = vmatprep.subr.mxu0 0.0
      %455 = vmatpush1.msra.mxu0 0.0
      %456 = vmatprep.subr.mxu0 0.0
      %457 = vmatpush1.msra.mxu0 0.0
      %458 = vmatprep.subr.mxu0 0.0
      %459 = vmatpush1.msra.mxu0 0.0
      %460 = vmatprep.subr.mxu0 0.0
      %461 = vmatpush1.msra.mxu0 0.0
      %462 = vmatprep.subr.mxu0 0.0
      %463 = vmatpush1.msra.mxu0 0.0
      %464 = vmatprep.subr.mxu0 0.0
      %465 = vmatpush1.msra.mxu0 0.0
      %466 = vmatprep.subr.mxu0 0.0
      %467 = vmatpush1.msra.mxu0 0.0
      %468 = vmatprep.subr.mxu0 0.0
      %469 = vmatpush1.msra.mxu0 0.0
      %470 = vmatprep.subr.mxu0 0.0
      %471 = vmatpush1.msra.mxu0 0.0
      %472 = vmatprep.subr.mxu0 0.0
      %473 = vmatpush1.msra.mxu0 0.0
      %474 = vmatprep.subr.mxu0 0.0
      %475 = vmatpush1.msra.mxu0 %v424
      %476 = vmatprep.subr.mxu0 0.0
      %477 = vmatpush1.msra.mxu0 %v423
      %478 = vmatprep.subr.mxu0 0.0
      %479 = vmatpush1.msra.mxu0 %v422
      %480 = vmatprep.subr.mxu0 0.0
      %481 = vmatpush1.msra.mxu0 %v421
      %482 = vmatprep.subr.mxu0 0.0
      %483 = vmatpush2.msra.mxu0 0.0
      %484 = vmatprep.subr.mxu0 0.0
      %485 = vmatpush2.msra.mxu0 0.0
      %486 = vmatprep.subr.mxu0 0.0
      %487 = vmatpush2.msra.mxu0 0.0
      %488 = vmatprep.subr.mxu0 0.0
      %489 = vmatpush2.msra.mxu0 0.0
      %490 = vmatprep.subr.mxu0 0.0
      %491 = vmatpush2.msra.mxu0 0.0
      %492 = vmatprep.subr.mxu0 0.0
      %493 = vmatpush2.msra.mxu0 0.0
      %494 = vmatprep.subr.mxu0 0.0
      %495 = vmatpush2.msra.mxu0 0.0
      %496 = vmatprep.subr.mxu0 0.0
      %497 = vmatpush2.msra.mxu0 0.0
      %498 = vmatprep.subr.mxu0 0.0
      %499 = vmatpush2.msra.mxu0 0.0
      %500 = vmatprep.subr.mxu0 0.0
      %501 = vmatpush2.msra.mxu0 0.0
      %502 = vmatprep.subr.mxu0 0.0
      %503 = vmatpush2.msra.mxu0 0.0
      %504 = vmatprep.subr.mxu0 0.0
      %505 = vmatpush2.msra.mxu0 0.0
      %506 = vmatprep.subr.mxu0 0.0
      %507 = vmatpush2.msra.mxu0 0.0
      %508 = vmatprep.subr.mxu0 0.0
      %509 = vmatpush2.msra.mxu0 0.0
      %510 = vmatprep.subr.mxu0 0.0
      %511 = vmatpush2.msra.mxu0 0.0
      %512 = vmatprep.subr.mxu0 0.0
      %513 = vmatpush2.msra.mxu0 0.0
      %514 = vmatprep.mubr.f32.mxu0 0.0
      %515 = vmatmul.mubr.f32.gmra.mxu0 %v448
      %v516 = vpop.f32.mrf.mxu0
      %v517 = vadd.f32 %v444, %v516
      %v518 = vpop.f32.mrf.mxu0
      %519 = vdwg.mxu0
      %v521 = vlaneseq
      %v522 = vshrl.u32 %v521, 7
      %v523 = vsub.s32 0, %v522
      %v524 = vrot.slane %v437, %v523
      %v527 = vsel %vm446, %v396, 0
      %v530 = vsel %vm446, %v397, 0
      %532 = vmatprep.subr.mxu0 0.0
      %533 = vmatpush1.msra.mxu0 0.0
      %534 = vmatprep.subr.mxu0 0.0
      %535 = vmatpush1.msra.mxu0 0.0
      %536 = vmatprep.subr.mxu0 0.0
      %537 = vmatpush1.msra.mxu0 0.0
      %538 = vmatprep.subr.mxu0 0.0
      %539 = vmatpush1.msra.mxu0 0.0
      %540 = vmatprep.subr.mxu0 0.0
      %541 = vmatpush1.msra.mxu0 0.0
      %542 = vmatprep.subr.mxu0 0.0
      %543 = vmatpush1.msra.mxu0 0.0
      %544 = vmatprep.subr.mxu0 0.0
      %545 = vmatpush1.msra.mxu0 0.0
      %546 = vmatprep.subr.mxu0 0.0
      %547 = vmatpush1.msra.mxu0 0.0
      %548 = vmatprep.subr.mxu0 0.0
      %549 = vmatpush1.msra.mxu0 0.0
      %550 = vmatprep.subr.mxu0 0.0
      %551 = vmatpush1.msra.mxu0 0.0
      %552 = vmatprep.subr.mxu0 0.0
      %553 = vmatpush1.msra.mxu0 0.0
      %554 = vmatprep.subr.mxu0 0.0
      %555 = vmatpush1.msra.mxu0 0.0
      %556 = vmatprep.subr.mxu0 0.0
      %557 = vmatpush1.msra.mxu0 %v429
      %558 = vmatprep.subr.mxu0 0.0
      %559 = vmatpush1.msra.mxu0 %v428
      %560 = vmatprep.subr.mxu0 0.0
      %561 = vmatpush1.msra.mxu0 %v427
      %562 = vmatprep.subr.mxu0 0.0
      %563 = vmatpush1.msra.mxu0 %v426
      %564 = vmatprep.subr.mxu0 0.0
      %565 = vmatpush2.msra.mxu0 0.0
      %566 = vmatprep.subr.mxu0 0.0
      %567 = vmatpush2.msra.mxu0 0.0
      %568 = vmatprep.subr.mxu0 0.0
      %569 = vmatpush2.msra.mxu0 0.0
      %570 = vmatprep.subr.mxu0 0.0
      %571 = vmatpush2.msra.mxu0 0.0
      %572 = vmatprep.subr.mxu0 0.0
      %573 = vmatpush2.msra.mxu0 0.0
      %574 = vmatprep.subr.mxu0 0.0
      %575 = vmatpush2.msra.mxu0 0.0
      %576 = vmatprep.subr.mxu0 0.0
      %577 = vmatpush2.msra.mxu0 0.0
      %578 = vmatprep.subr.mxu0 0.0
      %579 = vmatpush2.msra.mxu0 0.0
      %580 = vmatprep.subr.mxu0 0.0
      %581 = vmatpush2.msra.mxu0 0.0
      %582 = vmatprep.subr.mxu0 0.0
      %583 = vmatpush2.msra.mxu0 0.0
      %584 = vmatprep.subr.mxu0 0.0
      %585 = vmatpush2.msra.mxu0 0.0
      %586 = vmatprep.subr.mxu0 0.0
      %587 = vmatpush2.msra.mxu0 0.0
      %588 = vmatprep.subr.mxu0 0.0
      %589 = vmatpush2.msra.mxu0 0.0
      %590 = vmatprep.subr.mxu0 0.0
      %591 = vmatpush2.msra.mxu0 0.0
      %592 = vmatprep.subr.mxu0 0.0
      %593 = vmatpush2.msra.mxu0 0.0
      %594 = vmatprep.subr.mxu0 0.0
      %595 = vmatpush2.msra.mxu0 0.0
      %596 = vmatprep.mubr.f32.mxu0 0.0
      %597 = vmatmul.mubr.f32.gmra.mxu0 %v527
      %v598 = vpop.f32.mrf.mxu0
      %v599 = vadd.f32 %v524, %v598
      %v600 = vpop.f32.mrf.mxu0
      %601 = vmatprep.mubr.f32.mxu0 0.0
      %602 = vmatmul.mubr.f32.gmra.mxu0 %v530
      %v603 = vpop.f32.mrf.mxu0
      %v604 = vadd.f32 %v524, %v603
      %v605 = vpop.f32.mrf.mxu0
      %606 = vdwg.mxu0
      %v608 = vlaneseq
      %v609 = vshrl.u32 %v608, 7
      %v610 = vsub.s32 0, %v609
      %v611 = vrot.slane %v439, %v610
      %613 = vmatprep.subr.mxu0 0.0
      %614 = vmatpush1.msra.mxu0 0.0
      %615 = vmatprep.subr.mxu0 0.0
      %616 = vmatpush1.msra.mxu0 0.0
      %617 = vmatprep.subr.mxu0 0.0
      %618 = vmatpush1.msra.mxu0 0.0
      %619 = vmatprep.subr.mxu0 0.0
      %620 = vmatpush1.msra.mxu0 0.0
      %621 = vmatprep.subr.mxu0 0.0
      %622 = vmatpush1.msra.mxu0 0.0
      %623 = vmatprep.subr.mxu0 0.0
      %624 = vmatpush1.msra.mxu0 0.0
      %625 = vmatprep.subr.mxu0 0.0
      %626 = vmatpush1.msra.mxu0 0.0
      %627 = vmatprep.subr.mxu0 0.0
      %628 = vmatpush1.msra.mxu0 0.0
      %629 = vmatprep.subr.mxu0 0.0
      %630 = vmatpush1.msra.mxu0 0.0
      %631 = vmatprep.subr.mxu0 0.0
      %632 = vmatpush1.msra.mxu0 0.0
      %633 = vmatprep.subr.mxu0 0.0
      %634 = vmatpush1.msra.mxu0 0.0
      %635 = vmatprep.subr.mxu0 0.0
      %636 = vmatpush1.msra.mxu0 0.0
      %637 = vmatprep.subr.mxu0 0.0
      %638 = vmatpush1.msra.mxu0 %v434
      %639 = vmatprep.subr.mxu0 0.0
      %640 = vmatpush1.msra.mxu0 %v433
      %641 = vmatprep.subr.mxu0 0.0
      %642 = vmatpush1.msra.mxu0 %v432
      %643 = vmatprep.subr.mxu0 0.0
      %644 = vmatpush1.msra.mxu0 %v431
      %645 = vmatprep.subr.mxu0 0.0
      %646 = vmatpush2.msra.mxu0 0.0
      %647 = vmatprep.subr.mxu0 0.0
      %648 = vmatpush2.msra.mxu0 0.0
      %649 = vmatprep.subr.mxu0 0.0
      %650 = vmatpush2.msra.mxu0 0.0
      %651 = vmatprep.subr.mxu0 0.0
      %652 = vmatpush2.msra.mxu0 0.0
      %653 = vmatprep.subr.mxu0 0.0
      %654 = vmatpush2.msra.mxu0 0.0
      %655 = vmatprep.subr.mxu0 0.0
      %656 = vmatpush2.msra.mxu0 0.0
      %657 = vmatprep.subr.mxu0 0.0
      %658 = vmatpush2.msra.mxu0 0.0
      %659 = vmatprep.subr.mxu0 0.0
      %660 = vmatpush2.msra.mxu0 0.0
      %661 = vmatprep.subr.mxu0 0.0
      %662 = vmatpush2.msra.mxu0 0.0
      %663 = vmatprep.subr.mxu0 0.0
      %664 = vmatpush2.msra.mxu0 0.0
      %665 = vmatprep.subr.mxu0 0.0
      %666 = vmatpush2.msra.mxu0 0.0
      %667 = vmatprep.subr.mxu0 0.0
      %668 = vmatpush2.msra.mxu0 0.0
      %669 = vmatprep.subr.mxu0 0.0
      %670 = vmatpush2.msra.mxu0 0.0
      %671 = vmatprep.subr.mxu0 0.0
      %672 = vmatpush2.msra.mxu0 0.0
      %673 = vmatprep.subr.mxu0 0.0
      %674 = vmatpush2.msra.mxu0 0.0
      %675 = vmatprep.subr.mxu0 0.0
      %676 = vmatpush2.msra.mxu0 0.0
      %677 = vmatprep.mubr.f32.mxu0 0.0
      %678 = vmatmul.mubr.f32.gmra.mxu0 %v527
      %v679 = vpop.f32.mrf.mxu0
      %v680 = vadd.f32 %v611, %v679
      %v681 = vpop.f32.mrf.mxu0
      %682 = vmatprep.mubr.f32.mxu0 0.0
      %683 = vmatmul.mubr.f32.gmra.mxu0 %v530
      %v684 = vpop.f32.mrf.mxu0
      %v685 = vadd.f32 %v611, %v684
      %v686 = vpop.f32.mrf.mxu0
      %687 = vdwg.mxu0
      %vm688 = vcmask 64512
      %v690 = vsel %vm688, %v517, 0
      %v693 = vsel %vm688, %v599, 0
      %v696 = vsel %vm688, %v604, 0
      %698 = vmatprep.subr.mxu0 0.0
      %699 = vmatpush1.xpose.msra.mxu0 0.0
      %700 = vmatprep.subr.mxu0 0.0
      %701 = vmatpush1.xpose.msra.mxu0 0.0
      %702 = vmatprep.subr.mxu0 0.0
      %703 = vmatpush1.xpose.msra.mxu0 0.0
      %704 = vmatprep.subr.mxu0 0.0
      %705 = vmatpush1.xpose.msra.mxu0 0.0
      %706 = vmatprep.subr.mxu0 0.0
      %707 = vmatpush1.xpose.msra.mxu0 0.0
      %708 = vmatprep.subr.mxu0 0.0
      %709 = vmatpush1.xpose.msra.mxu0 0.0
      %710 = vmatprep.subr.mxu0 0.0
      %711 = vmatpush1.xpose.msra.mxu0 0.0
      %712 = vmatprep.subr.mxu0 0.0
      %713 = vmatpush1.xpose.msra.mxu0 0.0
      %714 = vmatprep.subr.mxu0 0.0
      %715 = vmatpush1.xpose.msra.mxu0 0.0
      %716 = vmatprep.subr.mxu0 0.0
      %717 = vmatpush1.xpose.msra.mxu0 0.0
      %718 = vmatprep.subr.mxu0 0.0
      %719 = vmatpush1.xpose.msra.mxu0 0.0
      %720 = vmatprep.subr.mxu0 0.0
      %721 = vmatpush1.xpose.msra.mxu0 0.0
      %722 = vmatprep.subr.mxu0 0.0
      %723 = vmatpush1.xpose.msra.mxu0 0.0
      %724 = vmatprep.subr.mxu0 0.0
      %725 = vmatpush1.xpose.msra.mxu0 0.0
      %726 = vmatprep.subr.mxu0 0.0
      %727 = vmatpush1.xpose.msra.mxu0 %v696
      %728 = vmatprep.subr.mxu0 0.0
      %729 = vmatpush1.xpose.msra.mxu0 %v693
      %730 = vmatprep.subr.mxu0 0.0
      %731 = vmatpush2.xpose.msra.mxu0 0.0
      %732 = vmatprep.subr.mxu0 0.0
      %733 = vmatpush2.xpose.msra.mxu0 0.0
      %734 = vmatprep.subr.mxu0 0.0
      %735 = vmatpush2.xpose.msra.mxu0 0.0
      %736 = vmatprep.subr.mxu0 0.0
      %737 = vmatpush2.xpose.msra.mxu0 0.0
      %738 = vmatprep.subr.mxu0 0.0
      %739 = vmatpush2.xpose.msra.mxu0 0.0
      %740 = vmatprep.subr.mxu0 0.0
      %741 = vmatpush2.xpose.msra.mxu0 0.0
      %742 = vmatprep.subr.mxu0 0.0
      %743 = vmatpush2.xpose.msra.mxu0 0.0
      %744 = vmatprep.subr.mxu0 0.0
      %745 = vmatpush2.xpose.msra.mxu0 0.0
      %746 = vmatprep.subr.mxu0 0.0
      %747 = vmatpush2.xpose.msra.mxu0 0.0
      %748 = vmatprep.subr.mxu0 0.0
      %749 = vmatpush2.xpose.msra.mxu0 0.0
      %750 = vmatprep.subr.mxu0 0.0
      %751 = vmatpush2.xpose.msra.mxu0 0.0
      %752 = vmatprep.subr.mxu0 0.0
      %753 = vmatpush2.xpose.msra.mxu0 0.0
      %754 = vmatprep.subr.mxu0 0.0
      %755 = vmatpush2.xpose.msra.mxu0 0.0
      %756 = vmatprep.subr.mxu0 0.0
      %757 = vmatpush2.xpose.msra.mxu0 0.0
      %758 = vmatprep.subr.mxu0 0.0
      %759 = vmatpush2.xpose.msra.mxu0 0.0
      %760 = vmatprep.subr.mxu0 0.0
      %761 = vmatpush2.xpose.msra.mxu0 0.0
      %762 = vmatprep.mubr.f32.mxu0 0.0
      %763 = vmatmul.mubr.f32.gmra.mxu0 %v690
      %v764 = vpop.f32.mrf.mxu0
      %v765 = vadd.f32 0.0, %v764
      %v766 = vpop.f32.mrf.mxu0
      %767 = vdwg.mxu0
      %vm768 = vcmask 97280
      %v769 = vsel %vm768, %v765, -inf
      %770 = vmax.xlane.f32.xlu0 %v769
      %v771 = vpop.xlane.xlu0 %770
      %v772 = vsub.f32 %v765, %v771
      %v773 = vmul.f32 %v772, 1.442695
      %v774 = vpow.pop %v773
      %v775 = vsel %vm768, %v774, 0.0
      %776 = vadd.xlane.f32.xlu0 %v775
      %v777 = vpop.xlane.xlu0 %776
      %v778 = vrcp.pop %v777
      %v779 = vmul.f32 %v774, %v778
      %v781 = vsel %vm768, %v779, 0
      %vm783 = vcmask 1043456
      %v785 = vsel %vm783, %v685, 0
      %787 = vmatprep.subr.mxu0 0.0
      %788 = vmatpush1.msra.mxu0 0.0
      %789 = vmatprep.subr.mxu0 0.0
      %790 = vmatpush1.msra.mxu0 0.0
      %791 = vmatprep.subr.mxu0 0.0
      %792 = vmatpush1.msra.mxu0 0.0
      %793 = vmatprep.subr.mxu0 0.0
      %794 = vmatpush1.msra.mxu0 0.0
      %795 = vmatprep.subr.mxu0 0.0
      %796 = vmatpush1.msra.mxu0 0.0
      %797 = vmatprep.subr.mxu0 0.0
      %798 = vmatpush1.msra.mxu0 0.0
      %799 = vmatprep.subr.mxu0 0.0
      %800 = vmatpush1.msra.mxu0 0.0
      %801 = vmatprep.subr.mxu0 0.0
      %802 = vmatpush1.msra.mxu0 0.0
      %803 = vmatprep.subr.mxu0 0.0
      %804 = vmatpush1.msra.mxu0 0.0
      %805 = vmatprep.subr.mxu0 0.0
      %806 = vmatpush1.msra.mxu0 0.0
      %807 = vmatprep.subr.mxu0 0.0
      %808 = vmatpush1.msra.mxu0 0.0
      %809 = vmatprep.subr.mxu0 0.0
      %810 = vmatpush1.msra.mxu0 0.0
      %811 = vmatprep.subr.mxu0 0.0
      %812 = vmatpush1.msra.mxu0 0.0
      %813 = vmatprep.subr.mxu0 0.0
      %814 = vmatpush1.msra.mxu0 0.0
      %815 = vmatprep.subr.mxu0 0.0
      %816 = vmatpush1.msra.mxu0 %v785
      %817 = vmatprep.subr.mxu0 0.0
      %818 = vmatpush1.msra.mxu0 %v680
      %819 = vmatprep.subr.mxu0 0.0
      %820 = vmatpush2.msra.mxu0 0.0
      %821 = vmatprep.subr.mxu0 0.0
      %822 = vmatpush2.msra.mxu0 0.0
      %823 = vmatprep.subr.mxu0 0.0
      %824 = vmatpush2.msra.mxu0 0.0
      %825 = vmatprep.subr.mxu0 0.0
      %826 = vmatpush2.msra.mxu0 0.0
      %827 = vmatprep.subr.mxu0 0.0
      %828 = vmatpush2.msra.mxu0 0.0
      %829 = vmatprep.subr.mxu0 0.0
      %830 = vmatpush2.msra.mxu0 0.0
      %831 = vmatprep.subr.mxu0 0.0
      %832 = vmatpush2.msra.mxu0 0.0
      %833 = vmatprep.subr.mxu0 0.0
      %834 = vmatpush2.msra.mxu0 0.0
      %835 = vmatprep.subr.mxu0 0.0
      %836 = vmatpush2.msra.mxu0 0.0
      %837 = vmatprep.subr.mxu0 0.0
      %838 = vmatpush2.msra.mxu0 0.0
      %839 = vmatprep.subr.mxu0 0.0
      %840 = vmatpush2.msra.mxu0 0.0
      %841 = vmatprep.subr.mxu0 0.0
      %842 = vmatpush2.msra.mxu0 0.0
      %843 = vmatprep.subr.mxu0 0.0
      %844 = vmatpush2.msra.mxu0 0.0
      %845 = vmatprep.subr.mxu0 0.0
      %846 = vmatpush2.msra.mxu0 0.0
      %847 = vmatprep.subr.mxu0 0.0
      %848 = vmatpush2.msra.mxu0 0.0
      %849 = vmatprep.subr.mxu0 0.0
      %850 = vmatpush2.msra.mxu0 0.0
      %851 = vmatprep.mubr.f32.mxu0 0.0
      %852 = vmatmul.mubr.f32.gmra.mxu0 %v781
      %v853 = vpop.f32.mrf.mxu0
      %v854 = vadd.f32 0.0, %v853
      %v855 = vpop.f32.mrf.mxu0
      %856 = vdwg.mxu0
      %s857 = scalar_lea.vmem %s3, 32
      %v858 = vld [vmem:[%s857] sm:$0xff]
      %v859 = vld [vmem:[%s857 + $0x8] sm:$0xff]
      %v860 = vld [vmem:[%s857 + $0x10] sm:$0xff]
      %v861 = vld [vmem:[%s857 + $0x18] sm:$0xff]
      %s862 = scalar_lea.vmem %s3, 160
      %v863 = vld [vmem:[%s862] sm:$0xff]
      %v864 = vld [vmem:[%s862 + $0x8] sm:$0xff]
      %v865 = vld [vmem:[%s862 + $0x10] sm:$0xff]
      %v866 = vld [vmem:[%s862 + $0x18] sm:$0xff]
      %s867 = scalar_lea.vmem %s3, 288
      %v868 = vld [vmem:[%s867] sm:$0xff]
      %v869 = vld [vmem:[%s867 + $0x8] sm:$0xff]
      %v870 = vld [vmem:[%s867 + $0x10] sm:$0xff]
      %v871 = vld [vmem:[%s867 + $0x18] sm:$0xff]
      %s872 = scalar_lea.vmem %s4, 1
      %v873 = vld [vmem:[%s872] sm:$0x1]
      %s874 = scalar_lea.vmem %s4, 5
      %v875 = vld [vmem:[%s874] sm:$0x1]
      %s876 = scalar_lea.vmem %s4, 9
      %v877 = vld [vmem:[%s876] sm:$0x1]
      %v879 = vlaneseq
      %v880 = vshrl.u32 %v879, 7
      %v881 = vsub.s32 0, %v880
      %v882 = vrot.slane %v873, %v881
      %884 = vmatprep.subr.mxu0 0.0
      %885 = vmatpush1.msra.mxu0 0.0
      %886 = vmatprep.subr.mxu0 0.0
      %887 = vmatpush1.msra.mxu0 0.0
      %888 = vmatprep.subr.mxu0 0.0
      %889 = vmatpush1.msra.mxu0 0.0
      %890 = vmatprep.subr.mxu0 0.0
      %891 = vmatpush1.msra.mxu0 0.0
      %892 = vmatprep.subr.mxu0 0.0
      %893 = vmatpush1.msra.mxu0 0.0
      %894 = vmatprep.subr.mxu0 0.0
      %895 = vmatpush1.msra.mxu0 0.0
      %896 = vmatprep.subr.mxu0 0.0
      %897 = vmatpush1.msra.mxu0 0.0
      %898 = vmatprep.subr.mxu0 0.0
      %899 = vmatpush1.msra.mxu0 0.0
      %900 = vmatprep.subr.mxu0 0.0
      %901 = vmatpush1.msra.mxu0 0.0
      %902 = vmatprep.subr.mxu0 0.0
      %903 = vmatpush1.msra.mxu0 0.0
      %904 = vmatprep.subr.mxu0 0.0
      %905 = vmatpush1.msra.mxu0 0.0
      %906 = vmatprep.subr.mxu0 0.0
      %907 = vmatpush1.msra.mxu0 0.0
      %908 = vmatprep.subr.mxu0 0.0
      %909 = vmatpush1.msra.mxu0 %v861
      %910 = vmatprep.subr.mxu0 0.0
      %911 = vmatpush1.msra.mxu0 %v860
      %912 = vmatprep.subr.mxu0 0.0
      %913 = vmatpush1.msra.mxu0 %v859
      %914 = vmatprep.subr.mxu0 0.0
      %915 = vmatpush1.msra.mxu0 %v858
      %916 = vmatprep.subr.mxu0 0.0
      %917 = vmatpush2.msra.mxu0 0.0
      %918 = vmatprep.subr.mxu0 0.0
      %919 = vmatpush2.msra.mxu0 0.0
      %920 = vmatprep.subr.mxu0 0.0
      %921 = vmatpush2.msra.mxu0 0.0
      %922 = vmatprep.subr.mxu0 0.0
      %923 = vmatpush2.msra.mxu0 0.0
      %924 = vmatprep.subr.mxu0 0.0
      %925 = vmatpush2.msra.mxu0 0.0
      %926 = vmatprep.subr.mxu0 0.0
      %927 = vmatpush2.msra.mxu0 0.0
      %928 = vmatprep.subr.mxu0 0.0
      %929 = vmatpush2.msra.mxu0 0.0
      %930 = vmatprep.subr.mxu0 0.0
      %931 = vmatpush2.msra.mxu0 0.0
      %932 = vmatprep.subr.mxu0 0.0
      %933 = vmatpush2.msra.mxu0 0.0
      %934 = vmatprep.subr.mxu0 0.0
      %935 = vmatpush2.msra.mxu0 0.0
      %936 = vmatprep.subr.mxu0 0.0
      %937 = vmatpush2.msra.mxu0 0.0
      %938 = vmatprep.subr.mxu0 0.0
      %939 = vmatpush2.msra.mxu0 0.0
      %940 = vmatprep.subr.mxu0 0.0
      %941 = vmatpush2.msra.mxu0 0.0
      %942 = vmatprep.subr.mxu0 0.0
      %943 = vmatpush2.msra.mxu0 0.0
      %944 = vmatprep.subr.mxu0 0.0
      %945 = vmatpush2.msra.mxu0 0.0
      %946 = vmatprep.subr.mxu0 0.0
      %947 = vmatpush2.msra.mxu0 0.0
      %948 = vmatprep.mubr.f32.mxu0 0.0
      %949 = vmatmul.mubr.f32.gmra.mxu0 %v448
      %v950 = vpop.f32.mrf.mxu0
      %v951 = vadd.f32 %v882, %v950
      %v952 = vpop.f32.mrf.mxu0
      %953 = vdwg.mxu0
      %v955 = vlaneseq
      %v956 = vshrl.u32 %v955, 7
      %v957 = vsub.s32 0, %v956
      %v958 = vrot.slane %v875, %v957
      %960 = vmatprep.subr.mxu0 0.0
      %961 = vmatpush1.msra.mxu0 0.0
      %962 = vmatprep.subr.mxu0 0.0
      %963 = vmatpush1.msra.mxu0 0.0
      %964 = vmatprep.subr.mxu0 0.0
      %965 = vmatpush1.msra.mxu0 0.0
      %966 = vmatprep.subr.mxu0 0.0
      %967 = vmatpush1.msra.mxu0 0.0
      %968 = vmatprep.subr.mxu0 0.0
      %969 = vmatpush1.msra.mxu0 0.0
      %970 = vmatprep.subr.mxu0 0.0
      %971 = vmatpush1.msra.mxu0 0.0
      %972 = vmatprep.subr.mxu0 0.0
      %973 = vmatpush1.msra.mxu0 0.0
      %974 = vmatprep.subr.mxu0 0.0
      %975 = vmatpush1.msra.mxu0 0.0
      %976 = vmatprep.subr.mxu0 0.0
      %977 = vmatpush1.msra.mxu0 0.0
      %978 = vmatprep.subr.mxu0 0.0
      %979 = vmatpush1.msra.mxu0 0.0
      %980 = vmatprep.subr.mxu0 0.0
      %981 = vmatpush1.msra.mxu0 0.0
      %982 = vmatprep.subr.mxu0 0.0
      %983 = vmatpush1.msra.mxu0 0.0
      %984 = vmatprep.subr.mxu0 0.0
      %985 = vmatpush1.msra.mxu0 %v866
      %986 = vmatprep.subr.mxu0 0.0
      %987 = vmatpush1.msra.mxu0 %v865
      %988 = vmatprep.subr.mxu0 0.0
      %989 = vmatpush1.msra.mxu0 %v864
      %990 = vmatprep.subr.mxu0 0.0
      %991 = vmatpush1.msra.mxu0 %v863
      %992 = vmatprep.subr.mxu0 0.0
      %993 = vmatpush2.msra.mxu0 0.0
      %994 = vmatprep.subr.mxu0 0.0
      %995 = vmatpush2.msra.mxu0 0.0
      %996 = vmatprep.subr.mxu0 0.0
      %997 = vmatpush2.msra.mxu0 0.0
      %998 = vmatprep.subr.mxu0 0.0
      %999 = vmatpush2.msra.mxu0 0.0
      %1000 = vmatprep.subr.mxu0 0.0
      %1001 = vmatpush2.msra.mxu0 0.0
      %1002 = vmatprep.subr.mxu0 0.0
      %1003 = vmatpush2.msra.mxu0 0.0
      %1004 = vmatprep.subr.mxu0 0.0
      %1005 = vmatpush2.msra.mxu0 0.0
      %1006 = vmatprep.subr.mxu0 0.0
      %1007 = vmatpush2.msra.mxu0 0.0
      %1008 = vmatprep.subr.mxu0 0.0
      %1009 = vmatpush2.msra.mxu0 0.0
      %1010 = vmatprep.subr.mxu0 0.0
      %1011 = vmatpush2.msra.mxu0 0.0
      %1012 = vmatprep.subr.mxu0 0.0
      %1013 = vmatpush2.msra.mxu0 0.0
      %1014 = vmatprep.subr.mxu0 0.0
      %1015 = vmatpush2.msra.mxu0 0.0
      %1016 = vmatprep.subr.mxu0 0.0
      %1017 = vmatpush2.msra.mxu0 0.0
      %1018 = vmatprep.subr.mxu0 0.0
      %1019 = vmatpush2.msra.mxu0 0.0
      %1020 = vmatprep.subr.mxu0 0.0
      %1021 = vmatpush2.msra.mxu0 0.0
      %1022 = vmatprep.subr.mxu0 0.0
      %1023 = vmatpush2.msra.mxu0 0.0
      %1024 = vmatprep.mubr.f32.mxu0 0.0
      %1025 = vmatmul.mubr.f32.gmra.mxu0 %v527
      %v1026 = vpop.f32.mrf.mxu0
      %v1027 = vadd.f32 %v958, %v1026
      %v1028 = vpop.f32.mrf.mxu0
      %1029 = vmatprep.mubr.f32.mxu0 0.0
      %1030 = vmatmul.mubr.f32.gmra.mxu0 %v530
      %v1031 = vpop.f32.mrf.mxu0
      %v1032 = vadd.f32 %v958, %v1031
      %v1033 = vpop.f32.mrf.mxu0
      %1034 = vdwg.mxu0
      %v1036 = vlaneseq
      %v1037 = vshrl.u32 %v1036, 7
      %v1038 = vsub.s32 0, %v1037
      %v1039 = vrot.slane %v877, %v1038
      %1041 = vmatprep.subr.mxu0 0.0
      %1042 = vmatpush1.msra.mxu0 0.0
      %1043 = vmatprep.subr.mxu0 0.0
      %1044 = vmatpush1.msra.mxu0 0.0
      %1045 = vmatprep.subr.mxu0 0.0
      %1046 = vmatpush1.msra.mxu0 0.0
      %1047 = vmatprep.subr.mxu0 0.0
      %1048 = vmatpush1.msra.mxu0 0.0
      %1049 = vmatprep.subr.mxu0 0.0
      %1050 = vmatpush1.msra.mxu0 0.0
      %1051 = vmatprep.subr.mxu0 0.0
      %1052 = vmatpush1.msra.mxu0 0.0
      %1053 = vmatprep.subr.mxu0 0.0
      %1054 = vmatpush1.msra.mxu0 0.0
      %1055 = vmatprep.subr.mxu0 0.0
      %1056 = vmatpush1.msra.mxu0 0.0
      %1057 = vmatprep.subr.mxu0 0.0
      %1058 = vmatpush1.msra.mxu0 0.0
      %1059 = vmatprep.subr.mxu0 0.0
      %1060 = vmatpush1.msra.mxu0 0.0
      %1061 = vmatprep.subr.mxu0 0.0
      %1062 = vmatpush1.msra.mxu0 0.0
      %1063 = vmatprep.subr.mxu0 0.0
      %1064 = vmatpush1.msra.mxu0 0.0
      %1065 = vmatprep.subr.mxu0 0.0
      %1066 = vmatpush1.msra.mxu0 %v871
      %1067 = vmatprep.subr.mxu0 0.0
      %1068 = vmatpush1.msra.mxu0 %v870
      %1069 = vmatprep.subr.mxu0 0.0
      %1070 = vmatpush1.msra.mxu0 %v869
      %1071 = vmatprep.subr.mxu0 0.0
      %1072 = vmatpush1.msra.mxu0 %v868
      %1073 = vmatprep.subr.mxu0 0.0
      %1074 = vmatpush2.msra.mxu0 0.0
      %1075 = vmatprep.subr.mxu0 0.0
      %1076 = vmatpush2.msra.mxu0 0.0
      %1077 = vmatprep.subr.mxu0 0.0
      %1078 = vmatpush2.msra.mxu0 0.0
      %1079 = vmatprep.subr.mxu0 0.0
      %1080 = vmatpush2.msra.mxu0 0.0
      %1081 = vmatprep.subr.mxu0 0.0
      %1082 = vmatpush2.msra.mxu0 0.0
      %1083 = vmatprep.subr.mxu0 0.0
      %1084 = vmatpush2.msra.mxu0 0.0
      %1085 = vmatprep.subr.mxu0 0.0
      %1086 = vmatpush2.msra.mxu0 0.0
      %1087 = vmatprep.subr.mxu0 0.0
      %1088 = vmatpush2.msra.mxu0 0.0
      %1089 = vmatprep.subr.mxu0 0.0
      %1090 = vmatpush2.msra.mxu0 0.0
      %1091 = vmatprep.subr.mxu0 0.0
      %1092 = vmatpush2.msra.mxu0 0.0
      %1093 = vmatprep.subr.mxu0 0.0
      %1094 = vmatpush2.msra.mxu0 0.0
      %1095 = vmatprep.subr.mxu0 0.0
      %1096 = vmatpush2.msra.mxu0 0.0
      %1097 = vmatprep.subr.mxu0 0.0
      %1098 = vmatpush2.msra.mxu0 0.0
      %1099 = vmatprep.subr.mxu0 0.0
      %1100 = vmatpush2.msra.mxu0 0.0
      %1101 = vmatprep.subr.mxu0 0.0
      %1102 = vmatpush2.msra.mxu0 0.0
      %1103 = vmatprep.subr.mxu0 0.0
      %1104 = vmatpush2.msra.mxu0 0.0
      %1105 = vmatprep.mubr.f32.mxu0 0.0
      %1106 = vmatmul.mubr.f32.gmra.mxu0 %v527
      %v1107 = vpop.f32.mrf.mxu0
      %v1108 = vadd.f32 %v1039, %v1107
      %v1109 = vpop.f32.mrf.mxu0
      %1110 = vmatprep.mubr.f32.mxu0 0.0
      %1111 = vmatmul.mubr.f32.gmra.mxu0 %v530
      %v1112 = vpop.f32.mrf.mxu0
      %v1113 = vadd.f32 %v1039, %v1112
      %v1114 = vpop.f32.mrf.mxu0
      %1115 = vdwg.mxu0
      %v1117 = vsel %vm688, %v951, 0
      %v1120 = vsel %vm688, %v1027, 0
      %v1123 = vsel %vm688, %v1032, 0
      %1125 = vmatprep.subr.mxu0 0.0
      %1126 = vmatpush1.xpose.msra.mxu0 0.0
      %1127 = vmatprep.subr.mxu0 0.0
      %1128 = vmatpush1.xpose.msra.mxu0 0.0
      %1129 = vmatprep.subr.mxu0 0.0
      %1130 = vmatpush1.xpose.msra.mxu0 0.0
      %1131 = vmatprep.subr.mxu0 0.0
      %1132 = vmatpush1.xpose.msra.mxu0 0.0
      %1133 = vmatprep.subr.mxu0 0.0
      %1134 = vmatpush1.xpose.msra.mxu0 0.0
      %1135 = vmatprep.subr.mxu0 0.0
      %1136 = vmatpush1.xpose.msra.mxu0 0.0
      %1137 = vmatprep.subr.mxu0 0.0
      %1138 = vmatpush1.xpose.msra.mxu0 0.0
      %1139 = vmatprep.subr.mxu0 0.0
      %1140 = vmatpush1.xpose.msra.mxu0 0.0
      %1141 = vmatprep.subr.mxu0 0.0
      %1142 = vmatpush1.xpose.msra.mxu0 0.0
      %1143 = vmatprep.subr.mxu0 0.0
      %1144 = vmatpush1.xpose.msra.mxu0 0.0
      %1145 = vmatprep.subr.mxu0 0.0
      %1146 = vmatpush1.xpose.msra.mxu0 0.0
      %1147 = vmatprep.subr.mxu0 0.0
      %1148 = vmatpush1.xpose.msra.mxu0 0.0
      %1149 = vmatprep.subr.mxu0 0.0
      %1150 = vmatpush1.xpose.msra.mxu0 0.0
      %1151 = vmatprep.subr.mxu0 0.0
      %1152 = vmatpush1.xpose.msra.mxu0 0.0
      %1153 = vmatprep.subr.mxu0 0.0
      %1154 = vmatpush1.xpose.msra.mxu0 %v1123
      %1155 = vmatprep.subr.mxu0 0.0
      %1156 = vmatpush1.xpose.msra.mxu0 %v1120
      %1157 = vmatprep.subr.mxu0 0.0
      %1158 = vmatpush2.xpose.msra.mxu0 0.0
      %1159 = vmatprep.subr.mxu0 0.0
      %1160 = vmatpush2.xpose.msra.mxu0 0.0
      %1161 = vmatprep.subr.mxu0 0.0
      %1162 = vmatpush2.xpose.msra.mxu0 0.0
      %1163 = vmatprep.subr.mxu0 0.0
      %1164 = vmatpush2.xpose.msra.mxu0 0.0
      %1165 = vmatprep.subr.mxu0 0.0
      %1166 = vmatpush2.xpose.msra.mxu0 0.0
      %1167 = vmatprep.subr.mxu0 0.0
      %1168 = vmatpush2.xpose.msra.mxu0 0.0
      %1169 = vmatprep.subr.mxu0 0.0
      %1170 = vmatpush2.xpose.msra.mxu0 0.0
      %1171 = vmatprep.subr.mxu0 0.0
      %1172 = vmatpush2.xpose.msra.mxu0 0.0
      %1173 = vmatprep.subr.mxu0 0.0
      %1174 = vmatpush2.xpose.msra.mxu0 0.0
      %1175 = vmatprep.subr.mxu0 0.0
      %1176 = vmatpush2.xpose.msra.mxu0 0.0
      %1177 = vmatprep.subr.mxu0 0.0
      %1178 = vmatpush2.xpose.msra.mxu0 0.0
      %1179 = vmatprep.subr.mxu0 0.0
      %1180 = vmatpush2.xpose.msra.mxu0 0.0
      %1181 = vmatprep.subr.mxu0 0.0
      %1182 = vmatpush2.xpose.msra.mxu0 0.0
      %1183 = vmatprep.subr.mxu0 0.0
      %1184 = vmatpush2.xpose.msra.mxu0 0.0
      %1185 = vmatprep.subr.mxu0 0.0
      %1186 = vmatpush2.xpose.msra.mxu0 0.0
      %1187 = vmatprep.subr.mxu0 0.0
      %1188 = vmatpush2.xpose.msra.mxu0 0.0
      %1189 = vmatprep.mubr.f32.mxu0 0.0
      %1190 = vmatmul.mubr.f32.gmra.mxu0 %v1117
      %v1191 = vpop.f32.mrf.mxu0
      %v1192 = vadd.f32 0.0, %v1191
      %v1193 = vpop.f32.mrf.mxu0
      %1194 = vdwg.mxu0
      %v1195 = vsel %vm768, %v1192, -inf
      %1196 = vmax.xlane.f32.xlu0 %v1195
      %v1197 = vpop.xlane.xlu0 %1196
      %v1198 = vsub.f32 %v1192, %v1197
      %v1199 = vmul.f32 %v1198, 1.442695
      %v1200 = vpow.pop %v1199
      %v1201 = vsel %vm768, %v1200, 0.0
      %1202 = vadd.xlane.f32.xlu0 %v1201
      %v1203 = vpop.xlane.xlu0 %1202
      %v1204 = vrcp.pop %v1203
      %v1205 = vmul.f32 %v1200, %v1204
      %v1207 = vsel %vm768, %v1205, 0
      %v1210 = vsel %vm783, %v1113, 0
      %1212 = vmatprep.subr.mxu0 0.0
      %1213 = vmatpush1.msra.mxu0 0.0
      %1214 = vmatprep.subr.mxu0 0.0
      %1215 = vmatpush1.msra.mxu0 0.0
      %1216 = vmatprep.subr.mxu0 0.0
      %1217 = vmatpush1.msra.mxu0 0.0
      %1218 = vmatprep.subr.mxu0 0.0
      %1219 = vmatpush1.msra.mxu0 0.0
      %1220 = vmatprep.subr.mxu0 0.0
      %1221 = vmatpush1.msra.mxu0 0.0
      %1222 = vmatprep.subr.mxu0 0.0
      %1223 = vmatpush1.msra.mxu0 0.0
      %1224 = vmatprep.subr.mxu0 0.0
      %1225 = vmatpush1.msra.mxu0 0.0
      %1226 = vmatprep.subr.mxu0 0.0
      %1227 = vmatpush1.msra.mxu0 0.0
      %1228 = vmatprep.subr.mxu0 0.0
      %1229 = vmatpush1.msra.mxu0 0.0
      %1230 = vmatprep.subr.mxu0 0.0
      %1231 = vmatpush1.msra.mxu0 0.0
      %1232 = vmatprep.subr.mxu0 0.0
      %1233 = vmatpush1.msra.mxu0 0.0
      %1234 = vmatprep.subr.mxu0 0.0
      %1235 = vmatpush1.msra.mxu0 0.0
      %1236 = vmatprep.subr.mxu0 0.0
      %1237 = vmatpush1.msra.mxu0 0.0
      %1238 = vmatprep.subr.mxu0 0.0
      %1239 = vmatpush1.msra.mxu0 0.0
      %1240 = vmatprep.subr.mxu0 0.0
      %1241 = vmatpush1.msra.mxu0 %v1210
      %1242 = vmatprep.subr.mxu0 0.0
      %1243 = vmatpush1.msra.mxu0 %v1108
      %1244 = vmatprep.subr.mxu0 0.0
      %1245 = vmatpush2.msra.mxu0 0.0
      %1246 = vmatprep.subr.mxu0 0.0
      %1247 = vmatpush2.msra.mxu0 0.0
      %1248 = vmatprep.subr.mxu0 0.0
      %1249 = vmatpush2.msra.mxu0 0.0
      %1250 = vmatprep.subr.mxu0 0.0
      %1251 = vmatpush2.msra.mxu0 0.0
      %1252 = vmatprep.subr.mxu0 0.0
      %1253 = vmatpush2.msra.mxu0 0.0
      %1254 = vmatprep.subr.mxu0 0.0
      %1255 = vmatpush2.msra.mxu0 0.0
      %1256 = vmatprep.subr.mxu0 0.0
      %1257 = vmatpush2.msra.mxu0 0.0
      %1258 = vmatprep.subr.mxu0 0.0
      %1259 = vmatpush2.msra.mxu0 0.0
      %1260 = vmatprep.subr.mxu0 0.0
      %1261 = vmatpush2.msra.mxu0 0.0
      %1262 = vmatprep.subr.mxu0 0.0
      %1263 = vmatpush2.msra.mxu0 0.0
      %1264 = vmatprep.subr.mxu0 0.0
      %1265 = vmatpush2.msra.mxu0 0.0
      %1266 = vmatprep.subr.mxu0 0.0
      %1267 = vmatpush2.msra.mxu0 0.0
      %1268 = vmatprep.subr.mxu0 0.0
      %1269 = vmatpush2.msra.mxu0 0.0
      %1270 = vmatprep.subr.mxu0 0.0
      %1271 = vmatpush2.msra.mxu0 0.0
      %1272 = vmatprep.subr.mxu0 0.0
      %1273 = vmatpush2.msra.mxu0 0.0
      %1274 = vmatprep.subr.mxu0 0.0
      %1275 = vmatpush2.msra.mxu0 0.0
      %1276 = vmatprep.mubr.f32.mxu0 0.0
      %1277 = vmatmul.mubr.f32.gmra.mxu0 %v1207
      %v1278 = vpop.f32.mrf.mxu0
      %v1279 = vadd.f32 0.0, %v1278
      %v1280 = vpop.f32.mrf.mxu0
      %1281 = vdwg.mxu0
      %v1283 = vsel %vm688, %v1279, 0
      %1285 = vmatprep.subr.mxu0 0.0
      %1286 = vmatpush1.msra.mxu0 0.0
      %1287 = vmatprep.subr.mxu0 0.0
      %1288 = vmatpush1.msra.mxu0 0.0
      %1289 = vmatprep.subr.mxu0 0.0
      %1290 = vmatpush1.msra.mxu0 0.0
      %1291 = vmatprep.subr.mxu0 0.0
      %1292 = vmatpush1.msra.mxu0 0.0
      %1293 = vmatprep.subr.mxu0 0.0
      %1294 = vmatpush1.msra.mxu0 0.0
      %1295 = vmatprep.subr.mxu0 0.0
      %1296 = vmatpush1.msra.mxu0 0.0
      %1297 = vmatprep.subr.mxu0 0.0
      %1298 = vmatpush1.msra.mxu0 0.0
      %1299 = vmatprep.subr.mxu0 0.0
      %1300 = vmatpush1.msra.mxu0 0.0
      %1301 = vmatprep.subr.mxu0 0.0
      %1302 = vmatpush1.msra.mxu0 0.0
      %1303 = vmatprep.subr.mxu0 0.0
      %1304 = vmatpush1.msra.mxu0 0.0
      %1305 = vmatprep.subr.mxu0 0.0
      %1306 = vmatpush1.msra.mxu0 0.0
      %1307 = vmatprep.subr.mxu0 0.0
      %1308 = vmatpush1.msra.mxu0 0.0
      %1309 = vmatprep.subr.mxu0 0.0
      %1310 = vmatpush1.msra.mxu0 0.0
      %1311 = vmatprep.subr.mxu0 0.0
      %1312 = vmatpush1.msra.mxu0 0.0
      %1313 = vmatprep.subr.mxu0 0.0
      %1314 = vmatpush1.msra.mxu0 0.0
      %1315 = vmatprep.subr.mxu0 0.0
      %1316 = vmatpush1.msra.mxu0 %v418
      %1317 = vmatprep.subr.mxu0 0.0
      %1318 = vmatpush2.msra.mxu0 0.0
      %1319 = vmatprep.subr.mxu0 0.0
      %1320 = vmatpush2.msra.mxu0 0.0
      %1321 = vmatprep.subr.mxu0 0.0
      %1322 = vmatpush2.msra.mxu0 0.0
      %1323 = vmatprep.subr.mxu0 0.0
      %1324 = vmatpush2.msra.mxu0 0.0
      %1325 = vmatprep.subr.mxu0 0.0
      %1326 = vmatpush2.msra.mxu0 0.0
      %1327 = vmatprep.subr.mxu0 0.0
      %1328 = vmatpush2.msra.mxu0 0.0
      %1329 = vmatprep.subr.mxu0 0.0
      %1330 = vmatpush2.msra.mxu0 0.0
      %1331 = vmatprep.subr.mxu0 0.0
      %1332 = vmatpush2.msra.mxu0 0.0
      %1333 = vmatprep.subr.mxu0 0.0
      %1334 = vmatpush2.msra.mxu0 0.0
      %1335 = vmatprep.subr.mxu0 0.0
      %1336 = vmatpush2.msra.mxu0 0.0
      %1337 = vmatprep.subr.mxu0 0.0
      %1338 = vmatpush2.msra.mxu0 0.0
      %1339 = vmatprep.subr.mxu0 0.0
      %1340 = vmatpush2.msra.mxu0 0.0
      %1341 = vmatprep.subr.mxu0 0.0
      %1342 = vmatpush2.msra.mxu0 0.0
      %1343 = vmatprep.subr.mxu0 0.0
      %1344 = vmatpush2.msra.mxu0 0.0
      %1345 = vmatprep.subr.mxu0 0.0
      %1346 = vmatpush2.msra.mxu0 0.0
      %1347 = vmatprep.subr.mxu0 0.0
      %1348 = vmatpush2.msra.mxu0 0.0
      %1349 = vmatprep.mubr.f32.mxu0 0.0
      %1350 = vmatmul.mubr.f32.gmra.mxu0 %v1283
      %v1351 = vpop.f32.mrf.mxu0
      %v1352 = vadd.f32 0.0, %v1351
      %v1353 = vpop.f32.mrf.mxu0
      %1354 = vdwg.mxu0
      %v1356 = vsel %vm688, %v854, 0
      %1358 = vmatprep.subr.mxu0 0.0
      %1359 = vmatpush1.msra.mxu0 0.0
      %1360 = vmatprep.subr.mxu0 0.0
      %1361 = vmatpush1.msra.mxu0 0.0
      %1362 = vmatprep.subr.mxu0 0.0
      %1363 = vmatpush1.msra.mxu0 0.0
      %1364 = vmatprep.subr.mxu0 0.0
      %1365 = vmatpush1.msra.mxu0 0.0
      %1366 = vmatprep.subr.mxu0 0.0
      %1367 = vmatpush1.msra.mxu0 0.0
      %1368 = vmatprep.subr.mxu0 0.0
      %1369 = vmatpush1.msra.mxu0 0.0
      %1370 = vmatprep.subr.mxu0 0.0
      %1371 = vmatpush1.msra.mxu0 0.0
      %1372 = vmatprep.subr.mxu0 0.0
      %1373 = vmatpush1.msra.mxu0 0.0
      %1374 = vmatprep.subr.mxu0 0.0
      %1375 = vmatpush1.msra.mxu0 0.0
      %1376 = vmatprep.subr.mxu0 0.0
      %1377 = vmatpush1.msra.mxu0 0.0
      %1378 = vmatprep.subr.mxu0 0.0
      %1379 = vmatpush1.msra.mxu0 0.0
      %1380 = vmatprep.subr.mxu0 0.0
      %1381 = vmatpush1.msra.mxu0 0.0
      %1382 = vmatprep.subr.mxu0 0.0
      %1383 = vmatpush1.msra.mxu0 0.0
      %1384 = vmatprep.subr.mxu0 0.0
      %1385 = vmatpush1.msra.mxu0 0.0
      %1386 = vmatprep.subr.mxu0 0.0
      %1387 = vmatpush1.msra.mxu0 0.0
      %1388 = vmatprep.subr.mxu0 0.0
      %1389 = vmatpush1.msra.mxu0 %v417
      %1390 = vmatprep.subr.mxu0 0.0
      %1391 = vmatpush2.msra.mxu0 0.0
      %1392 = vmatprep.subr.mxu0 0.0
      %1393 = vmatpush2.msra.mxu0 0.0
      %1394 = vmatprep.subr.mxu0 0.0
      %1395 = vmatpush2.msra.mxu0 0.0
      %1396 = vmatprep.subr.mxu0 0.0
      %1397 = vmatpush2.msra.mxu0 0.0
      %1398 = vmatprep.subr.mxu0 0.0
      %1399 = vmatpush2.msra.mxu0 0.0
      %1400 = vmatprep.subr.mxu0 0.0
      %1401 = vmatpush2.msra.mxu0 0.0
      %1402 = vmatprep.subr.mxu0 0.0
      %1403 = vmatpush2.msra.mxu0 0.0
      %1404 = vmatprep.subr.mxu0 0.0
      %1405 = vmatpush2.msra.mxu0 0.0
      %1406 = vmatprep.subr.mxu0 0.0
      %1407 = vmatpush2.msra.mxu0 0.0
      %1408 = vmatprep.subr.mxu0 0.0
      %1409 = vmatpush2.msra.mxu0 0.0
      %1410 = vmatprep.subr.mxu0 0.0
      %1411 = vmatpush2.msra.mxu0 0.0
      %1412 = vmatprep.subr.mxu0 0.0
      %1413 = vmatpush2.msra.mxu0 0.0
      %1414 = vmatprep.subr.mxu0 0.0
      %1415 = vmatpush2.msra.mxu0 0.0
      %1416 = vmatprep.subr.mxu0 0.0
      %1417 = vmatpush2.msra.mxu0 0.0
      %1418 = vmatprep.subr.mxu0 0.0
      %1419 = vmatpush2.msra.mxu0 0.0
      %1420 = vmatprep.subr.mxu0 0.0
      %1421 = vmatpush2.msra.mxu0 0.0
      %1422 = vmatprep.mubr.f32.mxu0 0.0
      %1423 = vmatmul.mubr.f32.gmra.mxu0 %v1356
      %v1424 = vpop.f32.mrf.mxu0
      %v1425 = vadd.f32 %v1352, %v1424
      %v1426 = vpop.f32.mrf.mxu0
      %1427 = vdwg.mxu0
      %s1428 = scalar_lea.vmem %s3, 64
      %v1429 = vld [vmem:[%s1428] sm:$0xff]
      %v1430 = vld [vmem:[%s1428 + $0x8] sm:$0xff]
      %v1431 = vld [vmem:[%s1428 + $0x10] sm:$0xff]
      %v1432 = vld [vmem:[%s1428 + $0x18] sm:$0xff]
      %s1433 = scalar_lea.vmem %s3, 192
      %v1434 = vld [vmem:[%s1433] sm:$0xff]
      %v1435 = vld [vmem:[%s1433 + $0x8] sm:$0xff]
      %v1436 = vld [vmem:[%s1433 + $0x10] sm:$0xff]
      %v1437 = vld [vmem:[%s1433 + $0x18] sm:$0xff]
      %s1438 = scalar_lea.vmem %s3, 320
      %v1439 = vld [vmem:[%s1438] sm:$0xff]
      %v1440 = vld [vmem:[%s1438 + $0x8] sm:$0xff]
      %v1441 = vld [vmem:[%s1438 + $0x10] sm:$0xff]
      %v1442 = vld [vmem:[%s1438 + $0x18] sm:$0xff]
      %s1443 = scalar_lea.vmem %s4, 2
      %v1444 = vld [vmem:[%s1443] sm:$0x1]
      %s1445 = scalar_lea.vmem %s4, 6
      %v1446 = vld [vmem:[%s1445] sm:$0x1]
      %s1447 = scalar_lea.vmem %s4, 10
      %v1448 = vld [vmem:[%s1447] sm:$0x1]
      %v1450 = vlaneseq
      %v1451 = vshrl.u32 %v1450, 7
      %v1452 = vsub.s32 0, %v1451
      %v1453 = vrot.slane %v1444, %v1452
      %1455 = vmatprep.subr.mxu0 0.0
      %1456 = vmatpush1.msra.mxu0 0.0
      %1457 = vmatprep.subr.mxu0 0.0
      %1458 = vmatpush1.msra.mxu0 0.0
      %1459 = vmatprep.subr.mxu0 0.0
      %1460 = vmatpush1.msra.mxu0 0.0
      %1461 = vmatprep.subr.mxu0 0.0
      %1462 = vmatpush1.msra.mxu0 0.0
      %1463 = vmatprep.subr.mxu0 0.0
      %1464 = vmatpush1.msra.mxu0 0.0
      %1465 = vmatprep.subr.mxu0 0.0
      %1466 = vmatpush1.msra.mxu0 0.0
      %1467 = vmatprep.subr.mxu0 0.0
      %1468 = vmatpush1.msra.mxu0 0.0
      %1469 = vmatprep.subr.mxu0 0.0
      %1470 = vmatpush1.msra.mxu0 0.0
      %1471 = vmatprep.subr.mxu0 0.0
      %1472 = vmatpush1.msra.mxu0 0.0
      %1473 = vmatprep.subr.mxu0 0.0
      %1474 = vmatpush1.msra.mxu0 0.0
      %1475 = vmatprep.subr.mxu0 0.0
      %1476 = vmatpush1.msra.mxu0 0.0
      %1477 = vmatprep.subr.mxu0 0.0
      %1478 = vmatpush1.msra.mxu0 0.0
      %1479 = vmatprep.subr.mxu0 0.0
      %1480 = vmatpush1.msra.mxu0 %v1432
      %1481 = vmatprep.subr.mxu0 0.0
      %1482 = vmatpush1.msra.mxu0 %v1431
      %1483 = vmatprep.subr.mxu0 0.0
      %1484 = vmatpush1.msra.mxu0 %v1430
      %1485 = vmatprep.subr.mxu0 0.0
      %1486 = vmatpush1.msra.mxu0 %v1429
      %1487 = vmatprep.subr.mxu0 0.0
      %1488 = vmatpush2.msra.mxu0 0.0
      %1489 = vmatprep.subr.mxu0 0.0
      %1490 = vmatpush2.msra.mxu0 0.0
      %1491 = vmatprep.subr.mxu0 0.0
      %1492 = vmatpush2.msra.mxu0 0.0
      %1493 = vmatprep.subr.mxu0 0.0
      %1494 = vmatpush2.msra.mxu0 0.0
      %1495 = vmatprep.subr.mxu0 0.0
      %1496 = vmatpush2.msra.mxu0 0.0
      %1497 = vmatprep.subr.mxu0 0.0
      %1498 = vmatpush2.msra.mxu0 0.0
      %1499 = vmatprep.subr.mxu0 0.0
      %1500 = vmatpush2.msra.mxu0 0.0
      %1501 = vmatprep.subr.mxu0 0.0
      %1502 = vmatpush2.msra.mxu0 0.0
      %1503 = vmatprep.subr.mxu0 0.0
      %1504 = vmatpush2.msra.mxu0 0.0
      %1505 = vmatprep.subr.mxu0 0.0
      %1506 = vmatpush2.msra.mxu0 0.0
      %1507 = vmatprep.subr.mxu0 0.0
      %1508 = vmatpush2.msra.mxu0 0.0
      %1509 = vmatprep.subr.mxu0 0.0
      %1510 = vmatpush2.msra.mxu0 0.0
      %1511 = vmatprep.subr.mxu0 0.0
      %1512 = vmatpush2.msra.mxu0 0.0
      %1513 = vmatprep.subr.mxu0 0.0
      %1514 = vmatpush2.msra.mxu0 0.0
      %1515 = vmatprep.subr.mxu0 0.0
      %1516 = vmatpush2.msra.mxu0 0.0
      %1517 = vmatprep.subr.mxu0 0.0
      %1518 = vmatpush2.msra.mxu0 0.0
      %1519 = vmatprep.mubr.f32.mxu0 0.0
      %1520 = vmatmul.mubr.f32.gmra.mxu0 %v448
      %v1521 = vpop.f32.mrf.mxu0
      %v1522 = vadd.f32 %v1453, %v1521
      %v1523 = vpop.f32.mrf.mxu0
      %1524 = vdwg.mxu0
      %v1526 = vlaneseq
      %v1527 = vshrl.u32 %v1526, 7
      %v1528 = vsub.s32 0, %v1527
      %v1529 = vrot.slane %v1446, %v1528
      %1531 = vmatprep.subr.mxu0 0.0
      %1532 = vmatpush1.msra.mxu0 0.0
      %1533 = vmatprep.subr.mxu0 0.0
      %1534 = vmatpush1.msra.mxu0 0.0
      %1535 = vmatprep.subr.mxu0 0.0
      %1536 = vmatpush1.msra.mxu0 0.0
      %1537 = vmatprep.subr.mxu0 0.0
      %1538 = vmatpush1.msra.mxu0 0.0
      %1539 = vmatprep.subr.mxu0 0.0
      %1540 = vmatpush1.msra.mxu0 0.0
      %1541 = vmatprep.subr.mxu0 0.0
      %1542 = vmatpush1.msra.mxu0 0.0
      %1543 = vmatprep.subr.mxu0 0.0
      %1544 = vmatpush1.msra.mxu0 0.0
      %1545 = vmatprep.subr.mxu0 0.0
      %1546 = vmatpush1.msra.mxu0 0.0
      %1547 = vmatprep.subr.mxu0 0.0
      %1548 = vmatpush1.msra.mxu0 0.0
      %1549 = vmatprep.subr.mxu0 0.0
      %1550 = vmatpush1.msra.mxu0 0.0
      %1551 = vmatprep.subr.mxu0 0.0
      %1552 = vmatpush1.msra.mxu0 0.0
      %1553 = vmatprep.subr.mxu0 0.0
      %1554 = vmatpush1.msra.mxu0 0.0
      %1555 = vmatprep.subr.mxu0 0.0
      %1556 = vmatpush1.msra.mxu0 %v1437
      %1557 = vmatprep.subr.mxu0 0.0
      %1558 = vmatpush1.msra.mxu0 %v1436
      %1559 = vmatprep.subr.mxu0 0.0
      %1560 = vmatpush1.msra.mxu0 %v1435
      %1561 = vmatprep.subr.mxu0 0.0
      %1562 = vmatpush1.msra.mxu0 %v1434
      %1563 = vmatprep.subr.mxu0 0.0
      %1564 = vmatpush2.msra.mxu0 0.0
      %1565 = vmatprep.subr.mxu0 0.0
      %1566 = vmatpush2.msra.mxu0 0.0
      %1567 = vmatprep.subr.mxu0 0.0
      %1568 = vmatpush2.msra.mxu0 0.0
      %1569 = vmatprep.subr.mxu0 0.0
      %1570 = vmatpush2.msra.mxu0 0.0
      %1571 = vmatprep.subr.mxu0 0.0
      %1572 = vmatpush2.msra.mxu0 0.0
      %1573 = vmatprep.subr.mxu0 0.0
      %1574 = vmatpush2.msra.mxu0 0.0
      %1575 = vmatprep.subr.mxu0 0.0
      %1576 = vmatpush2.msra.mxu0 0.0
      %1577 = vmatprep.subr.mxu0 0.0
      %1578 = vmatpush2.msra.mxu0 0.0
      %1579 = vmatprep.subr.mxu0 0.0
      %1580 = vmatpush2.msra.mxu0 0.0
      %1581 = vmatprep.subr.mxu0 0.0
      %1582 = vmatpush2.msra.mxu0 0.0
      %1583 = vmatprep.subr.mxu0 0.0
      %1584 = vmatpush2.msra.mxu0 0.0
      %1585 = vmatprep.subr.mxu0 0.0
      %1586 = vmatpush2.msra.mxu0 0.0
      %1587 = vmatprep.subr.mxu0 0.0
      %1588 = vmatpush2.msra.mxu0 0.0
      %1589 = vmatprep.subr.mxu0 0.0
      %1590 = vmatpush2.msra.mxu0 0.0
      %1591 = vmatprep.subr.mxu0 0.0
      %1592 = vmatpush2.msra.mxu0 0.0
      %1593 = vmatprep.subr.mxu0 0.0
      %1594 = vmatpush2.msra.mxu0 0.0
      %1595 = vmatprep.mubr.f32.mxu0 0.0
      %1596 = vmatmul.mubr.f32.gmra.mxu0 %v527
      %v1597 = vpop.f32.mrf.mxu0
      %v1598 = vadd.f32 %v1529, %v1597
      %v1599 = vpop.f32.mrf.mxu0
      %1600 = vmatprep.mubr.f32.mxu0 0.0
      %1601 = vmatmul.mubr.f32.gmra.mxu0 %v530
      %v1602 = vpop.f32.mrf.mxu0
      %v1603 = vadd.f32 %v1529, %v1602
      %v1604 = vpop.f32.mrf.mxu0
      %1605 = vdwg.mxu0
      %v1607 = vlaneseq
      %v1608 = vshrl.u32 %v1607, 7
      %v1609 = vsub.s32 0, %v1608
      %v1610 = vrot.slane %v1448, %v1609
      %1612 = vmatprep.subr.mxu0 0.0
      %1613 = vmatpush1.msra.mxu0 0.0
      %1614 = vmatprep.subr.mxu0 0.0
      %1615 = vmatpush1.msra.mxu0 0.0
      %1616 = vmatprep.subr.mxu0 0.0
      %1617 = vmatpush1.msra.mxu0 0.0
      %1618 = vmatprep.subr.mxu0 0.0
      %1619 = vmatpush1.msra.mxu0 0.0
      %1620 = vmatprep.subr.mxu0 0.0
      %1621 = vmatpush1.msra.mxu0 0.0
      %1622 = vmatprep.subr.mxu0 0.0
      %1623 = vmatpush1.msra.mxu0 0.0
      %1624 = vmatprep.subr.mxu0 0.0
      %1625 = vmatpush1.msra.mxu0 0.0
      %1626 = vmatprep.subr.mxu0 0.0
      %1627 = vmatpush1.msra.mxu0 0.0
      %1628 = vmatprep.subr.mxu0 0.0
      %1629 = vmatpush1.msra.mxu0 0.0
      %1630 = vmatprep.subr.mxu0 0.0
      %1631 = vmatpush1.msra.mxu0 0.0
      %1632 = vmatprep.subr.mxu0 0.0
      %1633 = vmatpush1.msra.mxu0 0.0
      %1634 = vmatprep.subr.mxu0 0.0
      %1635 = vmatpush1.msra.mxu0 0.0
      %1636 = vmatprep.subr.mxu0 0.0
      %1637 = vmatpush1.msra.mxu0 %v1442
      %1638 = vmatprep.subr.mxu0 0.0
      %1639 = vmatpush1.msra.mxu0 %v1441
      %1640 = vmatprep.subr.mxu0 0.0
      %1641 = vmatpush1.msra.mxu0 %v1440
      %1642 = vmatprep.subr.mxu0 0.0
      %1643 = vmatpush1.msra.mxu0 %v1439
      %1644 = vmatprep.subr.mxu0 0.0
      %1645 = vmatpush2.msra.mxu0 0.0
      %1646 = vmatprep.subr.mxu0 0.0
      %1647 = vmatpush2.msra.mxu0 0.0
      %1648 = vmatprep.subr.mxu0 0.0
      %1649 = vmatpush2.msra.mxu0 0.0
      %1650 = vmatprep.subr.mxu0 0.0
      %1651 = vmatpush2.msra.mxu0 0.0
      %1652 = vmatprep.subr.mxu0 0.0
      %1653 = vmatpush2.msra.mxu0 0.0
      %1654 = vmatprep.subr.mxu0 0.0
      %1655 = vmatpush2.msra.mxu0 0.0
      %1656 = vmatprep.subr.mxu0 0.0
      %1657 = vmatpush2.msra.mxu0 0.0
      %1658 = vmatprep.subr.mxu0 0.0
      %1659 = vmatpush2.msra.mxu0 0.0
      %1660 = vmatprep.subr.mxu0 0.0
      %1661 = vmatpush2.msra.mxu0 0.0
      %1662 = vmatprep.subr.mxu0 0.0
      %1663 = vmatpush2.msra.mxu0 0.0
      %1664 = vmatprep.subr.mxu0 0.0
      %1665 = vmatpush2.msra.mxu0 0.0
      %1666 = vmatprep.subr.mxu0 0.0
      %1667 = vmatpush2.msra.mxu0 0.0
      %1668 = vmatprep.subr.mxu0 0.0
      %1669 = vmatpush2.msra.mxu0 0.0
      %1670 = vmatprep.subr.mxu0 0.0
      %1671 = vmatpush2.msra.mxu0 0.0
      %1672 = vmatprep.subr.mxu0 0.0
      %1673 = vmatpush2.msra.mxu0 0.0
      %1674 = vmatprep.subr.mxu0 0.0
      %1675 = vmatpush2.msra.mxu0 0.0
      %1676 = vmatprep.mubr.f32.mxu0 0.0
      %1677 = vmatmul.mubr.f32.gmra.mxu0 %v527
      %v1678 = vpop.f32.mrf.mxu0
      %v1679 = vadd.f32 %v1610, %v1678
      %v1680 = vpop.f32.mrf.mxu0
      %1681 = vmatprep.mubr.f32.mxu0 0.0
      %1682 = vmatmul.mubr.f32.gmra.mxu0 %v530
      %v1683 = vpop.f32.mrf.mxu0
      %v1684 = vadd.f32 %v1610, %v1683
      %v1685 = vpop.f32.mrf.mxu0
      %1686 = vdwg.mxu0
      %v1688 = vsel %vm688, %v1522, 0
      %v1691 = vsel %vm688, %v1598, 0
      %v1694 = vsel %vm688, %v1603, 0
      %1696 = vmatprep.subr.mxu0 0.0
      %1697 = vmatpush1.xpose.msra.mxu0 0.0
      %1698 = vmatprep.subr.mxu0 0.0
      %1699 = vmatpush1.xpose.msra.mxu0 0.0
      %1700 = vmatprep.subr.mxu0 0.0
      %1701 = vmatpush1.xpose.msra.mxu0 0.0
      %1702 = vmatprep.subr.mxu0 0.0
      %1703 = vmatpush1.xpose.msra.mxu0 0.0
      %1704 = vmatprep.subr.mxu0 0.0
      %1705 = vmatpush1.xpose.msra.mxu0 0.0
      %1706 = vmatprep.subr.mxu0 0.0
      %1707 = vmatpush1.xpose.msra.mxu0 0.0
      %1708 = vmatprep.subr.mxu0 0.0
      %1709 = vmatpush1.xpose.msra.mxu0 0.0
      %1710 = vmatprep.subr.mxu0 0.0
      %1711 = vmatpush1.xpose.msra.mxu0 0.0
      %1712 = vmatprep.subr.mxu0 0.0
      %1713 = vmatpush1.xpose.msra.mxu0 0.0
      %1714 = vmatprep.subr.mxu0 0.0
      %1715 = vmatpush1.xpose.msra.mxu0 0.0
      %1716 = vmatprep.subr.mxu0 0.0
      %1717 = vmatpush1.xpose.msra.mxu0 0.0
      %1718 = vmatprep.subr.mxu0 0.0
      %1719 = vmatpush1.xpose.msra.mxu0 0.0
      %1720 = vmatprep.subr.mxu0 0.0
      %1721 = vmatpush1.xpose.msra.mxu0 0.0
      %1722 = vmatprep.subr.mxu0 0.0
      %1723 = vmatpush1.xpose.msra.mxu0 0.0
      %1724 = vmatprep.subr.mxu0 0.0
      %1725 = vmatpush1.xpose.msra.mxu0 %v1694
      %1726 = vmatprep.subr.mxu0 0.0
      %1727 = vmatpush1.xpose.msra.mxu0 %v1691
      %1728 = vmatprep.subr.mxu0 0.0
      %1729 = vmatpush2.xpose.msra.mxu0 0.0
      %1730 = vmatprep.subr.mxu0 0.0
      %1731 = vmatpush2.xpose.msra.mxu0 0.0
      %1732 = vmatprep.subr.mxu0 0.0
      %1733 = vmatpush2.xpose.msra.mxu0 0.0
      %1734 = vmatprep.subr.mxu0 0.0
      %1735 = vmatpush2.xpose.msra.mxu0 0.0
      %1736 = vmatprep.subr.mxu0 0.0
      %1737 = vmatpush2.xpose.msra.mxu0 0.0
      %1738 = vmatprep.subr.mxu0 0.0
      %1739 = vmatpush2.xpose.msra.mxu0 0.0
      %1740 = vmatprep.subr.mxu0 0.0
      %1741 = vmatpush2.xpose.msra.mxu0 0.0
      %1742 = vmatprep.subr.mxu0 0.0
      %1743 = vmatpush2.xpose.msra.mxu0 0.0
      %1744 = vmatprep.subr.mxu0 0.0
      %1745 = vmatpush2.xpose.msra.mxu0 0.0
      %1746 = vmatprep.subr.mxu0 0.0
      %1747 = vmatpush2.xpose.msra.mxu0 0.0
      %1748 = vmatprep.subr.mxu0 0.0
      %1749 = vmatpush2.xpose.msra.mxu0 0.0
      %1750 = vmatprep.subr.mxu0 0.0
      %1751 = vmatpush2.xpose.msra.mxu0 0.0
      %1752 = vmatprep.subr.mxu0 0.0
      %1753 = vmatpush2.xpose.msra.mxu0 0.0
      %1754 = vmatprep.subr.mxu0 0.0
      %1755 = vmatpush2.xpose.msra.mxu0 0.0
      %1756 = vmatprep.subr.mxu0 0.0
      %1757 = vmatpush2.xpose.msra.mxu0 0.0
      %1758 = vmatprep.subr.mxu0 0.0
      %1759 = vmatpush2.xpose.msra.mxu0 0.0
      %1760 = vmatprep.mubr.f32.mxu0 0.0
      %1761 = vmatmul.mubr.f32.gmra.mxu0 %v1688
      %v1762 = vpop.f32.mrf.mxu0
      %v1763 = vadd.f32 0.0, %v1762
      %v1764 = vpop.f32.mrf.mxu0
      %1765 = vdwg.mxu0
      %v1766 = vsel %vm768, %v1763, -inf
      %1767 = vmax.xlane.f32.xlu0 %v1766
      %v1768 = vpop.xlane.xlu0 %1767
      %v1769 = vsub.f32 %v1763, %v1768
      %v1770 = vmul.f32 %v1769, 1.442695
      %v1771 = vpow.pop %v1770
      %v1772 = vsel %vm768, %v1771, 0.0
      %1773 = vadd.xlane.f32.xlu0 %v1772
      %v1774 = vpop.xlane.xlu0 %1773
      %v1775 = vrcp.pop %v1774
      %v1776 = vmul.f32 %v1771, %v1775
      %v1778 = vsel %vm768, %v1776, 0
      %v1781 = vsel %vm783, %v1684, 0
      %1783 = vmatprep.subr.mxu0 0.0
      %1784 = vmatpush1.msra.mxu0 0.0
      %1785 = vmatprep.subr.mxu0 0.0
      %1786 = vmatpush1.msra.mxu0 0.0
      %1787 = vmatprep.subr.mxu0 0.0
      %1788 = vmatpush1.msra.mxu0 0.0
      %1789 = vmatprep.subr.mxu0 0.0
      %1790 = vmatpush1.msra.mxu0 0.0
      %1791 = vmatprep.subr.mxu0 0.0
      %1792 = vmatpush1.msra.mxu0 0.0
      %1793 = vmatprep.subr.mxu0 0.0
      %1794 = vmatpush1.msra.mxu0 0.0
      %1795 = vmatprep.subr.mxu0 0.0
      %1796 = vmatpush1.msra.mxu0 0.0
      %1797 = vmatprep.subr.mxu0 0.0
      %1798 = vmatpush1.msra.mxu0 0.0
      %1799 = vmatprep.subr.mxu0 0.0
      %1800 = vmatpush1.msra.mxu0 0.0
      %1801 = vmatprep.subr.mxu0 0.0
      %1802 = vmatpush1.msra.mxu0 0.0
      %1803 = vmatprep.subr.mxu0 0.0
      %1804 = vmatpush1.msra.mxu0 0.0
      %1805 = vmatprep.subr.mxu0 0.0
      %1806 = vmatpush1.msra.mxu0 0.0
      %1807 = vmatprep.subr.mxu0 0.0
      %1808 = vmatpush1.msra.mxu0 0.0
      %1809 = vmatprep.subr.mxu0 0.0
      %1810 = vmatpush1.msra.mxu0 0.0
      %1811 = vmatprep.subr.mxu0 0.0
      %1812 = vmatpush1.msra.mxu0 %v1781
      %1813 = vmatprep.subr.mxu0 0.0
      %1814 = vmatpush1.msra.mxu0 %v1679
      %1815 = vmatprep.subr.mxu0 0.0
      %1816 = vmatpush2.msra.mxu0 0.0
      %1817 = vmatprep.subr.mxu0 0.0
      %1818 = vmatpush2.msra.mxu0 0.0
      %1819 = vmatprep.subr.mxu0 0.0
      %1820 = vmatpush2.msra.mxu0 0.0
      %1821 = vmatprep.subr.mxu0 0.0
      %1822 = vmatpush2.msra.mxu0 0.0
      %1823 = vmatprep.subr.mxu0 0.0
      %1824 = vmatpush2.msra.mxu0 0.0
      %1825 = vmatprep.subr.mxu0 0.0
      %1826 = vmatpush2.msra.mxu0 0.0
      %1827 = vmatprep.subr.mxu0 0.0
      %1828 = vmatpush2.msra.mxu0 0.0
      %1829 = vmatprep.subr.mxu0 0.0
      %1830 = vmatpush2.msra.mxu0 0.0
      %1831 = vmatprep.subr.mxu0 0.0
      %1832 = vmatpush2.msra.mxu0 0.0
      %1833 = vmatprep.subr.mxu0 0.0
      %1834 = vmatpush2.msra.mxu0 0.0
      %1835 = vmatprep.subr.mxu0 0.0
      %1836 = vmatpush2.msra.mxu0 0.0
      %1837 = vmatprep.subr.mxu0 0.0
      %1838 = vmatpush2.msra.mxu0 0.0
      %1839 = vmatprep.subr.mxu0 0.0
      %1840 = vmatpush2.msra.mxu0 0.0
      %1841 = vmatprep.subr.mxu0 0.0
      %1842 = vmatpush2.msra.mxu0 0.0
      %1843 = vmatprep.subr.mxu0 0.0
      %1844 = vmatpush2.msra.mxu0 0.0
      %1845 = vmatprep.subr.mxu0 0.0
      %1846 = vmatpush2.msra.mxu0 0.0
      %1847 = vmatprep.mubr.f32.mxu0 0.0
      %1848 = vmatmul.mubr.f32.gmra.mxu0 %v1778
      %v1849 = vpop.f32.mrf.mxu0
      %v1850 = vadd.f32 0.0, %v1849
      %v1851 = vpop.f32.mrf.mxu0
      %1852 = vdwg.mxu0
      %v1854 = vsel %vm688, %v1850, 0
      %1856 = vmatprep.subr.mxu0 0.0
      %1857 = vmatpush1.msra.mxu0 0.0
      %1858 = vmatprep.subr.mxu0 0.0
      %1859 = vmatpush1.msra.mxu0 0.0
      %1860 = vmatprep.subr.mxu0 0.0
      %1861 = vmatpush1.msra.mxu0 0.0
      %1862 = vmatprep.subr.mxu0 0.0
      %1863 = vmatpush1.msra.mxu0 0.0
      %1864 = vmatprep.subr.mxu0 0.0
      %1865 = vmatpush1.msra.mxu0 0.0
      %1866 = vmatprep.subr.mxu0 0.0
      %1867 = vmatpush1.msra.mxu0 0.0
      %1868 = vmatprep.subr.mxu0 0.0
      %1869 = vmatpush1.msra.mxu0 0.0
      %1870 = vmatprep.subr.mxu0 0.0
      %1871 = vmatpush1.msra.mxu0 0.0
      %1872 = vmatprep.subr.mxu0 0.0
      %1873 = vmatpush1.msra.mxu0 0.0
      %1874 = vmatprep.subr.mxu0 0.0
      %1875 = vmatpush1.msra.mxu0 0.0
      %1876 = vmatprep.subr.mxu0 0.0
      %1877 = vmatpush1.msra.mxu0 0.0
      %1878 = vmatprep.subr.mxu0 0.0
      %1879 = vmatpush1.msra.mxu0 0.0
      %1880 = vmatprep.subr.mxu0 0.0
      %1881 = vmatpush1.msra.mxu0 0.0
      %1882 = vmatprep.subr.mxu0 0.0
      %1883 = vmatpush1.msra.mxu0 0.0
      %1884 = vmatprep.subr.mxu0 0.0
      %1885 = vmatpush1.msra.mxu0 0.0
      %1886 = vmatprep.subr.mxu0 0.0
      %1887 = vmatpush1.msra.mxu0 %v419
      %1888 = vmatprep.subr.mxu0 0.0
      %1889 = vmatpush2.msra.mxu0 0.0
      %1890 = vmatprep.subr.mxu0 0.0
      %1891 = vmatpush2.msra.mxu0 0.0
      %1892 = vmatprep.subr.mxu0 0.0
      %1893 = vmatpush2.msra.mxu0 0.0
      %1894 = vmatprep.subr.mxu0 0.0
      %1895 = vmatpush2.msra.mxu0 0.0
      %1896 = vmatprep.subr.mxu0 0.0
      %1897 = vmatpush2.msra.mxu0 0.0
      %1898 = vmatprep.subr.mxu0 0.0
      %1899 = vmatpush2.msra.mxu0 0.0
      %1900 = vmatprep.subr.mxu0 0.0
      %1901 = vmatpush2.msra.mxu0 0.0
      %1902 = vmatprep.subr.mxu0 0.0
      %1903 = vmatpush2.msra.mxu0 0.0
      %1904 = vmatprep.subr.mxu0 0.0
      %1905 = vmatpush2.msra.mxu0 0.0
      %1906 = vmatprep.subr.mxu0 0.0
      %1907 = vmatpush2.msra.mxu0 0.0
      %1908 = vmatprep.subr.mxu0 0.0
      %1909 = vmatpush2.msra.mxu0 0.0
      %1910 = vmatprep.subr.mxu0 0.0
      %1911 = vmatpush2.msra.mxu0 0.0
      %1912 = vmatprep.subr.mxu0 0.0
      %1913 = vmatpush2.msra.mxu0 0.0
      %1914 = vmatprep.subr.mxu0 0.0
      %1915 = vmatpush2.msra.mxu0 0.0
      %1916 = vmatprep.subr.mxu0 0.0
      %1917 = vmatpush2.msra.mxu0 0.0
      %1918 = vmatprep.subr.mxu0 0.0
      %1919 = vmatpush2.msra.mxu0 0.0
      %1920 = vmatprep.mubr.f32.mxu0 0.0
      %1921 = vmatmul.mubr.f32.gmra.mxu0 %v1854
      %v1922 = vpop.f32.mrf.mxu0
      %v1923 = vadd.f32 0.0, %v1922
      %v1924 = vpop.f32.mrf.mxu0
      %1925 = vdwg.mxu0
      %v1926 = vadd.f32 %v1425, %v1923
      %s1927 = scalar_lea.vmem %s3, 96
      %v1928 = vld [vmem:[%s1927] sm:$0xff]
      %v1929 = vld [vmem:[%s1927 + $0x8] sm:$0xff]
      %v1930 = vld [vmem:[%s1927 + $0x10] sm:$0xff]
      %v1931 = vld [vmem:[%s1927 + $0x18] sm:$0xff]
      %s1932 = scalar_lea.vmem %s3, 224
      %v1933 = vld [vmem:[%s1932] sm:$0xff]
      %v1934 = vld [vmem:[%s1932 + $0x8] sm:$0xff]
      %v1935 = vld [vmem:[%s1932 + $0x10] sm:$0xff]
      %v1936 = vld [vmem:[%s1932 + $0x18] sm:$0xff]
      %s1937 = scalar_lea.vmem %s3, 352
      %v1938 = vld [vmem:[%s1937] sm:$0xff]
      %v1939 = vld [vmem:[%s1937 + $0x8] sm:$0xff]
      %v1940 = vld [vmem:[%s1937 + $0x10] sm:$0xff]
      %v1941 = vld [vmem:[%s1937 + $0x18] sm:$0xff]
      %s1942 = scalar_lea.vmem %s4, 3
      %v1943 = vld [vmem:[%s1942] sm:$0x1]
      %s1944 = scalar_lea.vmem %s4, 7
      %v1945 = vld [vmem:[%s1944] sm:$0x1]
      %s1946 = scalar_lea.vmem %s4, 11
      %v1947 = vld [vmem:[%s1946] sm:$0x1]
      %v1949 = vlaneseq
      %v1950 = vshrl.u32 %v1949, 7
      %v1951 = vsub.s32 0, %v1950
      %v1952 = vrot.slane %v1943, %v1951
      %1954 = vmatprep.subr.mxu0 0.0
      %1955 = vmatpush1.msra.mxu0 0.0
      %1956 = vmatprep.subr.mxu0 0.0
      %1957 = vmatpush1.msra.mxu0 0.0
      %1958 = vmatprep.subr.mxu0 0.0
      %1959 = vmatpush1.msra.mxu0 0.0
      %1960 = vmatprep.subr.mxu0 0.0
      %1961 = vmatpush1.msra.mxu0 0.0
      %1962 = vmatprep.subr.mxu0 0.0
      %1963 = vmatpush1.msra.mxu0 0.0
      %1964 = vmatprep.subr.mxu0 0.0
      %1965 = vmatpush1.msra.mxu0 0.0
      %1966 = vmatprep.subr.mxu0 0.0
      %1967 = vmatpush1.msra.mxu0 0.0
      %1968 = vmatprep.subr.mxu0 0.0
      %1969 = vmatpush1.msra.mxu0 0.0
      %1970 = vmatprep.subr.mxu0 0.0
      %1971 = vmatpush1.msra.mxu0 0.0
      %1972 = vmatprep.subr.mxu0 0.0
      %1973 = vmatpush1.msra.mxu0 0.0
      %1974 = vmatprep.subr.mxu0 0.0
      %1975 = vmatpush1.msra.mxu0 0.0
      %1976 = vmatprep.subr.mxu0 0.0
      %1977 = vmatpush1.msra.mxu0 0.0
      %1978 = vmatprep.subr.mxu0 0.0
      %1979 = vmatpush1.msra.mxu0 %v1931
      %1980 = vmatprep.subr.mxu0 0.0
      %1981 = vmatpush1.msra.mxu0 %v1930
      %1982 = vmatprep.subr.mxu0 0.0
      %1983 = vmatpush1.msra.mxu0 %v1929
      %1984 = vmatprep.subr.mxu0 0.0
      %1985 = vmatpush1.msra.mxu0 %v1928
      %1986 = vmatprep.subr.mxu0 0.0
      %1987 = vmatpush2.msra.mxu0 0.0
      %1988 = vmatprep.subr.mxu0 0.0
      %1989 = vmatpush2.msra.mxu0 0.0
      %1990 = vmatprep.subr.mxu0 0.0
      %1991 = vmatpush2.msra.mxu0 0.0
      %1992 = vmatprep.subr.mxu0 0.0
      %1993 = vmatpush2.msra.mxu0 0.0
      %1994 = vmatprep.subr.mxu0 0.0
      %1995 = vmatpush2.msra.mxu0 0.0
      %1996 = vmatprep.subr.mxu0 0.0
      %1997 = vmatpush2.msra.mxu0 0.0
      %1998 = vmatprep.subr.mxu0 0.0
      %1999 = vmatpush2.msra.mxu0 0.0
      %2000 = vmatprep.subr.mxu0 0.0
      %2001 = vmatpush2.msra.mxu0 0.0
      %2002 = vmatprep.subr.mxu0 0.0
      %2003 = vmatpush2.msra.mxu0 0.0
      %2004 = vmatprep.subr.mxu0 0.0
      %2005 = vmatpush2.msra.mxu0 0.0
      %2006 = vmatprep.subr.mxu0 0.0
      %2007 = vmatpush2.msra.mxu0 0.0
      %2008 = vmatprep.subr.mxu0 0.0
      %2009 = vmatpush2.msra.mxu0 0.0
      %2010 = vmatprep.subr.mxu0 0.0
      %2011 = vmatpush2.msra.mxu0 0.0
      %2012 = vmatprep.subr.mxu0 0.0
      %2013 = vmatpush2.msra.mxu0 0.0
      %2014 = vmatprep.subr.mxu0 0.0
      %2015 = vmatpush2.msra.mxu0 0.0
      %2016 = vmatprep.subr.mxu0 0.0
      %2017 = vmatpush2.msra.mxu0 0.0
      %2018 = vmatprep.mubr.f32.mxu0 0.0
      %2019 = vmatmul.mubr.f32.gmra.mxu0 %v448
      %v2020 = vpop.f32.mrf.mxu0
      %v2021 = vadd.f32 %v1952, %v2020
      %v2022 = vpop.f32.mrf.mxu0
      %2023 = vdwg.mxu0
      %v2025 = vlaneseq
      %v2026 = vshrl.u32 %v2025, 7
      %v2027 = vsub.s32 0, %v2026
      %v2028 = vrot.slane %v1945, %v2027
      %2030 = vmatprep.subr.mxu0 0.0
      %2031 = vmatpush1.msra.mxu0 0.0
      %2032 = vmatprep.subr.mxu0 0.0
      %2033 = vmatpush1.msra.mxu0 0.0
      %2034 = vmatprep.subr.mxu0 0.0
      %2035 = vmatpush1.msra.mxu0 0.0
      %2036 = vmatprep.subr.mxu0 0.0
      %2037 = vmatpush1.msra.mxu0 0.0
      %2038 = vmatprep.subr.mxu0 0.0
      %2039 = vmatpush1.msra.mxu0 0.0
      %2040 = vmatprep.subr.mxu0 0.0
      %2041 = vmatpush1.msra.mxu0 0.0
      %2042 = vmatprep.subr.mxu0 0.0
      %2043 = vmatpush1.msra.mxu0 0.0
      %2044 = vmatprep.subr.mxu0 0.0
      %2045 = vmatpush1.msra.mxu0 0.0
      %2046 = vmatprep.subr.mxu0 0.0
      %2047 = vmatpush1.msra.mxu0 0.0
      %2048 = vmatprep.subr.mxu0 0.0
      %2049 = vmatpush1.msra.mxu0 0.0
      %2050 = vmatprep.subr.mxu0 0.0
      %2051 = vmatpush1.msra.mxu0 0.0
      %2052 = vmatprep.subr.mxu0 0.0
      %2053 = vmatpush1.msra.mxu0 0.0
      %2054 = vmatprep.subr.mxu0 0.0
      %2055 = vmatpush1.msra.mxu0 %v1936
      %2056 = vmatprep.subr.mxu0 0.0
      %2057 = vmatpush1.msra.mxu0 %v1935
      %2058 = vmatprep.subr.mxu0 0.0
      %2059 = vmatpush1.msra.mxu0 %v1934
      %2060 = vmatprep.subr.mxu0 0.0
      %2061 = vmatpush1.msra.mxu0 %v1933
      %2062 = vmatprep.subr.mxu0 0.0
      %2063 = vmatpush2.msra.mxu0 0.0
      %2064 = vmatprep.subr.mxu0 0.0
      %2065 = vmatpush2.msra.mxu0 0.0
      %2066 = vmatprep.subr.mxu0 0.0
      %2067 = vmatpush2.msra.mxu0 0.0
      %2068 = vmatprep.subr.mxu0 0.0
      %2069 = vmatpush2.msra.mxu0 0.0
      %2070 = vmatprep.subr.mxu0 0.0
      %2071 = vmatpush2.msra.mxu0 0.0
      %2072 = vmatprep.subr.mxu0 0.0
      %2073 = vmatpush2.msra.mxu0 0.0
      %2074 = vmatprep.subr.mxu0 0.0
      %2075 = vmatpush2.msra.mxu0 0.0
      %2076 = vmatprep.subr.mxu0 0.0
      %2077 = vmatpush2.msra.mxu0 0.0
      %2078 = vmatprep.subr.mxu0 0.0
      %2079 = vmatpush2.msra.mxu0 0.0
      %2080 = vmatprep.subr.mxu0 0.0
      %2081 = vmatpush2.msra.mxu0 0.0
      %2082 = vmatprep.subr.mxu0 0.0
      %2083 = vmatpush2.msra.mxu0 0.0
      %2084 = vmatprep.subr.mxu0 0.0
      %2085 = vmatpush2.msra.mxu0 0.0
      %2086 = vmatprep.subr.mxu0 0.0
      %2087 = vmatpush2.msra.mxu0 0.0
      %2088 = vmatprep.subr.mxu0 0.0
      %2089 = vmatpush2.msra.mxu0 0.0
      %2090 = vmatprep.subr.mxu0 0.0
      %2091 = vmatpush2.msra.mxu0 0.0
      %2092 = vmatprep.subr.mxu0 0.0
      %2093 = vmatpush2.msra.mxu0 0.0
      %2094 = vmatprep.mubr.f32.mxu0 0.0
      %2095 = vmatmul.mubr.f32.gmra.mxu0 %v527
      %v2096 = vpop.f32.mrf.mxu0
      %v2097 = vadd.f32 %v2028, %v2096
      %v2098 = vpop.f32.mrf.mxu0
      %2099 = vmatprep.mubr.f32.mxu0 0.0
      %2100 = vmatmul.mubr.f32.gmra.mxu0 %v530
      %v2101 = vpop.f32.mrf.mxu0
      %v2102 = vadd.f32 %v2028, %v2101
      %v2103 = vpop.f32.mrf.mxu0
      %2104 = vdwg.mxu0
      %v2106 = vlaneseq
      %v2107 = vshrl.u32 %v2106, 7
      %v2108 = vsub.s32 0, %v2107
      %v2109 = vrot.slane %v1947, %v2108
      %2111 = vmatprep.subr.mxu0 0.0
      %2112 = vmatpush1.msra.mxu0 0.0
      %2113 = vmatprep.subr.mxu0 0.0
      %2114 = vmatpush1.msra.mxu0 0.0
      %2115 = vmatprep.subr.mxu0 0.0
      %2116 = vmatpush1.msra.mxu0 0.0
      %2117 = vmatprep.subr.mxu0 0.0
      %2118 = vmatpush1.msra.mxu0 0.0
      %2119 = vmatprep.subr.mxu0 0.0
      %2120 = vmatpush1.msra.mxu0 0.0
      %2121 = vmatprep.subr.mxu0 0.0
      %2122 = vmatpush1.msra.mxu0 0.0
      %2123 = vmatprep.subr.mxu0 0.0
      %2124 = vmatpush1.msra.mxu0 0.0
      %2125 = vmatprep.subr.mxu0 0.0
      %2126 = vmatpush1.msra.mxu0 0.0
      %2127 = vmatprep.subr.mxu0 0.0
      %2128 = vmatpush1.msra.mxu0 0.0
      %2129 = vmatprep.subr.mxu0 0.0
      %2130 = vmatpush1.msra.mxu0 0.0
      %2131 = vmatprep.subr.mxu0 0.0
      %2132 = vmatpush1.msra.mxu0 0.0
      %2133 = vmatprep.subr.mxu0 0.0
      %2134 = vmatpush1.msra.mxu0 0.0
      %2135 = vmatprep.subr.mxu0 0.0
      %2136 = vmatpush1.msra.mxu0 %v1941
      %2137 = vmatprep.subr.mxu0 0.0
      %2138 = vmatpush1.msra.mxu0 %v1940
      %2139 = vmatprep.subr.mxu0 0.0
      %2140 = vmatpush1.msra.mxu0 %v1939
      %2141 = vmatprep.subr.mxu0 0.0
      %2142 = vmatpush1.msra.mxu0 %v1938
      %2143 = vmatprep.subr.mxu0 0.0
      %2144 = vmatpush2.msra.mxu0 0.0
      %2145 = vmatprep.subr.mxu0 0.0
      %2146 = vmatpush2.msra.mxu0 0.0
      %2147 = vmatprep.subr.mxu0 0.0
      %2148 = vmatpush2.msra.mxu0 0.0
      %2149 = vmatprep.subr.mxu0 0.0
      %2150 = vmatpush2.msra.mxu0 0.0
      %2151 = vmatprep.subr.mxu0 0.0
      %2152 = vmatpush2.msra.mxu0 0.0
      %2153 = vmatprep.subr.mxu0 0.0
      %2154 = vmatpush2.msra.mxu0 0.0
      %2155 = vmatprep.subr.mxu0 0.0
      %2156 = vmatpush2.msra.mxu0 0.0
      %2157 = vmatprep.subr.mxu0 0.0
      %2158 = vmatpush2.msra.mxu0 0.0
      %2159 = vmatprep.subr.mxu0 0.0
      %2160 = vmatpush2.msra.mxu0 0.0
      %2161 = vmatprep.subr.mxu0 0.0
      %2162 = vmatpush2.msra.mxu0 0.0
      %2163 = vmatprep.subr.mxu0 0.0
      %2164 = vmatpush2.msra.mxu0 0.0
      %2165 = vmatprep.subr.mxu0 0.0
      %2166 = vmatpush2.msra.mxu0 0.0
      %2167 = vmatprep.subr.mxu0 0.0
      %2168 = vmatpush2.msra.mxu0 0.0
      %2169 = vmatprep.subr.mxu0 0.0
      %2170 = vmatpush2.msra.mxu0 0.0
      %2171 = vmatprep.subr.mxu0 0.0
      %2172 = vmatpush2.msra.mxu0 0.0
      %2173 = vmatprep.subr.mxu0 0.0
      %2174 = vmatpush2.msra.mxu0 0.0
      %2175 = vmatprep.mubr.f32.mxu0 0.0
      %2176 = vmatmul.mubr.f32.gmra.mxu0 %v527
      %v2177 = vpop.f32.mrf.mxu0
      %v2178 = vadd.f32 %v2109, %v2177
      %v2179 = vpop.f32.mrf.mxu0
      %2180 = vmatprep.mubr.f32.mxu0 0.0
      %2181 = vmatmul.mubr.f32.gmra.mxu0 %v530
      %v2182 = vpop.f32.mrf.mxu0
      %v2183 = vadd.f32 %v2109, %v2182
      %v2184 = vpop.f32.mrf.mxu0
      %2185 = vdwg.mxu0
      %v2187 = vsel %vm688, %v2021, 0
      %v2190 = vsel %vm688, %v2097, 0
      %v2193 = vsel %vm688, %v2102, 0
      %2195 = vmatprep.subr.mxu0 0.0
      %2196 = vmatpush1.xpose.msra.mxu0 0.0
      %2197 = vmatprep.subr.mxu0 0.0
      %2198 = vmatpush1.xpose.msra.mxu0 0.0
      %2199 = vmatprep.subr.mxu0 0.0
      %2200 = vmatpush1.xpose.msra.mxu0 0.0
      %2201 = vmatprep.subr.mxu0 0.0
      %2202 = vmatpush1.xpose.msra.mxu0 0.0
      %2203 = vmatprep.subr.mxu0 0.0
      %2204 = vmatpush1.xpose.msra.mxu0 0.0
      %2205 = vmatprep.subr.mxu0 0.0
      %2206 = vmatpush1.xpose.msra.mxu0 0.0
      %2207 = vmatprep.subr.mxu0 0.0
      %2208 = vmatpush1.xpose.msra.mxu0 0.0
      %2209 = vmatprep.subr.mxu0 0.0
      %2210 = vmatpush1.xpose.msra.mxu0 0.0
      %2211 = vmatprep.subr.mxu0 0.0
      %2212 = vmatpush1.xpose.msra.mxu0 0.0
      %2213 = vmatprep.subr.mxu0 0.0
      %2214 = vmatpush1.xpose.msra.mxu0 0.0
      %2215 = vmatprep.subr.mxu0 0.0
      %2216 = vmatpush1.xpose.msra.mxu0 0.0
      %2217 = vmatprep.subr.mxu0 0.0
      %2218 = vmatpush1.xpose.msra.mxu0 0.0
      %2219 = vmatprep.subr.mxu0 0.0
      %2220 = vmatpush1.xpose.msra.mxu0 0.0
      %2221 = vmatprep.subr.mxu0 0.0
      %2222 = vmatpush1.xpose.msra.mxu0 0.0
      %2223 = vmatprep.subr.mxu0 0.0
      %2224 = vmatpush1.xpose.msra.mxu0 %v2193
      %2225 = vmatprep.subr.mxu0 0.0
      %2226 = vmatpush1.xpose.msra.mxu0 %v2190
      %2227 = vmatprep.subr.mxu0 0.0
      %2228 = vmatpush2.xpose.msra.mxu0 0.0
      %2229 = vmatprep.subr.mxu0 0.0
      %2230 = vmatpush2.xpose.msra.mxu0 0.0
      %2231 = vmatprep.subr.mxu0 0.0
      %2232 = vmatpush2.xpose.msra.mxu0 0.0
      %2233 = vmatprep.subr.mxu0 0.0
      %2234 = vmatpush2.xpose.msra.mxu0 0.0
      %2235 = vmatprep.subr.mxu0 0.0
      %2236 = vmatpush2.xpose.msra.mxu0 0.0
      %2237 = vmatprep.subr.mxu0 0.0
      %2238 = vmatpush2.xpose.msra.mxu0 0.0
      %2239 = vmatprep.subr.mxu0 0.0
      %2240 = vmatpush2.xpose.msra.mxu0 0.0
      %2241 = vmatprep.subr.mxu0 0.0
      %2242 = vmatpush2.xpose.msra.mxu0 0.0
      %2243 = vmatprep.subr.mxu0 0.0
      %2244 = vmatpush2.xpose.msra.mxu0 0.0
      %2245 = vmatprep.subr.mxu0 0.0
      %2246 = vmatpush2.xpose.msra.mxu0 0.0
      %2247 = vmatprep.subr.mxu0 0.0
      %2248 = vmatpush2.xpose.msra.mxu0 0.0
      %2249 = vmatprep.subr.mxu0 0.0
      %2250 = vmatpush2.xpose.msra.mxu0 0.0
      %2251 = vmatprep.subr.mxu0 0.0
      %2252 = vmatpush2.xpose.msra.mxu0 0.0
      %2253 = vmatprep.subr.mxu0 0.0
      %2254 = vmatpush2.xpose.msra.mxu0 0.0
      %2255 = vmatprep.subr.mxu0 0.0
      %2256 = vmatpush2.xpose.msra.mxu0 0.0
      %2257 = vmatprep.subr.mxu0 0.0
      %2258 = vmatpush2.xpose.msra.mxu0 0.0
      %2259 = vmatprep.mubr.f32.mxu0 0.0
      %2260 = vmatmul.mubr.f32.gmra.mxu0 %v2187
      %v2261 = vpop.f32.mrf.mxu0
      %v2262 = vadd.f32 0.0, %v2261
      %v2263 = vpop.f32.mrf.mxu0
      %2264 = vdwg.mxu0
      %v2265 = vsel %vm768, %v2262, -inf
      %2266 = vmax.xlane.f32.xlu0 %v2265
      %v2267 = vpop.xlane.xlu0 %2266
      %v2268 = vsub.f32 %v2262, %v2267
      %v2269 = vmul.f32 %v2268, 1.442695
      %v2270 = vpow.pop %v2269
      %v2271 = vsel %vm768, %v2270, 0.0
      %2272 = vadd.xlane.f32.xlu0 %v2271
      %v2273 = vpop.xlane.xlu0 %2272
      %v2274 = vrcp.pop %v2273
      %v2275 = vmul.f32 %v2270, %v2274
      %v2277 = vsel %vm768, %v2275, 0
      %v2280 = vsel %vm783, %v2183, 0
      %2282 = vmatprep.subr.mxu0 0.0
      %2283 = vmatpush1.msra.mxu0 0.0
      %2284 = vmatprep.subr.mxu0 0.0
      %2285 = vmatpush1.msra.mxu0 0.0
      %2286 = vmatprep.subr.mxu0 0.0
      %2287 = vmatpush1.msra.mxu0 0.0
      %2288 = vmatprep.subr.mxu0 0.0
      %2289 = vmatpush1.msra.mxu0 0.0
      %2290 = vmatprep.subr.mxu0 0.0
      %2291 = vmatpush1.msra.mxu0 0.0
      %2292 = vmatprep.subr.mxu0 0.0
      %2293 = vmatpush1.msra.mxu0 0.0
      %2294 = vmatprep.subr.mxu0 0.0
      %2295 = vmatpush1.msra.mxu0 0.0
      %2296 = vmatprep.subr.mxu0 0.0
      %2297 = vmatpush1.msra.mxu0 0.0
      %2298 = vmatprep.subr.mxu0 0.0
      %2299 = vmatpush1.msra.mxu0 0.0
      %2300 = vmatprep.subr.mxu0 0.0
      %2301 = vmatpush1.msra.mxu0 0.0
      %2302 = vmatprep.subr.mxu0 0.0
      %2303 = vmatpush1.msra.mxu0 0.0
      %2304 = vmatprep.subr.mxu0 0.0
      %2305 = vmatpush1.msra.mxu0 0.0
      %2306 = vmatprep.subr.mxu0 0.0
      %2307 = vmatpush1.msra.mxu0 0.0
      %2308 = vmatprep.subr.mxu0 0.0
      %2309 = vmatpush1.msra.mxu0 0.0
      %2310 = vmatprep.subr.mxu0 0.0
      %2311 = vmatpush1.msra.mxu0 %v2280
      %2312 = vmatprep.subr.mxu0 0.0
      %2313 = vmatpush1.msra.mxu0 %v2178
      %2314 = vmatprep.subr.mxu0 0.0
      %2315 = vmatpush2.msra.mxu0 0.0
      %2316 = vmatprep.subr.mxu0 0.0
      %2317 = vmatpush2.msra.mxu0 0.0
      %2318 = vmatprep.subr.mxu0 0.0
      %2319 = vmatpush2.msra.mxu0 0.0
      %2320 = vmatprep.subr.mxu0 0.0
      %2321 = vmatpush2.msra.mxu0 0.0
      %2322 = vmatprep.subr.mxu0 0.0
      %2323 = vmatpush2.msra.mxu0 0.0
      %2324 = vmatprep.subr.mxu0 0.0
      %2325 = vmatpush2.msra.mxu0 0.0
      %2326 = vmatprep.subr.mxu0 0.0
      %2327 = vmatpush2.msra.mxu0 0.0
      %2328 = vmatprep.subr.mxu0 0.0
      %2329 = vmatpush2.msra.mxu0 0.0
      %2330 = vmatprep.subr.mxu0 0.0
      %2331 = vmatpush2.msra.mxu0 0.0
      %2332 = vmatprep.subr.mxu0 0.0
      %2333 = vmatpush2.msra.mxu0 0.0
      %2334 = vmatprep.subr.mxu0 0.0
      %2335 = vmatpush2.msra.mxu0 0.0
      %2336 = vmatprep.subr.mxu0 0.0
      %2337 = vmatpush2.msra.mxu0 0.0
      %2338 = vmatprep.subr.mxu0 0.0
      %2339 = vmatpush2.msra.mxu0 0.0
      %2340 = vmatprep.subr.mxu0 0.0
      %2341 = vmatpush2.msra.mxu0 0.0
      %2342 = vmatprep.subr.mxu0 0.0
      %2343 = vmatpush2.msra.mxu0 0.0
      %2344 = vmatprep.subr.mxu0 0.0
      %2345 = vmatpush2.msra.mxu0 0.0
      %2346 = vmatprep.mubr.f32.mxu0 0.0
      %2347 = vmatmul.mubr.f32.gmra.mxu0 %v2277
      %v2348 = vpop.f32.mrf.mxu0
      %v2349 = vadd.f32 0.0, %v2348
      %v2350 = vpop.f32.mrf.mxu0
      %2351 = vdwg.mxu0
      %v2353 = vsel %vm688, %v2349, 0
      %2355 = vmatprep.subr.mxu0 0.0
      %2356 = vmatpush1.msra.mxu0 0.0
      %2357 = vmatprep.subr.mxu0 0.0
      %2358 = vmatpush1.msra.mxu0 0.0
      %2359 = vmatprep.subr.mxu0 0.0
      %2360 = vmatpush1.msra.mxu0 0.0
      %2361 = vmatprep.subr.mxu0 0.0
      %2362 = vmatpush1.msra.mxu0 0.0
      %2363 = vmatprep.subr.mxu0 0.0
      %2364 = vmatpush1.msra.mxu0 0.0
      %2365 = vmatprep.subr.mxu0 0.0
      %2366 = vmatpush1.msra.mxu0 0.0
      %2367 = vmatprep.subr.mxu0 0.0
      %2368 = vmatpush1.msra.mxu0 0.0
      %2369 = vmatprep.subr.mxu0 0.0
      %2370 = vmatpush1.msra.mxu0 0.0
      %2371 = vmatprep.subr.mxu0 0.0
      %2372 = vmatpush1.msra.mxu0 0.0
      %2373 = vmatprep.subr.mxu0 0.0
      %2374 = vmatpush1.msra.mxu0 0.0
      %2375 = vmatprep.subr.mxu0 0.0
      %2376 = vmatpush1.msra.mxu0 0.0
      %2377 = vmatprep.subr.mxu0 0.0
      %2378 = vmatpush1.msra.mxu0 0.0
      %2379 = vmatprep.subr.mxu0 0.0
      %2380 = vmatpush1.msra.mxu0 0.0
      %2381 = vmatprep.subr.mxu0 0.0
      %2382 = vmatpush1.msra.mxu0 0.0
      %2383 = vmatprep.subr.mxu0 0.0
      %2384 = vmatpush1.msra.mxu0 0.0
      %2385 = vmatprep.subr.mxu0 0.0
      %2386 = vmatpush1.msra.mxu0 %v420
      %2387 = vmatprep.subr.mxu0 0.0
      %2388 = vmatpush2.msra.mxu0 0.0
      %2389 = vmatprep.subr.mxu0 0.0
      %2390 = vmatpush2.msra.mxu0 0.0
      %2391 = vmatprep.subr.mxu0 0.0
      %2392 = vmatpush2.msra.mxu0 0.0
      %2393 = vmatprep.subr.mxu0 0.0
      %2394 = vmatpush2.msra.mxu0 0.0
      %2395 = vmatprep.subr.mxu0 0.0
      %2396 = vmatpush2.msra.mxu0 0.0
      %2397 = vmatprep.subr.mxu0 0.0
      %2398 = vmatpush2.msra.mxu0 0.0
      %2399 = vmatprep.subr.mxu0 0.0
      %2400 = vmatpush2.msra.mxu0 0.0
      %2401 = vmatprep.subr.mxu0 0.0
      %2402 = vmatpush2.msra.mxu0 0.0
      %2403 = vmatprep.subr.mxu0 0.0
      %2404 = vmatpush2.msra.mxu0 0.0
      %2405 = vmatprep.subr.mxu0 0.0
      %2406 = vmatpush2.msra.mxu0 0.0
      %2407 = vmatprep.subr.mxu0 0.0
      %2408 = vmatpush2.msra.mxu0 0.0
      %2409 = vmatprep.subr.mxu0 0.0
      %2410 = vmatpush2.msra.mxu0 0.0
      %2411 = vmatprep.subr.mxu0 0.0
      %2412 = vmatpush2.msra.mxu0 0.0
      %2413 = vmatprep.subr.mxu0 0.0
      %2414 = vmatpush2.msra.mxu0 0.0
      %2415 = vmatprep.subr.mxu0 0.0
      %2416 = vmatpush2.msra.mxu0 0.0
      %2417 = vmatprep.subr.mxu0 0.0
      %2418 = vmatpush2.msra.mxu0 0.0
      %2419 = vmatprep.mubr.f32.mxu0 0.0
      %2420 = vmatmul.mubr.f32.gmra.mxu0 %v2353
      %v2421 = vpop.f32.mrf.mxu0
      %v2422 = vadd.f32 0.0, %v2421
      %v2423 = vpop.f32.mrf.mxu0
      %2424 = vdwg.mxu0
      %v2425 = vadd.f32 %v1926, %v2422
      %v2427 = vlaneseq
      %v2428 = vshrl.u32 %v2427, 7
      %v2429 = vsub.s32 0, %v2428
      %v2430 = vrot.slane %v400, %v2429
      %v2432 = vadd.f32 %v2425, %v2430
      %v2433 = vadd.f32 %v395, %v2432
      %v2434 = vsel %vm446, %v2433, 0.0
      %2435 = vadd.xlane.f32.xlu0 %v2434
      %v2436 = vpop.xlane.xlu0 %2435
      %v2437 = vrcp.pop 32.0
      %v2438 = vmul.f32 %v2436, %v2437
      %v2439 = vsub.f32 %v2433, %v2438
      %v2440 = vmul.f32 %v2439, %v2439
      %v2441 = vsel %vm446, %v2440, 0.0
      %2442 = vadd.xlane.f32.xlu0 %v2441
      %v2443 = vpop.xlane.xlu0 %2442
      %v2444 = vmul.f32 %v2443, %v2437
      %v2445 = vadd.f32 %v2444, 1e-05
      %v2446 = vrsqrt.pop %v2445
      %v2447 = vmul.f32 %v2439, %v2446
      %v2449 = vlaneseq
      %v2450 = vshrl.u32 %v2449, 7
      %v2451 = vsub.s32 0, %v2450
      %v2452 = vrot.slane %v402, %v2451
      %v2454 = vmul.f32 %v2447, %v2452
      %v2456 = vlaneseq
      %v2457 = vshrl.u32 %v2456, 7
      %v2458 = vsub.s32 0, %v2457
      %v2459 = vrot.slane %v404, %v2458
      %v2461 = vadd.f32 %v2454, %v2459
      %s2462 = scalar_lea.vmem %s5, 32
      %v2463 = vld [vmem:[%s2462] sm:$0xff]
      %v2464 = vld [vmem:[%s2462 + $0x8] sm:$0xff]
      %v2465 = vld [vmem:[%s2462 + $0x10] sm:$0xff]
      %v2466 = vld [vmem:[%s2462 + $0x18] sm:$0xff]
      %s2467 = scalar_lea.vmem %s3, 384
      %v2468 = vld [vmem:[%s2467] sm:$0xff]
      %v2469 = vld [vmem:[%s2467 + $0x8] sm:$0xff]
      %v2470 = vld [vmem:[%s2467 + $0x10] sm:$0xff]
      %v2471 = vld [vmem:[%s2467 + $0x18] sm:$0xff]
      %s2472 = scalar_lea.vmem %s3, 512
      %v2473 = vld [vmem:[%s2472] sm:$0xff]
      %v2474 = vld [vmem:[%s2472 + $0x8] sm:$0xff]
      %v2475 = vld [vmem:[%s2472 + $0x10] sm:$0xff]
      %v2476 = vld [vmem:[%s2472 + $0x18] sm:$0xff]
      %s2477 = scalar_lea.vmem %s3, 640
      %v2478 = vld [vmem:[%s2477] sm:$0xff]
      %v2479 = vld [vmem:[%s2477 + $0x8] sm:$0xff]
      %v2480 = vld [vmem:[%s2477 + $0x10] sm:$0xff]
      %v2481 = vld [vmem:[%s2477 + $0x18] sm:$0xff]
      %s2482 = scalar_lea.vmem %s4, 12
      %v2483 = vld [vmem:[%s2482] sm:$0x1]
      %s2484 = scalar_lea.vmem %s4, 16
      %v2485 = vld [vmem:[%s2484] sm:$0x1]
      %s2486 = scalar_lea.vmem %s4, 20
      %v2487 = vld [vmem:[%s2486] sm:$0x1]
      %v2489 = vlaneseq
      %v2490 = vshrl.u32 %v2489, 7
      %v2491 = vsub.s32 0, %v2490
      %v2492 = vrot.slane %v2483, %v2491
      %v2495 = vsel %vm446, %v2461, 0
      %2497 = vmatprep.subr.mxu0 0.0
      %2498 = vmatpush1.msra.mxu0 0.0
      %2499 = vmatprep.subr.mxu0 0.0
      %2500 = vmatpush1.msra.mxu0 0.0
      %2501 = vmatprep.subr.mxu0 0.0
      %2502 = vmatpush1.msra.mxu0 0.0
      %2503 = vmatprep.subr.mxu0 0.0
      %2504 = vmatpush1.msra.mxu0 0.0
      %2505 = vmatprep.subr.mxu0 0.0
      %2506 = vmatpush1.msra.mxu0 0.0
      %2507 = vmatprep.subr.mxu0 0.0
      %2508 = vmatpush1.msra.mxu0 0.0
      %2509 = vmatprep.subr.mxu0 0.0
      %2510 = vmatpush1.msra.mxu0 0.0
      %2511 = vmatprep.subr.mxu0 0.0
      %2512 = vmatpush1.msra.mxu0 0.0
      %2513 = vmatprep.subr.mxu0 0.0
      %2514 = vmatpush1.msra.mxu0 0.0
      %2515 = vmatprep.subr.mxu0 0.0
      %2516 = vmatpush1.msra.mxu0 0.0
      %2517 = vmatprep.subr.mxu0 0.0
      %2518 = vmatpush1.msra.mxu0 0.0
      %2519 = vmatprep.subr.mxu0 0.0
      %2520 = vmatpush1.msra.mxu0 0.0
      %2521 = vmatprep.subr.mxu0 0.0
      %2522 = vmatpush1.msra.mxu0 %v2471
      %2523 = vmatprep.subr.mxu0 0.0
      %2524 = vmatpush1.msra.mxu0 %v2470
      %2525 = vmatprep.subr.mxu0 0.0
      %2526 = vmatpush1.msra.mxu0 %v2469
      %2527 = vmatprep.subr.mxu0 0.0
      %2528 = vmatpush1.msra.mxu0 %v2468
      %2529 = vmatprep.subr.mxu0 0.0
      %2530 = vmatpush2.msra.mxu0 0.0
      %2531 = vmatprep.subr.mxu0 0.0
      %2532 = vmatpush2.msra.mxu0 0.0
      %2533 = vmatprep.subr.mxu0 0.0
      %2534 = vmatpush2.msra.mxu0 0.0
      %2535 = vmatprep.subr.mxu0 0.0
      %2536 = vmatpush2.msra.mxu0 0.0
      %2537 = vmatprep.subr.mxu0 0.0
      %2538 = vmatpush2.msra.mxu0 0.0
      %2539 = vmatprep.subr.mxu0 0.0
      %2540 = vmatpush2.msra.mxu0 0.0
      %2541 = vmatprep.subr.mxu0 0.0
      %2542 = vmatpush2.msra.mxu0 0.0
      %2543 = vmatprep.subr.mxu0 0.0
      %2544 = vmatpush2.msra.mxu0 0.0
      %2545 = vmatprep.subr.mxu0 0.0
      %2546 = vmatpush2.msra.mxu0 0.0
      %2547 = vmatprep.subr.mxu0 0.0
      %2548 = vmatpush2.msra.mxu0 0.0
      %2549 = vmatprep.subr.mxu0 0.0
      %2550 = vmatpush2.msra.mxu0 0.0
      %2551 = vmatprep.subr.mxu0 0.0
      %2552 = vmatpush2.msra.mxu0 0.0
      %2553 = vmatprep.subr.mxu0 0.0
      %2554 = vmatpush2.msra.mxu0 0.0
      %2555 = vmatprep.subr.mxu0 0.0
      %2556 = vmatpush2.msra.mxu0 0.0
      %2557 = vmatprep.subr.mxu0 0.0
      %2558 = vmatpush2.msra.mxu0 0.0
      %2559 = vmatprep.subr.mxu0 0.0
      %2560 = vmatpush2.msra.mxu0 0.0
      %2561 = vmatprep.mubr.f32.mxu0 0.0
      %2562 = vmatmul.mubr.f32.gmra.mxu0 %v2495
      %v2563 = vpop.f32.mrf.mxu0
      %v2564 = vadd.f32 %v2492, %v2563
      %v2565 = vpop.f32.mrf.mxu0
      %2566 = vdwg.mxu0
      %v2568 = vlaneseq
      %v2569 = vshrl.u32 %v2568, 7
      %v2570 = vsub.s32 0, %v2569
      %v2571 = vrot.slane %v2485, %v2570
      %v2574 = vsel %vm446, %v398, 0
      %v2577 = vsel %vm446, %v399, 0
      %2579 = vmatprep.subr.mxu0 0.0
      %2580 = vmatpush1.msra.mxu0 0.0
      %2581 = vmatprep.subr.mxu0 0.0
      %2582 = vmatpush1.msra.mxu0 0.0
      %2583 = vmatprep.subr.mxu0 0.0
      %2584 = vmatpush1.msra.mxu0 0.0
      %2585 = vmatprep.subr.mxu0 0.0
      %2586 = vmatpush1.msra.mxu0 0.0
      %2587 = vmatprep.subr.mxu0 0.0
      %2588 = vmatpush1.msra.mxu0 0.0
      %2589 = vmatprep.subr.mxu0 0.0
      %2590 = vmatpush1.msra.mxu0 0.0
      %2591 = vmatprep.subr.mxu0 0.0
      %2592 = vmatpush1.msra.mxu0 0.0
      %2593 = vmatprep.subr.mxu0 0.0
      %2594 = vmatpush1.msra.mxu0 0.0
      %2595 = vmatprep.subr.mxu0 0.0
      %2596 = vmatpush1.msra.mxu0 0.0
      %2597 = vmatprep.subr.mxu0 0.0
      %2598 = vmatpush1.msra.mxu0 0.0
      %2599 = vmatprep.subr.mxu0 0.0
      %2600 = vmatpush1.msra.mxu0 0.0
      %2601 = vmatprep.subr.mxu0 0.0
      %2602 = vmatpush1.msra.mxu0 0.0
      %2603 = vmatprep.subr.mxu0 0.0
      %2604 = vmatpush1.msra.mxu0 %v2476
      %2605 = vmatprep.subr.mxu0 0.0
      %2606 = vmatpush1.msra.mxu0 %v2475
      %2607 = vmatprep.subr.mxu0 0.0
      %2608 = vmatpush1.msra.mxu0 %v2474
      %2609 = vmatprep.subr.mxu0 0.0
      %2610 = vmatpush1.msra.mxu0 %v2473
      %2611 = vmatprep.subr.mxu0 0.0
      %2612 = vmatpush2.msra.mxu0 0.0
      %2613 = vmatprep.subr.mxu0 0.0
      %2614 = vmatpush2.msra.mxu0 0.0
      %2615 = vmatprep.subr.mxu0 0.0
      %2616 = vmatpush2.msra.mxu0 0.0
      %2617 = vmatprep.subr.mxu0 0.0
      %2618 = vmatpush2.msra.mxu0 0.0
      %2619 = vmatprep.subr.mxu0 0.0
      %2620 = vmatpush2.msra.mxu0 0.0
      %2621 = vmatprep.subr.mxu0 0.0
      %2622 = vmatpush2.msra.mxu0 0.0
      %2623 = vmatprep.subr.mxu0 0.0
      %2624 = vmatpush2.msra.mxu0 0.0
      %2625 = vmatprep.subr.mxu0 0.0
      %2626 = vmatpush2.msra.mxu0 0.0
      %2627 = vmatprep.subr.mxu0 0.0
      %2628 = vmatpush2.msra.mxu0 0.0
      %2629 = vmatprep.subr.mxu0 0.0
      %2630 = vmatpush2.msra.mxu0 0.0
      %2631 = vmatprep.subr.mxu0 0.0
      %2632 = vmatpush2.msra.mxu0 0.0
      %2633 = vmatprep.subr.mxu0 0.0
      %2634 = vmatpush2.msra.mxu0 0.0
      %2635 = vmatprep.subr.mxu0 0.0
      %2636 = vmatpush2.msra.mxu0 0.0
      %2637 = vmatprep.subr.mxu0 0.0
      %2638 = vmatpush2.msra.mxu0 0.0
      %2639 = vmatprep.subr.mxu0 0.0
      %2640 = vmatpush2.msra.mxu0 0.0
      %2641 = vmatprep.subr.mxu0 0.0
      %2642 = vmatpush2.msra.mxu0 0.0
      %2643 = vmatprep.mubr.f32.mxu0 0.0
      %2644 = vmatmul.mubr.f32.gmra.mxu0 %v2574
      %v2645 = vpop.f32.mrf.mxu0
      %v2646 = vadd.f32 %v2571, %v2645
      %v2647 = vpop.f32.mrf.mxu0
      %2648 = vmatprep.mubr.f32.mxu0 0.0
      %2649 = vmatmul.mubr.f32.gmra.mxu0 %v2577
      %v2650 = vpop.f32.mrf.mxu0
      %v2651 = vadd.f32 %v2571, %v2650
      %v2652 = vpop.f32.mrf.mxu0
      %2653 = vdwg.mxu0
      %v2655 = vlaneseq
      %v2656 = vshrl.u32 %v2655, 7
      %v2657 = vsub.s32 0, %v2656
      %v2658 = vrot.slane %v2487, %v2657
      %2660 = vmatprep.subr.mxu0 0.0
      %2661 = vmatpush1.msra.mxu0 0.0
      %2662 = vmatprep.subr.mxu0 0.0
      %2663 = vmatpush1.msra.mxu0 0.0
      %2664 = vmatprep.subr.mxu0 0.0
      %2665 = vmatpush1.msra.mxu0 0.0
      %2666 = vmatprep.subr.mxu0 0.0
      %2667 = vmatpush1.msra.mxu0 0.0
      %2668 = vmatprep.subr.mxu0 0.0
      %2669 = vmatpush1.msra.mxu0 0.0
      %2670 = vmatprep.subr.mxu0 0.0
      %2671 = vmatpush1.msra.mxu0 0.0
      %2672 = vmatprep.subr.mxu0 0.0
      %2673 = vmatpush1.msra.mxu0 0.0
      %2674 = vmatprep.subr.mxu0 0.0
      %2675 = vmatpush1.msra.mxu0 0.0
      %2676 = vmatprep.subr.mxu0 0.0
      %2677 = vmatpush1.msra.mxu0 0.0
      %2678 = vmatprep.subr.mxu0 0.0
      %2679 = vmatpush1.msra.mxu0 0.0
      %2680 = vmatprep.subr.mxu0 0.0
      %2681 = vmatpush1.msra.mxu0 0.0
      %2682 = vmatprep.subr.mxu0 0.0
      %2683 = vmatpush1.msra.mxu0 0.0
      %2684 = vmatprep.subr.mxu0 0.0
      %2685 = vmatpush1.msra.mxu0 %v2481
      %2686 = vmatprep.subr.mxu0 0.0
      %2687 = vmatpush1.msra.mxu0 %v2480
      %2688 = vmatprep.subr.mxu0 0.0
      %2689 = vmatpush1.msra.mxu0 %v2479
      %2690 = vmatprep.subr.mxu0 0.0
      %2691 = vmatpush1.msra.mxu0 %v2478
      %2692 = vmatprep.subr.mxu0 0.0
      %2693 = vmatpush2.msra.mxu0 0.0
      %2694 = vmatprep.subr.mxu0 0.0
      %2695 = vmatpush2.msra.mxu0 0.0
      %2696 = vmatprep.subr.mxu0 0.0
      %2697 = vmatpush2.msra.mxu0 0.0
      %2698 = vmatprep.subr.mxu0 0.0
      %2699 = vmatpush2.msra.mxu0 0.0
      %2700 = vmatprep.subr.mxu0 0.0
      %2701 = vmatpush2.msra.mxu0 0.0
      %2702 = vmatprep.subr.mxu0 0.0
      %2703 = vmatpush2.msra.mxu0 0.0
      %2704 = vmatprep.subr.mxu0 0.0
      %2705 = vmatpush2.msra.mxu0 0.0
      %2706 = vmatprep.subr.mxu0 0.0
      %2707 = vmatpush2.msra.mxu0 0.0
      %2708 = vmatprep.subr.mxu0 0.0
      %2709 = vmatpush2.msra.mxu0 0.0
      %2710 = vmatprep.subr.mxu0 0.0
      %2711 = vmatpush2.msra.mxu0 0.0
      %2712 = vmatprep.subr.mxu0 0.0
      %2713 = vmatpush2.msra.mxu0 0.0
      %2714 = vmatprep.subr.mxu0 0.0
      %2715 = vmatpush2.msra.mxu0 0.0
      %2716 = vmatprep.subr.mxu0 0.0
      %2717 = vmatpush2.msra.mxu0 0.0
      %2718 = vmatprep.subr.mxu0 0.0
      %2719 = vmatpush2.msra.mxu0 0.0
      %2720 = vmatprep.subr.mxu0 0.0
      %2721 = vmatpush2.msra.mxu0 0.0
      %2722 = vmatprep.subr.mxu0 0.0
      %2723 = vmatpush2.msra.mxu0 0.0
      %2724 = vmatprep.mubr.f32.mxu0 0.0
      %2725 = vmatmul.mubr.f32.gmra.mxu0 %v2574
      %v2726 = vpop.f32.mrf.mxu0
      %v2727 = vadd.f32 %v2658, %v2726
      %v2728 = vpop.f32.mrf.mxu0
      %2729 = vmatprep.mubr.f32.mxu0 0.0
      %2730 = vmatmul.mubr.f32.gmra.mxu0 %v2577
      %v2731 = vpop.f32.mrf.mxu0
      %v2732 = vadd.f32 %v2658, %v2731
      %v2733 = vpop.f32.mrf.mxu0
      %2734 = vdwg.mxu0
      %v2736 = vsel %vm688, %v2564, 0
      %v2739 = vsel %vm688, %v2646, 0
      %v2742 = vsel %vm688, %v2651, 0
      %2744 = vmatprep.subr.mxu0 0.0
      %2745 = vmatpush1.xpose.msra.mxu0 0.0
      %2746 = vmatprep.subr.mxu0 0.0
      %2747 = vmatpush1.xpose.msra.mxu0 0.0
      %2748 = vmatprep.subr.mxu0 0.0
      %2749 = vmatpush1.xpose.msra.mxu0 0.0
      %2750 = vmatprep.subr.mxu0 0.0
      %2751 = vmatpush1.xpose.msra.mxu0 0.0
      %2752 = vmatprep.subr.mxu0 0.0
      %2753 = vmatpush1.xpose.msra.mxu0 0.0
      %2754 = vmatprep.subr.mxu0 0.0
      %2755 = vmatpush1.xpose.msra.mxu0 0.0
      %2756 = vmatprep.subr.mxu0 0.0
      %2757 = vmatpush1.xpose.msra.mxu0 0.0
      %2758 = vmatprep.subr.mxu0 0.0
      %2759 = vmatpush1.xpose.msra.mxu0 0.0
      %2760 = vmatprep.subr.mxu0 0.0
      %2761 = vmatpush1.xpose.msra.mxu0 0.0
      %2762 = vmatprep.subr.mxu0 0.0
      %2763 = vmatpush1.xpose.msra.mxu0 0.0
      %2764 = vmatprep.subr.mxu0 0.0
      %2765 = vmatpush1.xpose.msra.mxu0 0.0
      %2766 = vmatprep.subr.mxu0 0.0
      %2767 = vmatpush1.xpose.msra.mxu0 0.0
      %2768 = vmatprep.subr.mxu0 0.0
      %2769 = vmatpush1.xpose.msra.mxu0 0.0
      %2770 = vmatprep.subr.mxu0 0.0
      %2771 = vmatpush1.xpose.msra.mxu0 0.0
      %2772 = vmatprep.subr.mxu0 0.0
      %2773 = vmatpush1.xpose.msra.mxu0 %v2742
      %2774 = vmatprep.subr.mxu0 0.0
      %2775 = vmatpush1.xpose.msra.mxu0 %v2739
      %2776 = vmatprep.subr.mxu0 0.0
      %2777 = vmatpush2.xpose.msra.mxu0 0.0
      %2778 = vmatprep.subr.mxu0 0.0
      %2779 = vmatpush2.xpose.msra.mxu0 0.0
      %2780 = vmatprep.subr.mxu0 0.0
      %2781 = vmatpush2.xpose.msra.mxu0 0.0
      %2782 = vmatprep.subr.mxu0 0.0
      %2783 = vmatpush2.xpose.msra.mxu0 0.0
      %2784 = vmatprep.subr.mxu0 0.0
      %2785 = vmatpush2.xpose.msra.mxu0 0.0
      %2786 = vmatprep.subr.mxu0 0.0
      %2787 = vmatpush2.xpose.msra.mxu0 0.0
      %2788 = vmatprep.subr.mxu0 0.0
      %2789 = vmatpush2.xpose.msra.mxu0 0.0
      %2790 = vmatprep.subr.mxu0 0.0
      %2791 = vmatpush2.xpose.msra.mxu0 0.0
      %2792 = vmatprep.subr.mxu0 0.0
      %2793 = vmatpush2.xpose.msra.mxu0 0.0
      %2794 = vmatprep.subr.mxu0 0.0
      %2795 = vmatpush2.xpose.msra.mxu0 0.0
      %2796 = vmatprep.subr.mxu0 0.0
      %2797 = vmatpush2.xpose.msra.mxu0 0.0
      %2798 = vmatprep.subr.mxu0 0.0
      %2799 = vmatpush2.xpose.msra.mxu0 0.0
      %2800 = vmatprep.subr.mxu0 0.0
      %2801 = vmatpush2.xpose.msra.mxu0 0.0
      %2802 = vmatprep.subr.mxu0 0.0
      %2803 = vmatpush2.xpose.msra.mxu0 0.0
      %2804 = vmatprep.subr.mxu0 0.0
      %2805 = vmatpush2.xpose.msra.mxu0 0.0
      %2806 = vmatprep.subr.mxu0 0.0
      %2807 = vmatpush2.xpose.msra.mxu0 0.0
      %2808 = vmatprep.mubr.f32.mxu0 0.0
      %2809 = vmatmul.mubr.f32.gmra.mxu0 %v2736
      %v2810 = vpop.f32.mrf.mxu0
      %v2811 = vadd.f32 0.0, %v2810
      %v2812 = vpop.f32.mrf.mxu0
      %2813 = vdwg.mxu0
      %vm2814 = vcmask 80896
      %v2815 = vsel %vm2814, %v2811, -inf
      %2816 = vmax.xlane.f32.xlu0 %v2815
      %v2817 = vpop.xlane.xlu0 %2816
      %v2818 = vsub.f32 %v2811, %v2817
      %v2819 = vmul.f32 %v2818, 1.442695
      %v2820 = vpow.pop %v2819
      %v2821 = vsel %vm2814, %v2820, 0.0
      %2822 = vadd.xlane.f32.xlu0 %v2821
      %v2823 = vpop.xlane.xlu0 %2822
      %v2824 = vrcp.pop %v2823
      %v2825 = vmul.f32 %v2820, %v2824
      %v2827 = vsel %vm2814, %v2825, 0
      %vm2829 = vcmask 1041408
      %v2831 = vsel %vm2829, %v2732, 0
      %2833 = vmatprep.subr.mxu0 0.0
      %2834 = vmatpush1.msra.mxu0 0.0
      %2835 = vmatprep.subr.mxu0 0.0
      %2836 = vmatpush1.msra.mxu0 0.0
      %2837 = vmatprep.subr.mxu0 0.0
      %2838 = vmatpush1.msra.mxu0 0.0
      %2839 = vmatprep.subr.mxu0 0.0
      %2840 = vmatpush1.msra.mxu0 0.0
      %2841 = vmatprep.subr.mxu0 0.0
      %2842 = vmatpush1.msra.mxu0 0.0
      %2843 = vmatprep.subr.mxu0 0.0
      %2844 = vmatpush1.msra.mxu0 0.0
      %2845 = vmatprep.subr.mxu0 0.0
      %2846 = vmatpush1.msra.mxu0 0.0
      %2847 = vmatprep.subr.mxu0 0.0
      %2848 = vmatpush1.msra.mxu0 0.0
      %2849 = vmatprep.subr.mxu0 0.0
      %2850 = vmatpush1.msra.mxu0 0.0
      %2851 = vmatprep.subr.mxu0 0.0
      %2852 = vmatpush1.msra.mxu0 0.0
      %2853 = vmatprep.subr.mxu0 0.0
      %2854 = vmatpush1.msra.mxu0 0.0
      %2855 = vmatprep.subr.mxu0 0.0
      %2856 = vmatpush1.msra.mxu0 0.0
      %2857 = vmatprep.subr.mxu0 0.0
      %2858 = vmatpush1.msra.mxu0 0.0
      %2859 = vmatprep.subr.mxu0 0.0
      %2860 = vmatpush1.msra.mxu0 0.0
      %2861 = vmatprep.subr.mxu0 0.0
      %2862 = vmatpush1.msra.mxu0 %v2831
      %2863 = vmatprep.subr.mxu0 0.0
      %2864 = vmatpush1.msra.mxu0 %v2727
      %2865 = vmatprep.subr.mxu0 0.0
      %2866 = vmatpush2.msra.mxu0 0.0
      %2867 = vmatprep.subr.mxu0 0.0
      %2868 = vmatpush2.msra.mxu0 0.0
      %2869 = vmatprep.subr.mxu0 0.0
      %2870 = vmatpush2.msra.mxu0 0.0
      %2871 = vmatprep.subr.mxu0 0.0
      %2872 = vmatpush2.msra.mxu0 0.0
      %2873 = vmatprep.subr.mxu0 0.0
      %2874 = vmatpush2.msra.mxu0 0.0
      %2875 = vmatprep.subr.mxu0 0.0
      %2876 = vmatpush2.msra.mxu0 0.0
      %2877 = vmatprep.subr.mxu0 0.0
      %2878 = vmatpush2.msra.mxu0 0.0
      %2879 = vmatprep.subr.mxu0 0.0
      %2880 = vmatpush2.msra.mxu0 0.0
      %2881 = vmatprep.subr.mxu0 0.0
      %2882 = vmatpush2.msra.mxu0 0.0
      %2883 = vmatprep.subr.mxu0 0.0
      %2884 = vmatpush2.msra.mxu0 0.0
      %2885 = vmatprep.subr.mxu0 0.0
      %2886 = vmatpush2.msra.mxu0 0.0
      %2887 = vmatprep.subr.mxu0 0.0
      %2888 = vmatpush2.msra.mxu0 0.0
      %2889 = vmatprep.subr.mxu0 0.0
      %2890 = vmatpush2.msra.mxu0 0.0
      %2891 = vmatprep.subr.mxu0 0.0
      %2892 = vmatpush2.msra.mxu0 0.0
      %2893 = vmatprep.subr.mxu0 0.0
      %2894 = vmatpush2.msra.mxu0 0.0
      %2895 = vmatprep.subr.mxu0 0.0
      %2896 = vmatpush2.msra.mxu0 0.0
      %2897 = vmatprep.mubr.f32.mxu0 0.0
      %2898 = vmatmul.mubr.f32.gmra.mxu0 %v2827
      %v2899 = vpop.f32.mrf.mxu0
      %v2900 = vadd.f32 0.0, %v2899
      %v2901 = vpop.f32.mrf.mxu0
      %2902 = vdwg.mxu0
      %s2903 = scalar_lea.vmem %s3, 416
      %v2904 = vld [vmem:[%s2903] sm:$0xff]
      %v2905 = vld [vmem:[%s2903 + $0x8] sm:$0xff]
      %v2906 = vld [vmem:[%s2903 + $0x10] sm:$0xff]
      %v2907 = vld [vmem:[%s2903 + $0x18] sm:$0xff]
      %s2908 = scalar_lea.vmem %s3, 544
      %v2909 = vld [vmem:[%s2908] sm:$0xff]
      %v2910 = vld [vmem:[%s2908 + $0x8] sm:$0xff]
      %v2911 = vld [vmem:[%s2908 + $0x10] sm:$0xff]
      %v2912 = vld [vmem:[%s2908 + $0x18] sm:$0xff]
      %s2913 = scalar_lea.vmem %s3, 672
      %v2914 = vld [vmem:[%s2913] sm:$0xff]
      %v2915 = vld [vmem:[%s2913 + $0x8] sm:$0xff]
      %v2916 = vld [vmem:[%s2913 + $0x10] sm:$0xff]
      %v2917 = vld [vmem:[%s2913 + $0x18] sm:$0xff]
      %s2918 = scalar_lea.vmem %s4, 13
      %v2919 = vld [vmem:[%s2918] sm:$0x1]
      %s2920 = scalar_lea.vmem %s4, 17
      %v2921 = vld [vmem:[%s2920] sm:$0x1]
      %s2922 = scalar_lea.vmem %s4, 21
      %v2923 = vld [vmem:[%s2922] sm:$0x1]
      %v2925 = vlaneseq
      %v2926 = vshrl.u32 %v2925, 7
      %v2927 = vsub.s32 0, %v2926
      %v2928 = vrot.slane %v2919, %v2927
      %2930 = vmatprep.subr.mxu0 0.0
      %2931 = vmatpush1.msra.mxu0 0.0
      %2932 = vmatprep.subr.mxu0 0.0
      %2933 = vmatpush1.msra.mxu0 0.0
      %2934 = vmatprep.subr.mxu0 0.0
      %2935 = vmatpush1.msra.mxu0 0.0
      %2936 = vmatprep.subr.mxu0 0.0
      %2937 = vmatpush1.msra.mxu0 0.0
      %2938 = vmatprep.subr.mxu0 0.0
      %2939 = vmatpush1.msra.mxu0 0.0
      %2940 = vmatprep.subr.mxu0 0.0
      %2941 = vmatpush1.msra.mxu0 0.0
      %2942 = vmatprep.subr.mxu0 0.0
      %2943 = vmatpush1.msra.mxu0 0.0
      %2944 = vmatprep.subr.mxu0 0.0
      %2945 = vmatpush1.msra.mxu0 0.0
      %2946 = vmatprep.subr.mxu0 0.0
      %2947 = vmatpush1.msra.mxu0 0.0
      %2948 = vmatprep.subr.mxu0 0.0
      %2949 = vmatpush1.msra.mxu0 0.0
      %2950 = vmatprep.subr.mxu0 0.0
      %2951 = vmatpush1.msra.mxu0 0.0
      %2952 = vmatprep.subr.mxu0 0.0
      %2953 = vmatpush1.msra.mxu0 0.0
      %2954 = vmatprep.subr.mxu0 0.0
      %2955 = vmatpush1.msra.mxu0 %v2907
      %2956 = vmatprep.subr.mxu0 0.0
      %2957 = vmatpush1.msra.mxu0 %v2906
      %2958 = vmatprep.subr.mxu0 0.0
      %2959 = vmatpush1.msra.mxu0 %v2905
      %2960 = vmatprep.subr.mxu0 0.0
      %2961 = vmatpush1.msra.mxu0 %v2904
      %2962 = vmatprep.subr.mxu0 0.0
      %2963 = vmatpush2.msra.mxu0 0.0
      %2964 = vmatprep.subr.mxu0 0.0
      %2965 = vmatpush2.msra.mxu0 0.0
      %2966 = vmatprep.subr.mxu0 0.0
      %2967 = vmatpush2.msra.mxu0 0.0
      %2968 = vmatprep.subr.mxu0 0.0
      %2969 = vmatpush2.msra.mxu0 0.0
      %2970 = vmatprep.subr.mxu0 0.0
      %2971 = vmatpush2.msra.mxu0 0.0
      %2972 = vmatprep.subr.mxu0 0.0
      %2973 = vmatpush2.msra.mxu0 0.0
      %2974 = vmatprep.subr.mxu0 0.0
      %2975 = vmatpush2.msra.mxu0 0.0
      %2976 = vmatprep.subr.mxu0 0.0
      %2977 = vmatpush2.msra.mxu0 0.0
      %2978 = vmatprep.subr.mxu0 0.0
      %2979 = vmatpush2.msra.mxu0 0.0
      %2980 = vmatprep.subr.mxu0 0.0
      %2981 = vmatpush2.msra.mxu0 0.0
      %2982 = vmatprep.subr.mxu0 0.0
      %2983 = vmatpush2.msra.mxu0 0.0
      %2984 = vmatprep.subr.mxu0 0.0
      %2985 = vmatpush2.msra.mxu0 0.0
      %2986 = vmatprep.subr.mxu0 0.0
      %2987 = vmatpush2.msra.mxu0 0.0
      %2988 = vmatprep.subr.mxu0 0.0
      %2989 = vmatpush2.msra.mxu0 0.0
      %2990 = vmatprep.subr.mxu0 0.0
      %2991 = vmatpush2.msra.mxu0 0.0
      %2992 = vmatprep.subr.mxu0 0.0
      %2993 = vmatpush2.msra.mxu0 0.0
      %2994 = vmatprep.mubr.f32.mxu0 0.0
      %2995 = vmatmul.mubr.f32.gmra.mxu0 %v2495
      %v2996 = vpop.f32.mrf.mxu0
      %v2997 = vadd.f32 %v2928, %v2996
      %v2998 = vpop.f32.mrf.mxu0
      %2999 = vdwg.mxu0
      %v3001 = vlaneseq
      %v3002 = vshrl.u32 %v3001, 7
      %v3003 = vsub.s32 0, %v3002
      %v3004 = vrot.slane %v2921, %v3003
      %3006 = vmatprep.subr.mxu0 0.0
      %3007 = vmatpush1.msra.mxu0 0.0
      %3008 = vmatprep.subr.mxu0 0.0
      %3009 = vmatpush1.msra.mxu0 0.0
      %3010 = vmatprep.subr.mxu0 0.0
      %3011 = vmatpush1.msra.mxu0 0.0
      %3012 = vmatprep.subr.mxu0 0.0
      %3013 = vmatpush1.msra.mxu0 0.0
      %3014 = vmatprep.subr.mxu0 0.0
      %3015 = vmatpush1.msra.mxu0 0.0
      %3016 = vmatprep.subr.mxu0 0.0
      %3017 = vmatpush1.msra.mxu0 0.0
      %3018 = vmatprep.subr.mxu0 0.0
      %3019 = vmatpush1.msra.mxu0 0.0
      %3020 = vmatprep.subr.mxu0 0.0
      %3021 = vmatpush1.msra.mxu0 0.0
      %3022 = vmatprep.subr.mxu0 0.0
      %3023 = vmatpush1.msra.mxu0 0.0
      %3024 = vmatprep.subr.mxu0 0.0
      %3025 = vmatpush1.msra.mxu0 0.0
      %3026 = vmatprep.subr.mxu0 0.0
      %3027 = vmatpush1.msra.mxu0 0.0
      %3028 = vmatprep.subr.mxu0 0.0
      %3029 = vmatpush1.msra.mxu0 0.0
      %3030 = vmatprep.subr.mxu0 0.0
      %3031 = vmatpush1.msra.mxu0 %v2912
      %3032 = vmatprep.subr.mxu0 0.0
      %3033 = vmatpush1.msra.mxu0 %v2911
      %3034 = vmatprep.subr.mxu0 0.0
      %3035 = vmatpush1.msra.mxu0 %v2910
      %3036 = vmatprep.subr.mxu0 0.0
      %3037 = vmatpush1.msra.mxu0 %v2909
      %3038 = vmatprep.subr.mxu0 0.0
      %3039 = vmatpush2.msra.mxu0 0.0
      %3040 = vmatprep.subr.mxu0 0.0
      %3041 = vmatpush2.msra.mxu0 0.0
      %3042 = vmatprep.subr.mxu0 0.0
      %3043 = vmatpush2.msra.mxu0 0.0
      %3044 = vmatprep.subr.mxu0 0.0
      %3045 = vmatpush2.msra.mxu0 0.0
      %3046 = vmatprep.subr.mxu0 0.0
      %3047 = vmatpush2.msra.mxu0 0.0
      %3048 = vmatprep.subr.mxu0 0.0
      %3049 = vmatpush2.msra.mxu0 0.0
      %3050 = vmatprep.subr.mxu0 0.0
      %3051 = vmatpush2.msra.mxu0 0.0
      %3052 = vmatprep.subr.mxu0 0.0
      %3053 = vmatpush2.msra.mxu0 0.0
      %3054 = vmatprep.subr.mxu0 0.0
      %3055 = vmatpush2.msra.mxu0 0.0
      %3056 = vmatprep.subr.mxu0 0.0
      %3057 = vmatpush2.msra.mxu0 0.0
      %3058 = vmatprep.subr.mxu0 0.0
      %3059 = vmatpush2.msra.mxu0 0.0
      %3060 = vmatprep.subr.mxu0 0.0
      %3061 = vmatpush2.msra.mxu0 0.0
      %3062 = vmatprep.subr.mxu0 0.0
      %3063 = vmatpush2.msra.mxu0 0.0
      %3064 = vmatprep.subr.mxu0 0.0
      %3065 = vmatpush2.msra.mxu0 0.0
      %3066 = vmatprep.subr.mxu0 0.0
      %3067 = vmatpush2.msra.mxu0 0.0
      %3068 = vmatprep.subr.mxu0 0.0
      %3069 = vmatpush2.msra.mxu0 0.0
      %3070 = vmatprep.mubr.f32.mxu0 0.0
      %3071 = vmatmul.mubr.f32.gmra.mxu0 %v2574
      %v3072 = vpop.f32.mrf.mxu0
      %v3073 = vadd.f32 %v3004, %v3072
      %v3074 = vpop.f32.mrf.mxu0
      %3075 = vmatprep.mubr.f32.mxu0 0.0
      %3076 = vmatmul.mubr.f32.gmra.mxu0 %v2577
      %v3077 = vpop.f32.mrf.mxu0
      %v3078 = vadd.f32 %v3004, %v3077
      %v3079 = vpop.f32.mrf.mxu0
      %3080 = vdwg.mxu0
      %v3082 = vlaneseq
      %v3083 = vshrl.u32 %v3082, 7
      %v3084 = vsub.s32 0, %v3083
      %v3085 = vrot.slane %v2923, %v3084
      %3087 = vmatprep.subr.mxu0 0.0
      %3088 = vmatpush1.msra.mxu0 0.0
      %3089 = vmatprep.subr.mxu0 0.0
      %3090 = vmatpush1.msra.mxu0 0.0
      %3091 = vmatprep.subr.mxu0 0.0
      %3092 = vmatpush1.msra.mxu0 0.0
      %3093 = vmatprep.subr.mxu0 0.0
      %3094 = vmatpush1.msra.mxu0 0.0
      %3095 = vmatprep.subr.mxu0 0.0
      %3096 = vmatpush1.msra.mxu0 0.0
      %3097 = vmatprep.subr.mxu0 0.0
      %3098 = vmatpush1.msra.mxu0 0.0
      %3099 = vmatprep.subr.mxu0 0.0
      %3100 = vmatpush1.msra.mxu0 0.0
      %3101 = vmatprep.subr.mxu0 0.0
      %3102 = vmatpush1.msra.mxu0 0.0
      %3103 = vmatprep.subr.mxu0 0.0
      %3104 = vmatpush1.msra.mxu0 0.0
      %3105 = vmatprep.subr.mxu0 0.0
      %3106 = vmatpush1.msra.mxu0 0.0
      %3107 = vmatprep.subr.mxu0 0.0
      %3108 = vmatpush1.msra.mxu0 0.0
      %3109 = vmatprep.subr.mxu0 0.0
      %3110 = vmatpush1.msra.mxu0 0.0
      %3111 = vmatprep.subr.mxu0 0.0
      %3112 = vmatpush1.msra.mxu0 %v2917
      %3113 = vmatprep.subr.mxu0 0.0
      %3114 = vmatpush1.msra.mxu0 %v2916
      %3115 = vmatprep.subr.mxu0 0.0
      %3116 = vmatpush1.msra.mxu0 %v2915
      %3117 = vmatprep.subr.mxu0 0.0
      %3118 = vmatpush1.msra.mxu0 %v2914
      %3119 = vmatprep.subr.mxu0 0.0
      %3120 = vmatpush2.msra.mxu0 0.0
      %3121 = vmatprep.subr.mxu0 0.0
      %3122 = vmatpush2.msra.mxu0 0.0
      %3123 = vmatprep.subr.mxu0 0.0
      %3124 = vmatpush2.msra.mxu0 0.0
      %3125 = vmatprep.subr.mxu0 0.0
      %3126 = vmatpush2.msra.mxu0 0.0
      %3127 = vmatprep.subr.mxu0 0.0
      %3128 = vmatpush2.msra.mxu0 0.0
      %3129 = vmatprep.subr.mxu0 0.0
      %3130 = vmatpush2.msra.mxu0 0.0
      %3131 = vmatprep.subr.mxu0 0.0
      %3132 = vmatpush2.msra.mxu0 0.0
      %3133 = vmatprep.subr.mxu0 0.0
      %3134 = vmatpush2.msra.mxu0 0.0
      %3135 = vmatprep.subr.mxu0 0.0
      %3136 = vmatpush2.msra.mxu0 0.0
      %3137 = vmatprep.subr.mxu0 0.0
      %3138 = vmatpush2.msra.mxu0 0.0
      %3139 = vmatprep.subr.mxu0 0.0
      %3140 = vmatpush2.msra.mxu0 0.0
      %3141 = vmatprep.subr.mxu0 0.0
      %3142 = vmatpush2.msra.mxu0 0.0
      %3143 = vmatprep.subr.mxu0 0.0
      %3144 = vmatpush2.msra.mxu0 0.0
      %3145 = vmatprep.subr.mxu0 0.0
      %3146 = vmatpush2.msra.mxu0 0.0
      %3147 = vmatprep.subr.mxu0 0.0
      %3148 = vmatpush2.msra.mxu0 0.0
      %3149 = vmatprep.subr.mxu0 0.0
      %3150 = vmatpush2.msra.mxu0 0.0
      %3151 = vmatprep.mubr.f32.mxu0 0.0
      %3152 = vmatmul.mubr.f32.gmra.mxu0 %v2574
      %v3153 = vpop.f32.mrf.mxu0
      %v3154 = vadd.f32 %v3085, %v3153
      %v3155 = vpop.f32.mrf.mxu0
      %3156 = vmatprep.mubr.f32.mxu0 0.0
      %3157 = vmatmul.mubr.f32.gmra.mxu0 %v2577
      %v3158 = vpop.f32.mrf.mxu0
      %v3159 = vadd.f32 %v3085, %v3158
      %v3160 = vpop.f32.mrf.mxu0
      %3161 = vdwg.mxu0
      %v3163 = vsel %vm688, %v2997, 0
      %v3166 = vsel %vm688, %v3073, 0
      %v3169 = vsel %vm688, %v3078, 0
      %3171 = vmatprep.subr.mxu0 0.0
      %3172 = vmatpush1.xpose.msra.mxu0 0.0
      %3173 = vmatprep.subr.mxu0 0.0
      %3174 = vmatpush1.xpose.msra.mxu0 0.0
      %3175 = vmatprep.subr.mxu0 0.0
      %3176 = vmatpush1.xpose.msra.mxu0 0.0
      %3177 = vmatprep.subr.mxu0 0.0
      %3178 = vmatpush1.xpose.msra.mxu0 0.0
      %3179 = vmatprep.subr.mxu0 0.0
      %3180 = vmatpush1.xpose.msra.mxu0 0.0
      %3181 = vmatprep.subr.mxu0 0.0
      %3182 = vmatpush1.xpose.msra.mxu0 0.0
      %3183 = vmatprep.subr.mxu0 0.0
      %3184 = vmatpush1.xpose.msra.mxu0 0.0
      %3185 = vmatprep.subr.mxu0 0.0
      %3186 = vmatpush1.xpose.msra.mxu0 0.0
      %3187 = vmatprep.subr.mxu0 0.0
      %3188 = vmatpush1.xpose.msra.mxu0 0.0
      %3189 = vmatprep.subr.mxu0 0.0
      %3190 = vmatpush1.xpose.msra.mxu0 0.0
      %3191 = vmatprep.subr.mxu0 0.0
      %3192 = vmatpush1.xpose.msra.mxu0 0.0
      %3193 = vmatprep.subr.mxu0 0.0
      %3194 = vmatpush1.xpose.msra.mxu0 0.0
      %3195 = vmatprep.subr.mxu0 0.0
      %3196 = vmatpush1.xpose.msra.mxu0 0.0
      %3197 = vmatprep.subr.mxu0 0.0
      %3198 = vmatpush1.xpose.msra.mxu0 0.0
      %3199 = vmatprep.subr.mxu0 0.0
      %3200 = vmatpush1.xpose.msra.mxu0 %v3169
      %3201 = vmatprep.subr.mxu0 0.0
      %3202 = vmatpush1.xpose.msra.mxu0 %v3166
      %3203 = vmatprep.subr.mxu0 0.0
      %3204 = vmatpush2.xpose.msra.mxu0 0.0
      %3205 = vmatprep.subr.mxu0 0.0
      %3206 = vmatpush2.xpose.msra.mxu0 0.0
      %3207 = vmatprep.subr.mxu0 0.0
      %3208 = vmatpush2.xpose.msra.mxu0 0.0
      %3209 = vmatprep.subr.mxu0 0.0
      %3210 = vmatpush2.xpose.msra.mxu0 0.0
      %3211 = vmatprep.subr.mxu0 0.0
      %3212 = vmatpush2.xpose.msra.mxu0 0.0
      %3213 = vmatprep.subr.mxu0 0.0
      %3214 = vmatpush2.xpose.msra.mxu0 0.0
      %3215 = vmatprep.subr.mxu0 0.0
      %3216 = vmatpush2.xpose.msra.mxu0 0.0
      %3217 = vmatprep.subr.mxu0 0.0
      %3218 = vmatpush2.xpose.msra.mxu0 0.0
      %3219 = vmatprep.subr.mxu0 0.0
      %3220 = vmatpush2.xpose.msra.mxu0 0.0
      %3221 = vmatprep.subr.mxu0 0.0
      %3222 = vmatpush2.xpose.msra.mxu0 0.0
      %3223 = vmatprep.subr.mxu0 0.0
      %3224 = vmatpush2.xpose.msra.mxu0 0.0
      %3225 = vmatprep.subr.mxu0 0.0
      %3226 = vmatpush2.xpose.msra.mxu0 0.0
      %3227 = vmatprep.subr.mxu0 0.0
      %3228 = vmatpush2.xpose.msra.mxu0 0.0
      %3229 = vmatprep.subr.mxu0 0.0
      %3230 = vmatpush2.xpose.msra.mxu0 0.0
      %3231 = vmatprep.subr.mxu0 0.0
      %3232 = vmatpush2.xpose.msra.mxu0 0.0
      %3233 = vmatprep.subr.mxu0 0.0
      %3234 = vmatpush2.xpose.msra.mxu0 0.0
      %3235 = vmatprep.mubr.f32.mxu0 0.0
      %3236 = vmatmul.mubr.f32.gmra.mxu0 %v3163
      %v3237 = vpop.f32.mrf.mxu0
      %v3238 = vadd.f32 0.0, %v3237
      %v3239 = vpop.f32.mrf.mxu0
      %3240 = vdwg.mxu0
      %v3241 = vsel %vm2814, %v3238, -inf
      %3242 = vmax.xlane.f32.xlu0 %v3241
      %v3243 = vpop.xlane.xlu0 %3242
      %v3244 = vsub.f32 %v3238, %v3243
      %v3245 = vmul.f32 %v3244, 1.442695
      %v3246 = vpow.pop %v3245
      %v3247 = vsel %vm2814, %v3246, 0.0
      %3248 = vadd.xlane.f32.xlu0 %v3247
      %v3249 = vpop.xlane.xlu0 %3248
      %v3250 = vrcp.pop %v3249
      %v3251 = vmul.f32 %v3246, %v3250
      %v3253 = vsel %vm2814, %v3251, 0
      %v3256 = vsel %vm2829, %v3159, 0
      %3258 = vmatprep.subr.mxu0 0.0
      %3259 = vmatpush1.msra.mxu0 0.0
      %3260 = vmatprep.subr.mxu0 0.0
      %3261 = vmatpush1.msra.mxu0 0.0
      %3262 = vmatprep.subr.mxu0 0.0
      %3263 = vmatpush1.msra.mxu0 0.0
      %3264 = vmatprep.subr.mxu0 0.0
      %3265 = vmatpush1.msra.mxu0 0.0
      %3266 = vmatprep.subr.mxu0 0.0
      %3267 = vmatpush1.msra.mxu0 0.0
      %3268 = vmatprep.subr.mxu0 0.0
      %3269 = vmatpush1.msra.mxu0 0.0
      %3270 = vmatprep.subr.mxu0 0.0
      %3271 = vmatpush1.msra.mxu0 0.0
      %3272 = vmatprep.subr.mxu0 0.0
      %3273 = vmatpush1.msra.mxu0 0.0
      %3274 = vmatprep.subr.mxu0 0.0
      %3275 = vmatpush1.msra.mxu0 0.0
      %3276 = vmatprep.subr.mxu0 0.0
      %3277 = vmatpush1.msra.mxu0 0.0
      %3278 = vmatprep.subr.mxu0 0.0
      %3279 = vmatpush1.msra.mxu0 0.0
      %3280 = vmatprep.subr.mxu0 0.0
      %3281 = vmatpush1.msra.mxu0 0.0
      %3282 = vmatprep.subr.mxu0 0.0
      %3283 = vmatpush1.msra.mxu0 0.0
      %3284 = vmatprep.subr.mxu0 0.0
      %3285 = vmatpush1.msra.mxu0 0.0
      %3286 = vmatprep.subr.mxu0 0.0
      %3287 = vmatpush1.msra.mxu0 %v3256
      %3288 = vmatprep.subr.mxu0 0.0
      %3289 = vmatpush1.msra.mxu0 %v3154
      %3290 = vmatprep.subr.mxu0 0.0
      %3291 = vmatpush2.msra.mxu0 0.0
      %3292 = vmatprep.subr.mxu0 0.0
      %3293 = vmatpush2.msra.mxu0 0.0
      %3294 = vmatprep.subr.mxu0 0.0
      %3295 = vmatpush2.msra.mxu0 0.0
      %3296 = vmatprep.subr.mxu0 0.0
      %3297 = vmatpush2.msra.mxu0 0.0
      %3298 = vmatprep.subr.mxu0 0.0
      %3299 = vmatpush2.msra.mxu0 0.0
      %3300 = vmatprep.subr.mxu0 0.0
      %3301 = vmatpush2.msra.mxu0 0.0
      %3302 = vmatprep.subr.mxu0 0.0
      %3303 = vmatpush2.msra.mxu0 0.0
      %3304 = vmatprep.subr.mxu0 0.0
      %3305 = vmatpush2.msra.mxu0 0.0
      %3306 = vmatprep.subr.mxu0 0.0
      %3307 = vmatpush2.msra.mxu0 0.0
      %3308 = vmatprep.subr.mxu0 0.0
      %3309 = vmatpush2.msra.mxu0 0.0
      %3310 = vmatprep.subr.mxu0 0.0
      %3311 = vmatpush2.msra.mxu0 0.0
      %3312 = vmatprep.subr.mxu0 0.0
      %3313 = vmatpush2.msra.mxu0 0.0
      %3314 = vmatprep.subr.mxu0 0.0
      %3315 = vmatpush2.msra.mxu0 0.0
      %3316 = vmatprep.subr.mxu0 0.0
      %3317 = vmatpush2.msra.mxu0 0.0
      %3318 = vmatprep.subr.mxu0 0.0
      %3319 = vmatpush2.msra.mxu0 0.0
      %3320 = vmatprep.subr.mxu0 0.0
      %3321 = vmatpush2.msra.mxu0 0.0
      %3322 = vmatprep.mubr.f32.mxu0 0.0
      %3323 = vmatmul.mubr.f32.gmra.mxu0 %v3253
      %v3324 = vpop.f32.mrf.mxu0
      %v3325 = vadd.f32 0.0, %v3324
      %v3326 = vpop.f32.mrf.mxu0
      %3327 = vdwg.mxu0
      %v3329 = vsel %vm688, %v3325, 0
      %3331 = vmatprep.subr.mxu0 0.0
      %3332 = vmatpush1.msra.mxu0 0.0
      %3333 = vmatprep.subr.mxu0 0.0
      %3334 = vmatpush1.msra.mxu0 0.0
      %3335 = vmatprep.subr.mxu0 0.0
      %3336 = vmatpush1.msra.mxu0 0.0
      %3337 = vmatprep.subr.mxu0 0.0
      %3338 = vmatpush1.msra.mxu0 0.0
      %3339 = vmatprep.subr.mxu0 0.0
      %3340 = vmatpush1.msra.mxu0 0.0
      %3341 = vmatprep.subr.mxu0 0.0
      %3342 = vmatpush1.msra.mxu0 0.0
      %3343 = vmatprep.subr.mxu0 0.0
      %3344 = vmatpush1.msra.mxu0 0.0
      %3345 = vmatprep.subr.mxu0 0.0
      %3346 = vmatpush1.msra.mxu0 0.0
      %3347 = vmatprep.subr.mxu0 0.0
      %3348 = vmatpush1.msra.mxu0 0.0
      %3349 = vmatprep.subr.mxu0 0.0
      %3350 = vmatpush1.msra.mxu0 0.0
      %3351 = vmatprep.subr.mxu0 0.0
      %3352 = vmatpush1.msra.mxu0 0.0
      %3353 = vmatprep.subr.mxu0 0.0
      %3354 = vmatpush1.msra.mxu0 0.0
      %3355 = vmatprep.subr.mxu0 0.0
      %3356 = vmatpush1.msra.mxu0 0.0
      %3357 = vmatprep.subr.mxu0 0.0
      %3358 = vmatpush1.msra.mxu0 0.0
      %3359 = vmatprep.subr.mxu0 0.0
      %3360 = vmatpush1.msra.mxu0 0.0
      %3361 = vmatprep.subr.mxu0 0.0
      %3362 = vmatpush1.msra.mxu0 %v2464
      %3363 = vmatprep.subr.mxu0 0.0
      %3364 = vmatpush2.msra.mxu0 0.0
      %3365 = vmatprep.subr.mxu0 0.0
      %3366 = vmatpush2.msra.mxu0 0.0
      %3367 = vmatprep.subr.mxu0 0.0
      %3368 = vmatpush2.msra.mxu0 0.0
      %3369 = vmatprep.subr.mxu0 0.0
      %3370 = vmatpush2.msra.mxu0 0.0
      %3371 = vmatprep.subr.mxu0 0.0
      %3372 = vmatpush2.msra.mxu0 0.0
      %3373 = vmatprep.subr.mxu0 0.0
      %3374 = vmatpush2.msra.mxu0 0.0
      %3375 = vmatprep.subr.mxu0 0.0
      %3376 = vmatpush2.msra.mxu0 0.0
      %3377 = vmatprep.subr.mxu0 0.0
      %3378 = vmatpush2.msra.mxu0 0.0
      %3379 = vmatprep.subr.mxu0 0.0
      %3380 = vmatpush2.msra.mxu0 0.0
      %3381 = vmatprep.subr.mxu0 0.0
      %3382 = vmatpush2.msra.mxu0 0.0
      %3383 = vmatprep.subr.mxu0 0.0
      %3384 = vmatpush2.msra.mxu0 0.0
      %3385 = vmatprep.subr.mxu0 0.0
      %3386 = vmatpush2.msra.mxu0 0.0
      %3387 = vmatprep.subr.mxu0 0.0
      %3388 = vmatpush2.msra.mxu0 0.0
      %3389 = vmatprep.subr.mxu0 0.0
      %3390 = vmatpush2.msra.mxu0 0.0
      %3391 = vmatprep.subr.mxu0 0.0
      %3392 = vmatpush2.msra.mxu0 0.0
      %3393 = vmatprep.subr.mxu0 0.0
      %3394 = vmatpush2.msra.mxu0 0.0
      %3395 = vmatprep.mubr.f32.mxu0 0.0
      %3396 = vmatmul.mubr.f32.gmra.mxu0 %v3329
      %v3397 = vpop.f32.mrf.mxu0
      %v3398 = vadd.f32 0.0, %v3397
      %v3399 = vpop.f32.mrf.mxu0
      %3400 = vdwg.mxu0
      %v3402 = vsel %vm688, %v2900, 0
      %3404 = vmatprep.subr.mxu0 0.0
      %3405 = vmatpush1.msra.mxu0 0.0
      %3406 = vmatprep.subr.mxu0 0.0
      %3407 = vmatpush1.msra.mxu0 0.0
      %3408 = vmatprep.subr.mxu0 0.0
      %3409 = vmatpush1.msra.mxu0 0.0
      %3410 = vmatprep.subr.mxu0 0.0
      %3411 = vmatpush1.msra.mxu0 0.0
      %3412 = vmatprep.subr.mxu0 0.0
      %3413 = vmatpush1.msra.mxu0 0.0
      %3414 = vmatprep.subr.mxu0 0.0
      %3415 = vmatpush1.msra.mxu0 0.0
      %3416 = vmatprep.subr.mxu0 0.0
      %3417 = vmatpush1.msra.mxu0 0.0
      %3418 = vmatprep.subr.mxu0 0.0
      %3419 = vmatpush1.msra.mxu0 0.0
      %3420 = vmatprep.subr.mxu0 0.0
      %3421 = vmatpush1.msra.mxu0 0.0
      %3422 = vmatprep.subr.mxu0 0.0
      %3423 = vmatpush1.msra.mxu0 0.0
      %3424 = vmatprep.subr.mxu0 0.0
      %3425 = vmatpush1.msra.mxu0 0.0
      %3426 = vmatprep.subr.mxu0 0.0
      %3427 = vmatpush1.msra.mxu0 0.0
      %3428 = vmatprep.subr.mxu0 0.0
      %3429 = vmatpush1.msra.mxu0 0.0
      %3430 = vmatprep.subr.mxu0 0.0
      %3431 = vmatpush1.msra.mxu0 0.0
      %3432 = vmatprep.subr.mxu0 0.0
      %3433 = vmatpush1.msra.mxu0 0.0
      %3434 = vmatprep.subr.mxu0 0.0
      %3435 = vmatpush1.msra.mxu0 %v2463
      %3436 = vmatprep.subr.mxu0 0.0
      %3437 = vmatpush2.msra.mxu0 0.0
      %3438 = vmatprep.subr.mxu0 0.0
      %3439 = vmatpush2.msra.mxu0 0.0
      %3440 = vmatprep.subr.mxu0 0.0
      %3441 = vmatpush2.msra.mxu0 0.0
      %3442 = vmatprep.subr.mxu0 0.0
      %3443 = vmatpush2.msra.mxu0 0.0
      %3444 = vmatprep.subr.mxu0 0.0
      %3445 = vmatpush2.msra.mxu0 0.0
      %3446 = vmatprep.subr.mxu0 0.0
      %3447 = vmatpush2.msra.mxu0 0.0
      %3448 = vmatprep.subr.mxu0 0.0
      %3449 = vmatpush2.msra.mxu0 0.0
      %3450 = vmatprep.subr.mxu0 0.0
      %3451 = vmatpush2.msra.mxu0 0.0
      %3452 = vmatprep.subr.mxu0 0.0
      %3453 = vmatpush2.msra.mxu0 0.0
      %3454 = vmatprep.subr.mxu0 0.0
      %3455 = vmatpush2.msra.mxu0 0.0
      %3456 = vmatprep.subr.mxu0 0.0
      %3457 = vmatpush2.msra.mxu0 0.0
      %3458 = vmatprep.subr.mxu0 0.0
      %3459 = vmatpush2.msra.mxu0 0.0
      %3460 = vmatprep.subr.mxu0 0.0
      %3461 = vmatpush2.msra.mxu0 0.0
      %3462 = vmatprep.subr.mxu0 0.0
      %3463 = vmatpush2.msra.mxu0 0.0
      %3464 = vmatprep.subr.mxu0 0.0
      %3465 = vmatpush2.msra.mxu0 0.0
      %3466 = vmatprep.subr.mxu0 0.0
      %3467 = vmatpush2.msra.mxu0 0.0
      %3468 = vmatprep.mubr.f32.mxu0 0.0
      %3469 = vmatmul.mubr.f32.gmra.mxu0 %v3402
      %v3470 = vpop.f32.mrf.mxu0
      %v3471 = vadd.f32 %v3398, %v3470
      %v3472 = vpop.f32.mrf.mxu0
      %3473 = vdwg.mxu0
      %s3474 = scalar_lea.vmem %s3, 448
      %v3475 = vld [vmem:[%s3474] sm:$0xff]
      %v3476 = vld [vmem:[%s3474 + $0x8] sm:$0xff]
      %v3477 = vld [vmem:[%s3474 + $0x10] sm:$0xff]
      %v3478 = vld [vmem:[%s3474 + $0x18] sm:$0xff]
      %s3479 = scalar_lea.vmem %s3, 576
      %v3480 = vld [vmem:[%s3479] sm:$0xff]
      %v3481 = vld [vmem:[%s3479 + $0x8] sm:$0xff]
      %v3482 = vld [vmem:[%s3479 + $0x10] sm:$0xff]
      %v3483 = vld [vmem:[%s3479 + $0x18] sm:$0xff]
      %s3484 = scalar_lea.vmem %s3, 704
      %v3485 = vld [vmem:[%s3484] sm:$0xff]
      %v3486 = vld [vmem:[%s3484 + $0x8] sm:$0xff]
      %v3487 = vld [vmem:[%s3484 + $0x10] sm:$0xff]
      %v3488 = vld [vmem:[%s3484 + $0x18] sm:$0xff]
      %s3489 = scalar_lea.vmem %s4, 14
      %v3490 = vld [vmem:[%s3489] sm:$0x1]
      %s3491 = scalar_lea.vmem %s4, 18
      %v3492 = vld [vmem:[%s3491] sm:$0x1]
      %s3493 = scalar_lea.vmem %s4, 22
      %v3494 = vld [vmem:[%s3493] sm:$0x1]
      %v3496 = vlaneseq
      %v3497 = vshrl.u32 %v3496, 7
      %v3498 = vsub.s32 0, %v3497
      %v3499 = vrot.slane %v3490, %v3498
      %3501 = vmatprep.subr.mxu0 0.0
      %3502 = vmatpush1.msra.mxu0 0.0
      %3503 = vmatprep.subr.mxu0 0.0
      %3504 = vmatpush1.msra.mxu0 0.0
      %3505 = vmatprep.subr.mxu0 0.0
      %3506 = vmatpush1.msra.mxu0 0.0
      %3507 = vmatprep.subr.mxu0 0.0
      %3508 = vmatpush1.msra.mxu0 0.0
      %3509 = vmatprep.subr.mxu0 0.0
      %3510 = vmatpush1.msra.mxu0 0.0
      %3511 = vmatprep.subr.mxu0 0.0
      %3512 = vmatpush1.msra.mxu0 0.0
      %3513 = vmatprep.subr.mxu0 0.0
      %3514 = vmatpush1.msra.mxu0 0.0
      %3515 = vmatprep.subr.mxu0 0.0
      %3516 = vmatpush1.msra.mxu0 0.0
      %3517 = vmatprep.subr.mxu0 0.0
      %3518 = vmatpush1.msra.mxu0 0.0
      %3519 = vmatprep.subr.mxu0 0.0
      %3520 = vmatpush1.msra.mxu0 0.0
      %3521 = vmatprep.subr.mxu0 0.0
      %3522 = vmatpush1.msra.mxu0 0.0
      %3523 = vmatprep.subr.mxu0 0.0
      %3524 = vmatpush1.msra.mxu0 0.0
      %3525 = vmatprep.subr.mxu0 0.0
      %3526 = vmatpush1.msra.mxu0 %v3478
      %3527 = vmatprep.subr.mxu0 0.0
      %3528 = vmatpush1.msra.mxu0 %v3477
      %3529 = vmatprep.subr.mxu0 0.0
      %3530 = vmatpush1.msra.mxu0 %v3476
      %3531 = vmatprep.subr.mxu0 0.0
      %3532 = vmatpush1.msra.mxu0 %v3475
      %3533 = vmatprep.subr.mxu0 0.0
      %3534 = vmatpush2.msra.mxu0 0.0
      %3535 = vmatprep.subr.mxu0 0.0
      %3536 = vmatpush2.msra.mxu0 0.0
      %3537 = vmatprep.subr.mxu0 0.0
      %3538 = vmatpush2.msra.mxu0 0.0
      %3539 = vmatprep.subr.mxu0 0.0
      %3540 = vmatpush2.msra.mxu0 0.0
      %3541 = vmatprep.subr.mxu0 0.0
      %3542 = vmatpush2.msra.mxu0 0.0
      %3543 = vmatprep.subr.mxu0 0.0
      %3544 = vmatpush2.msra.mxu0 0.0
      %3545 = vmatprep.subr.mxu0 0.0
      %3546 = vmatpush2.msra.mxu0 0.0
      %3547 = vmatprep.subr.mxu0 0.0
      %3548 = vmatpush2.msra.mxu0 0.0
      %3549 = vmatprep.subr.mxu0 0.0
      %3550 = vmatpush2.msra.mxu0 0.0
      %3551 = vmatprep.subr.mxu0 0.0
      %3552 = vmatpush2.msra.mxu0 0.0
      %3553 = vmatprep.subr.mxu0 0.0
      %3554 = vmatpush2.msra.mxu0 0.0
      %3555 = vmatprep.subr.mxu0 0.0
      %3556 = vmatpush2.msra.mxu0 0.0
      %3557 = vmatprep.subr.mxu0 0.0
      %3558 = vmatpush2.msra.mxu0 0.0
      %3559 = vmatprep.subr.mxu0 0.0
      %3560 = vmatpush2.msra.mxu0 0.0
      %3561 = vmatprep.subr.mxu0 0.0
      %3562 = vmatpush2.msra.mxu0 0.0
      %3563 = vmatprep.subr.mxu0 0.0
      %3564 = vmatpush2.msra.mxu0 0.0
      %3565 = vmatprep.mubr.f32.mxu0 0.0
      %3566 = vmatmul.mubr.f32.gmra.mxu0 %v2495
      %v3567 = vpop.f32.mrf.mxu0
      %v3568 = vadd.f32 %v3499, %v3567
      %v3569 = vpop.f32.mrf.mxu0
      %3570 = vdwg.mxu0
      %v3572 = vlaneseq
      %v3573 = vshrl.u32 %v3572, 7
      %v3574 = vsub.s32 0, %v3573
      %v3575 = vrot.slane %v3492, %v3574
      %3577 = vmatprep.subr.mxu0 0.0
      %3578 = vmatpush1.msra.mxu0 0.0
      %3579 = vmatprep.subr.mxu0 0.0
      %3580 = vmatpush1.msra.mxu0 0.0
      %3581 = vmatprep.subr.mxu0 0.0
      %3582 = vmatpush1.msra.mxu0 0.0
      %3583 = vmatprep.subr.mxu0 0.0
      %3584 = vmatpush1.msra.mxu0 0.0
      %3585 = vmatprep.subr.mxu0 0.0
      %3586 = vmatpush1.msra.mxu0 0.0
      %3587 = vmatprep.subr.mxu0 0.0
      %3588 = vmatpush1.msra.mxu0 0.0
      %3589 = vmatprep.subr.mxu0 0.0
      %3590 = vmatpush1.msra.mxu0 0.0
      %3591 = vmatprep.subr.mxu0 0.0
      %3592 = vmatpush1.msra.mxu0 0.0
      %3593 = vmatprep.subr.mxu0 0.0
      %3594 = vmatpush1.msra.mxu0 0.0
      %3595 = vmatprep.subr.mxu0 0.0
      %3596 = vmatpush1.msra.mxu0 0.0
      %3597 = vmatprep.subr.mxu0 0.0
      %3598 = vmatpush1.msra.mxu0 0.0
      %3599 = vmatprep.subr.mxu0 0.0
      %3600 = vmatpush1.msra.mxu0 0.0
      %3601 = vmatprep.subr.mxu0 0.0
      %3602 = vmatpush1.msra.mxu0 %v3483
      %3603 = vmatprep.subr.mxu0 0.0
      %3604 = vmatpush1.msra.mxu0 %v3482
      %3605 = vmatprep.subr.mxu0 0.0
      %3606 = vmatpush1.msra.mxu0 %v3481
      %3607 = vmatprep.subr.mxu0 0.0
      %3608 = vmatpush1.msra.mxu0 %v3480
      %3609 = vmatprep.subr.mxu0 0.0
      %3610 = vmatpush2.msra.mxu0 0.0
      %3611 = vmatprep.subr.mxu0 0.0
      %3612 = vmatpush2.msra.mxu0 0.0
      %3613 = vmatprep.subr.mxu0 0.0
      %3614 = vmatpush2.msra.mxu0 0.0
      %3615 = vmatprep.subr.mxu0 0.0
      %3616 = vmatpush2.msra.mxu0 0.0
      %3617 = vmatprep.subr.mxu0 0.0
      %3618 = vmatpush2.msra.mxu0 0.0
      %3619 = vmatprep.subr.mxu0 0.0
      %3620 = vmatpush2.msra.mxu0 0.0
      %3621 = vmatprep.subr.mxu0 0.0
      %3622 = vmatpush2.msra.mxu0 0.0
      %3623 = vmatprep.subr.mxu0 0.0
      %3624 = vmatpush2.msra.mxu0 0.0
      %3625 = vmatprep.subr.mxu0 0.0
      %3626 = vmatpush2.msra.mxu0 0.0
      %3627 = vmatprep.subr.mxu0 0.0
      %3628 = vmatpush2.msra.mxu0 0.0
      %3629 = vmatprep.subr.mxu0 0.0
      %3630 = vmatpush2.msra.mxu0 0.0
      %3631 = vmatprep.subr.mxu0 0.0
      %3632 = vmatpush2.msra.mxu0 0.0
      %3633 = vmatprep.subr.mxu0 0.0
      %3634 = vmatpush2.msra.mxu0 0.0
      %3635 = vmatprep.subr.mxu0 0.0
      %3636 = vmatpush2.msra.mxu0 0.0
      %3637 = vmatprep.subr.mxu0 0.0
      %3638 = vmatpush2.msra.mxu0 0.0
      %3639 = vmatprep.subr.mxu0 0.0
      %3640 = vmatpush2.msra.mxu0 0.0
      %3641 = vmatprep.mubr.f32.mxu0 0.0
      %3642 = vmatmul.mubr.f32.gmra.mxu0 %v2574
      %v3643 = vpop.f32.mrf.mxu0
      %v3644 = vadd.f32 %v3575, %v3643
      %v3645 = vpop.f32.mrf.mxu0
      %3646 = vmatprep.mubr.f32.mxu0 0.0
      %3647 = vmatmul.mubr.f32.gmra.mxu0 %v2577
      %v3648 = vpop.f32.mrf.mxu0
      %v3649 = vadd.f32 %v3575, %v3648
      %v3650 = vpop.f32.mrf.mxu0
      %3651 = vdwg.mxu0
      %v3653 = vlaneseq
      %v3654 = vshrl.u32 %v3653, 7
      %v3655 = vsub.s32 0, %v3654
      %v3656 = vrot.slane %v3494, %v3655
      %3658 = vmatprep.subr.mxu0 0.0
      %3659 = vmatpush1.msra.mxu0 0.0
      %3660 = vmatprep.subr.mxu0 0.0
      %3661 = vmatpush1.msra.mxu0 0.0
      %3662 = vmatprep.subr.mxu0 0.0
      %3663 = vmatpush1.msra.mxu0 0.0
      %3664 = vmatprep.subr.mxu0 0.0
      %3665 = vmatpush1.msra.mxu0 0.0
      %3666 = vmatprep.subr.mxu0 0.0
      %3667 = vmatpush1.msra.mxu0 0.0
      %3668 = vmatprep.subr.mxu0 0.0
      %3669 = vmatpush1.msra.mxu0 0.0
      %3670 = vmatprep.subr.mxu0 0.0
      %3671 = vmatpush1.msra.mxu0 0.0
      %3672 = vmatprep.subr.mxu0 0.0
      %3673 = vmatpush1.msra.mxu0 0.0
      %3674 = vmatprep.subr.mxu0 0.0
      %3675 = vmatpush1.msra.mxu0 0.0
      %3676 = vmatprep.subr.mxu0 0.0
      %3677 = vmatpush1.msra.mxu0 0.0
      %3678 = vmatprep.subr.mxu0 0.0
      %3679 = vmatpush1.msra.mxu0 0.0
      %3680 = vmatprep.subr.mxu0 0.0
      %3681 = vmatpush1.msra.mxu0 0.0
      %3682 = vmatprep.subr.mxu0 0.0
      %3683 = vmatpush1.msra.mxu0 %v3488
      %3684 = vmatprep.subr.mxu0 0.0
      %3685 = vmatpush1.msra.mxu0 %v3487
      %3686 = vmatprep.subr.mxu0 0.0
      %3687 = vmatpush1.msra.mxu0 %v3486
      %3688 = vmatprep.subr.mxu0 0.0
      %3689 = vmatpush1.msra.mxu0 %v3485
      %3690 = vmatprep.subr.mxu0 0.0
      %3691 = vmatpush2.msra.mxu0 0.0
      %3692 = vmatprep.subr.mxu0 0.0
      %3693 = vmatpush2.msra.mxu0 0.0
      %3694 = vmatprep.subr.mxu0 0.0
      %3695 = vmatpush2.msra.mxu0 0.0
      %3696 = vmatprep.subr.mxu0 0.0
      %3697 = vmatpush2.msra.mxu0 0.0
      %3698 = vmatprep.subr.mxu0 0.0
      %3699 = vmatpush2.msra.mxu0 0.0
      %3700 = vmatprep.subr.mxu0 0.0
      %3701 = vmatpush2.msra.mxu0 0.0
      %3702 = vmatprep.subr.mxu0 0.0
      %3703 = vmatpush2.msra.mxu0 0.0
      %3704 = vmatprep.subr.mxu0 0.0
      %3705 = vmatpush2.msra.mxu0 0.0
      %3706 = vmatprep.subr.mxu0 0.0
      %3707 = vmatpush2.msra.mxu0 0.0
      %3708 = vmatprep.subr.mxu0 0.0
      %3709 = vmatpush2.msra.mxu0 0.0
      %3710 = vmatprep.subr.mxu0 0.0
      %3711 = vmatpush2.msra.mxu0 0.0
      %3712 = vmatprep.subr.mxu0 0.0
      %3713 = vmatpush2.msra.mxu0 0.0
      %3714 = vmatprep.subr.mxu0 0.0
      %3715 = vmatpush2.msra.mxu0 0.0
      %3716 = vmatprep.subr.mxu0 0.0
      %3717 = vmatpush2.msra.mxu0 0.0
      %3718 = vmatprep.subr.mxu0 0.0
      %3719 = vmatpush2.msra.mxu0 0.0
      %3720 = vmatprep.subr.mxu0 0.0
      %3721 = vmatpush2.msra.mxu0 0.0
      %3722 = vmatprep.mubr.f32.mxu0 0.0
      %3723 = vmatmul.mubr.f32.gmra.mxu0 %v2574
      %v3724 = vpop.f32.mrf.mxu0
      %v3725 = vadd.f32 %v3656, %v3724
      %v3726 = vpop.f32.mrf.mxu0
      %3727 = vmatprep.mubr.f32.mxu0 0.0
      %3728 = vmatmul.mubr.f32.gmra.mxu0 %v2577
      %v3729 = vpop.f32.mrf.mxu0
      %v3730 = vadd.f32 %v3656, %v3729
      %v3731 = vpop.f32.mrf.mxu0
      %3732 = vdwg.mxu0
      %v3734 = vsel %vm688, %v3568, 0
      %v3737 = vsel %vm688, %v3644, 0
      %v3740 = vsel %vm688, %v3649, 0
      %3742 = vmatprep.subr.mxu0 0.0
      %3743 = vmatpush1.xpose.msra.mxu0 0.0
      %3744 = vmatprep.subr.mxu0 0.0
      %3745 = vmatpush1.xpose.msra.mxu0 0.0
      %3746 = vmatprep.subr.mxu0 0.0
      %3747 = vmatpush1.xpose.msra.mxu0 0.0
      %3748 = vmatprep.subr.mxu0 0.0
      %3749 = vmatpush1.xpose.msra.mxu0 0.0
      %3750 = vmatprep.subr.mxu0 0.0
      %3751 = vmatpush1.xpose.msra.mxu0 0.0
      %3752 = vmatprep.subr.mxu0 0.0
      %3753 = vmatpush1.xpose.msra.mxu0 0.0
      %3754 = vmatprep.subr.mxu0 0.0
      %3755 = vmatpush1.xpose.msra.mxu0 0.0
      %3756 = vmatprep.subr.mxu0 0.0
      %3757 = vmatpush1.xpose.msra.mxu0 0.0
      %3758 = vmatprep.subr.mxu0 0.0
      %3759 = vmatpush1.xpose.msra.mxu0 0.0
      %3760 = vmatprep.subr.mxu0 0.0
      %3761 = vmatpush1.xpose.msra.mxu0 0.0
      %3762 = vmatprep.subr.mxu0 0.0
      %3763 = vmatpush1.xpose.msra.mxu0 0.0
      %3764 = vmatprep.subr.mxu0 0.0
      %3765 = vmatpush1.xpose.msra.mxu0 0.0
      %3766 = vmatprep.subr.mxu0 0.0
      %3767 = vmatpush1.xpose.msra.mxu0 0.0
      %3768 = vmatprep.subr.mxu0 0.0
      %3769 = vmatpush1.xpose.msra.mxu0 0.0
      %3770 = vmatprep.subr.mxu0 0.0
      %3771 = vmatpush1.xpose.msra.mxu0 %v3740
      %3772 = vmatprep.subr.mxu0 0.0
      %3773 = vmatpush1.xpose.msra.mxu0 %v3737
      %3774 = vmatprep.subr.mxu0 0.0
      %3775 = vmatpush2.xpose.msra.mxu0 0.0
      %3776 = vmatprep.subr.mxu0 0.0
      %3777 = vmatpush2.xpose.msra.mxu0 0.0
      %3778 = vmatprep.subr.mxu0 0.0
      %3779 = vmatpush2.xpose.msra.mxu0 0.0
      %3780 = vmatprep.subr.mxu0 0.0
      %3781 = vmatpush2.xpose.msra.mxu0 0.0
      %3782 = vmatprep.subr.mxu0 0.0
      %3783 = vmatpush2.xpose.msra.mxu0 0.0
      %3784 = vmatprep.subr.mxu0 0.0
      %3785 = vmatpush2.xpose.msra.mxu0 0.0
      %3786 = vmatprep.subr.mxu0 0.0
      %3787 = vmatpush2.xpose.msra.mxu0 0.0
      %3788 = vmatprep.subr.mxu0 0.0
      %3789 = vmatpush2.xpose.msra.mxu0 0.0
      %3790 = vmatprep.subr.mxu0 0.0
      %3791 = vmatpush2.xpose.msra.mxu0 0.0
      %3792 = vmatprep.subr.mxu0 0.0
      %3793 = vmatpush2.xpose.msra.mxu0 0.0
      %3794 = vmatprep.subr.mxu0 0.0
      %3795 = vmatpush2.xpose.msra.mxu0 0.0
      %3796 = vmatprep.subr.mxu0 0.0
      %3797 = vmatpush2.xpose.msra.mxu0 0.0
      %3798 = vmatprep.subr.mxu0 0.0
      %3799 = vmatpush2.xpose.msra.mxu0 0.0
      %3800 = vmatprep.subr.mxu0 0.0
      %3801 = vmatpush2.xpose.msra.mxu0 0.0
      %3802 = vmatprep.subr.mxu0 0.0
      %3803 = vmatpush2.xpose.msra.mxu0 0.0
      %3804 = vmatprep.subr.mxu0 0.0
      %3805 = vmatpush2.xpose.msra.mxu0 0.0
      %3806 = vmatprep.mubr.f32.mxu0 0.0
      %3807 = vmatmul.mubr.f32.gmra.mxu0 %v3734
      %v3808 = vpop.f32.mrf.mxu0
      %v3809 = vadd.f32 0.0, %v3808
      %v3810 = vpop.f32.mrf.mxu0
      %3811 = vdwg.mxu0
      %v3812 = vsel %vm2814, %v3809, -inf
      %3813 = vmax.xlane.f32.xlu0 %v3812
      %v3814 = vpop.xlane.xlu0 %3813
      %v3815 = vsub.f32 %v3809, %v3814
      %v3816 = vmul.f32 %v3815, 1.442695
      %v3817 = vpow.pop %v3816
      %v3818 = vsel %vm2814, %v3817, 0.0
      %3819 = vadd.xlane.f32.xlu0 %v3818
      %v3820 = vpop.xlane.xlu0 %3819
      %v3821 = vrcp.pop %v3820
      %v3822 = vmul.f32 %v3817, %v3821
      %v3824 = vsel %vm2814, %v3822, 0
      %v3827 = vsel %vm2829, %v3730, 0
      %3829 = vmatprep.subr.mxu0 0.0
      %3830 = vmatpush1.msra.mxu0 0.0
      %3831 = vmatprep.subr.mxu0 0.0
      %3832 = vmatpush1.msra.mxu0 0.0
      %3833 = vmatprep.subr.mxu0 0.0
      %3834 = vmatpush1.msra.mxu0 0.0
      %3835 = vmatprep.subr.mxu0 0.0
      %3836 = vmatpush1.msra.mxu0 0.0
      %3837 = vmatprep.subr.mxu0 0.0
      %3838 = vmatpush1.msra.mxu0 0.0
      %3839 = vmatprep.subr.mxu0 0.0
      %3840 = vmatpush1.msra.mxu0 0.0
      %3841 = vmatprep.subr.mxu0 0.0
      %3842 = vmatpush1.msra.mxu0 0.0
      %3843 = vmatprep.subr.mxu0 0.0
      %3844 = vmatpush1.msra.mxu0 0.0
      %3845 = vmatprep.subr.mxu0 0.0
      %3846 = vmatpush1.msra.mxu0 0.0
      %3847 = vmatprep.subr.mxu0 0.0
      %3848 = vmatpush1.msra.mxu0 0.0
      %3849 = vmatprep.subr.mxu0 0.0
      %3850 = vmatpush1.msra.mxu0 0.0
      %3851 = vmatprep.subr.mxu0 0.0
      %3852 = vmatpush1.msra.mxu0 0.0
      %3853 = vmatprep.subr.mxu0 0.0
      %3854 = vmatpush1.msra.mxu0 0.0
      %3855 = vmatprep.subr.mxu0 0.0
      %3856 = vmatpush1.msra.mxu0 0.0
      %3857 = vmatprep.subr.mxu0 0.0
      %3858 = vmatpush1.msra.mxu0 %v3827
      %3859 = vmatprep.subr.mxu0 0.0
      %3860 = vmatpush1.msra.mxu0 %v3725
      %3861 = vmatprep.subr.mxu0 0.0
      %3862 = vmatpush2.msra.mxu0 0.0
      %3863 = vmatprep.subr.mxu0 0.0
      %3864 = vmatpush2.msra.mxu0 0.0
      %3865 = vmatprep.subr.mxu0 0.0
      %3866 = vmatpush2.msra.mxu0 0.0
      %3867 = vmatprep.subr.mxu0 0.0
      %3868 = vmatpush2.msra.mxu0 0.0
      %3869 = vmatprep.subr.mxu0 0.0
      %3870 = vmatpush2.msra.mxu0 0.0
      %3871 = vmatprep.subr.mxu0 0.0
      %3872 = vmatpush2.msra.mxu0 0.0
      %3873 = vmatprep.subr.mxu0 0.0
      %3874 = vmatpush2.msra.mxu0 0.0
      %3875 = vmatprep.subr.mxu0 0.0
      %3876 = vmatpush2.msra.mxu0 0.0
      %3877 = vmatprep.subr.mxu0 0.0
      %3878 = vmatpush2.msra.mxu0 0.0
      %3879 = vmatprep.subr.mxu0 0.0
      %3880 = vmatpush2.msra.mxu0 0.0
      %3881 = vmatprep.subr.mxu0 0.0
      %3882 = vmatpush2.msra.mxu0 0.0
      %3883 = vmatprep.subr.mxu0 0.0
      %3884 = vmatpush2.msra.mxu0 0.0
      %3885 = vmatprep.subr.mxu0 0.0
      %3886 = vmatpush2.msra.mxu0 0.0
      %3887 = vmatprep.subr.mxu0 0.0
      %3888 = vmatpush2.msra.mxu0 0.0
      %3889 = vmatprep.subr.mxu0 0.0
      %3890 = vmatpush2.msra.mxu0 0.0
      %3891 = vmatprep.subr.mxu0 0.0
      %3892 = vmatpush2.msra.mxu0 0.0
      %3893 = vmatprep.mubr.f32.mxu0 0.0
      %3894 = vmatmul.mubr.f32.gmra.mxu0 %v3824
      %v3895 = vpop.f32.mrf.mxu0
      %v3896 = vadd.f32 0.0, %v3895
      %v3897 = vpop.f32.mrf.mxu0
      %3898 = vdwg.mxu0
      %v3900 = vsel %vm688, %v3896, 0
      %3902 = vmatprep.subr.mxu0 0.0
      %3903 = vmatpush1.msra.mxu0 0.0
      %3904 = vmatprep.subr.mxu0 0.0
      %3905 = vmatpush1.msra.mxu0 0.0
      %3906 = vmatprep.subr.mxu0 0.0
      %3907 = vmatpush1.msra.mxu0 0.0
      %3908 = vmatprep.subr.mxu0 0.0
      %3909 = vmatpush1.msra.mxu0 0.0
      %3910 = vmatprep.subr.mxu0 0.0
      %3911 = vmatpush1.msra.mxu0 0.0
      %3912 = vmatprep.subr.mxu0 0.0
      %3913 = vmatpush1.msra.mxu0 0.0
      %3914 = vmatprep.subr.mxu0 0.0
      %3915 = vmatpush1.msra.mxu0 0.0
      %3916 = vmatprep.subr.mxu0 0.0
      %3917 = vmatpush1.msra.mxu0 0.0
      %3918 = vmatprep.subr.mxu0 0.0
      %3919 = vmatpush1.msra.mxu0 0.0
      %3920 = vmatprep.subr.mxu0 0.0
      %3921 = vmatpush1.msra.mxu0 0.0
      %3922 = vmatprep.subr.mxu0 0.0
      %3923 = vmatpush1.msra.mxu0 0.0
      %3924 = vmatprep.subr.mxu0 0.0
      %3925 = vmatpush1.msra.mxu0 0.0
      %3926 = vmatprep.subr.mxu0 0.0
      %3927 = vmatpush1.msra.mxu0 0.0
      %3928 = vmatprep.subr.mxu0 0.0
      %3929 = vmatpush1.msra.mxu0 0.0
      %3930 = vmatprep.subr.mxu0 0.0
      %3931 = vmatpush1.msra.mxu0 0.0
      %3932 = vmatprep.subr.mxu0 0.0
      %3933 = vmatpush1.msra.mxu0 %v2465
      %3934 = vmatprep.subr.mxu0 0.0
      %3935 = vmatpush2.msra.mxu0 0.0
      %3936 = vmatprep.subr.mxu0 0.0
      %3937 = vmatpush2.msra.mxu0 0.0
      %3938 = vmatprep.subr.mxu0 0.0
      %3939 = vmatpush2.msra.mxu0 0.0
      %3940 = vmatprep.subr.mxu0 0.0
      %3941 = vmatpush2.msra.mxu0 0.0
      %3942 = vmatprep.subr.mxu0 0.0
      %3943 = vmatpush2.msra.mxu0 0.0
      %3944 = vmatprep.subr.mxu0 0.0
      %3945 = vmatpush2.msra.mxu0 0.0
      %3946 = vmatprep.subr.mxu0 0.0
      %3947 = vmatpush2.msra.mxu0 0.0
      %3948 = vmatprep.subr.mxu0 0.0
      %3949 = vmatpush2.msra.mxu0 0.0
      %3950 = vmatprep.subr.mxu0 0.0
      %3951 = vmatpush2.msra.mxu0 0.0
      %3952 = vmatprep.subr.mxu0 0.0
      %3953 = vmatpush2.msra.mxu0 0.0
      %3954 = vmatprep.subr.mxu0 0.0
      %3955 = vmatpush2.msra.mxu0 0.0
      %3956 = vmatprep.subr.mxu0 0.0
      %3957 = vmatpush2.msra.mxu0 0.0
      %3958 = vmatprep.subr.mxu0 0.0
      %3959 = vmatpush2.msra.mxu0 0.0
      %3960 = vmatprep.subr.mxu0 0.0
      %3961 = vmatpush2.msra.mxu0 0.0
      %3962 = vmatprep.subr.mxu0 0.0
      %3963 = vmatpush2.msra.mxu0 0.0
      %3964 = vmatprep.subr.mxu0 0.0
      %3965 = vmatpush2.msra.mxu0 0.0
      %3966 = vmatprep.mubr.f32.mxu0 0.0
      %3967 = vmatmul.mubr.f32.gmra.mxu0 %v3900
      %v3968 = vpop.f32.mrf.mxu0
      %v3969 = vadd.f32 0.0, %v3968
      %v3970 = vpop.f32.mrf.mxu0
      %3971 = vdwg.mxu0
      %v3972 = vadd.f32 %v3471, %v3969
      %s3973 = scalar_lea.vmem %s3, 480
      %v3974 = vld [vmem:[%s3973] sm:$0xff]
      %v3975 = vld [vmem:[%s3973 + $0x8] sm:$0xff]
      %v3976 = vld [vmem:[%s3973 + $0x10] sm:$0xff]
      %v3977 = vld [vmem:[%s3973 + $0x18] sm:$0xff]
      %s3978 = scalar_lea.vmem %s3, 608
      %v3979 = vld [vmem:[%s3978] sm:$0xff]
      %v3980 = vld [vmem:[%s3978 + $0x8] sm:$0xff]
      %v3981 = vld [vmem:[%s3978 + $0x10] sm:$0xff]
      %v3982 = vld [vmem:[%s3978 + $0x18] sm:$0xff]
      %s3983 = scalar_lea.vmem %s3, 736
      %v3984 = vld [vmem:[%s3983] sm:$0xff]
      %v3985 = vld [vmem:[%s3983 + $0x8] sm:$0xff]
      %v3986 = vld [vmem:[%s3983 + $0x10] sm:$0xff]
      %v3987 = vld [vmem:[%s3983 + $0x18] sm:$0xff]
      %s3988 = scalar_lea.vmem %s4, 15
      %v3989 = vld [vmem:[%s3988] sm:$0x1]
      %s3990 = scalar_lea.vmem %s4, 19
      %v3991 = vld [vmem:[%s3990] sm:$0x1]
      %s3992 = scalar_lea.vmem %s4, 23
      %v3993 = vld [vmem:[%s3992] sm:$0x1]
      %v3995 = vlaneseq
      %v3996 = vshrl.u32 %v3995, 7
      %v3997 = vsub.s32 0, %v3996
      %v3998 = vrot.slane %v3989, %v3997
      %4000 = vmatprep.subr.mxu0 0.0
      %4001 = vmatpush1.msra.mxu0 0.0
      %4002 = vmatprep.subr.mxu0 0.0
      %4003 = vmatpush1.msra.mxu0 0.0
      %4004 = vmatprep.subr.mxu0 0.0
      %4005 = vmatpush1.msra.mxu0 0.0
      %4006 = vmatprep.subr.mxu0 0.0
      %4007 = vmatpush1.msra.mxu0 0.0
      %4008 = vmatprep.subr.mxu0 0.0
      %4009 = vmatpush1.msra.mxu0 0.0
      %4010 = vmatprep.subr.mxu0 0.0
      %4011 = vmatpush1.msra.mxu0 0.0
      %4012 = vmatprep.subr.mxu0 0.0
      %4013 = vmatpush1.msra.mxu0 0.0
      %4014 = vmatprep.subr.mxu0 0.0
      %4015 = vmatpush1.msra.mxu0 0.0
      %4016 = vmatprep.subr.mxu0 0.0
      %4017 = vmatpush1.msra.mxu0 0.0
      %4018 = vmatprep.subr.mxu0 0.0
      %4019 = vmatpush1.msra.mxu0 0.0
      %4020 = vmatprep.subr.mxu0 0.0
      %4021 = vmatpush1.msra.mxu0 0.0
      %4022 = vmatprep.subr.mxu0 0.0
      %4023 = vmatpush1.msra.mxu0 0.0
      %4024 = vmatprep.subr.mxu0 0.0
      %4025 = vmatpush1.msra.mxu0 %v3977
      %4026 = vmatprep.subr.mxu0 0.0
      %4027 = vmatpush1.msra.mxu0 %v3976
      %4028 = vmatprep.subr.mxu0 0.0
      %4029 = vmatpush1.msra.mxu0 %v3975
      %4030 = vmatprep.subr.mxu0 0.0
      %4031 = vmatpush1.msra.mxu0 %v3974
      %4032 = vmatprep.subr.mxu0 0.0
      %4033 = vmatpush2.msra.mxu0 0.0
      %4034 = vmatprep.subr.mxu0 0.0
      %4035 = vmatpush2.msra.mxu0 0.0
      %4036 = vmatprep.subr.mxu0 0.0
      %4037 = vmatpush2.msra.mxu0 0.0
      %4038 = vmatprep.subr.mxu0 0.0
      %4039 = vmatpush2.msra.mxu0 0.0
      %4040 = vmatprep.subr.mxu0 0.0
      %4041 = vmatpush2.msra.mxu0 0.0
      %4042 = vmatprep.subr.mxu0 0.0
      %4043 = vmatpush2.msra.mxu0 0.0
      %4044 = vmatprep.subr.mxu0 0.0
      %4045 = vmatpush2.msra.mxu0 0.0
      %4046 = vmatprep.subr.mxu0 0.0
      %4047 = vmatpush2.msra.mxu0 0.0
      %4048 = vmatprep.subr.mxu0 0.0
      %4049 = vmatpush2.msra.mxu0 0.0
      %4050 = vmatprep.subr.mxu0 0.0
      %4051 = vmatpush2.msra.mxu0 0.0
      %4052 = vmatprep.subr.mxu0 0.0
      %4053 = vmatpush2.msra.mxu0 0.0
      %4054 = vmatprep.subr.mxu0 0.0
      %4055 = vmatpush2.msra.mxu0 0.0
      %4056 = vmatprep.subr.mxu0 0.0
      %4057 = vmatpush2.msra.mxu0 0.0
      %4058 = vmatprep.subr.mxu0 0.0
      %4059 = vmatpush2.msra.mxu0 0.0
      %4060 = vmatprep.subr.mxu0 0.0
      %4061 = vmatpush2.msra.mxu0 0.0
      %4062 = vmatprep.subr.mxu0 0.0
      %4063 = vmatpush2.msra.mxu0 0.0
      %4064 = vmatprep.mubr.f32.mxu0 0.0
      %4065 = vmatmul.mubr.f32.gmra.mxu0 %v2495
      %v4066 = vpop.f32.mrf.mxu0
      %v4067 = vadd.f32 %v3998, %v4066
      %v4068 = vpop.f32.mrf.mxu0
      %4069 = vdwg.mxu0
      %v4071 = vlaneseq
      %v4072 = vshrl.u32 %v4071, 7
      %v4073 = vsub.s32 0, %v4072
      %v4074 = vrot.slane %v3991, %v4073
      %4076 = vmatprep.subr.mxu0 0.0
      %4077 = vmatpush1.msra.mxu0 0.0
      %4078 = vmatprep.subr.mxu0 0.0
      %4079 = vmatpush1.msra.mxu0 0.0
      %4080 = vmatprep.subr.mxu0 0.0
      %4081 = vmatpush1.msra.mxu0 0.0
      %4082 = vmatprep.subr.mxu0 0.0
      %4083 = vmatpush1.msra.mxu0 0.0
      %4084 = vmatprep.subr.mxu0 0.0
      %4085 = vmatpush1.msra.mxu0 0.0
      %4086 = vmatprep.subr.mxu0 0.0
      %4087 = vmatpush1.msra.mxu0 0.0
      %4088 = vmatprep.subr.mxu0 0.0
      %4089 = vmatpush1.msra.mxu0 0.0
      %4090 = vmatprep.subr.mxu0 0.0
      %4091 = vmatpush1.msra.mxu0 0.0
      %4092 = vmatprep.subr.mxu0 0.0
      %4093 = vmatpush1.msra.mxu0 0.0
      %4094 = vmatprep.subr.mxu0 0.0
      %4095 = vmatpush1.msra.mxu0 0.0
      %4096 = vmatprep.subr.mxu0 0.0
      %4097 = vmatpush1.msra.mxu0 0.0
      %4098 = vmatprep.subr.mxu0 0.0
      %4099 = vmatpush1.msra.mxu0 0.0
      %4100 = vmatprep.subr.mxu0 0.0
      %4101 = vmatpush1.msra.mxu0 %v3982
      %4102 = vmatprep.subr.mxu0 0.0
      %4103 = vmatpush1.msra.mxu0 %v3981
      %4104 = vmatprep.subr.mxu0 0.0
      %4105 = vmatpush1.msra.mxu0 %v3980
      %4106 = vmatprep.subr.mxu0 0.0
      %4107 = vmatpush1.msra.mxu0 %v3979
      %4108 = vmatprep.subr.mxu0 0.0
      %4109 = vmatpush2.msra.mxu0 0.0
      %4110 = vmatprep.subr.mxu0 0.0
      %4111 = vmatpush2.msra.mxu0 0.0
      %4112 = vmatprep.subr.mxu0 0.0
      %4113 = vmatpush2.msra.mxu0 0.0
      %4114 = vmatprep.subr.mxu0 0.0
      %4115 = vmatpush2.msra.mxu0 0.0
      %4116 = vmatprep.subr.mxu0 0.0
      %4117 = vmatpush2.msra.mxu0 0.0
      %4118 = vmatprep.subr.mxu0 0.0
      %4119 = vmatpush2.msra.mxu0 0.0
      %4120 = vmatprep.subr.mxu0 0.0
      %4121 = vmatpush2.msra.mxu0 0.0
      %4122 = vmatprep.subr.mxu0 0.0
      %4123 = vmatpush2.msra.mxu0 0.0
      %4124 = vmatprep.subr.mxu0 0.0
      %4125 = vmatpush2.msra.mxu0 0.0
      %4126 = vmatprep.subr.mxu0 0.0
      %4127 = vmatpush2.msra.mxu0 0.0
      %4128 = vmatprep.subr.mxu0 0.0
      %4129 = vmatpush2.msra.mxu0 0.0
      %4130 = vmatprep.subr.mxu0 0.0
      %4131 = vmatpush2.msra.mxu0 0.0
      %4132 = vmatprep.subr.mxu0 0.0
      %4133 = vmatpush2.msra.mxu0 0.0
      %4134 = vmatprep.subr.mxu0 0.0
      %4135 = vmatpush2.msra.mxu0 0.0
      %4136 = vmatprep.subr.mxu0 0.0
      %4137 = vmatpush2.msra.mxu0 0.0
      %4138 = vmatprep.subr.mxu0 0.0
      %4139 = vmatpush2.msra.mxu0 0.0
      %4140 = vmatprep.mubr.f32.mxu0 0.0
      %4141 = vmatmul.mubr.f32.gmra.mxu0 %v2574
      %v4142 = vpop.f32.mrf.mxu0
      %v4143 = vadd.f32 %v4074, %v4142
      %v4144 = vpop.f32.mrf.mxu0
      %4145 = vmatprep.mubr.f32.mxu0 0.0
      %4146 = vmatmul.mubr.f32.gmra.mxu0 %v2577
      %v4147 = vpop.f32.mrf.mxu0
      %v4148 = vadd.f32 %v4074, %v4147
      %v4149 = vpop.f32.mrf.mxu0
      %4150 = vdwg.mxu0
      %v4152 = vlaneseq
      %v4153 = vshrl.u32 %v4152, 7
      %v4154 = vsub.s32 0, %v4153
      %v4155 = vrot.slane %v3993, %v4154
      %4157 = vmatprep.subr.mxu0 0.0
      %4158 = vmatpush1.msra.mxu0 0.0
      %4159 = vmatprep.subr.mxu0 0.0
      %4160 = vmatpush1.msra.mxu0 0.0
      %4161 = vmatprep.subr.mxu0 0.0
      %4162 = vmatpush1.msra.mxu0 0.0
      %4163 = vmatprep.subr.mxu0 0.0
      %4164 = vmatpush1.msra.mxu0 0.0
      %4165 = vmatprep.subr.mxu0 0.0
      %4166 = vmatpush1.msra.mxu0 0.0
      %4167 = vmatprep.subr.mxu0 0.0
      %4168 = vmatpush1.msra.mxu0 0.0
      %4169 = vmatprep.subr.mxu0 0.0
      %4170 = vmatpush1.msra.mxu0 0.0
      %4171 = vmatprep.subr.mxu0 0.0
      %4172 = vmatpush1.msra.mxu0 0.0
      %4173 = vmatprep.subr.mxu0 0.0
      %4174 = vmatpush1.msra.mxu0 0.0
      %4175 = vmatprep.subr.mxu0 0.0
      %4176 = vmatpush1.msra.mxu0 0.0
      %4177 = vmatprep.subr.mxu0 0.0
      %4178 = vmatpush1.msra.mxu0 0.0
      %4179 = vmatprep.subr.mxu0 0.0
      %4180 = vmatpush1.msra.mxu0 0.0
      %4181 = vmatprep.subr.mxu0 0.0
      %4182 = vmatpush1.msra.mxu0 %v3987
      %4183 = vmatprep.subr.mxu0 0.0
      %4184 = vmatpush1.msra.mxu0 %v3986
      %4185 = vmatprep.subr.mxu0 0.0
      %4186 = vmatpush1.msra.mxu0 %v3985
      %4187 = vmatprep.subr.mxu0 0.0
      %4188 = vmatpush1.msra.mxu0 %v3984
      %4189 = vmatprep.subr.mxu0 0.0
      %4190 = vmatpush2.msra.mxu0 0.0
      %4191 = vmatprep.subr.mxu0 0.0
      %4192 = vmatpush2.msra.mxu0 0.0
      %4193 = vmatprep.subr.mxu0 0.0
      %4194 = vmatpush2.msra.mxu0 0.0
      %4195 = vmatprep.subr.mxu0 0.0
      %4196 = vmatpush2.msra.mxu0 0.0
      %4197 = vmatprep.subr.mxu0 0.0
      %4198 = vmatpush2.msra.mxu0 0.0
      %4199 = vmatprep.subr.mxu0 0.0
      %4200 = vmatpush2.msra.mxu0 0.0
      %4201 = vmatprep.subr.mxu0 0.0
      %4202 = vmatpush2.msra.mxu0 0.0
      %4203 = vmatprep.subr.mxu0 0.0
      %4204 = vmatpush2.msra.mxu0 0.0
      %4205 = vmatprep.subr.mxu0 0.0
      %4206 = vmatpush2.msra.mxu0 0.0
      %4207 = vmatprep.subr.mxu0 0.0
      %4208 = vmatpush2.msra.mxu0 0.0
      %4209 = vmatprep.subr.mxu0 0.0
      %4210 = vmatpush2.msra.mxu0 0.0
      %4211 = vmatprep.subr.mxu0 0.0
      %4212 = vmatpush2.msra.mxu0 0.0
      %4213 = vmatprep.subr.mxu0 0.0
      %4214 = vmatpush2.msra.mxu0 0.0
      %4215 = vmatprep.subr.mxu0 0.0
      %4216 = vmatpush2.msra.mxu0 0.0
      %4217 = vmatprep.subr.mxu0 0.0
      %4218 = vmatpush2.msra.mxu0 0.0
      %4219 = vmatprep.subr.mxu0 0.0
      %4220 = vmatpush2.msra.mxu0 0.0
      %4221 = vmatprep.mubr.f32.mxu0 0.0
      %4222 = vmatmul.mubr.f32.gmra.mxu0 %v2574
      %v4223 = vpop.f32.mrf.mxu0
      %v4224 = vadd.f32 %v4155, %v4223
      %v4225 = vpop.f32.mrf.mxu0
      %4226 = vmatprep.mubr.f32.mxu0 0.0
      %4227 = vmatmul.mubr.f32.gmra.mxu0 %v2577
      %v4228 = vpop.f32.mrf.mxu0
      %v4229 = vadd.f32 %v4155, %v4228
      %v4230 = vpop.f32.mrf.mxu0
      %4231 = vdwg.mxu0
      %v4233 = vsel %vm688, %v4067, 0
      %v4236 = vsel %vm688, %v4143, 0
      %v4239 = vsel %vm688, %v4148, 0
      %4241 = vmatprep.subr.mxu0 0.0
      %4242 = vmatpush1.xpose.msra.mxu0 0.0
      %4243 = vmatprep.subr.mxu0 0.0
      %4244 = vmatpush1.xpose.msra.mxu0 0.0
      %4245 = vmatprep.subr.mxu0 0.0
      %4246 = vmatpush1.xpose.msra.mxu0 0.0
      %4247 = vmatprep.subr.mxu0 0.0
      %4248 = vmatpush1.xpose.msra.mxu0 0.0
      %4249 = vmatprep.subr.mxu0 0.0
      %4250 = vmatpush1.xpose.msra.mxu0 0.0
      %4251 = vmatprep.subr.mxu0 0.0
      %4252 = vmatpush1.xpose.msra.mxu0 0.0
      %4253 = vmatprep.subr.mxu0 0.0
      %4254 = vmatpush1.xpose.msra.mxu0 0.0
      %4255 = vmatprep.subr.mxu0 0.0
      %4256 = vmatpush1.xpose.msra.mxu0 0.0
      %4257 = vmatprep.subr.mxu0 0.0
      %4258 = vmatpush1.xpose.msra.mxu0 0.0
      %4259 = vmatprep.subr.mxu0 0.0
      %4260 = vmatpush1.xpose.msra.mxu0 0.0
      %4261 = vmatprep.subr.mxu0 0.0
      %4262 = vmatpush1.xpose.msra.mxu0 0.0
      %4263 = vmatprep.subr.mxu0 0.0
      %4264 = vmatpush1.xpose.msra.mxu0 0.0
      %4265 = vmatprep.subr.mxu0 0.0
      %4266 = vmatpush1.xpose.msra.mxu0 0.0
      %4267 = vmatprep.subr.mxu0 0.0
      %4268 = vmatpush1.xpose.msra.mxu0 0.0
      %4269 = vmatprep.subr.mxu0 0.0
      %4270 = vmatpush1.xpose.msra.mxu0 %v4239
      %4271 = vmatprep.subr.mxu0 0.0
      %4272 = vmatpush1.xpose.msra.mxu0 %v4236
      %4273 = vmatprep.subr.mxu0 0.0
      %4274 = vmatpush2.xpose.msra.mxu0 0.0
      %4275 = vmatprep.subr.mxu0 0.0
      %4276 = vmatpush2.xpose.msra.mxu0 0.0
      %4277 = vmatprep.subr.mxu0 0.0
      %4278 = vmatpush2.xpose.msra.mxu0 0.0
      %4279 = vmatprep.subr.mxu0 0.0
      %4280 = vmatpush2.xpose.msra.mxu0 0.0
      %4281 = vmatprep.subr.mxu0 0.0
      %4282 = vmatpush2.xpose.msra.mxu0 0.0
      %4283 = vmatprep.subr.mxu0 0.0
      %4284 = vmatpush2.xpose.msra.mxu0 0.0
      %4285 = vmatprep.subr.mxu0 0.0
      %4286 = vmatpush2.xpose.msra.mxu0 0.0
      %4287 = vmatprep.subr.mxu0 0.0
      %4288 = vmatpush2.xpose.msra.mxu0 0.0
      %4289 = vmatprep.subr.mxu0 0.0
      %4290 = vmatpush2.xpose.msra.mxu0 0.0
      %4291 = vmatprep.subr.mxu0 0.0
      %4292 = vmatpush2.xpose.msra.mxu0 0.0
      %4293 = vmatprep.subr.mxu0 0.0
      %4294 = vmatpush2.xpose.msra.mxu0 0.0
      %4295 = vmatprep.subr.mxu0 0.0
      %4296 = vmatpush2.xpose.msra.mxu0 0.0
      %4297 = vmatprep.subr.mxu0 0.0
      %4298 = vmatpush2.xpose.msra.mxu0 0.0
      %4299 = vmatprep.subr.mxu0 0.0
      %4300 = vmatpush2.xpose.msra.mxu0 0.0
      %4301 = vmatprep.subr.mxu0 0.0
      %4302 = vmatpush2.xpose.msra.mxu0 0.0
      %4303 = vmatprep.subr.mxu0 0.0
      %4304 = vmatpush2.xpose.msra.mxu0 0.0
      %4305 = vmatprep.mubr.f32.mxu0 0.0
      %4306 = vmatmul.mubr.f32.gmra.mxu0 %v4233
      %v4307 = vpop.f32.mrf.mxu0
      %v4308 = vadd.f32 0.0, %v4307
      %v4309 = vpop.f32.mrf.mxu0
      %4310 = vdwg.mxu0
      %v4311 = vsel %vm2814, %v4308, -inf
      %4312 = vmax.xlane.f32.xlu0 %v4311
      %v4313 = vpop.xlane.xlu0 %4312
      %v4314 = vsub.f32 %v4308, %v4313
      %v4315 = vmul.f32 %v4314, 1.442695
      %v4316 = vpow.pop %v4315
      %v4317 = vsel %vm2814, %v4316, 0.0
      %4318 = vadd.xlane.f32.xlu0 %v4317
      %v4319 = vpop.xlane.xlu0 %4318
      %v4320 = vrcp.pop %v4319
      %v4321 = vmul.f32 %v4316, %v4320
      %v4323 = vsel %vm2814, %v4321, 0
      %v4326 = vsel %vm2829, %v4229, 0
      %4328 = vmatprep.subr.mxu0 0.0
      %4329 = vmatpush1.msra.mxu0 0.0
      %4330 = vmatprep.subr.mxu0 0.0
      %4331 = vmatpush1.msra.mxu0 0.0
      %4332 = vmatprep.subr.mxu0 0.0
      %4333 = vmatpush1.msra.mxu0 0.0
      %4334 = vmatprep.subr.mxu0 0.0
      %4335 = vmatpush1.msra.mxu0 0.0
      %4336 = vmatprep.subr.mxu0 0.0
      %4337 = vmatpush1.msra.mxu0 0.0
      %4338 = vmatprep.subr.mxu0 0.0
      %4339 = vmatpush1.msra.mxu0 0.0
      %4340 = vmatprep.subr.mxu0 0.0
      %4341 = vmatpush1.msra.mxu0 0.0
      %4342 = vmatprep.subr.mxu0 0.0
      %4343 = vmatpush1.msra.mxu0 0.0
      %4344 = vmatprep.subr.mxu0 0.0
      %4345 = vmatpush1.msra.mxu0 0.0
      %4346 = vmatprep.subr.mxu0 0.0
      %4347 = vmatpush1.msra.mxu0 0.0
      %4348 = vmatprep.subr.mxu0 0.0
      %4349 = vmatpush1.msra.mxu0 0.0
      %4350 = vmatprep.subr.mxu0 0.0
      %4351 = vmatpush1.msra.mxu0 0.0
      %4352 = vmatprep.subr.mxu0 0.0
      %4353 = vmatpush1.msra.mxu0 0.0
      %4354 = vmatprep.subr.mxu0 0.0
      %4355 = vmatpush1.msra.mxu0 0.0
      %4356 = vmatprep.subr.mxu0 0.0
      %4357 = vmatpush1.msra.mxu0 %v4326
      %4358 = vmatprep.subr.mxu0 0.0
      %4359 = vmatpush1.msra.mxu0 %v4224
      %4360 = vmatprep.subr.mxu0 0.0
      %4361 = vmatpush2.msra.mxu0 0.0
      %4362 = vmatprep.subr.mxu0 0.0
      %4363 = vmatpush2.msra.mxu0 0.0
      %4364 = vmatprep.subr.mxu0 0.0
      %4365 = vmatpush2.msra.mxu0 0.0
      %4366 = vmatprep.subr.mxu0 0.0
      %4367 = vmatpush2.msra.mxu0 0.0
      %4368 = vmatprep.subr.mxu0 0.0
      %4369 = vmatpush2.msra.mxu0 0.0
      %4370 = vmatprep.subr.mxu0 0.0
      %4371 = vmatpush2.msra.mxu0 0.0
      %4372 = vmatprep.subr.mxu0 0.0
      %4373 = vmatpush2.msra.mxu0 0.0
      %4374 = vmatprep.subr.mxu0 0.0
      %4375 = vmatpush2.msra.mxu0 0.0
      %4376 = vmatprep.subr.mxu0 0.0
      %4377 = vmatpush2.msra.mxu0 0.0
      %4378 = vmatprep.subr.mxu0 0.0
      %4379 = vmatpush2.msra.mxu0 0.0
      %4380 = vmatprep.subr.mxu0 0.0
      %4381 = vmatpush2.msra.mxu0 0.0
      %4382 = vmatprep.subr.mxu0 0.0
      %4383 = vmatpush2.msra.mxu0 0.0
      %4384 = vmatprep.subr.mxu0 0.0
      %4385 = vmatpush2.msra.mxu0 0.0
      %4386 = vmatprep.subr.mxu0 0.0
      %4387 = vmatpush2.msra.mxu0 0.0
      %4388 = vmatprep.subr.mxu0 0.0
      %4389 = vmatpush2.msra.mxu0 0.0
      %4390 = vmatprep.subr.mxu0 0.0
      %4391 = vmatpush2.msra.mxu0 0.0
      %4392 = vmatprep.mubr.f32.mxu0 0.0
      %4393 = vmatmul.mubr.f32.gmra.mxu0 %v4323
      %v4394 = vpop.f32.mrf.mxu0
      %v4395 = vadd.f32 0.0, %v4394
      %v4396 = vpop.f32.mrf.mxu0
      %4397 = vdwg.mxu0
      %v4399 = vsel %vm688, %v4395, 0
      %4401 = vmatprep.subr.mxu0 0.0
      %4402 = vmatpush1.msra.mxu0 0.0
      %4403 = vmatprep.subr.mxu0 0.0
      %4404 = vmatpush1.msra.mxu0 0.0
      %4405 = vmatprep.subr.mxu0 0.0
      %4406 = vmatpush1.msra.mxu0 0.0
      %4407 = vmatprep.subr.mxu0 0.0
      %4408 = vmatpush1.msra.mxu0 0.0
      %4409 = vmatprep.subr.mxu0 0.0
      %4410 = vmatpush1.msra.mxu0 0.0
      %4411 = vmatprep.subr.mxu0 0.0
      %4412 = vmatpush1.msra.mxu0 0.0
      %4413 = vmatprep.subr.mxu0 0.0
      %4414 = vmatpush1.msra.mxu0 0.0
      %4415 = vmatprep.subr.mxu0 0.0
      %4416 = vmatpush1.msra.mxu0 0.0
      %4417 = vmatprep.subr.mxu0 0.0
      %4418 = vmatpush1.msra.mxu0 0.0
      %4419 = vmatprep.subr.mxu0 0.0
      %4420 = vmatpush1.msra.mxu0 0.0
      %4421 = vmatprep.subr.mxu0 0.0
      %4422 = vmatpush1.msra.mxu0 0.0
      %4423 = vmatprep.subr.mxu0 0.0
      %4424 = vmatpush1.msra.mxu0 0.0
      %4425 = vmatprep.subr.mxu0 0.0
      %4426 = vmatpush1.msra.mxu0 0.0
      %4427 = vmatprep.subr.mxu0 0.0
      %4428 = vmatpush1.msra.mxu0 0.0
      %4429 = vmatprep.subr.mxu0 0.0
      %4430 = vmatpush1.msra.mxu0 0.0
      %4431 = vmatprep.subr.mxu0 0.0
      %4432 = vmatpush1.msra.mxu0 %v2466
      %4433 = vmatprep.subr.mxu0 0.0
      %4434 = vmatpush2.msra.mxu0 0.0
      %4435 = vmatprep.subr.mxu0 0.0
      %4436 = vmatpush2.msra.mxu0 0.0
      %4437 = vmatprep.subr.mxu0 0.0
      %4438 = vmatpush2.msra.mxu0 0.0
      %4439 = vmatprep.subr.mxu0 0.0
      %4440 = vmatpush2.msra.mxu0 0.0
      %4441 = vmatprep.subr.mxu0 0.0
      %4442 = vmatpush2.msra.mxu0 0.0
      %4443 = vmatprep.subr.mxu0 0.0
      %4444 = vmatpush2.msra.mxu0 0.0
      %4445 = vmatprep.subr.mxu0 0.0
      %4446 = vmatpush2.msra.mxu0 0.0
      %4447 = vmatprep.subr.mxu0 0.0
      %4448 = vmatpush2.msra.mxu0 0.0
      %4449 = vmatprep.subr.mxu0 0.0
      %4450 = vmatpush2.msra.mxu0 0.0
      %4451 = vmatprep.subr.mxu0 0.0
      %4452 = vmatpush2.msra.mxu0 0.0
      %4453 = vmatprep.subr.mxu0 0.0
      %4454 = vmatpush2.msra.mxu0 0.0
      %4455 = vmatprep.subr.mxu0 0.0
      %4456 = vmatpush2.msra.mxu0 0.0
      %4457 = vmatprep.subr.mxu0 0.0
      %4458 = vmatpush2.msra.mxu0 0.0
      %4459 = vmatprep.subr.mxu0 0.0
      %4460 = vmatpush2.msra.mxu0 0.0
      %4461 = vmatprep.subr.mxu0 0.0
      %4462 = vmatpush2.msra.mxu0 0.0
      %4463 = vmatprep.subr.mxu0 0.0
      %4464 = vmatpush2.msra.mxu0 0.0
      %4465 = vmatprep.mubr.f32.mxu0 0.0
      %4466 = vmatmul.mubr.f32.gmra.mxu0 %v4399
      %v4467 = vpop.f32.mrf.mxu0
      %v4468 = vadd.f32 0.0, %v4467
      %v4469 = vpop.f32.mrf.mxu0
      %4470 = vdwg.mxu0
      %v4471 = vadd.f32 %v3972, %v4468
      %v4473 = vlaneseq
      %v4474 = vshrl.u32 %v4473, 7
      %v4475 = vsub.s32 0, %v4474
      %v4476 = vrot.slane %v406, %v4475
      %v4478 = vadd.f32 %v4471, %v4476
      %v4479 = vadd.f32 %v2461, %v4478
      %v4480 = vsel %vm446, %v4479, 0.0
      %4481 = vadd.xlane.f32.xlu0 %v4480
      %v4482 = vpop.xlane.xlu0 %4481
      %v4483 = vmul.f32 %v4482, %v2437
      %v4484 = vsub.f32 %v4479, %v4483
      %v4485 = vmul.f32 %v4484, %v4484
      %v4486 = vsel %vm446, %v4485, 0.0
      %4487 = vadd.xlane.f32.xlu0 %v4486
      %v4488 = vpop.xlane.xlu0 %4487
      %v4489 = vmul.f32 %v4488, %v2437
      %v4490 = vadd.f32 %v4489, 1e-05
      %v4491 = vrsqrt.pop %v4490
      %v4492 = vmul.f32 %v4484, %v4491
      %v4494 = vlaneseq
      %v4495 = vshrl.u32 %v4494, 7
      %v4496 = vsub.s32 0, %v4495
      %v4497 = vrot.slane %v408, %v4496
      %v4499 = vmul.f32 %v4492, %v4497
      %v4501 = vlaneseq
      %v4502 = vshrl.u32 %v4501, 7
      %v4503 = vsub.s32 0, %v4502
      %v4504 = vrot.slane %v410, %v4503
      %v4506 = vadd.f32 %v4499, %v4504
      %v4507 = vld [vmem:[%s7] sm:$0xff]
      %v4508 = vld [vmem:[%s7 + $0x8] sm:$0xff]
      %v4509 = vld [vmem:[%s7 + $0x10] sm:$0xff]
      %v4510 = vld [vmem:[%s7 + $0x18] sm:$0xff]
      %v4511 = vld [vmem:[%s8] sm:$0x1]
      %v4513 = vlaneseq
      %v4514 = vshrl.u32 %v4513, 7
      %v4515 = vsub.s32 0, %v4514
      %v4516 = vrot.slane %v4511, %v4515
      %v4519 = vsel %vm446, %v4506, 0
      %4521 = vmatprep.subr.mxu0 0.0
      %4522 = vmatpush1.msra.mxu0 0.0
      %4523 = vmatprep.subr.mxu0 0.0
      %4524 = vmatpush1.msra.mxu0 0.0
      %4525 = vmatprep.subr.mxu0 0.0
      %4526 = vmatpush1.msra.mxu0 0.0
      %4527 = vmatprep.subr.mxu0 0.0
      %4528 = vmatpush1.msra.mxu0 0.0
      %4529 = vmatprep.subr.mxu0 0.0
      %4530 = vmatpush1.msra.mxu0 0.0
      %4531 = vmatprep.subr.mxu0 0.0
      %4532 = vmatpush1.msra.mxu0 0.0
      %4533 = vmatprep.subr.mxu0 0.0
      %4534 = vmatpush1.msra.mxu0 0.0
      %4535 = vmatprep.subr.mxu0 0.0
      %4536 = vmatpush1.msra.mxu0 0.0
      %4537 = vmatprep.subr.mxu0 0.0
      %4538 = vmatpush1.msra.mxu0 0.0
      %4539 = vmatprep.subr.mxu0 0.0
      %4540 = vmatpush1.msra.mxu0 0.0
      %4541 = vmatprep.subr.mxu0 0.0
      %4542 = vmatpush1.msra.mxu0 0.0
      %4543 = vmatprep.subr.mxu0 0.0
      %4544 = vmatpush1.msra.mxu0 0.0
      %4545 = vmatprep.subr.mxu0 0.0
      %4546 = vmatpush1.msra.mxu0 %v4510
      %4547 = vmatprep.subr.mxu0 0.0
      %4548 = vmatpush1.msra.mxu0 %v4509
      %4549 = vmatprep.subr.mxu0 0.0
      %4550 = vmatpush1.msra.mxu0 %v4508
      %4551 = vmatprep.subr.mxu0 0.0
      %4552 = vmatpush1.msra.mxu0 %v4507
      %4553 = vmatprep.subr.mxu0 0.0
      %4554 = vmatpush2.msra.mxu0 0.0
      %4555 = vmatprep.subr.mxu0 0.0
      %4556 = vmatpush2.msra.mxu0 0.0
      %4557 = vmatprep.subr.mxu0 0.0
      %4558 = vmatpush2.msra.mxu0 0.0
      %4559 = vmatprep.subr.mxu0 0.0
      %4560 = vmatpush2.msra.mxu0 0.0
      %4561 = vmatprep.subr.mxu0 0.0
      %4562 = vmatpush2.msra.mxu0 0.0
      %4563 = vmatprep.subr.mxu0 0.0
      %4564 = vmatpush2.msra.mxu0 0.0
      %4565 = vmatprep.subr.mxu0 0.0
      %4566 = vmatpush2.msra.mxu0 0.0
      %4567 = vmatprep.subr.mxu0 0.0
      %4568 = vmatpush2.msra.mxu0 0.0
      %4569 = vmatprep.subr.mxu0 0.0
      %4570 = vmatpush2.msra.mxu0 0.0
      %4571 = vmatprep.subr.mxu0 0.0
      %4572 = vmatpush2.msra.mxu0 0.0
      %4573 = vmatprep.subr.mxu0 0.0
      %4574 = vmatpush2.msra.mxu0 0.0
      %4575 = vmatprep.subr.mxu0 0.0
      %4576 = vmatpush2.msra.mxu0 0.0
      %4577 = vmatprep.subr.mxu0 0.0
      %4578 = vmatpush2.msra.mxu0 0.0
      %4579 = vmatprep.subr.mxu0 0.0
      %4580 = vmatpush2.msra.mxu0 0.0
      %4581 = vmatprep.subr.mxu0 0.0
      %4582 = vmatpush2.msra.mxu0 0.0
      %4583 = vmatprep.subr.mxu0 0.0
      %4584 = vmatpush2.msra.mxu0 0.0
      %4585 = vmatprep.mubr.f32.mxu0 0.0
      %4586 = vmatmul.mubr.f32.gmra.mxu0 %v4519
      %v4587 = vpop.f32.mrf.mxu0
      %v4588 = vadd.f32 %v4516, %v4587
      %v4589 = vpop.f32.mrf.mxu0
      %4590 = vdwg.mxu0
      %v4591 = vmax.f32 %v4588, 0.0
      %v4592 = vld [vmem:[%s9] sm:$0xff]
      %v4593 = vld [vmem:[%s9 + $0x8] sm:$0xff]
      %v4594 = vld [vmem:[%s9 + $0x10] sm:$0xff]
      %v4595 = vld [vmem:[%s9 + $0x18] sm:$0xff]
      %v4596 = vld [vmem:[%s9 + $0x20] sm:$0xff]
      %v4597 = vld [vmem:[%s9 + $0x28] sm:$0xff]
      %v4598 = vld [vmem:[%s9 + $0x30] sm:$0xff]
      %v4599 = vld [vmem:[%s9 + $0x38] sm:$0xff]
      %v4601 = vlaneseq
      %v4602 = vshrl.u32 %v4601, 7
      %v4603 = vsub.s32 0, %v4602
      %v4604 = vrot.slane %v416, %v4603
      %vm4606 = vcmask 523264
      %v4608 = vsel %vm4606, %v4591, 0
      %4610 = vmatprep.subr.mxu0 0.0
      %4611 = vmatpush1.msra.mxu0 0.0
      %4612 = vmatprep.subr.mxu0 0.0
      %4613 = vmatpush1.msra.mxu0 0.0
      %4614 = vmatprep.subr.mxu0 0.0
      %4615 = vmatpush1.msra.mxu0 0.0
      %4616 = vmatprep.subr.mxu0 0.0
      %4617 = vmatpush1.msra.mxu0 0.0
      %4618 = vmatprep.subr.mxu0 0.0
      %4619 = vmatpush1.msra.mxu0 0.0
      %4620 = vmatprep.subr.mxu0 0.0
      %4621 = vmatpush1.msra.mxu0 0.0
      %4622 = vmatprep.subr.mxu0 0.0
      %4623 = vmatpush1.msra.mxu0 0.0
      %4624 = vmatprep.subr.mxu0 0.0
      %4625 = vmatpush1.msra.mxu0 0.0
      %4626 = vmatprep.subr.mxu0 0.0
      %4627 = vmatpush1.msra.mxu0 %v4599
      %4628 = vmatprep.subr.mxu0 0.0
      %4629 = vmatpush1.msra.mxu0 %v4598
      %4630 = vmatprep.subr.mxu0 0.0
      %4631 = vmatpush1.msra.mxu0 %v4597
      %4632 = vmatprep.subr.mxu0 0.0
      %4633 = vmatpush1.msra.mxu0 %v4596
      %4634 = vmatprep.subr.mxu0 0.0
      %4635 = vmatpush1.msra.mxu0 %v4595
      %4636 = vmatprep.subr.mxu0 0.0
      %4637 = vmatpush1.msra.mxu0 %v4594
      %4638 = vmatprep.subr.mxu0 0.0
      %4639 = vmatpush1.msra.mxu0 %v4593
      %4640 = vmatprep.subr.mxu0 0.0
      %4641 = vmatpush1.msra.mxu0 %v4592
      %4642 = vmatprep.subr.mxu0 0.0
      %4643 = vmatpush2.msra.mxu0 0.0
      %4644 = vmatprep.subr.mxu0 0.0
      %4645 = vmatpush2.msra.mxu0 0.0
      %4646 = vmatprep.subr.mxu0 0.0
      %4647 = vmatpush2.msra.mxu0 0.0
      %4648 = vmatprep.subr.mxu0 0.0
      %4649 = vmatpush2.msra.mxu0 0.0
      %4650 = vmatprep.subr.mxu0 0.0
      %4651 = vmatpush2.msra.mxu0 0.0
      %4652 = vmatprep.subr.mxu0 0.0
      %4653 = vmatpush2.msra.mxu0 0.0
      %4654 = vmatprep.subr.mxu0 0.0
      %4655 = vmatpush2.msra.mxu0 0.0
      %4656 = vmatprep.subr.mxu0 0.0
      %4657 = vmatpush2.msra.mxu0 0.0
      %4658 = vmatprep.subr.mxu0 0.0
      %4659 = vmatpush2.msra.mxu0 0.0
      %4660 = vmatprep.subr.mxu0 0.0
      %4661 = vmatpush2.msra.mxu0 0.0
      %4662 = vmatprep.subr.mxu0 0.0
      %4663 = vmatpush2.msra.mxu0 0.0
      %4664 = vmatprep.subr.mxu0 0.0
      %4665 = vmatpush2.msra.mxu0 0.0
      %4666 = vmatprep.subr.mxu0 0.0
      %4667 = vmatpush2.msra.mxu0 0.0
      %4668 = vmatprep.subr.mxu0 0.0
      %4669 = vmatpush2.msra.mxu0 0.0
      %4670 = vmatprep.subr.mxu0 0.0
      %4671 = vmatpush2.msra.mxu0 0.0
      %4672 = vmatprep.subr.mxu0 0.0
      %4673 = vmatpush2.msra.mxu0 0.0
      %4674 = vmatprep.mubr.f32.mxu0 0.0
      %4675 = vmatmul.mubr.f32.gmra.mxu0 %v4608
      %v4676 = vpop.f32.mrf.mxu0
      %v4677 = vadd.f32 %v4604, %v4676
      %v4678 = vpop.f32.mrf.mxu0
      %4679 = vdwg.mxu0
      %v4680 = vadd.f32 %v4506, %v4677
      %v4681 = vsel %vm446, %v4680, 0.0
      %4682 = vadd.xlane.f32.xlu0 %v4681
      %v4683 = vpop.xlane.xlu0 %4682
      %v4684 = vmul.f32 %v4683, %v2437
      %v4685 = vsub.f32 %v4680, %v4684
      %v4686 = vmul.f32 %v4685, %v4685
      %v4687 = vsel %vm446, %v4686, 0.0
      %4688 = vadd.xlane.f32.xlu0 %v4687
      %v4689 = vpop.xlane.xlu0 %4688
      %v4690 = vmul.f32 %v4689, %v2437
      %v4691 = vadd.f32 %v4690, 1e-05
      %v4692 = vrsqrt.pop %v4691
      %v4693 = vmul.f32 %v4685, %v4692
      %v4695 = vlaneseq
      %v4696 = vshrl.u32 %v4695, 7
      %v4697 = vsub.s32 0, %v4696
      %v4698 = vrot.slane %v412, %v4697
      %v4700 = vmul.f32 %v4693, %v4698
      %v4702 = vlaneseq
      %v4703 = vshrl.u32 %v4702, 7
      %v4704 = vsub.s32 0, %v4703
      %v4705 = vrot.slane %v414, %v4704
      %v4707 = vadd.f32 %v4700, %v4705
      %s4708 = scalar_lea.vmem %s6, 9
      %v4709 = vld [vmem:[%s4708] sm:$0x1]
      %s4710 = scalar_lea.vmem %s6, 10
      %v4711 = vld [vmem:[%s4710] sm:$0x1]
      %s4712 = scalar_lea.vmem %s6, 11
      %v4713 = vld [vmem:[%s4712] sm:$0x1]
      %s4714 = scalar_lea.vmem %s6, 12
      %v4715 = vld [vmem:[%s4714] sm:$0x1]
      %s4716 = scalar_lea.vmem %s6, 13
      %v4717 = vld [vmem:[%s4716] sm:$0x1]
      %s4718 = scalar_lea.vmem %s6, 14
      %v4719 = vld [vmem:[%s4718] sm:$0x1]
      %s4720 = scalar_lea.vmem %s6, 15
      %v4721 = vld [vmem:[%s4720] sm:$0x1]
      %s4722 = scalar_lea.vmem %s6, 16
      %v4723 = vld [vmem:[%s4722] sm:$0x1]
      %s4724 = scalar_lea.vmem %s6, 17
      %v4725 = vld [vmem:[%s4724] sm:$0x1]
      %s4726 = scalar_lea.vmem %s5, 64
      %v4727 = vld [vmem:[%s4726] sm:$0xff]
      %v4728 = vld [vmem:[%s4726 + $0x8] sm:$0xff]
      %v4729 = vld [vmem:[%s4726 + $0x10] sm:$0xff]
      %v4730 = vld [vmem:[%s4726 + $0x18] sm:$0xff]
      %s4731 = scalar_lea.vmem %s3, 768
      %v4732 = vld [vmem:[%s4731] sm:$0xff]
      %v4733 = vld [vmem:[%s4731 + $0x8] sm:$0xff]
      %v4734 = vld [vmem:[%s4731 + $0x10] sm:$0xff]
      %v4735 = vld [vmem:[%s4731 + $0x18] sm:$0xff]
      %s4736 = scalar_lea.vmem %s3, 896
      %v4737 = vld [vmem:[%s4736] sm:$0xff]
      %v4738 = vld [vmem:[%s4736 + $0x8] sm:$0xff]
      %v4739 = vld [vmem:[%s4736 + $0x10] sm:$0xff]
      %v4740 = vld [vmem:[%s4736 + $0x18] sm:$0xff]
      %s4741 = scalar_lea.vmem %s3, 1024
      %v4742 = vld [vmem:[%s4741] sm:$0xff]
      %v4743 = vld [vmem:[%s4741 + $0x8] sm:$0xff]
      %v4744 = vld [vmem:[%s4741 + $0x10] sm:$0xff]
      %v4745 = vld [vmem:[%s4741 + $0x18] sm:$0xff]
      %s4746 = scalar_lea.vmem %s4, 24
      %v4747 = vld [vmem:[%s4746] sm:$0x1]
      %s4748 = scalar_lea.vmem %s4, 28
      %v4749 = vld [vmem:[%s4748] sm:$0x1]
      %s4750 = scalar_lea.vmem %s4, 32
      %v4751 = vld [vmem:[%s4750] sm:$0x1]
      %v4753 = vlaneseq
      %v4754 = vshrl.u32 %v4753, 7
      %v4755 = vsub.s32 0, %v4754
      %v4756 = vrot.slane %v4747, %v4755
      %v4759 = vsel %vm446, %v4707, 0
      %4761 = vmatprep.subr.mxu0 0.0
      %4762 = vmatpush1.msra.mxu0 0.0
      %4763 = vmatprep.subr.mxu0 0.0
      %4764 = vmatpush1.msra.mxu0 0.0
      %4765 = vmatprep.subr.mxu0 0.0
      %4766 = vmatpush1.msra.mxu0 0.0
      %4767 = vmatprep.subr.mxu0 0.0
      %4768 = vmatpush1.msra.mxu0 0.0
      %4769 = vmatprep.subr.mxu0 0.0
      %4770 = vmatpush1.msra.mxu0 0.0
      %4771 = vmatprep.subr.mxu0 0.0
      %4772 = vmatpush1.msra.mxu0 0.0
      %4773 = vmatprep.subr.mxu0 0.0
      %4774 = vmatpush1.msra.mxu0 0.0
      %4775 = vmatprep.subr.mxu0 0.0
      %4776 = vmatpush1.msra.mxu0 0.0
      %4777 = vmatprep.subr.mxu0 0.0
      %4778 = vmatpush1.msra.mxu0 0.0
      %4779 = vmatprep.subr.mxu0 0.0
      %4780 = vmatpush1.msra.mxu0 0.0
      %4781 = vmatprep.subr.mxu0 0.0
      %4782 = vmatpush1.msra.mxu0 0.0
      %4783 = vmatprep.subr.mxu0 0.0
      %4784 = vmatpush1.msra.mxu0 0.0
      %4785 = vmatprep.subr.mxu0 0.0
      %4786 = vmatpush1.msra.mxu0 %v4735
      %4787 = vmatprep.subr.mxu0 0.0
      %4788 = vmatpush1.msra.mxu0 %v4734
      %4789 = vmatprep.subr.mxu0 0.0
      %4790 = vmatpush1.msra.mxu0 %v4733
      %4791 = vmatprep.subr.mxu0 0.0
      %4792 = vmatpush1.msra.mxu0 %v4732
      %4793 = vmatprep.subr.mxu0 0.0
      %4794 = vmatpush2.msra.mxu0 0.0
      %4795 = vmatprep.subr.mxu0 0.0
      %4796 = vmatpush2.msra.mxu0 0.0
      %4797 = vmatprep.subr.mxu0 0.0
      %4798 = vmatpush2.msra.mxu0 0.0
      %4799 = vmatprep.subr.mxu0 0.0
      %4800 = vmatpush2.msra.mxu0 0.0
      %4801 = vmatprep.subr.mxu0 0.0
      %4802 = vmatpush2.msra.mxu0 0.0
      %4803 = vmatprep.subr.mxu0 0.0
      %4804 = vmatpush2.msra.mxu0 0.0
      %4805 = vmatprep.subr.mxu0 0.0
      %4806 = vmatpush2.msra.mxu0 0.0
      %4807 = vmatprep.subr.mxu0 0.0
      %4808 = vmatpush2.msra.mxu0 0.0
      %4809 = vmatprep.subr.mxu0 0.0
      %4810 = vmatpush2.msra.mxu0 0.0
      %4811 = vmatprep.subr.mxu0 0.0
      %4812 = vmatpush2.msra.mxu0 0.0
      %4813 = vmatprep.subr.mxu0 0.0
      %4814 = vmatpush2.msra.mxu0 0.0
      %4815 = vmatprep.subr.mxu0 0.0
      %4816 = vmatpush2.msra.mxu0 0.0
      %4817 = vmatprep.subr.mxu0 0.0
      %4818 = vmatpush2.msra.mxu0 0.0
      %4819 = vmatprep.subr.mxu0 0.0
      %4820 = vmatpush2.msra.mxu0 0.0
      %4821 = vmatprep.subr.mxu0 0.0
      %4822 = vmatpush2.msra.mxu0 0.0
      %4823 = vmatprep.subr.mxu0 0.0
      %4824 = vmatpush2.msra.mxu0 0.0
      %4825 = vmatprep.mubr.f32.mxu0 0.0
      %4826 = vmatmul.mubr.f32.gmra.mxu0 %v4759
      %v4827 = vpop.f32.mrf.mxu0
      %v4828 = vadd.f32 %v4756, %v4827
      %v4829 = vpop.f32.mrf.mxu0
      %4830 = vdwg.mxu0
      %v4832 = vlaneseq
      %v4833 = vshrl.u32 %v4832, 7
      %v4834 = vsub.s32 0, %v4833
      %v4835 = vrot.slane %v4749, %v4834
      %4837 = vmatprep.subr.mxu0 0.0
      %4838 = vmatpush1.msra.mxu0 0.0
      %4839 = vmatprep.subr.mxu0 0.0
      %4840 = vmatpush1.msra.mxu0 0.0
      %4841 = vmatprep.subr.mxu0 0.0
      %4842 = vmatpush1.msra.mxu0 0.0
      %4843 = vmatprep.subr.mxu0 0.0
      %4844 = vmatpush1.msra.mxu0 0.0
      %4845 = vmatprep.subr.mxu0 0.0
      %4846 = vmatpush1.msra.mxu0 0.0
      %4847 = vmatprep.subr.mxu0 0.0
      %4848 = vmatpush1.msra.mxu0 0.0
      %4849 = vmatprep.subr.mxu0 0.0
      %4850 = vmatpush1.msra.mxu0 0.0
      %4851 = vmatprep.subr.mxu0 0.0
      %4852 = vmatpush1.msra.mxu0 0.0
      %4853 = vmatprep.subr.mxu0 0.0
      %4854 = vmatpush1.msra.mxu0 0.0
      %4855 = vmatprep.subr.mxu0 0.0
      %4856 = vmatpush1.msra.mxu0 0.0
      %4857 = vmatprep.subr.mxu0 0.0
      %4858 = vmatpush1.msra.mxu0 0.0
      %4859 = vmatprep.subr.mxu0 0.0
      %4860 = vmatpush1.msra.mxu0 0.0
      %4861 = vmatprep.subr.mxu0 0.0
      %4862 = vmatpush1.msra.mxu0 %v4740
      %4863 = vmatprep.subr.mxu0 0.0
      %4864 = vmatpush1.msra.mxu0 %v4739
      %4865 = vmatprep.subr.mxu0 0.0
      %4866 = vmatpush1.msra.mxu0 %v4738
      %4867 = vmatprep.subr.mxu0 0.0
      %4868 = vmatpush1.msra.mxu0 %v4737
      %4869 = vmatprep.subr.mxu0 0.0
      %4870 = vmatpush2.msra.mxu0 0.0
      %4871 = vmatprep.subr.mxu0 0.0
      %4872 = vmatpush2.msra.mxu0 0.0
      %4873 = vmatprep.subr.mxu0 0.0
      %4874 = vmatpush2.msra.mxu0 0.0
      %4875 = vmatprep.subr.mxu0 0.0
      %4876 = vmatpush2.msra.mxu0 0.0
      %4877 = vmatprep.subr.mxu0 0.0
      %4878 = vmatpush2.msra.mxu0 0.0
      %4879 = vmatprep.subr.mxu0 0.0
      %4880 = vmatpush2.msra.mxu0 0.0
      %4881 = vmatprep.subr.mxu0 0.0
      %4882 = vmatpush2.msra.mxu0 0.0
      %4883 = vmatprep.subr.mxu0 0.0
      %4884 = vmatpush2.msra.mxu0 0.0
      %4885 = vmatprep.subr.mxu0 0.0
      %4886 = vmatpush2.msra.mxu0 0.0
      %4887 = vmatprep.subr.mxu0 0.0
      %4888 = vmatpush2.msra.mxu0 0.0
      %4889 = vmatprep.subr.mxu0 0.0
      %4890 = vmatpush2.msra.mxu0 0.0
      %4891 = vmatprep.subr.mxu0 0.0
      %4892 = vmatpush2.msra.mxu0 0.0
      %4893 = vmatprep.subr.mxu0 0.0
      %4894 = vmatpush2.msra.mxu0 0.0
      %4895 = vmatprep.subr.mxu0 0.0
      %4896 = vmatpush2.msra.mxu0 0.0
      %4897 = vmatprep.subr.mxu0 0.0
      %4898 = vmatpush2.msra.mxu0 0.0
      %4899 = vmatprep.subr.mxu0 0.0
      %4900 = vmatpush2.msra.mxu0 0.0
      %4901 = vmatprep.mubr.f32.mxu0 0.0
      %4902 = vmatmul.mubr.f32.gmra.mxu0 %v527
      %v4903 = vpop.f32.mrf.mxu0
      %v4904 = vadd.f32 %v4835, %v4903
      %v4905 = vpop.f32.mrf.mxu0
      %4906 = vmatprep.mubr.f32.mxu0 0.0
      %4907 = vmatmul.mubr.f32.gmra.mxu0 %v530
      %v4908 = vpop.f32.mrf.mxu0
      %v4909 = vadd.f32 %v4835, %v4908
      %v4910 = vpop.f32.mrf.mxu0
      %4911 = vdwg.mxu0
      %v4913 = vlaneseq
      %v4914 = vshrl.u32 %v4913, 7
      %v4915 = vsub.s32 0, %v4914
      %v4916 = vrot.slane %v4751, %v4915
      %4918 = vmatprep.subr.mxu0 0.0
      %4919 = vmatpush1.msra.mxu0 0.0
      %4920 = vmatprep.subr.mxu0 0.0
      %4921 = vmatpush1.msra.mxu0 0.0
      %4922 = vmatprep.subr.mxu0 0.0
      %4923 = vmatpush1.msra.mxu0 0.0
      %4924 = vmatprep.subr.mxu0 0.0
      %4925 = vmatpush1.msra.mxu0 0.0
      %4926 = vmatprep.subr.mxu0 0.0
      %4927 = vmatpush1.msra.mxu0 0.0
      %4928 = vmatprep.subr.mxu0 0.0
      %4929 = vmatpush1.msra.mxu0 0.0
      %4930 = vmatprep.subr.mxu0 0.0
      %4931 = vmatpush1.msra.mxu0 0.0
      %4932 = vmatprep.subr.mxu0 0.0
      %4933 = vmatpush1.msra.mxu0 0.0
      %4934 = vmatprep.subr.mxu0 0.0
      %4935 = vmatpush1.msra.mxu0 0.0
      %4936 = vmatprep.subr.mxu0 0.0
      %4937 = vmatpush1.msra.mxu0 0.0
      %4938 = vmatprep.subr.mxu0 0.0
      %4939 = vmatpush1.msra.mxu0 0.0
      %4940 = vmatprep.subr.mxu0 0.0
      %4941 = vmatpush1.msra.mxu0 0.0
      %4942 = vmatprep.subr.mxu0 0.0
      %4943 = vmatpush1.msra.mxu0 %v4745
      %4944 = vmatprep.subr.mxu0 0.0
      %4945 = vmatpush1.msra.mxu0 %v4744
      %4946 = vmatprep.subr.mxu0 0.0
      %4947 = vmatpush1.msra.mxu0 %v4743
      %4948 = vmatprep.subr.mxu0 0.0
      %4949 = vmatpush1.msra.mxu0 %v4742
      %4950 = vmatprep.subr.mxu0 0.0
      %4951 = vmatpush2.msra.mxu0 0.0
      %4952 = vmatprep.subr.mxu0 0.0
      %4953 = vmatpush2.msra.mxu0 0.0
      %4954 = vmatprep.subr.mxu0 0.0
      %4955 = vmatpush2.msra.mxu0 0.0
      %4956 = vmatprep.subr.mxu0 0.0
      %4957 = vmatpush2.msra.mxu0 0.0
      %4958 = vmatprep.subr.mxu0 0.0
      %4959 = vmatpush2.msra.mxu0 0.0
      %4960 = vmatprep.subr.mxu0 0.0
      %4961 = vmatpush2.msra.mxu0 0.0
      %4962 = vmatprep.subr.mxu0 0.0
      %4963 = vmatpush2.msra.mxu0 0.0
      %4964 = vmatprep.subr.mxu0 0.0
      %4965 = vmatpush2.msra.mxu0 0.0
      %4966 = vmatprep.subr.mxu0 0.0
      %4967 = vmatpush2.msra.mxu0 0.0
      %4968 = vmatprep.subr.mxu0 0.0
      %4969 = vmatpush2.msra.mxu0 0.0
      %4970 = vmatprep.subr.mxu0 0.0
      %4971 = vmatpush2.msra.mxu0 0.0
      %4972 = vmatprep.subr.mxu0 0.0
      %4973 = vmatpush2.msra.mxu0 0.0
      %4974 = vmatprep.subr.mxu0 0.0
      %4975 = vmatpush2.msra.mxu0 0.0
      %4976 = vmatprep.subr.mxu0 0.0
      %4977 = vmatpush2.msra.mxu0 0.0
      %4978 = vmatprep.subr.mxu0 0.0
      %4979 = vmatpush2.msra.mxu0 0.0
      %4980 = vmatprep.subr.mxu0 0.0
      %4981 = vmatpush2.msra.mxu0 0.0
      %4982 = vmatprep.mubr.f32.mxu0 0.0
      %4983 = vmatmul.mubr.f32.gmra.mxu0 %v527
      %v4984 = vpop.f32.mrf.mxu0
      %v4985 = vadd.f32 %v4916, %v4984
      %v4986 = vpop.f32.mrf.mxu0
      %4987 = vmatprep.mubr.f32.mxu0 0.0
      %4988 = vmatmul.mubr.f32.gmra.mxu0 %v530
      %v4989 = vpop.f32.mrf.mxu0
      %v4990 = vadd.f32 %v4916, %v4989
      %v4991 = vpop.f32.mrf.mxu0
      %4992 = vdwg.mxu0
      %v4994 = vsel %vm688, %v4828, 0
      %v4997 = vsel %vm688, %v4904, 0
      %v5000 = vsel %vm688, %v4909, 0
      %5002 = vmatprep.subr.mxu0 0.0
      %5003 = vmatpush1.xpose.msra.mxu0 0.0
      %5004 = vmatprep.subr.mxu0 0.0
      %5005 = vmatpush1.xpose.msra.mxu0 0.0
      %5006 = vmatprep.subr.mxu0 0.0
      %5007 = vmatpush1.xpose.msra.mxu0 0.0
      %5008 = vmatprep.subr.mxu0 0.0
      %5009 = vmatpush1.xpose.msra.mxu0 0.0
      %5010 = vmatprep.subr.mxu0 0.0
      %5011 = vmatpush1.xpose.msra.mxu0 0.0
      %5012 = vmatprep.subr.mxu0 0.0
      %5013 = vmatpush1.xpose.msra.mxu0 0.0
      %5014 = vmatprep.subr.mxu0 0.0
      %5015 = vmatpush1.xpose.msra.mxu0 0.0
      %5016 = vmatprep.subr.mxu0 0.0
      %5017 = vmatpush1.xpose.msra.mxu0 0.0
      %5018 = vmatprep.subr.mxu0 0.0
      %5019 = vmatpush1.xpose.msra.mxu0 0.0
      %5020 = vmatprep.subr.mxu0 0.0
      %5021 = vmatpush1.xpose.msra.mxu0 0.0
      %5022 = vmatprep.subr.mxu0 0.0
      %5023 = vmatpush1.xpose.msra.mxu0 0.0
      %5024 = vmatprep.subr.mxu0 0.0
      %5025 = vmatpush1.xpose.msra.mxu0 0.0
      %5026 = vmatprep.subr.mxu0 0.0
      %5027 = vmatpush1.xpose.msra.mxu0 0.0
      %5028 = vmatprep.subr.mxu0 0.0
      %5029 = vmatpush1.xpose.msra.mxu0 0.0
      %5030 = vmatprep.subr.mxu0 0.0
      %5031 = vmatpush1.xpose.msra.mxu0 %v5000
      %5032 = vmatprep.subr.mxu0 0.0
      %5033 = vmatpush1.xpose.msra.mxu0 %v4997
      %5034 = vmatprep.subr.mxu0 0.0
      %5035 = vmatpush2.xpose.msra.mxu0 0.0
      %5036 = vmatprep.subr.mxu0 0.0
      %5037 = vmatpush2.xpose.msra.mxu0 0.0
      %5038 = vmatprep.subr.mxu0 0.0
      %5039 = vmatpush2.xpose.msra.mxu0 0.0
      %5040 = vmatprep.subr.mxu0 0.0
      %5041 = vmatpush2.xpose.msra.mxu0 0.0
      %5042 = vmatprep.subr.mxu0 0.0
      %5043 = vmatpush2.xpose.msra.mxu0 0.0
      %5044 = vmatprep.subr.mxu0 0.0
      %5045 = vmatpush2.xpose.msra.mxu0 0.0
      %5046 = vmatprep.subr.mxu0 0.0
      %5047 = vmatpush2.xpose.msra.mxu0 0.0
      %5048 = vmatprep.subr.mxu0 0.0
      %5049 = vmatpush2.xpose.msra.mxu0 0.0
      %5050 = vmatprep.subr.mxu0 0.0
      %5051 = vmatpush2.xpose.msra.mxu0 0.0
      %5052 = vmatprep.subr.mxu0 0.0
      %5053 = vmatpush2.xpose.msra.mxu0 0.0
      %5054 = vmatprep.subr.mxu0 0.0
      %5055 = vmatpush2.xpose.msra.mxu0 0.0
      %5056 = vmatprep.subr.mxu0 0.0
      %5057 = vmatpush2.xpose.msra.mxu0 0.0
      %5058 = vmatprep.subr.mxu0 0.0
      %5059 = vmatpush2.xpose.msra.mxu0 0.0
      %5060 = vmatprep.subr.mxu0 0.0
      %5061 = vmatpush2.xpose.msra.mxu0 0.0
      %5062 = vmatprep.subr.mxu0 0.0
      %5063 = vmatpush2.xpose.msra.mxu0 0.0
      %5064 = vmatprep.subr.mxu0 0.0
      %5065 = vmatpush2.xpose.msra.mxu0 0.0
      %5066 = vmatprep.mubr.f32.mxu0 0.0
      %5067 = vmatmul.mubr.f32.gmra.mxu0 %v4994
      %v5068 = vpop.f32.mrf.mxu0
      %v5069 = vadd.f32 0.0, %v5068
      %v5070 = vpop.f32.mrf.mxu0
      %5071 = vdwg.mxu0
      %v5072 = vsel %vm768, %v5069, -inf
      %5073 = vmax.xlane.f32.xlu0 %v5072
      %v5074 = vpop.xlane.xlu0 %5073
      %v5075 = vsub.f32 %v5069, %v5074
      %v5076 = vmul.f32 %v5075, 1.442695
      %v5077 = vpow.pop %v5076
      %v5078 = vsel %vm768, %v5077, 0.0
      %5079 = vadd.xlane.f32.xlu0 %v5078
      %v5080 = vpop.xlane.xlu0 %5079
      %v5081 = vrcp.pop %v5080
      %v5082 = vmul.f32 %v5077, %v5081
      %v5084 = vsel %vm768, %v5082, 0
      %v5087 = vsel %vm783, %v4990, 0
      %5089 = vmatprep.subr.mxu0 0.0
      %5090 = vmatpush1.msra.mxu0 0.0
      %5091 = vmatprep.subr.mxu0 0.0
      %5092 = vmatpush1.msra.mxu0 0.0
      %5093 = vmatprep.subr.mxu0 0.0
      %5094 = vmatpush1.msra.mxu0 0.0
      %5095 = vmatprep.subr.mxu0 0.0
      %5096 = vmatpush1.msra.mxu0 0.0
      %5097 = vmatprep.subr.mxu0 0.0
      %5098 = vmatpush1.msra.mxu0 0.0
      %5099 = vmatprep.subr.mxu0 0.0
      %5100 = vmatpush1.msra.mxu0 0.0
      %5101 = vmatprep.subr.mxu0 0.0
      %5102 = vmatpush1.msra.mxu0 0.0
      %5103 = vmatprep.subr.mxu0 0.0
      %5104 = vmatpush1.msra.mxu0 0.0
      %5105 = vmatprep.subr.mxu0 0.0
      %5106 = vmatpush1.msra.mxu0 0.0
      %5107 = vmatprep.subr.mxu0 0.0
      %5108 = vmatpush1.msra.mxu0 0.0
      %5109 = vmatprep.subr.mxu0 0.0
      %5110 = vmatpush1.msra.mxu0 0.0
      %5111 = vmatprep.subr.mxu0 0.0
      %5112 = vmatpush1.msra.mxu0 0.0
      %5113 = vmatprep.subr.mxu0 0.0
      %5114 = vmatpush1.msra.mxu0 0.0
      %5115 = vmatprep.subr.mxu0 0.0
      %5116 = vmatpush1.msra.mxu0 0.0
      %5117 = vmatprep.subr.mxu0 0.0
      %5118 = vmatpush1.msra.mxu0 %v5087
      %5119 = vmatprep.subr.mxu0 0.0
      %5120 = vmatpush1.msra.mxu0 %v4985
      %5121 = vmatprep.subr.mxu0 0.0
      %5122 = vmatpush2.msra.mxu0 0.0
      %5123 = vmatprep.subr.mxu0 0.0
      %5124 = vmatpush2.msra.mxu0 0.0
      %5125 = vmatprep.subr.mxu0 0.0
      %5126 = vmatpush2.msra.mxu0 0.0
      %5127 = vmatprep.subr.mxu0 0.0
      %5128 = vmatpush2.msra.mxu0 0.0
      %5129 = vmatprep.subr.mxu0 0.0
      %5130 = vmatpush2.msra.mxu0 0.0
      %5131 = vmatprep.subr.mxu0 0.0
      %5132 = vmatpush2.msra.mxu0 0.0
      %5133 = vmatprep.subr.mxu0 0.0
      %5134 = vmatpush2.msra.mxu0 0.0
      %5135 = vmatprep.subr.mxu0 0.0
      %5136 = vmatpush2.msra.mxu0 0.0
      %5137 = vmatprep.subr.mxu0 0.0
      %5138 = vmatpush2.msra.mxu0 0.0
      %5139 = vmatprep.subr.mxu0 0.0
      %5140 = vmatpush2.msra.mxu0 0.0
      %5141 = vmatprep.subr.mxu0 0.0
      %5142 = vmatpush2.msra.mxu0 0.0
      %5143 = vmatprep.subr.mxu0 0.0
      %5144 = vmatpush2.msra.mxu0 0.0
      %5145 = vmatprep.subr.mxu0 0.0
      %5146 = vmatpush2.msra.mxu0 0.0
      %5147 = vmatprep.subr.mxu0 0.0
      %5148 = vmatpush2.msra.mxu0 0.0
      %5149 = vmatprep.subr.mxu0 0.0
      %5150 = vmatpush2.msra.mxu0 0.0
      %5151 = vmatprep.subr.mxu0 0.0
      %5152 = vmatpush2.msra.mxu0 0.0
      %5153 = vmatprep.mubr.f32.mxu0 0.0
      %5154 = vmatmul.mubr.f32.gmra.mxu0 %v5084
      %v5155 = vpop.f32.mrf.mxu0
      %v5156 = vadd.f32 0.0, %v5155
      %v5157 = vpop.f32.mrf.mxu0
      %5158 = vdwg.mxu0
      %s5159 = scalar_lea.vmem %s3, 800
      %v5160 = vld [vmem:[%s5159] sm:$0xff]
      %v5161 = vld [vmem:[%s5159 + $0x8] sm:$0xff]
      %v5162 = vld [vmem:[%s5159 + $0x10] sm:$0xff]
      %v5163 = vld [vmem:[%s5159 + $0x18] sm:$0xff]
      %s5164 = scalar_lea.vmem %s3, 928
      %v5165 = vld [vmem:[%s5164] sm:$0xff]
      %v5166 = vld [vmem:[%s5164 + $0x8] sm:$0xff]
      %v5167 = vld [vmem:[%s5164 + $0x10] sm:$0xff]
      %v5168 = vld [vmem:[%s5164 + $0x18] sm:$0xff]
      %s5169 = scalar_lea.vmem %s3, 1056
      %v5170 = vld [vmem:[%s5169] sm:$0xff]
      %v5171 = vld [vmem:[%s5169 + $0x8] sm:$0xff]
      %v5172 = vld [vmem:[%s5169 + $0x10] sm:$0xff]
      %v5173 = vld [vmem:[%s5169 + $0x18] sm:$0xff]
      %s5174 = scalar_lea.vmem %s4, 25
      %v5175 = vld [vmem:[%s5174] sm:$0x1]
      %s5176 = scalar_lea.vmem %s4, 29
      %v5177 = vld [vmem:[%s5176] sm:$0x1]
      %s5178 = scalar_lea.vmem %s4, 33
      %v5179 = vld [vmem:[%s5178] sm:$0x1]
      %v5181 = vlaneseq
      %v5182 = vshrl.u32 %v5181, 7
      %v5183 = vsub.s32 0, %v5182
      %v5184 = vrot.slane %v5175, %v5183
      %5186 = vmatprep.subr.mxu0 0.0
      %5187 = vmatpush1.msra.mxu0 0.0
      %5188 = vmatprep.subr.mxu0 0.0
      %5189 = vmatpush1.msra.mxu0 0.0
      %5190 = vmatprep.subr.mxu0 0.0
      %5191 = vmatpush1.msra.mxu0 0.0
      %5192 = vmatprep.subr.mxu0 0.0
      %5193 = vmatpush1.msra.mxu0 0.0
      %5194 = vmatprep.subr.mxu0 0.0
      %5195 = vmatpush1.msra.mxu0 0.0
      %5196 = vmatprep.subr.mxu0 0.0
      %5197 = vmatpush1.msra.mxu0 0.0
      %5198 = vmatprep.subr.mxu0 0.0
      %5199 = vmatpush1.msra.mxu0 0.0
      %5200 = vmatprep.subr.mxu0 0.0
      %5201 = vmatpush1.msra.mxu0 0.0
      %5202 = vmatprep.subr.mxu0 0.0
      %5203 = vmatpush1.msra.mxu0 0.0
      %5204 = vmatprep.subr.mxu0 0.0
      %5205 = vmatpush1.msra.mxu0 0.0
      %5206 = vmatprep.subr.mxu0 0.0
      %5207 = vmatpush1.msra.mxu0 0.0
      %5208 = vmatprep.subr.mxu0 0.0
      %5209 = vmatpush1.msra.mxu0 0.0
      %5210 = vmatprep.subr.mxu0 0.0
      %5211 = vmatpush1.msra.mxu0 %v5163
      %5212 = vmatprep.subr.mxu0 0.0
      %5213 = vmatpush1.msra.mxu0 %v5162
      %5214 = vmatprep.subr.mxu0 0.0
      %5215 = vmatpush1.msra.mxu0 %v5161
      %5216 = vmatprep.subr.mxu0 0.0
      %5217 = vmatpush1.msra.mxu0 %v5160
      %5218 = vmatprep.subr.mxu0 0.0
      %5219 = vmatpush2.msra.mxu0 0.0
      %5220 = vmatprep.subr.mxu0 0.0
      %5221 = vmatpush2.msra.mxu0 0.0
      %5222 = vmatprep.subr.mxu0 0.0
      %5223 = vmatpush2.msra.mxu0 0.0
      %5224 = vmatprep.subr.mxu0 0.0
      %5225 = vmatpush2.msra.mxu0 0.0
      %5226 = vmatprep.subr.mxu0 0.0
      %5227 = vmatpush2.msra.mxu0 0.0
      %5228 = vmatprep.subr.mxu0 0.0
      %5229 = vmatpush2.msra.mxu0 0.0
      %5230 = vmatprep.subr.mxu0 0.0
      %5231 = vmatpush2.msra.mxu0 0.0
      %5232 = vmatprep.subr.mxu0 0.0
      %5233 = vmatpush2.msra.mxu0 0.0
      %5234 = vmatprep.subr.mxu0 0.0
      %5235 = vmatpush2.msra.mxu0 0.0
      %5236 = vmatprep.subr.mxu0 0.0
      %5237 = vmatpush2.msra.mxu0 0.0
      %5238 = vmatprep.subr.mxu0 0.0
      %5239 = vmatpush2.msra.mxu0 0.0
      %5240 = vmatprep.subr.mxu0 0.0
      %5241 = vmatpush2.msra.mxu0 0.0
      %5242 = vmatprep.subr.mxu0 0.0
      %5243 = vmatpush2.msra.mxu0 0.0
      %5244 = vmatprep.subr.mxu0 0.0
      %5245 = vmatpush2.msra.mxu0 0.0
      %5246 = vmatprep.subr.mxu0 0.0
      %5247 = vmatpush2.msra.mxu0 0.0
      %5248 = vmatprep.subr.mxu0 0.0
      %5249 = vmatpush2.msra.mxu0 0.0
      %5250 = vmatprep.mubr.f32.mxu0 0.0
      %5251 = vmatmul.mubr.f32.gmra.mxu0 %v4759
      %v5252 = vpop.f32.mrf.mxu0
      %v5253 = vadd.f32 %v5184, %v5252
      %v5254 = vpop.f32.mrf.mxu0
      %5255 = vdwg.mxu0
      %v5257 = vlaneseq
      %v5258 = vshrl.u32 %v5257, 7
      %v5259 = vsub.s32 0, %v5258
      %v5260 = vrot.slane %v5177, %v5259
      %5262 = vmatprep.subr.mxu0 0.0
      %5263 = vmatpush1.msra.mxu0 0.0
      %5264 = vmatprep.subr.mxu0 0.0
      %5265 = vmatpush1.msra.mxu0 0.0
      %5266 = vmatprep.subr.mxu0 0.0
      %5267 = vmatpush1.msra.mxu0 0.0
      %5268 = vmatprep.subr.mxu0 0.0
      %5269 = vmatpush1.msra.mxu0 0.0
      %5270 = vmatprep.subr.mxu0 0.0
      %5271 = vmatpush1.msra.mxu0 0.0
      %5272 = vmatprep.subr.mxu0 0.0
      %5273 = vmatpush1.msra.mxu0 0.0
      %5274 = vmatprep.subr.mxu0 0.0
      %5275 = vmatpush1.msra.mxu0 0.0
      %5276 = vmatprep.subr.mxu0 0.0
      %5277 = vmatpush1.msra.mxu0 0.0
      %5278 = vmatprep.subr.mxu0 0.0
      %5279 = vmatpush1.msra.mxu0 0.0
      %5280 = vmatprep.subr.mxu0 0.0
      %5281 = vmatpush1.msra.mxu0 0.0
      %5282 = vmatprep.subr.mxu0 0.0
      %5283 = vmatpush1.msra.mxu0 0.0
      %5284 = vmatprep.subr.mxu0 0.0
      %5285 = vmatpush1.msra.mxu0 0.0
      %5286 = vmatprep.subr.mxu0 0.0
      %5287 = vmatpush1.msra.mxu0 %v5168
      %5288 = vmatprep.subr.mxu0 0.0
      %5289 = vmatpush1.msra.mxu0 %v5167
      %5290 = vmatprep.subr.mxu0 0.0
      %5291 = vmatpush1.msra.mxu0 %v5166
      %5292 = vmatprep.subr.mxu0 0.0
      %5293 = vmatpush1.msra.mxu0 %v5165
      %5294 = vmatprep.subr.mxu0 0.0
      %5295 = vmatpush2.msra.mxu0 0.0
      %5296 = vmatprep.subr.mxu0 0.0
      %5297 = vmatpush2.msra.mxu0 0.0
      %5298 = vmatprep.subr.mxu0 0.0
      %5299 = vmatpush2.msra.mxu0 0.0
      %5300 = vmatprep.subr.mxu0 0.0
      %5301 = vmatpush2.msra.mxu0 0.0
      %5302 = vmatprep.subr.mxu0 0.0
      %5303 = vmatpush2.msra.mxu0 0.0
      %5304 = vmatprep.subr.mxu0 0.0
      %5305 = vmatpush2.msra.mxu0 0.0
      %5306 = vmatprep.subr.mxu0 0.0
      %5307 = vmatpush2.msra.mxu0 0.0
      %5308 = vmatprep.subr.mxu0 0.0
      %5309 = vmatpush2.msra.mxu0 0.0
      %5310 = vmatprep.subr.mxu0 0.0
      %5311 = vmatpush2.msra.mxu0 0.0
      %5312 = vmatprep.subr.mxu0 0.0
      %5313 = vmatpush2.msra.mxu0 0.0
      %5314 = vmatprep.subr.mxu0 0.0
      %5315 = vmatpush2.msra.mxu0 0.0
      %5316 = vmatprep.subr.mxu0 0.0
      %5317 = vmatpush2.msra.mxu0 0.0
      %5318 = vmatprep.subr.mxu0 0.0
      %5319 = vmatpush2.msra.mxu0 0.0
      %5320 = vmatprep.subr.mxu0 0.0
      %5321 = vmatpush2.msra.mxu0 0.0
      %5322 = vmatprep.subr.mxu0 0.0
      %5323 = vmatpush2.msra.mxu0 0.0
      %5324 = vmatprep.subr.mxu0 0.0
      %5325 = vmatpush2.msra.mxu0 0.0
      %5326 = vmatprep.mubr.f32.mxu0 0.0
      %5327 = vmatmul.mubr.f32.gmra.mxu0 %v527
      %v5328 = vpop.f32.mrf.mxu0
      %v5329 = vadd.f32 %v5260, %v5328
      %v5330 = vpop.f32.mrf.mxu0
      %5331 = vmatprep.mubr.f32.mxu0 0.0
      %5332 = vmatmul.mubr.f32.gmra.mxu0 %v530
      %v5333 = vpop.f32.mrf.mxu0
      %v5334 = vadd.f32 %v5260, %v5333
      %v5335 = vpop.f32.mrf.mxu0
      %5336 = vdwg.mxu0
      %v5338 = vlaneseq
      %v5339 = vshrl.u32 %v5338, 7
      %v5340 = vsub.s32 0, %v5339
      %v5341 = vrot.slane %v5179, %v5340
      %5343 = vmatprep.subr.mxu0 0.0
      %5344 = vmatpush1.msra.mxu0 0.0
      %5345 = vmatprep.subr.mxu0 0.0
      %5346 = vmatpush1.msra.mxu0 0.0
      %5347 = vmatprep.subr.mxu0 0.0
      %5348 = vmatpush1.msra.mxu0 0.0
      %5349 = vmatprep.subr.mxu0 0.0
      %5350 = vmatpush1.msra.mxu0 0.0
      %5351 = vmatprep.subr.mxu0 0.0
      %5352 = vmatpush1.msra.mxu0 0.0
      %5353 = vmatprep.subr.mxu0 0.0
      %5354 = vmatpush1.msra.mxu0 0.0
      %5355 = vmatprep.subr.mxu0 0.0
      %5356 = vmatpush1.msra.mxu0 0.0
      %5357 = vmatprep.subr.mxu0 0.0
      %5358 = vmatpush1.msra.mxu0 0.0
      %5359 = vmatprep.subr.mxu0 0.0
      %5360 = vmatpush1.msra.mxu0 0.0
      %5361 = vmatprep.subr.mxu0 0.0
      %5362 = vmatpush1.msra.mxu0 0.0
      %5363 = vmatprep.subr.mxu0 0.0
      %5364 = vmatpush1.msra.mxu0 0.0
      %5365 = vmatprep.subr.mxu0 0.0
      %5366 = vmatpush1.msra.mxu0 0.0
      %5367 = vmatprep.subr.mxu0 0.0
      %5368 = vmatpush1.msra.mxu0 %v5173
      %5369 = vmatprep.subr.mxu0 0.0
      %5370 = vmatpush1.msra.mxu0 %v5172
      %5371 = vmatprep.subr.mxu0 0.0
      %5372 = vmatpush1.msra.mxu0 %v5171
      %5373 = vmatprep.subr.mxu0 0.0
      %5374 = vmatpush1.msra.mxu0 %v5170
      %5375 = vmatprep.subr.mxu0 0.0
      %5376 = vmatpush2.msra.mxu0 0.0
      %5377 = vmatprep.subr.mxu0 0.0
      %5378 = vmatpush2.msra.mxu0 0.0
      %5379 = vmatprep.subr.mxu0 0.0
      %5380 = vmatpush2.msra.mxu0 0.0
      %5381 = vmatprep.subr.mxu0 0.0
      %5382 = vmatpush2.msra.mxu0 0.0
      %5383 = vmatprep.subr.mxu0 0.0
      %5384 = vmatpush2.msra.mxu0 0.0
      %5385 = vmatprep.subr.mxu0 0.0
      %5386 = vmatpush2.msra.mxu0 0.0
      %5387 = vmatprep.subr.mxu0 0.0
      %5388 = vmatpush2.msra.mxu0 0.0
      %5389 = vmatprep.subr.mxu0 0.0
      %5390 = vmatpush2.msra.mxu0 0.0
      %5391 = vmatprep.subr.mxu0 0.0
      %5392 = vmatpush2.msra.mxu0 0.0
      %5393 = vmatprep.subr.mxu0 0.0
      %5394 = vmatpush2.msra.mxu0 0.0
      %5395 = vmatprep.subr.mxu0 0.0
      %5396 = vmatpush2.msra.mxu0 0.0
      %5397 = vmatprep.subr.mxu0 0.0
      %5398 = vmatpush2.msra.mxu0 0.0
      %5399 = vmatprep.subr.mxu0 0.0
      %5400 = vmatpush2.msra.mxu0 0.0
      %5401 = vmatprep.subr.mxu0 0.0
      %5402 = vmatpush2.msra.mxu0 0.0
      %5403 = vmatprep.subr.mxu0 0.0
      %5404 = vmatpush2.msra.mxu0 0.0
      %5405 = vmatprep.subr.mxu0 0.0
      %5406 = vmatpush2.msra.mxu0 0.0
      %5407 = vmatprep.mubr.f32.mxu0 0.0
      %5408 = vmatmul.mubr.f32.gmra.mxu0 %v527
      %v5409 = vpop.f32.mrf.mxu0
      %v5410 = vadd.f32 %v5341, %v5409
      %v5411 = vpop.f32.mrf.mxu0
      %5412 = vmatprep.mubr.f32.mxu0 0.0
      %5413 = vmatmul.mubr.f32.gmra.mxu0 %v530
      %v5414 = vpop.f32.mrf.mxu0
      %v5415 = vadd.f32 %v5341, %v5414
      %v5416 = vpop.f32.mrf.mxu0
      %5417 = vdwg.mxu0
      %v5419 = vsel %vm688, %v5253, 0
      %v5422 = vsel %vm688, %v5329, 0
      %v5425 = vsel %vm688, %v5334, 0
      %5427 = vmatprep.subr.mxu0 0.0
      %5428 = vmatpush1.xpose.msra.mxu0 0.0
      %5429 = vmatprep.subr.mxu0 0.0
      %5430 = vmatpush1.xpose.msra.mxu0 0.0
      %5431 = vmatprep.subr.mxu0 0.0
      %5432 = vmatpush1.xpose.msra.mxu0 0.0
      %5433 = vmatprep.subr.mxu0 0.0
      %5434 = vmatpush1.xpose.msra.mxu0 0.0
      %5435 = vmatprep.subr.mxu0 0.0
      %5436 = vmatpush1.xpose.msra.mxu0 0.0
      %5437 = vmatprep.subr.mxu0 0.0
      %5438 = vmatpush1.xpose.msra.mxu0 0.0
      %5439 = vmatprep.subr.mxu0 0.0
      %5440 = vmatpush1.xpose.msra.mxu0 0.0
      %5441 = vmatprep.subr.mxu0 0.0
      %5442 = vmatpush1.xpose.msra.mxu0 0.0
      %5443 = vmatprep.subr.mxu0 0.0
      %5444 = vmatpush1.xpose.msra.mxu0 0.0
      %5445 = vmatprep.subr.mxu0 0.0
      %5446 = vmatpush1.xpose.msra.mxu0 0.0
      %5447 = vmatprep.subr.mxu0 0.0
      %5448 = vmatpush1.xpose.msra.mxu0 0.0
      %5449 = vmatprep.subr.mxu0 0.0
      %5450 = vmatpush1.xpose.msra.mxu0 0.0
      %5451 = vmatprep.subr.mxu0 0.0
      %5452 = vmatpush1.xpose.msra.mxu0 0.0
      %5453 = vmatprep.subr.mxu0 0.0
      %5454 = vmatpush1.xpose.msra.mxu0 0.0
      %5455 = vmatprep.subr.mxu0 0.0
      %5456 = vmatpush1.xpose.msra.mxu0 %v5425
      %5457 = vmatprep.subr.mxu0 0.0
      %5458 = vmatpush1.xpose.msra.mxu0 %v5422
      %5459 = vmatprep.subr.mxu0 0.0
      %5460 = vmatpush2.xpose.msra.mxu0 0.0
      %5461 = vmatprep.subr.mxu0 0.0
      %5462 = vmatpush2.xpose.msra.mxu0 0.0
      %5463 = vmatprep.subr.mxu0 0.0
      %5464 = vmatpush2.xpose.msra.mxu0 0.0
      %5465 = vmatprep.subr.mxu0 0.0
      %5466 = vmatpush2.xpose.msra.mxu0 0.0
      %5467 = vmatprep.subr.mxu0 0.0
      %5468 = vmatpush2.xpose.msra.mxu0 0.0
      %5469 = vmatprep.subr.mxu0 0.0
      %5470 = vmatpush2.xpose.msra.mxu0 0.0
      %5471 = vmatprep.subr.mxu0 0.0
      %5472 = vmatpush2.xpose.msra.mxu0 0.0
      %5473 = vmatprep.subr.mxu0 0.0
      %5474 = vmatpush2.xpose.msra.mxu0 0.0
      %5475 = vmatprep.subr.mxu0 0.0
      %5476 = vmatpush2.xpose.msra.mxu0 0.0
      %5477 = vmatprep.subr.mxu0 0.0
      %5478 = vmatpush2.xpose.msra.mxu0 0.0
      %5479 = vmatprep.subr.mxu0 0.0
      %5480 = vmatpush2.xpose.msra.mxu0 0.0
      %5481 = vmatprep.subr.mxu0 0.0
      %5482 = vmatpush2.xpose.msra.mxu0 0.0
      %5483 = vmatprep.subr.mxu0 0.0
      %5484 = vmatpush2.xpose.msra.mxu0 0.0
      %5485 = vmatprep.subr.mxu0 0.0
      %5486 = vmatpush2.xpose.msra.mxu0 0.0
      %5487 = vmatprep.subr.mxu0 0.0
      %5488 = vmatpush2.xpose.msra.mxu0 0.0
      %5489 = vmatprep.subr.mxu0 0.0
      %5490 = vmatpush2.xpose.msra.mxu0 0.0
      %5491 = vmatprep.mubr.f32.mxu0 0.0
      %5492 = vmatmul.mubr.f32.gmra.mxu0 %v5419
      %v5493 = vpop.f32.mrf.mxu0
      %v5494 = vadd.f32 0.0, %v5493
      %v5495 = vpop.f32.mrf.mxu0
      %5496 = vdwg.mxu0
      %v5497 = vsel %vm768, %v5494, -inf
      %5498 = vmax.xlane.f32.xlu0 %v5497
      %v5499 = vpop.xlane.xlu0 %5498
      %v5500 = vsub.f32 %v5494, %v5499
      %v5501 = vmul.f32 %v5500, 1.442695
      %v5502 = vpow.pop %v5501
      %v5503 = vsel %vm768, %v5502, 0.0
      %5504 = vadd.xlane.f32.xlu0 %v5503
      %v5505 = vpop.xlane.xlu0 %5504
      %v5506 = vrcp.pop %v5505
      %v5507 = vmul.f32 %v5502, %v5506
      %v5509 = vsel %vm768, %v5507, 0
      %v5512 = vsel %vm783, %v5415, 0
      %5514 = vmatprep.subr.mxu0 0.0
      %5515 = vmatpush1.msra.mxu0 0.0
      %5516 = vmatprep.subr.mxu0 0.0
      %5517 = vmatpush1.msra.mxu0 0.0
      %5518 = vmatprep.subr.mxu0 0.0
      %5519 = vmatpush1.msra.mxu0 0.0
      %5520 = vmatprep.subr.mxu0 0.0
      %5521 = vmatpush1.msra.mxu0 0.0
      %5522 = vmatprep.subr.mxu0 0.0
      %5523 = vmatpush1.msra.mxu0 0.0
      %5524 = vmatprep.subr.mxu0 0.0
      %5525 = vmatpush1.msra.mxu0 0.0
      %5526 = vmatprep.subr.mxu0 0.0
      %5527 = vmatpush1.msra.mxu0 0.0
      %5528 = vmatprep.subr.mxu0 0.0
      %5529 = vmatpush1.msra.mxu0 0.0
      %5530 = vmatprep.subr.mxu0 0.0
      %5531 = vmatpush1.msra.mxu0 0.0
      %5532 = vmatprep.subr.mxu0 0.0
      %5533 = vmatpush1.msra.mxu0 0.0
      %5534 = vmatprep.subr.mxu0 0.0
      %5535 = vmatpush1.msra.mxu0 0.0
      %5536 = vmatprep.subr.mxu0 0.0
      %5537 = vmatpush1.msra.mxu0 0.0
      %5538 = vmatprep.subr.mxu0 0.0
      %5539 = vmatpush1.msra.mxu0 0.0
      %5540 = vmatprep.subr.mxu0 0.0
      %5541 = vmatpush1.msra.mxu0 0.0
      %5542 = vmatprep.subr.mxu0 0.0
      %5543 = vmatpush1.msra.mxu0 %v5512
      %5544 = vmatprep.subr.mxu0 0.0
      %5545 = vmatpush1.msra.mxu0 %v5410
      %5546 = vmatprep.subr.mxu0 0.0
      %5547 = vmatpush2.msra.mxu0 0.0
      %5548 = vmatprep.subr.mxu0 0.0
      %5549 = vmatpush2.msra.mxu0 0.0
      %5550 = vmatprep.subr.mxu0 0.0
      %5551 = vmatpush2.msra.mxu0 0.0
      %5552 = vmatprep.subr.mxu0 0.0
      %5553 = vmatpush2.msra.mxu0 0.0
      %5554 = vmatprep.subr.mxu0 0.0
      %5555 = vmatpush2.msra.mxu0 0.0
      %5556 = vmatprep.subr.mxu0 0.0
      %5557 = vmatpush2.msra.mxu0 0.0
      %5558 = vmatprep.subr.mxu0 0.0
      %5559 = vmatpush2.msra.mxu0 0.0
      %5560 = vmatprep.subr.mxu0 0.0
      %5561 = vmatpush2.msra.mxu0 0.0
      %5562 = vmatprep.subr.mxu0 0.0
      %5563 = vmatpush2.msra.mxu0 0.0
      %5564 = vmatprep.subr.mxu0 0.0
      %5565 = vmatpush2.msra.mxu0 0.0
      %5566 = vmatprep.subr.mxu0 0.0
      %5567 = vmatpush2.msra.mxu0 0.0
      %5568 = vmatprep.subr.mxu0 0.0
      %5569 = vmatpush2.msra.mxu0 0.0
      %5570 = vmatprep.subr.mxu0 0.0
      %5571 = vmatpush2.msra.mxu0 0.0
      %5572 = vmatprep.subr.mxu0 0.0
      %5573 = vmatpush2.msra.mxu0 0.0
      %5574 = vmatprep.subr.mxu0 0.0
      %5575 = vmatpush2.msra.mxu0 0.0
      %5576 = vmatprep.subr.mxu0 0.0
      %5577 = vmatpush2.msra.mxu0 0.0
      %5578 = vmatprep.mubr.f32.mxu0 0.0
      %5579 = vmatmul.mubr.f32.gmra.mxu0 %v5509
      %v5580 = vpop.f32.mrf.mxu0
      %v5581 = vadd.f32 0.0, %v5580
      %v5582 = vpop.f32.mrf.mxu0
      %5583 = vdwg.mxu0
      %v5585 = vsel %vm688, %v5581, 0
      %5587 = vmatprep.subr.mxu0 0.0
      %5588 = vmatpush1.msra.mxu0 0.0
      %5589 = vmatprep.subr.mxu0 0.0
      %5590 = vmatpush1.msra.mxu0 0.0
      %5591 = vmatprep.subr.mxu0 0.0
      %5592 = vmatpush1.msra.mxu0 0.0
      %5593 = vmatprep.subr.mxu0 0.0
      %5594 = vmatpush1.msra.mxu0 0.0
      %5595 = vmatprep.subr.mxu0 0.0
      %5596 = vmatpush1.msra.mxu0 0.0
      %5597 = vmatprep.subr.mxu0 0.0
      %5598 = vmatpush1.msra.mxu0 0.0
      %5599 = vmatprep.subr.mxu0 0.0
      %5600 = vmatpush1.msra.mxu0 0.0
      %5601 = vmatprep.subr.mxu0 0.0
      %5602 = vmatpush1.msra.mxu0 0.0
      %5603 = vmatprep.subr.mxu0 0.0
      %5604 = vmatpush1.msra.mxu0 0.0
      %5605 = vmatprep.subr.mxu0 0.0
      %5606 = vmatpush1.msra.mxu0 0.0
      %5607 = vmatprep.subr.mxu0 0.0
      %5608 = vmatpush1.msra.mxu0 0.0
      %5609 = vmatprep.subr.mxu0 0.0
      %5610 = vmatpush1.msra.mxu0 0.0
      %5611 = vmatprep.subr.mxu0 0.0
      %5612 = vmatpush1.msra.mxu0 0.0
      %5613 = vmatprep.subr.mxu0 0.0
      %5614 = vmatpush1.msra.mxu0 0.0
      %5615 = vmatprep.subr.mxu0 0.0
      %5616 = vmatpush1.msra.mxu0 0.0
      %5617 = vmatprep.subr.mxu0 0.0
      %5618 = vmatpush1.msra.mxu0 %v4728
      %5619 = vmatprep.subr.mxu0 0.0
      %5620 = vmatpush2.msra.mxu0 0.0
      %5621 = vmatprep.subr.mxu0 0.0
      %5622 = vmatpush2.msra.mxu0 0.0
      %5623 = vmatprep.subr.mxu0 0.0
      %5624 = vmatpush2.msra.mxu0 0.0
      %5625 = vmatprep.subr.mxu0 0.0
      %5626 = vmatpush2.msra.mxu0 0.0
      %5627 = vmatprep.subr.mxu0 0.0
      %5628 = vmatpush2.msra.mxu0 0.0
      %5629 = vmatprep.subr.mxu0 0.0
      %5630 = vmatpush2.msra.mxu0 0.0
      %5631 = vmatprep.subr.mxu0 0.0
      %5632 = vmatpush2.msra.mxu0 0.0
      %5633 = vmatprep.subr.mxu0 0.0
      %5634 = vmatpush2.msra.mxu0 0.0
      %5635 = vmatprep.subr.mxu0 0.0
      %5636 = vmatpush2.msra.mxu0 0.0
      %5637 = vmatprep.subr.mxu0 0.0
      %5638 = vmatpush2.msra.mxu0 0.0
      %5639 = vmatprep.subr.mxu0 0.0
      %5640 = vmatpush2.msra.mxu0 0.0
      %5641 = vmatprep.subr.mxu0 0.0
      %5642 = vmatpush2.msra.mxu0 0.0
      %5643 = vmatprep.subr.mxu0 0.0
      %5644 = vmatpush2.msra.mxu0 0.0
      %5645 = vmatprep.subr.mxu0 0.0
      %5646 = vmatpush2.msra.mxu0 0.0
      %5647 = vmatprep.subr.mxu0 0.0
      %5648 = vmatpush2.msra.mxu0 0.0
      %5649 = vmatprep.subr.mxu0 0.0
      %5650 = vmatpush2.msra.mxu0 0.0
      %5651 = vmatprep.mubr.f32.mxu0 0.0
      %5652 = vmatmul.mubr.f32.gmra.mxu0 %v5585
      %v5653 = vpop.f32.mrf.mxu0
      %v5654 = vadd.f32 0.0, %v5653
      %v5655 = vpop.f32.mrf.mxu0
      %5656 = vdwg.mxu0
      %v5658 = vsel %vm688, %v5156, 0
      %5660 = vmatprep.subr.mxu0 0.0
      %5661 = vmatpush1.msra.mxu0 0.0
      %5662 = vmatprep.subr.mxu0 0.0
      %5663 = vmatpush1.msra.mxu0 0.0
      %5664 = vmatprep.subr.mxu0 0.0
      %5665 = vmatpush1.msra.mxu0 0.0
      %5666 = vmatprep.subr.mxu0 0.0
      %5667 = vmatpush1.msra.mxu0 0.0
      %5668 = vmatprep.subr.mxu0 0.0
      %5669 = vmatpush1.msra.mxu0 0.0
      %5670 = vmatprep.subr.mxu0 0.0
      %5671 = vmatpush1.msra.mxu0 0.0
      %5672 = vmatprep.subr.mxu0 0.0
      %5673 = vmatpush1.msra.mxu0 0.0
      %5674 = vmatprep.subr.mxu0 0.0
      %5675 = vmatpush1.msra.mxu0 0.0
      %5676 = vmatprep.subr.mxu0 0.0
      %5677 = vmatpush1.msra.mxu0 0.0
      %5678 = vmatprep.subr.mxu0 0.0
      %5679 = vmatpush1.msra.mxu0 0.0
      %5680 = vmatprep.subr.mxu0 0.0
      %5681 = vmatpush1.msra.mxu0 0.0
      %5682 = vmatprep.subr.mxu0 0.0
      %5683 = vmatpush1.msra.mxu0 0.0
      %5684 = vmatprep.subr.mxu0 0.0
      %5685 = vmatpush1.msra.mxu0 0.0
      %5686 = vmatprep.subr.mxu0 0.0
      %5687 = vmatpush1.msra.mxu0 0.0
      %5688 = vmatprep.subr.mxu0 0.0
      %5689 = vmatpush1.msra.mxu0 0.0
      %5690 = vmatprep.subr.mxu0 0.0
      %5691 = vmatpush1.msra.mxu0 %v4727
      %5692 = vmatprep.subr.mxu0 0.0
      %5693 = vmatpush2.msra.mxu0 0.0
      %5694 = vmatprep.subr.mxu0 0.0
      %5695 = vmatpush2.msra.mxu0 0.0
      %5696 = vmatprep.subr.mxu0 0.0
      %5697 = vmatpush2.msra.mxu0 0.0
      %5698 = vmatprep.subr.mxu0 0.0
      %5699 = vmatpush2.msra.mxu0 0.0
      %5700 = vmatprep.subr.mxu0 0.0
      %5701 = vmatpush2.msra.mxu0 0.0
      %5702 = vmatprep.subr.mxu0 0.0
      %5703 = vmatpush2.msra.mxu0 0.0
      %5704 = vmatprep.subr.mxu0 0.0
      %5705 = vmatpush2.msra.mxu0 0.0
      %5706 = vmatprep.subr.mxu0 0.0
      %5707 = vmatpush2.msra.mxu0 0.0
      %5708 = vmatprep.subr.mxu0 0.0
      %5709 = vmatpush2.msra.mxu0 0.0
      %5710 = vmatprep.subr.mxu0 0.0
      %5711 = vmatpush2.msra.mxu0 0.0
      %5712 = vmatprep.subr.mxu0 0.0
      %5713 = vmatpush2.msra.mxu0 0.0
      %5714 = vmatprep.subr.mxu0 0.0
      %5715 = vmatpush2.msra.mxu0 0.0
      %5716 = vmatprep.subr.mxu0 0.0
      %5717 = vmatpush2.msra.mxu0 0.0
      %5718 = vmatprep.subr.mxu0 0.0
      %5719 = vmatpush2.msra.mxu0 0.0
      %5720 = vmatprep.subr.mxu0 0.0
      %5721 = vmatpush2.msra.mxu0 0.0
      %5722 = vmatprep.subr.mxu0 0.0
      %5723 = vmatpush2.msra.mxu0 0.0
      %5724 = vmatprep.mubr.f32.mxu0 0.0
      %5725 = vmatmul.mubr.f32.gmra.mxu0 %v5658
      %v5726 = vpop.f32.mrf.mxu0
      %v5727 = vadd.f32 %v5654, %v5726
      %v5728 = vpop.f32.mrf.mxu0
      %5729 = vdwg.mxu0
      %s5730 = scalar_lea.vmem %s3, 832
      %v5731 = vld [vmem:[%s5730] sm:$0xff]
      %v5732 = vld [vmem:[%s5730 + $0x8] sm:$0xff]
      %v5733 = vld [vmem:[%s5730 + $0x10] sm:$0xff]
      %v5734 = vld [vmem:[%s5730 + $0x18] sm:$0xff]
      %s5735 = scalar_lea.vmem %s3, 960
      %v5736 = vld [vmem:[%s5735] sm:$0xff]
      %v5737 = vld [vmem:[%s5735 + $0x8] sm:$0xff]
      %v5738 = vld [vmem:[%s5735 + $0x10] sm:$0xff]
      %v5739 = vld [vmem:[%s5735 + $0x18] sm:$0xff]
      %s5740 = scalar_lea.vmem %s3, 1088
      %v5741 = vld [vmem:[%s5740] sm:$0xff]
      %v5742 = vld [vmem:[%s5740 + $0x8] sm:$0xff]
      %v5743 = vld [vmem:[%s5740 + $0x10] sm:$0xff]
      %v5744 = vld [vmem:[%s5740 + $0x18] sm:$0xff]
      %s5745 = scalar_lea.vmem %s4, 26
      %v5746 = vld [vmem:[%s5745] sm:$0x1]
      %s5747 = scalar_lea.vmem %s4, 30
      %v5748 = vld [vmem:[%s5747] sm:$0x1]
      %s5749 = scalar_lea.vmem %s4, 34
      %v5750 = vld [vmem:[%s5749] sm:$0x1]
      %v5752 = vlaneseq
      %v5753 = vshrl.u32 %v5752, 7
      %v5754 = vsub.s32 0, %v5753
      %v5755 = vrot.slane %v5746, %v5754
      %5757 = vmatprep.subr.mxu0 0.0
      %5758 = vmatpush1.msra.mxu0 0.0
      %5759 = vmatprep.subr.mxu0 0.0
      %5760 = vmatpush1.msra.mxu0 0.0
      %5761 = vmatprep.subr.mxu0 0.0
      %5762 = vmatpush1.msra.mxu0 0.0
      %5763 = vmatprep.subr.mxu0 0.0
      %5764 = vmatpush1.msra.mxu0 0.0
      %5765 = vmatprep.subr.mxu0 0.0
      %5766 = vmatpush1.msra.mxu0 0.0
      %5767 = vmatprep.subr.mxu0 0.0
      %5768 = vmatpush1.msra.mxu0 0.0
      %5769 = vmatprep.subr.mxu0 0.0
      %5770 = vmatpush1.msra.mxu0 0.0
      %5771 = vmatprep.subr.mxu0 0.0
      %5772 = vmatpush1.msra.mxu0 0.0
      %5773 = vmatprep.subr.mxu0 0.0
      %5774 = vmatpush1.msra.mxu0 0.0
      %5775 = vmatprep.subr.mxu0 0.0
      %5776 = vmatpush1.msra.mxu0 0.0
      %5777 = vmatprep.subr.mxu0 0.0
      %5778 = vmatpush1.msra.mxu0 0.0
      %5779 = vmatprep.subr.mxu0 0.0
      %5780 = vmatpush1.msra.mxu0 0.0
      %5781 = vmatprep.subr.mxu0 0.0
      %5782 = vmatpush1.msra.mxu0 %v5734
      %5783 = vmatprep.subr.mxu0 0.0
      %5784 = vmatpush1.msra.mxu0 %v5733
      %5785 = vmatprep.subr.mxu0 0.0
      %5786 = vmatpush1.msra.mxu0 %v5732
      %5787 = vmatprep.subr.mxu0 0.0
      %5788 = vmatpush1.msra.mxu0 %v5731
      %5789 = vmatprep.subr.mxu0 0.0
      %5790 = vmatpush2.msra.mxu0 0.0
      %5791 = vmatprep.subr.mxu0 0.0
      %5792 = vmatpush2.msra.mxu0 0.0
      %5793 = vmatprep.subr.mxu0 0.0
      %5794 = vmatpush2.msra.mxu0 0.0
      %5795 = vmatprep.subr.mxu0 0.0
      %5796 = vmatpush2.msra.mxu0 0.0
      %5797 = vmatprep.subr.mxu0 0.0
      %5798 = vmatpush2.msra.mxu0 0.0
      %5799 = vmatprep.subr.mxu0 0.0
      %5800 = vmatpush2.msra.mxu0 0.0
      %5801 = vmatprep.subr.mxu0 0.0
      %5802 = vmatpush2.msra.mxu0 0.0
      %5803 = vmatprep.subr.mxu0 0.0
      %5804 = vmatpush2.msra.mxu0 0.0
      %5805 = vmatprep.subr.mxu0 0.0
      %5806 = vmatpush2.msra.mxu0 0.0
      %5807 = vmatprep.subr.mxu0 0.0
      %5808 = vmatpush2.msra.mxu0 0.0
      %5809 = vmatprep.subr.mxu0 0.0
      %5810 = vmatpush2.msra.mxu0 0.0
      %5811 = vmatprep.subr.mxu0 0.0
      %5812 = vmatpush2.msra.mxu0 0.0
      %5813 = vmatprep.subr.mxu0 0.0
      %5814 = vmatpush2.msra.mxu0 0.0
      %5815 = vmatprep.subr.mxu0 0.0
      %5816 = vmatpush2.msra.mxu0 0.0
      %5817 = vmatprep.subr.mxu0 0.0
      %5818 = vmatpush2.msra.mxu0 0.0
      %5819 = vmatprep.subr.mxu0 0.0
      %5820 = vmatpush2.msra.mxu0 0.0
      %5821 = vmatprep.mubr.f32.mxu0 0.0
      %5822 = vmatmul.mubr.f32.gmra.mxu0 %v4759
      %v5823 = vpop.f32.mrf.mxu0
      %v5824 = vadd.f32 %v5755, %v5823
      %v5825 = vpop.f32.mrf.mxu0
      %5826 = vdwg.mxu0
      %v5828 = vlaneseq
      %v5829 = vshrl.u32 %v5828, 7
      %v5830 = vsub.s32 0, %v5829
      %v5831 = vrot.slane %v5748, %v5830
      %5833 = vmatprep.subr.mxu0 0.0
      %5834 = vmatpush1.msra.mxu0 0.0
      %5835 = vmatprep.subr.mxu0 0.0
      %5836 = vmatpush1.msra.mxu0 0.0
      %5837 = vmatprep.subr.mxu0 0.0
      %5838 = vmatpush1.msra.mxu0 0.0
      %5839 = vmatprep.subr.mxu0 0.0
      %5840 = vmatpush1.msra.mxu0 0.0
      %5841 = vmatprep.subr.mxu0 0.0
      %5842 = vmatpush1.msra.mxu0 0.0
      %5843 = vmatprep.subr.mxu0 0.0
      %5844 = vmatpush1.msra.mxu0 0.0
      %5845 = vmatprep.subr.mxu0 0.0
      %5846 = vmatpush1.msra.mxu0 0.0
      %5847 = vmatprep.subr.mxu0 0.0
      %5848 = vmatpush1.msra.mxu0 0.0
      %5849 = vmatprep.subr.mxu0 0.0
      %5850 = vmatpush1.msra.mxu0 0.0
      %5851 = vmatprep.subr.mxu0 0.0
      %5852 = vmatpush1.msra.mxu0 0.0
      %5853 = vmatprep.subr.mxu0 0.0
      %5854 = vmatpush1.msra.mxu0 0.0
      %5855 = vmatprep.subr.mxu0 0.0
      %5856 = vmatpush1.msra.mxu0 0.0
      %5857 = vmatprep.subr.mxu0 0.0
      %5858 = vmatpush1.msra.mxu0 %v5739
      %5859 = vmatprep.subr.mxu0 0.0
      %5860 = vmatpush1.msra.mxu0 %v5738
      %5861 = vmatprep.subr.mxu0 0.0
      %5862 = vmatpush1.msra.mxu0 %v5737
      %5863 = vmatprep.subr.mxu0 0.0
      %5864 = vmatpush1.msra.mxu0 %v5736
      %5865 = vmatprep.subr.mxu0 0.0
      %5866 = vmatpush2.msra.mxu0 0.0
      %5867 = vmatprep.subr.mxu0 0.0
      %5868 = vmatpush2.msra.mxu0 0.0
      %5869 = vmatprep.subr.mxu0 0.0
      %5870 = vmatpush2.msra.mxu0 0.0
      %5871 = vmatprep.subr.mxu0 0.0
      %5872 = vmatpush2.msra.mxu0 0.0
      %5873 = vmatprep.subr.mxu0 0.0
      %5874 = vmatpush2.msra.mxu0 0.0
      %5875 = vmatprep.subr.mxu0 0.0
      %5876 = vmatpush2.msra.mxu0 0.0
      %5877 = vmatprep.subr.mxu0 0.0
      %5878 = vmatpush2.msra.mxu0 0.0
      %5879 = vmatprep.subr.mxu0 0.0
      %5880 = vmatpush2.msra.mxu0 0.0
      %5881 = vmatprep.subr.mxu0 0.0
      %5882 = vmatpush2.msra.mxu0 0.0
      %5883 = vmatprep.subr.mxu0 0.0
      %5884 = vmatpush2.msra.mxu0 0.0
      %5885 = vmatprep.subr.mxu0 0.0
      %5886 = vmatpush2.msra.mxu0 0.0
      %5887 = vmatprep.subr.mxu0 0.0
      %5888 = vmatpush2.msra.mxu0 0.0
      %5889 = vmatprep.subr.mxu0 0.0
      %5890 = vmatpush2.msra.mxu0 0.0
      %5891 = vmatprep.subr.mxu0 0.0
      %5892 = vmatpush2.msra.mxu0 0.0
      %5893 = vmatprep.subr.mxu0 0.0
      %5894 = vmatpush2.msra.mxu0 0.0
      %5895 = vmatprep.subr.mxu0 0.0
      %5896 = vmatpush2.msra.mxu0 0.0
      %5897 = vmatprep.mubr.f32.mxu0 0.0
      %5898 = vmatmul.mubr.f32.gmra.mxu0 %v527
      %v5899 = vpop.f32.mrf.mxu0
      %v5900 = vadd.f32 %v5831, %v5899
      %v5901 = vpop.f32.mrf.mxu0
      %5902 = vmatprep.mubr.f32.mxu0 0.0
      %5903 = vmatmul.mubr.f32.gmra.mxu0 %v530
      %v5904 = vpop.f32.mrf.mxu0
      %v5905 = vadd.f32 %v5831, %v5904
      %v5906 = vpop.f32.mrf.mxu0
      %5907 = vdwg.mxu0
      %v5909 = vlaneseq
      %v5910 = vshrl.u32 %v5909, 7
      %v5911 = vsub.s32 0, %v5910
      %v5912 = vrot.slane %v5750, %v5911
      %5914 = vmatprep.subr.mxu0 0.0
      %5915 = vmatpush1.msra.mxu0 0.0
      %5916 = vmatprep.subr.mxu0 0.0
      %5917 = vmatpush1.msra.mxu0 0.0
      %5918 = vmatprep.subr.mxu0 0.0
      %5919 = vmatpush1.msra.mxu0 0.0
      %5920 = vmatprep.subr.mxu0 0.0
      %5921 = vmatpush1.msra.mxu0 0.0
      %5922 = vmatprep.subr.mxu0 0.0
      %5923 = vmatpush1.msra.mxu0 0.0
      %5924 = vmatprep.subr.mxu0 0.0
      %5925 = vmatpush1.msra.mxu0 0.0
      %5926 = vmatprep.subr.mxu0 0.0
      %5927 = vmatpush1.msra.mxu0 0.0
      %5928 = vmatprep.subr.mxu0 0.0
      %5929 = vmatpush1.msra.mxu0 0.0
      %5930 = vmatprep.subr.mxu0 0.0
      %5931 = vmatpush1.msra.mxu0 0.0
      %5932 = vmatprep.subr.mxu0 0.0
      %5933 = vmatpush1.msra.mxu0 0.0
      %5934 = vmatprep.subr.mxu0 0.0
      %5935 = vmatpush1.msra.mxu0 0.0
      %5936 = vmatprep.subr.mxu0 0.0
      %5937 = vmatpush1.msra.mxu0 0.0
      %5938 = vmatprep.subr.mxu0 0.0
      %5939 = vmatpush1.msra.mxu0 %v5744
      %5940 = vmatprep.subr.mxu0 0.0
      %5941 = vmatpush1.msra.mxu0 %v5743
      %5942 = vmatprep.subr.mxu0 0.0
      %5943 = vmatpush1.msra.mxu0 %v5742
      %5944 = vmatprep.subr.mxu0 0.0
      %5945 = vmatpush1.msra.mxu0 %v5741
      %5946 = vmatprep.subr.mxu0 0.0
      %5947 = vmatpush2.msra.mxu0 0.0
      %5948 = vmatprep.subr.mxu0 0.0
      %5949 = vmatpush2.msra.mxu0 0.0
      %5950 = vmatprep.subr.mxu0 0.0
      %5951 = vmatpush2.msra.mxu0 0.0
      %5952 = vmatprep.subr.mxu0 0.0
      %5953 = vmatpush2.msra.mxu0 0.0
      %5954 = vmatprep.subr.mxu0 0.0
      %5955 = vmatpush2.msra.mxu0 0.0
      %5956 = vmatprep.subr.mxu0 0.0
      %5957 = vmatpush2.msra.mxu0 0.0
      %5958 = vmatprep.subr.mxu0 0.0
      %5959 = vmatpush2.msra.mxu0 0.0
      %5960 = vmatprep.subr.mxu0 0.0
      %5961 = vmatpush2.msra.mxu0 0.0
      %5962 = vmatprep.subr.mxu0 0.0
      %5963 = vmatpush2.msra.mxu0 0.0
      %5964 = vmatprep.subr.mxu0 0.0
      %5965 = vmatpush2.msra.mxu0 0.0
      %5966 = vmatprep.subr.mxu0 0.0
      %5967 = vmatpush2.msra.mxu0 0.0
      %5968 = vmatprep.subr.mxu0 0.0
      %5969 = vmatpush2.msra.mxu0 0.0
      %5970 = vmatprep.subr.mxu0 0.0
      %5971 = vmatpush2.msra.mxu0 0.0
      %5972 = vmatprep.subr.mxu0 0.0
      %5973 = vmatpush2.msra.mxu0 0.0
      %5974 = vmatprep.subr.mxu0 0.0
      %5975 = vmatpush2.msra.mxu0 0.0
      %5976 = vmatprep.subr.mxu0 0.0
      %5977 = vmatpush2.msra.mxu0 0.0
      %5978 = vmatprep.mubr.f32.mxu0 0.0
      %5979 = vmatmul.mubr.f32.gmra.mxu0 %v527
      %v5980 = vpop.f32.mrf.mxu0
      %v5981 = vadd.f32 %v5912, %v5980
      %v5982 = vpop.f32.mrf.mxu0
      %5983 = vmatprep.mubr.f32.mxu0 0.0
      %5984 = vmatmul.mubr.f32.gmra.mxu0 %v530
      %v5985 = vpop.f32.mrf.mxu0
      %v5986 = vadd.f32 %v5912, %v5985
      %v5987 = vpop.f32.mrf.mxu0
      %5988 = vdwg.mxu0
      %v5990 = vsel %vm688, %v5824, 0
      %v5993 = vsel %vm688, %v5900, 0
      %v5996 = vsel %vm688, %v5905, 0
      %5998 = vmatprep.subr.mxu0 0.0
      %5999 = vmatpush1.xpose.msra.mxu0 0.0
      %6000 = vmatprep.subr.mxu0 0.0
      %6001 = vmatpush1.xpose.msra.mxu0 0.0
      %6002 = vmatprep.subr.mxu0 0.0
      %6003 = vmatpush1.xpose.msra.mxu0 0.0
      %6004 = vmatprep.subr.mxu0 0.0
      %6005 = vmatpush1.xpose.msra.mxu0 0.0
      %6006 = vmatprep.subr.mxu0 0.0
      %6007 = vmatpush1.xpose.msra.mxu0 0.0
      %6008 = vmatprep.subr.mxu0 0.0
      %6009 = vmatpush1.xpose.msra.mxu0 0.0
      %6010 = vmatprep.subr.mxu0 0.0
      %6011 = vmatpush1.xpose.msra.mxu0 0.0
      %6012 = vmatprep.subr.mxu0 0.0
      %6013 = vmatpush1.xpose.msra.mxu0 0.0
      %6014 = vmatprep.subr.mxu0 0.0
      %6015 = vmatpush1.xpose.msra.mxu0 0.0
      %6016 = vmatprep.subr.mxu0 0.0
      %6017 = vmatpush1.xpose.msra.mxu0 0.0
      %6018 = vmatprep.subr.mxu0 0.0
      %6019 = vmatpush1.xpose.msra.mxu0 0.0
      %6020 = vmatprep.subr.mxu0 0.0
      %6021 = vmatpush1.xpose.msra.mxu0 0.0
      %6022 = vmatprep.subr.mxu0 0.0
      %6023 = vmatpush1.xpose.msra.mxu0 0.0
      %6024 = vmatprep.subr.mxu0 0.0
      %6025 = vmatpush1.xpose.msra.mxu0 0.0
      %6026 = vmatprep.subr.mxu0 0.0
      %6027 = vmatpush1.xpose.msra.mxu0 %v5996
      %6028 = vmatprep.subr.mxu0 0.0
      %6029 = vmatpush1.xpose.msra.mxu0 %v5993
      %6030 = vmatprep.subr.mxu0 0.0
      %6031 = vmatpush2.xpose.msra.mxu0 0.0
      %6032 = vmatprep.subr.mxu0 0.0
      %6033 = vmatpush2.xpose.msra.mxu0 0.0
      %6034 = vmatprep.subr.mxu0 0.0
      %6035 = vmatpush2.xpose.msra.mxu0 0.0
      %6036 = vmatprep.subr.mxu0 0.0
      %6037 = vmatpush2.xpose.msra.mxu0 0.0
      %6038 = vmatprep.subr.mxu0 0.0
      %6039 = vmatpush2.xpose.msra.mxu0 0.0
      %6040 = vmatprep.subr.mxu0 0.0
      %6041 = vmatpush2.xpose.msra.mxu0 0.0
      %6042 = vmatprep.subr.mxu0 0.0
      %6043 = vmatpush2.xpose.msra.mxu0 0.0
      %6044 = vmatprep.subr.mxu0 0.0
      %6045 = vmatpush2.xpose.msra.mxu0 0.0
      %6046 = vmatprep.subr.mxu0 0.0
      %6047 = vmatpush2.xpose.msra.mxu0 0.0
      %6048 = vmatprep.subr.mxu0 0.0
      %6049 = vmatpush2.xpose.msra.mxu0 0.0
      %6050 = vmatprep.subr.mxu0 0.0
      %6051 = vmatpush2.xpose.msra.mxu0 0.0
      %6052 = vmatprep.subr.mxu0 0.0
      %6053 = vmatpush2.xpose.msra.mxu0 0.0
      %6054 = vmatprep.subr.mxu0 0.0
      %6055 = vmatpush2.xpose.msra.mxu0 0.0
      %6056 = vmatprep.subr.mxu0 0.0
      %6057 = vmatpush2.xpose.msra.mxu0 0.0
      %6058 = vmatprep.subr.mxu0 0.0
      %6059 = vmatpush2.xpose.msra.mxu0 0.0
      %6060 = vmatprep.subr.mxu0 0.0
      %6061 = vmatpush2.xpose.msra.mxu0 0.0
      %6062 = vmatprep.mubr.f32.mxu0 0.0
      %6063 = vmatmul.mubr.f32.gmra.mxu0 %v5990
      %v6064 = vpop.f32.mrf.mxu0
      %v6065 = vadd.f32 0.0, %v6064
      %v6066 = vpop.f32.mrf.mxu0
      %6067 = vdwg.mxu0
      %v6068 = vsel %vm768, %v6065, -inf
      %6069 = vmax.xlane.f32.xlu0 %v6068
      %v6070 = vpop.xlane.xlu0 %6069
      %v6071 = vsub.f32 %v6065, %v6070
      %v6072 = vmul.f32 %v6071, 1.442695
      %v6073 = vpow.pop %v6072
      %v6074 = vsel %vm768, %v6073, 0.0
      %6075 = vadd.xlane.f32.xlu0 %v6074
      %v6076 = vpop.xlane.xlu0 %6075
      %v6077 = vrcp.pop %v6076
      %v6078 = vmul.f32 %v6073, %v6077
      %v6080 = vsel %vm768, %v6078, 0
      %v6083 = vsel %vm783, %v5986, 0
      %6085 = vmatprep.subr.mxu0 0.0
      %6086 = vmatpush1.msra.mxu0 0.0
      %6087 = vmatprep.subr.mxu0 0.0
      %6088 = vmatpush1.msra.mxu0 0.0
      %6089 = vmatprep.subr.mxu0 0.0
      %6090 = vmatpush1.msra.mxu0 0.0
      %6091 = vmatprep.subr.mxu0 0.0
      %6092 = vmatpush1.msra.mxu0 0.0
      %6093 = vmatprep.subr.mxu0 0.0
      %6094 = vmatpush1.msra.mxu0 0.0
      %6095 = vmatprep.subr.mxu0 0.0
      %6096 = vmatpush1.msra.mxu0 0.0
      %6097 = vmatprep.subr.mxu0 0.0
      %6098 = vmatpush1.msra.mxu0 0.0
      %6099 = vmatprep.subr.mxu0 0.0
      %6100 = vmatpush1.msra.mxu0 0.0
      %6101 = vmatprep.subr.mxu0 0.0
      %6102 = vmatpush1.msra.mxu0 0.0
      %6103 = vmatprep.subr.mxu0 0.0
      %6104 = vmatpush1.msra.mxu0 0.0
      %6105 = vmatprep.subr.mxu0 0.0
      %6106 = vmatpush1.msra.mxu0 0.0
      %6107 = vmatprep.subr.mxu0 0.0
      %6108 = vmatpush1.msra.mxu0 0.0
      %6109 = vmatprep.subr.mxu0 0.0
      %6110 = vmatpush1.msra.mxu0 0.0
      %6111 = vmatprep.subr.mxu0 0.0
      %6112 = vmatpush1.msra.mxu0 0.0
      %6113 = vmatprep.subr.mxu0 0.0
      %6114 = vmatpush1.msra.mxu0 %v6083
      %6115 = vmatprep.subr.mxu0 0.0
      %6116 = vmatpush1.msra.mxu0 %v5981
      %6117 = vmatprep.subr.mxu0 0.0
      %6118 = vmatpush2.msra.mxu0 0.0
      %6119 = vmatprep.subr.mxu0 0.0
      %6120 = vmatpush2.msra.mxu0 0.0
      %6121 = vmatprep.subr.mxu0 0.0
      %6122 = vmatpush2.msra.mxu0 0.0
      %6123 = vmatprep.subr.mxu0 0.0
      %6124 = vmatpush2.msra.mxu0 0.0
      %6125 = vmatprep.subr.mxu0 0.0
      %6126 = vmatpush2.msra.mxu0 0.0
      %6127 = vmatprep.subr.mxu0 0.0
      %6128 = vmatpush2.msra.mxu0 0.0
      %6129 = vmatprep.subr.mxu0 0.0
      %6130 = vmatpush2.msra.mxu0 0.0
      %6131 = vmatprep.subr.mxu0 0.0
      %6132 = vmatpush2.msra.mxu0 0.0
      %6133 = vmatprep.subr.mxu0 0.0
      %6134 = vmatpush2.msra.mxu0 0.0
      %6135 = vmatprep.subr.mxu0 0.0
      %6136 = vmatpush2.msra.mxu0 0.0
      %6137 = vmatprep.subr.mxu0 0.0
      %6138 = vmatpush2.msra.mxu0 0.0
      %6139 = vmatprep.subr.mxu0 0.0
      %6140 = vmatpush2.msra.mxu0 0.0
      %6141 = vmatprep.subr.mxu0 0.0
      %6142 = vmatpush2.msra.mxu0 0.0
      %6143 = vmatprep.subr.mxu0 0.0
      %6144 = vmatpush2.msra.mxu0 0.0
      %6145 = vmatprep.subr.mxu0 0.0
      %6146 = vmatpush2.msra.mxu0 0.0
      %6147 = vmatprep.subr.mxu0 0.0
      %6148 = vmatpush2.msra.mxu0 0.0
      %6149 = vmatprep.mubr.f32.mxu0 0.0
      %6150 = vmatmul.mubr.f32.gmra.mxu0 %v6080
      %v6151 = vpop.f32.mrf.mxu0
      %v6152 = vadd.f32 0.0, %v6151
      %v6153 = vpop.f32.mrf.mxu0
      %6154 = vdwg.mxu0
      %v6156 = vsel %vm688, %v6152, 0
      %6158 = vmatprep.subr.mxu0 0.0
      %6159 = vmatpush1.msra.mxu0 0.0
      %6160 = vmatprep.subr.mxu0 0.0
      %6161 = vmatpush1.msra.mxu0 0.0
      %6162 = vmatprep.subr.mxu0 0.0
      %6163 = vmatpush1.msra.mxu0 0.0
      %6164 = vmatprep.subr.mxu0 0.0
      %6165 = vmatpush1.msra.mxu0 0.0
      %6166 = vmatprep.subr.mxu0 0.0
      %6167 = vmatpush1.msra.mxu0 0.0
      %6168 = vmatprep.subr.mxu0 0.0
      %6169 = vmatpush1.msra.mxu0 0.0
      %6170 = vmatprep.subr.mxu0 0.0
      %6171 = vmatpush1.msra.mxu0 0.0
      %6172 = vmatprep.subr.mxu0 0.0
      %6173 = vmatpush1.msra.mxu0 0.0
      %6174 = vmatprep.subr.mxu0 0.0
      %6175 = vmatpush1.msra.mxu0 0.0
      %6176 = vmatprep.subr.mxu0 0.0
      %6177 = vmatpush1.msra.mxu0 0.0
      %6178 = vmatprep.subr.mxu0 0.0
      %6179 = vmatpush1.msra.mxu0 0.0
      %6180 = vmatprep.subr.mxu0 0.0
      %6181 = vmatpush1.msra.mxu0 0.0
      %6182 = vmatprep.subr.mxu0 0.0
      %6183 = vmatpush1.msra.mxu0 0.0
      %6184 = vmatprep.subr.mxu0 0.0
      %6185 = vmatpush1.msra.mxu0 0.0
      %6186 = vmatprep.subr.mxu0 0.0
      %6187 = vmatpush1.msra.mxu0 0.0
      %6188 = vmatprep.subr.mxu0 0.0
      %6189 = vmatpush1.msra.mxu0 %v4729
      %6190 = vmatprep.subr.mxu0 0.0
      %6191 = vmatpush2.msra.mxu0 0.0
      %6192 = vmatprep.subr.mxu0 0.0
      %6193 = vmatpush2.msra.mxu0 0.0
      %6194 = vmatprep.subr.mxu0 0.0
      %6195 = vmatpush2.msra.mxu0 0.0
      %6196 = vmatprep.subr.mxu0 0.0
      %6197 = vmatpush2.msra.mxu0 0.0
      %6198 = vmatprep.subr.mxu0 0.0
      %6199 = vmatpush2.msra.mxu0 0.0
      %6200 = vmatprep.subr.mxu0 0.0
      %6201 = vmatpush2.msra.mxu0 0.0
      %6202 = vmatprep.subr.mxu0 0.0
      %6203 = vmatpush2.msra.mxu0 0.0
      %6204 = vmatprep.subr.mxu0 0.0
      %6205 = vmatpush2.msra.mxu0 0.0
      %6206 = vmatprep.subr.mxu0 0.0
      %6207 = vmatpush2.msra.mxu0 0.0
      %6208 = vmatprep.subr.mxu0 0.0
      %6209 = vmatpush2.msra.mxu0 0.0
      %6210 = vmatprep.subr.mxu0 0.0
      %6211 = vmatpush2.msra.mxu0 0.0
      %6212 = vmatprep.subr.mxu0 0.0
      %6213 = vmatpush2.msra.mxu0 0.0
      %6214 = vmatprep.subr.mxu0 0.0
      %6215 = vmatpush2.msra.mxu0 0.0
      %6216 = vmatprep.subr.mxu0 0.0
      %6217 = vmatpush2.msra.mxu0 0.0
      %6218 = vmatprep.subr.mxu0 0.0
      %6219 = vmatpush2.msra.mxu0 0.0
      %6220 = vmatprep.subr.mxu0 0.0
      %6221 = vmatpush2.msra.mxu0 0.0
      %6222 = vmatprep.mubr.f32.mxu0 0.0
      %6223 = vmatmul.mubr.f32.gmra.mxu0 %v6156
      %v6224 = vpop.f32.mrf.mxu0
      %v6225 = vadd.f32 0.0, %v6224
      %v6226 = vpop.f32.mrf.mxu0
      %6227 = vdwg.mxu0
      %v6228 = vadd.f32 %v5727, %v6225
      %s6229 = scalar_lea.vmem %s3, 864
      %v6230 = vld [vmem:[%s6229] sm:$0xff]
      %v6231 = vld [vmem:[%s6229 + $0x8] sm:$0xff]
      %v6232 = vld [vmem:[%s6229 + $0x10] sm:$0xff]
      %v6233 = vld [vmem:[%s6229 + $0x18] sm:$0xff]
      %s6234 = scalar_lea.vmem %s3, 992
      %v6235 = vld [vmem:[%s6234] sm:$0xff]
      %v6236 = vld [vmem:[%s6234 + $0x8] sm:$0xff]
      %v6237 = vld [vmem:[%s6234 + $0x10] sm:$0xff]
      %v6238 = vld [vmem:[%s6234 + $0x18] sm:$0xff]
      %s6239 = scalar_lea.vmem %s3, 1120
      %v6240 = vld [vmem:[%s6239] sm:$0xff]
      %v6241 = vld [vmem:[%s6239 + $0x8] sm:$0xff]
      %v6242 = vld [vmem:[%s6239 + $0x10] sm:$0xff]
      %v6243 = vld [vmem:[%s6239 + $0x18] sm:$0xff]
      %s6244 = scalar_lea.vmem %s4, 27
      %v6245 = vld [vmem:[%s6244] sm:$0x1]
      %s6246 = scalar_lea.vmem %s4, 31
      %v6247 = vld [vmem:[%s6246] sm:$0x1]
      %s6248 = scalar_lea.vmem %s4, 35
      %v6249 = vld [vmem:[%s6248] sm:$0x1]
      %v6251 = vlaneseq
      %v6252 = vshrl.u32 %v6251, 7
      %v6253 = vsub.s32 0, %v6252
      %v6254 = vrot.slane %v6245, %v6253
      %6256 = vmatprep.subr.mxu0 0.0
      %6257 = vmatpush1.msra.mxu0 0.0
      %6258 = vmatprep.subr.mxu0 0.0
      %6259 = vmatpush1.msra.mxu0 0.0
      %6260 = vmatprep.subr.mxu0 0.0
      %6261 = vmatpush1.msra.mxu0 0.0
      %6262 = vmatprep.subr.mxu0 0.0
      %6263 = vmatpush1.msra.mxu0 0.0
      %6264 = vmatprep.subr.mxu0 0.0
      %6265 = vmatpush1.msra.mxu0 0.0
      %6266 = vmatprep.subr.mxu0 0.0
      %6267 = vmatpush1.msra.mxu0 0.0
      %6268 = vmatprep.subr.mxu0 0.0
      %6269 = vmatpush1.msra.mxu0 0.0
      %6270 = vmatprep.subr.mxu0 0.0
      %6271 = vmatpush1.msra.mxu0 0.0
      %6272 = vmatprep.subr.mxu0 0.0
      %6273 = vmatpush1.msra.mxu0 0.0
      %6274 = vmatprep.subr.mxu0 0.0
      %6275 = vmatpush1.msra.mxu0 0.0
      %6276 = vmatprep.subr.mxu0 0.0
      %6277 = vmatpush1.msra.mxu0 0.0
      %6278 = vmatprep.subr.mxu0 0.0
      %6279 = vmatpush1.msra.mxu0 0.0
      %6280 = vmatprep.subr.mxu0 0.0
      %6281 = vmatpush1.msra.mxu0 %v6233
      %6282 = vmatprep.subr.mxu0 0.0
      %6283 = vmatpush1.msra.mxu0 %v6232
      %6284 = vmatprep.subr.mxu0 0.0
      %6285 = vmatpush1.msra.mxu0 %v6231
      %6286 = vmatprep.subr.mxu0 0.0
      %6287 = vmatpush1.msra.mxu0 %v6230
      %6288 = vmatprep.subr.mxu0 0.0
      %6289 = vmatpush2.msra.mxu0 0.0
      %6290 = vmatprep.subr.mxu0 0.0
      %6291 = vmatpush2.msra.mxu0 0.0
      %6292 = vmatprep.subr.mxu0 0.0
      %6293 = vmatpush2.msra.mxu0 0.0
      %6294 = vmatprep.subr.mxu0 0.0
      %6295 = vmatpush2.msra.mxu0 0.0
      %6296 = vmatprep.subr.mxu0 0.0
      %6297 = vmatpush2.msra.mxu0 0.0
      %6298 = vmatprep.subr.mxu0 0.0
      %6299 = vmatpush2.msra.mxu0 0.0
      %6300 = vmatprep.subr.mxu0 0.0
      %6301 = vmatpush2.msra.mxu0 0.0
      %6302 = vmatprep.subr.mxu0 0.0
      %6303 = vmatpush2.msra.mxu0 0.0
      %6304 = vmatprep.subr.mxu0 0.0
      %6305 = vmatpush2.msra.mxu0 0.0
      %6306 = vmatprep.subr.mxu0 0.0
      %6307 = vmatpush2.msra.mxu0 0.0
      %6308 = vmatprep.subr.mxu0 0.0
      %6309 = vmatpush2.msra.mxu0 0.0
      %6310 = vmatprep.subr.mxu0 0.0
      %6311 = vmatpush2.msra.mxu0 0.0
      %6312 = vmatprep.subr.mxu0 0.0
      %6313 = vmatpush2.msra.mxu0 0.0
      %6314 = vmatprep.subr.mxu0 0.0
      %6315 = vmatpush2.msra.mxu0 0.0
      %6316 = vmatprep.subr.mxu0 0.0
      %6317 = vmatpush2.msra.mxu0 0.0
      %6318 = vmatprep.subr.mxu0 0.0
      %6319 = vmatpush2.msra.mxu0 0.0
      %6320 = vmatprep.mubr.f32.mxu0 0.0
      %6321 = vmatmul.mubr.f32.gmra.mxu0 %v4759
      %v6322 = vpop.f32.mrf.mxu0
      %v6323 = vadd.f32 %v6254, %v6322
      %v6324 = vpop.f32.mrf.mxu0
      %6325 = vdwg.mxu0
      %v6327 = vlaneseq
      %v6328 = vshrl.u32 %v6327, 7
      %v6329 = vsub.s32 0, %v6328
      %v6330 = vrot.slane %v6247, %v6329
      %6332 = vmatprep.subr.mxu0 0.0
      %6333 = vmatpush1.msra.mxu0 0.0
      %6334 = vmatprep.subr.mxu0 0.0
      %6335 = vmatpush1.msra.mxu0 0.0
      %6336 = vmatprep.subr.mxu0 0.0
      %6337 = vmatpush1.msra.mxu0 0.0
      %6338 = vmatprep.subr.mxu0 0.0
      %6339 = vmatpush1.msra.mxu0 0.0
      %6340 = vmatprep.subr.mxu0 0.0
      %6341 = vmatpush1.msra.mxu0 0.0
      %6342 = vmatprep.subr.mxu0 0.0
      %6343 = vmatpush1.msra.mxu0 0.0
      %6344 = vmatprep.subr.mxu0 0.0
      %6345 = vmatpush1.msra.mxu0 0.0
      %6346 = vmatprep.subr.mxu0 0.0
      %6347 = vmatpush1.msra.mxu0 0.0
      %6348 = vmatprep.subr.mxu0 0.0
      %6349 = vmatpush1.msra.mxu0 0.0
      %6350 = vmatprep.subr.mxu0 0.0
      %6351 = vmatpush1.msra.mxu0 0.0
      %6352 = vmatprep.subr.mxu0 0.0
      %6353 = vmatpush1.msra.mxu0 0.0
      %6354 = vmatprep.subr.mxu0 0.0
      %6355 = vmatpush1.msra.mxu0 0.0
      %6356 = vmatprep.subr.mxu0 0.0
      %6357 = vmatpush1.msra.mxu0 %v6238
      %6358 = vmatprep.subr.mxu0 0.0
      %6359 = vmatpush1.msra.mxu0 %v6237
      %6360 = vmatprep.subr.mxu0 0.0
      %6361 = vmatpush1.msra.mxu0 %v6236
      %6362 = vmatprep.subr.mxu0 0.0
      %6363 = vmatpush1.msra.mxu0 %v6235
      %6364 = vmatprep.subr.mxu0 0.0
      %6365 = vmatpush2.msra.mxu0 0.0
      %6366 = vmatprep.subr.mxu0 0.0
      %6367 = vmatpush2.msra.mxu0 0.0
      %6368 = vmatprep.subr.mxu0 0.0
      %6369 = vmatpush2.msra.mxu0 0.0
      %6370 = vmatprep.subr.mxu0 0.0
      %6371 = vmatpush2.msra.mxu0 0.0
      %6372 = vmatprep.subr.mxu0 0.0
      %6373 = vmatpush2.msra.mxu0 0.0
      %6374 = vmatprep.subr.mxu0 0.0
      %6375 = vmatpush2.msra.mxu0 0.0
      %6376 = vmatprep.subr.mxu0 0.0
      %6377 = vmatpush2.msra.mxu0 0.0
      %6378 = vmatprep.subr.mxu0 0.0
      %6379 = vmatpush2.msra.mxu0 0.0
      %6380 = vmatprep.subr.mxu0 0.0
      %6381 = vmatpush2.msra.mxu0 0.0
      %6382 = vmatprep.subr.mxu0 0.0
      %6383 = vmatpush2.msra.mxu0 0.0
      %6384 = vmatprep.subr.mxu0 0.0
      %6385 = vmatpush2.msra.mxu0 0.0
      %6386 = vmatprep.subr.mxu0 0.0
      %6387 = vmatpush2.msra.mxu0 0.0
      %6388 = vmatprep.subr.mxu0 0.0
      %6389 = vmatpush2.msra.mxu0 0.0
      %6390 = vmatprep.subr.mxu0 0.0
      %6391 = vmatpush2.msra.mxu0 0.0
      %6392 = vmatprep.subr.mxu0 0.0
      %6393 = vmatpush2.msra.mxu0 0.0
      %6394 = vmatprep.subr.mxu0 0.0
      %6395 = vmatpush2.msra.mxu0 0.0
      %6396 = vmatprep.mubr.f32.mxu0 0.0
      %6397 = vmatmul.mubr.f32.gmra.mxu0 %v527
      %v6398 = vpop.f32.mrf.mxu0
      %v6399 = vadd.f32 %v6330, %v6398
      %v6400 = vpop.f32.mrf.mxu0
      %6401 = vmatprep.mubr.f32.mxu0 0.0
      %6402 = vmatmul.mubr.f32.gmra.mxu0 %v530
      %v6403 = vpop.f32.mrf.mxu0
      %v6404 = vadd.f32 %v6330, %v6403
      %v6405 = vpop.f32.mrf.mxu0
      %6406 = vdwg.mxu0
      %v6408 = vlaneseq
      %v6409 = vshrl.u32 %v6408, 7
      %v6410 = vsub.s32 0, %v6409
      %v6411 = vrot.slane %v6249, %v6410
      %6413 = vmatprep.subr.mxu0 0.0
      %6414 = vmatpush1.msra.mxu0 0.0
      %6415 = vmatprep.subr.mxu0 0.0
      %6416 = vmatpush1.msra.mxu0 0.0
      %6417 = vmatprep.subr.mxu0 0.0
      %6418 = vmatpush1.msra.mxu0 0.0
      %6419 = vmatprep.subr.mxu0 0.0
      %6420 = vmatpush1.msra.mxu0 0.0
      %6421 = vmatprep.subr.mxu0 0.0
      %6422 = vmatpush1.msra.mxu0 0.0
      %6423 = vmatprep.subr.mxu0 0.0
      %6424 = vmatpush1.msra.mxu0 0.0
      %6425 = vmatprep.subr.mxu0 0.0
      %6426 = vmatpush1.msra.mxu0 0.0
      %6427 = vmatprep.subr.mxu0 0.0
      %6428 = vmatpush1.msra.mxu0 0.0
      %6429 = vmatprep.subr.mxu0 0.0
      %6430 = vmatpush1.msra.mxu0 0.0
      %6431 = vmatprep.subr.mxu0 0.0
      %6432 = vmatpush1.msra.mxu0 0.0
      %6433 = vmatprep.subr.mxu0 0.0
      %6434 = vmatpush1.msra.mxu0 0.0
      %6435 = vmatprep.subr.mxu0 0.0
      %6436 = vmatpush1.msra.mxu0 0.0
      %6437 = vmatprep.subr.mxu0 0.0
      %6438 = vmatpush1.msra.mxu0 %v6243
      %6439 = vmatprep.subr.mxu0 0.0
      %6440 = vmatpush1.msra.mxu0 %v6242
      %6441 = vmatprep.subr.mxu0 0.0
      %6442 = vmatpush1.msra.mxu0 %v6241
      %6443 = vmatprep.subr.mxu0 0.0
      %6444 = vmatpush1.msra.mxu0 %v6240
      %6445 = vmatprep.subr.mxu0 0.0
      %6446 = vmatpush2.msra.mxu0 0.0
      %6447 = vmatprep.subr.mxu0 0.0
      %6448 = vmatpush2.msra.mxu0 0.0
      %6449 = vmatprep.subr.mxu0 0.0
      %6450 = vmatpush2.msra.mxu0 0.0
      %6451 = vmatprep.subr.mxu0 0.0
      %6452 = vmatpush2.msra.mxu0 0.0
      %6453 = vmatprep.subr.mxu0 0.0
      %6454 = vmatpush2.msra.mxu0 0.0
      %6455 = vmatprep.subr.mxu0 0.0
      %6456 = vmatpush2.msra.mxu0 0.0
      %6457 = vmatprep.subr.mxu0 0.0
      %6458 = vmatpush2.msra.mxu0 0.0
      %6459 = vmatprep.subr.mxu0 0.0
      %6460 = vmatpush2.msra.mxu0 0.0
      %6461 = vmatprep.subr.mxu0 0.0
      %6462 = vmatpush2.msra.mxu0 0.0
      %6463 = vmatprep.subr.mxu0 0.0
      %6464 = vmatpush2.msra.mxu0 0.0
      %6465 = vmatprep.subr.mxu0 0.0
      %6466 = vmatpush2.msra.mxu0 0.0
      %6467 = vmatprep.subr.mxu0 0.0
      %6468 = vmatpush2.msra.mxu0 0.0
      %6469 = vmatprep.subr.mxu0 0.0
      %6470 = vmatpush2.msra.mxu0 0.0
      %6471 = vmatprep.subr.mxu0 0.0
      %6472 = vmatpush2.msra.mxu0 0.0
      %6473 = vmatprep.subr.mxu0 0.0
      %6474 = vmatpush2.msra.mxu0 0.0
      %6475 = vmatprep.subr.mxu0 0.0
      %6476 = vmatpush2.msra.mxu0 0.0
      %6477 = vmatprep.mubr.f32.mxu0 0.0
      %6478 = vmatmul.mubr.f32.gmra.mxu0 %v527
      %v6479 = vpop.f32.mrf.mxu0
      %v6480 = vadd.f32 %v6411, %v6479
      %v6481 = vpop.f32.mrf.mxu0
      %6482 = vmatprep.mubr.f32.mxu0 0.0
      %6483 = vmatmul.mubr.f32.gmra.mxu0 %v530
      %v6484 = vpop.f32.mrf.mxu0
      %v6485 = vadd.f32 %v6411, %v6484
      %v6486 = vpop.f32.mrf.mxu0
      %6487 = vdwg.mxu0
      %v6489 = vsel %vm688, %v6323, 0
      %v6492 = vsel %vm688, %v6399, 0
      %v6495 = vsel %vm688, %v6404, 0
      %6497 = vmatprep.subr.mxu0 0.0
      %6498 = vmatpush1.xpose.msra.mxu0 0.0
      %6499 = vmatprep.subr.mxu0 0.0
      %6500 = vmatpush1.xpose.msra.mxu0 0.0
      %6501 = vmatprep.subr.mxu0 0.0
      %6502 = vmatpush1.xpose.msra.mxu0 0.0
      %6503 = vmatprep.subr.mxu0 0.0
      %6504 = vmatpush1.xpose.msra.mxu0 0.0
      %6505 = vmatprep.subr.mxu0 0.0
      %6506 = vmatpush1.xpose.msra.mxu0 0.0
      %6507 = vmatprep.subr.mxu0 0.0
      %6508 = vmatpush1.xpose.msra.mxu0 0.0
      %6509 = vmatprep.subr.mxu0 0.0
      %6510 = vmatpush1.xpose.msra.mxu0 0.0
      %6511 = vmatprep.subr.mxu0 0.0
      %6512 = vmatpush1.xpose.msra.mxu0 0.0
      %6513 = vmatprep.subr.mxu0 0.0
      %6514 = vmatpush1.xpose.msra.mxu0 0.0
      %6515 = vmatprep.subr.mxu0 0.0
      %6516 = vmatpush1.xpose.msra.mxu0 0.0
      %6517 = vmatprep.subr.mxu0 0.0
      %6518 = vmatpush1.xpose.msra.mxu0 0.0
      %6519 = vmatprep.subr.mxu0 0.0
      %6520 = vmatpush1.xpose.msra.mxu0 0.0
      %6521 = vmatprep.subr.mxu0 0.0
      %6522 = vmatpush1.xpose.msra.mxu0 0.0
      %6523 = vmatprep.subr.mxu0 0.0
      %6524 = vmatpush1.xpose.msra.mxu0 0.0
      %6525 = vmatprep.subr.mxu0 0.0
      %6526 = vmatpush1.xpose.msra.mxu0 %v6495
      %6527 = vmatprep.subr.mxu0 0.0
      %6528 = vmatpush1.xpose.msra.mxu0 %v6492
      %6529 = vmatprep.subr.mxu0 0.0
      %6530 = vmatpush2.xpose.msra.mxu0 0.0
      %6531 = vmatprep.subr.mxu0 0.0
      %6532 = vmatpush2.xpose.msra.mxu0 0.0
      %6533 = vmatprep.subr.mxu0 0.0
      %6534 = vmatpush2.xpose.msra.mxu0 0.0
      %6535 = vmatprep.subr.mxu0 0.0
      %6536 = vmatpush2.xpose.msra.mxu0 0.0
      %6537 = vmatprep.subr.mxu0 0.0
      %6538 = vmatpush2.xpose.msra.mxu0 0.0
      %6539 = vmatprep.subr.mxu0 0.0
      %6540 = vmatpush2.xpose.msra.mxu0 0.0
      %6541 = vmatprep.subr.mxu0 0.0
      %6542 = vmatpush2.xpose.msra.mxu0 0.0
      %6543 = vmatprep.subr.mxu0 0.0
      %6544 = vmatpush2.xpose.msra.mxu0 0.0
      %6545 = vmatprep.subr.mxu0 0.0
      %6546 = vmatpush2.xpose.msra.mxu0 0.0
      %6547 = vmatprep.subr.mxu0 0.0
      %6548 = vmatpush2.xpose.msra.mxu0 0.0
      %6549 = vmatprep.subr.mxu0 0.0
      %6550 = vmatpush2.xpose.msra.mxu0 0.0
      %6551 = vmatprep.subr.mxu0 0.0
      %6552 = vmatpush2.xpose.msra.mxu0 0.0
      %6553 = vmatprep.subr.mxu0 0.0
      %6554 = vmatpush2.xpose.msra.mxu0 0.0
      %6555 = vmatprep.subr.mxu0 0.0
      %6556 = vmatpush2.xpose.msra.mxu0 0.0
      %6557 = vmatprep.subr.mxu0 0.0
      %6558 = vmatpush2.xpose.msra.mxu0 0.0
      %6559 = vmatprep.subr.mxu0 0.0
      %6560 = vmatpush2.xpose.msra.mxu0 0.0
      %6561 = vmatprep.mubr.f32.mxu0 0.0
      %6562 = vmatmul.mubr.f32.gmra.mxu0 %v6489
      %v6563 = vpop.f32.mrf.mxu0
      %v6564 = vadd.f32 0.0, %v6563
      %v6565 = vpop.f32.mrf.mxu0
      %6566 = vdwg.mxu0
      %v6567 = vsel %vm768, %v6564, -inf
      %6568 = vmax.xlane.f32.xlu0 %v6567
      %v6569 = vpop.xlane.xlu0 %6568
      %v6570 = vsub.f32 %v6564, %v6569
      %v6571 = vmul.f32 %v6570, 1.442695
      %v6572 = vpow.pop %v6571
      %v6573 = vsel %vm768, %v6572, 0.0
      %6574 = vadd.xlane.f32.xlu0 %v6573
      %v6575 = vpop.xlane.xlu0 %6574
      %v6576 = vrcp.pop %v6575
      %v6577 = vmul.f32 %v6572, %v6576
      %v6579 = vsel %vm768, %v6577, 0
      %v6582 = vsel %vm783, %v6485, 0
      %6584 = vmatprep.subr.mxu0 0.0
      %6585 = vmatpush1.msra.mxu0 0.0
      %6586 = vmatprep.subr.mxu0 0.0
      %6587 = vmatpush1.msra.mxu0 0.0
      %6588 = vmatprep.subr.mxu0 0.0
      %6589 = vmatpush1.msra.mxu0 0.0
      %6590 = vmatprep.subr.mxu0 0.0
      %6591 = vmatpush1.msra.mxu0 0.0
      %6592 = vmatprep.subr.mxu0 0.0
      %6593 = vmatpush1.msra.mxu0 0.0
      %6594 = vmatprep.subr.mxu0 0.0
      %6595 = vmatpush1.msra.mxu0 0.0
      %6596 = vmatprep.subr.mxu0 0.0
      %6597 = vmatpush1.msra.mxu0 0.0
      %6598 = vmatprep.subr.mxu0 0.0
      %6599 = vmatpush1.msra.mxu0 0.0
      %6600 = vmatprep.subr.mxu0 0.0
      %6601 = vmatpush1.msra.mxu0 0.0
      %6602 = vmatprep.subr.mxu0 0.0
      %6603 = vmatpush1.msra.mxu0 0.0
      %6604 = vmatprep.subr.mxu0 0.0
      %6605 = vmatpush1.msra.mxu0 0.0
      %6606 = vmatprep.subr.mxu0 0.0
      %6607 = vmatpush1.msra.mxu0 0.0
      %6608 = vmatprep.subr.mxu0 0.0
      %6609 = vmatpush1.msra.mxu0 0.0
      %6610 = vmatprep.subr.mxu0 0.0
      %6611 = vmatpush1.msra.mxu0 0.0
      %6612 = vmatprep.subr.mxu0 0.0
      %6613 = vmatpush1.msra.mxu0 %v6582
      %6614 = vmatprep.subr.mxu0 0.0
      %6615 = vmatpush1.msra.mxu0 %v6480
      %6616 = vmatprep.subr.mxu0 0.0
      %6617 = vmatpush2.msra.mxu0 0.0
      %6618 = vmatprep.subr.mxu0 0.0
      %6619 = vmatpush2.msra.mxu0 0.0
      %6620 = vmatprep.subr.mxu0 0.0
      %6621 = vmatpush2.msra.mxu0 0.0
      %6622 = vmatprep.subr.mxu0 0.0
      %6623 = vmatpush2.msra.mxu0 0.0
      %6624 = vmatprep.subr.mxu0 0.0
      %6625 = vmatpush2.msra.mxu0 0.0
      %6626 = vmatprep.subr.mxu0 0.0
      %6627 = vmatpush2.msra.mxu0 0.0
      %6628 = vmatprep.subr.mxu0 0.0
      %6629 = vmatpush2.msra.mxu0 0.0
      %6630 = vmatprep.subr.mxu0 0.0
      %6631 = vmatpush2.msra.mxu0 0.0
      %6632 = vmatprep.subr.mxu0 0.0
      %6633 = vmatpush2.msra.mxu0 0.0
      %6634 = vmatprep.subr.mxu0 0.0
      %6635 = vmatpush2.msra.mxu0 0.0
      %6636 = vmatprep.subr.mxu0 0.0
      %6637 = vmatpush2.msra.mxu0 0.0
      %6638 = vmatprep.subr.mxu0 0.0
      %6639 = vmatpush2.msra.mxu0 0.0
      %6640 = vmatprep.subr.mxu0 0.0
      %6641 = vmatpush2.msra.mxu0 0.0
      %6642 = vmatprep.subr.mxu0 0.0
      %6643 = vmatpush2.msra.mxu0 0.0
      %6644 = vmatprep.subr.mxu0 0.0
      %6645 = vmatpush2.msra.mxu0 0.0
      %6646 = vmatprep.subr.mxu0 0.0
      %6647 = vmatpush2.msra.mxu0 0.0
      %6648 = vmatprep.mubr.f32.mxu0 0.0
      %6649 = vmatmul.mubr.f32.gmra.mxu0 %v6579
      %v6650 = vpop.f32.mrf.mxu0
      %v6651 = vadd.f32 0.0, %v6650
      %v6652 = vpop.f32.mrf.mxu0
      %6653 = vdwg.mxu0
      %v6655 = vsel %vm688, %v6651, 0
      %6657 = vmatprep.subr.mxu0 0.0
      %6658 = vmatpush1.msra.mxu0 0.0
      %6659 = vmatprep.subr.mxu0 0.0
      %6660 = vmatpush1.msra.mxu0 0.0
      %6661 = vmatprep.subr.mxu0 0.0
      %6662 = vmatpush1.msra.mxu0 0.0
      %6663 = vmatprep.subr.mxu0 0.0
      %6664 = vmatpush1.msra.mxu0 0.0
      %6665 = vmatprep.subr.mxu0 0.0
      %6666 = vmatpush1.msra.mxu0 0.0
      %6667 = vmatprep.subr.mxu0 0.0
      %6668 = vmatpush1.msra.mxu0 0.0
      %6669 = vmatprep.subr.mxu0 0.0
      %6670 = vmatpush1.msra.mxu0 0.0
      %6671 = vmatprep.subr.mxu0 0.0
      %6672 = vmatpush1.msra.mxu0 0.0
      %6673 = vmatprep.subr.mxu0 0.0
      %6674 = vmatpush1.msra.mxu0 0.0
      %6675 = vmatprep.subr.mxu0 0.0
      %6676 = vmatpush1.msra.mxu0 0.0
      %6677 = vmatprep.subr.mxu0 0.0
      %6678 = vmatpush1.msra.mxu0 0.0
      %6679 = vmatprep.subr.mxu0 0.0
      %6680 = vmatpush1.msra.mxu0 0.0
      %6681 = vmatprep.subr.mxu0 0.0
      %6682 = vmatpush1.msra.mxu0 0.0
      %6683 = vmatprep.subr.mxu0 0.0
      %6684 = vmatpush1.msra.mxu0 0.0
      %6685 = vmatprep.subr.mxu0 0.0
      %6686 = vmatpush1.msra.mxu0 0.0
      %6687 = vmatprep.subr.mxu0 0.0
      %6688 = vmatpush1.msra.mxu0 %v4730
      %6689 = vmatprep.subr.mxu0 0.0
      %6690 = vmatpush2.msra.mxu0 0.0
      %6691 = vmatprep.subr.mxu0 0.0
      %6692 = vmatpush2.msra.mxu0 0.0
      %6693 = vmatprep.subr.mxu0 0.0
      %6694 = vmatpush2.msra.mxu0 0.0
      %6695 = vmatprep.subr.mxu0 0.0
      %6696 = vmatpush2.msra.mxu0 0.0
      %6697 = vmatprep.subr.mxu0 0.0
      %6698 = vmatpush2.msra.mxu0 0.0
      %6699 = vmatprep.subr.mxu0 0.0
      %6700 = vmatpush2.msra.mxu0 0.0
      %6701 = vmatprep.subr.mxu0 0.0
      %6702 = vmatpush2.msra.mxu0 0.0
      %6703 = vmatprep.subr.mxu0 0.0
      %6704 = vmatpush2.msra.mxu0 0.0
      %6705 = vmatprep.subr.mxu0 0.0
      %6706 = vmatpush2.msra.mxu0 0.0
      %6707 = vmatprep.subr.mxu0 0.0
      %6708 = vmatpush2.msra.mxu0 0.0
      %6709 = vmatprep.subr.mxu0 0.0
      %6710 = vmatpush2.msra.mxu0 0.0
      %6711 = vmatprep.subr.mxu0 0.0
      %6712 = vmatpush2.msra.mxu0 0.0
      %6713 = vmatprep.subr.mxu0 0.0
      %6714 = vmatpush2.msra.mxu0 0.0
      %6715 = vmatprep.subr.mxu0 0.0
      %6716 = vmatpush2.msra.mxu0 0.0
      %6717 = vmatprep.subr.mxu0 0.0
      %6718 = vmatpush2.msra.mxu0 0.0
      %6719 = vmatprep.subr.mxu0 0.0
      %6720 = vmatpush2.msra.mxu0 0.0
      %6721 = vmatprep.mubr.f32.mxu0 0.0
      %6722 = vmatmul.mubr.f32.gmra.mxu0 %v6655
      %v6723 = vpop.f32.mrf.mxu0
      %v6724 = vadd.f32 0.0, %v6723
      %v6725 = vpop.f32.mrf.mxu0
      %6726 = vdwg.mxu0
      %v6727 = vadd.f32 %v6228, %v6724
      %v6729 = vlaneseq
      %v6730 = vshrl.u32 %v6729, 7
      %v6731 = vsub.s32 0, %v6730
      %v6732 = vrot.slane %v4709, %v6731
      %v6734 = vadd.f32 %v6727, %v6732
      %v6735 = vadd.f32 %v4707, %v6734
      %v6736 = vsel %vm446, %v6735, 0.0
      %6737 = vadd.xlane.f32.xlu0 %v6736
      %v6738 = vpop.xlane.xlu0 %6737
      %v6739 = vmul.f32 %v6738, %v2437
      %v6740 = vsub.f32 %v6735, %v6739
      %v6741 = vmul.f32 %v6740, %v6740
      %v6742 = vsel %vm446, %v6741, 0.0
      %6743 = vadd.xlane.f32.xlu0 %v6742
      %v6744 = vpop.xlane.xlu0 %6743
      %v6745 = vmul.f32 %v6744, %v2437
      %v6746 = vadd.f32 %v6745, 1e-05
      %v6747 = vrsqrt.pop %v6746
      %v6748 = vmul.f32 %v6740, %v6747
      %v6750 = vlaneseq
      %v6751 = vshrl.u32 %v6750, 7
      %v6752 = vsub.s32 0, %v6751
      %v6753 = vrot.slane %v4711, %v6752
      %v6755 = vmul.f32 %v6748, %v6753
      %v6757 = vlaneseq
      %v6758 = vshrl.u32 %v6757, 7
      %v6759 = vsub.s32 0, %v6758
      %v6760 = vrot.slane %v4713, %v6759
      %v6762 = vadd.f32 %v6755, %v6760
      %s6763 = scalar_lea.vmem %s5, 96
      %v6764 = vld [vmem:[%s6763] sm:$0xff]
      %v6765 = vld [vmem:[%s6763 + $0x8] sm:$0xff]
      %v6766 = vld [vmem:[%s6763 + $0x10] sm:$0xff]
      %v6767 = vld [vmem:[%s6763 + $0x18] sm:$0xff]
      %s6768 = scalar_lea.vmem %s3, 1152
      %v6769 = vld [vmem:[%s6768] sm:$0xff]
      %v6770 = vld [vmem:[%s6768 + $0x8] sm:$0xff]
      %v6771 = vld [vmem:[%s6768 + $0x10] sm:$0xff]
      %v6772 = vld [vmem:[%s6768 + $0x18] sm:$0xff]
      %s6773 = scalar_lea.vmem %s3, 1280
      %v6774 = vld [vmem:[%s6773] sm:$0xff]
      %v6775 = vld [vmem:[%s6773 + $0x8] sm:$0xff]
      %v6776 = vld [vmem:[%s6773 + $0x10] sm:$0xff]
      %v6777 = vld [vmem:[%s6773 + $0x18] sm:$0xff]
      %s6778 = scalar_lea.vmem %s3, 1408
      %v6779 = vld [vmem:[%s6778] sm:$0xff]
      %v6780 = vld [vmem:[%s6778 + $0x8] sm:$0xff]
      %v6781 = vld [vmem:[%s6778 + $0x10] sm:$0xff]
      %v6782 = vld [vmem:[%s6778 + $0x18] sm:$0xff]
      %s6783 = scalar_lea.vmem %s4, 36
      %v6784 = vld [vmem:[%s6783] sm:$0x1]
      %s6785 = scalar_lea.vmem %s4, 40
      %v6786 = vld [vmem:[%s6785] sm:$0x1]
      %s6787 = scalar_lea.vmem %s4, 44
      %v6788 = vld [vmem:[%s6787] sm:$0x1]
      %v6790 = vlaneseq
      %v6791 = vshrl.u32 %v6790, 7
      %v6792 = vsub.s32 0, %v6791
      %v6793 = vrot.slane %v6784, %v6792
      %v6796 = vsel %vm446, %v6762, 0
      %6798 = vmatprep.subr.mxu0 0.0
      %6799 = vmatpush1.msra.mxu0 0.0
      %6800 = vmatprep.subr.mxu0 0.0
      %6801 = vmatpush1.msra.mxu0 0.0
      %6802 = vmatprep.subr.mxu0 0.0
      %6803 = vmatpush1.msra.mxu0 0.0
      %6804 = vmatprep.subr.mxu0 0.0
      %6805 = vmatpush1.msra.mxu0 0.0
      %6806 = vmatprep.subr.mxu0 0.0
      %6807 = vmatpush1.msra.mxu0 0.0
      %6808 = vmatprep.subr.mxu0 0.0
      %6809 = vmatpush1.msra.mxu0 0.0
      %6810 = vmatprep.subr.mxu0 0.0
      %6811 = vmatpush1.msra.mxu0 0.0
      %6812 = vmatprep.subr.mxu0 0.0
      %6813 = vmatpush1.msra.mxu0 0.0
      %6814 = vmatprep.subr.mxu0 0.0
      %6815 = vmatpush1.msra.mxu0 0.0
      %6816 = vmatprep.subr.mxu0 0.0
      %6817 = vmatpush1.msra.mxu0 0.0
      %6818 = vmatprep.subr.mxu0 0.0
      %6819 = vmatpush1.msra.mxu0 0.0
      %6820 = vmatprep.subr.mxu0 0.0
      %6821 = vmatpush1.msra.mxu0 0.0
      %6822 = vmatprep.subr.mxu0 0.0
      %6823 = vmatpush1.msra.mxu0 %v6772
      %6824 = vmatprep.subr.mxu0 0.0
      %6825 = vmatpush1.msra.mxu0 %v6771
      %6826 = vmatprep.subr.mxu0 0.0
      %6827 = vmatpush1.msra.mxu0 %v6770
      %6828 = vmatprep.subr.mxu0 0.0
      %6829 = vmatpush1.msra.mxu0 %v6769
      %6830 = vmatprep.subr.mxu0 0.0
      %6831 = vmatpush2.msra.mxu0 0.0
      %6832 = vmatprep.subr.mxu0 0.0
      %6833 = vmatpush2.msra.mxu0 0.0
      %6834 = vmatprep.subr.mxu0 0.0
      %6835 = vmatpush2.msra.mxu0 0.0
      %6836 = vmatprep.subr.mxu0 0.0
      %6837 = vmatpush2.msra.mxu0 0.0
      %6838 = vmatprep.subr.mxu0 0.0
      %6839 = vmatpush2.msra.mxu0 0.0
      %6840 = vmatprep.subr.mxu0 0.0
      %6841 = vmatpush2.msra.mxu0 0.0
      %6842 = vmatprep.subr.mxu0 0.0
      %6843 = vmatpush2.msra.mxu0 0.0
      %6844 = vmatprep.subr.mxu0 0.0
      %6845 = vmatpush2.msra.mxu0 0.0
      %6846 = vmatprep.subr.mxu0 0.0
      %6847 = vmatpush2.msra.mxu0 0.0
      %6848 = vmatprep.subr.mxu0 0.0
      %6849 = vmatpush2.msra.mxu0 0.0
      %6850 = vmatprep.subr.mxu0 0.0
      %6851 = vmatpush2.msra.mxu0 0.0
      %6852 = vmatprep.subr.mxu0 0.0
      %6853 = vmatpush2.msra.mxu0 0.0
      %6854 = vmatprep.subr.mxu0 0.0
      %6855 = vmatpush2.msra.mxu0 0.0
      %6856 = vmatprep.subr.mxu0 0.0
      %6857 = vmatpush2.msra.mxu0 0.0
      %6858 = vmatprep.subr.mxu0 0.0
      %6859 = vmatpush2.msra.mxu0 0.0
      %6860 = vmatprep.subr.mxu0 0.0
      %6861 = vmatpush2.msra.mxu0 0.0
      %6862 = vmatprep.mubr.f32.mxu0 0.0
      %6863 = vmatmul.mubr.f32.gmra.mxu0 %v6796
      %v6864 = vpop.f32.mrf.mxu0
      %v6865 = vadd.f32 %v6793, %v6864
      %v6866 = vpop.f32.mrf.mxu0
      %6867 = vdwg.mxu0
      %v6869 = vlaneseq
      %v6870 = vshrl.u32 %v6869, 7
      %v6871 = vsub.s32 0, %v6870
      %v6872 = vrot.slane %v6786, %v6871
      %6874 = vmatprep.subr.mxu0 0.0
      %6875 = vmatpush1.msra.mxu0 0.0
      %6876 = vmatprep.subr.mxu0 0.0
      %6877 = vmatpush1.msra.mxu0 0.0
      %6878 = vmatprep.subr.mxu0 0.0
      %6879 = vmatpush1.msra.mxu0 0.0
      %6880 = vmatprep.subr.mxu0 0.0
      %6881 = vmatpush1.msra.mxu0 0.0
      %6882 = vmatprep.subr.mxu0 0.0
      %6883 = vmatpush1.msra.mxu0 0.0
      %6884 = vmatprep.subr.mxu0 0.0
      %6885 = vmatpush1.msra.mxu0 0.0
      %6886 = vmatprep.subr.mxu0 0.0
      %6887 = vmatpush1.msra.mxu0 0.0
      %6888 = vmatprep.subr.mxu0 0.0
      %6889 = vmatpush1.msra.mxu0 0.0
      %6890 = vmatprep.subr.mxu0 0.0
      %6891 = vmatpush1.msra.mxu0 0.0
      %6892 = vmatprep.subr.mxu0 0.0
      %6893 = vmatpush1.msra.mxu0 0.0
      %6894 = vmatprep.subr.mxu0 0.0
      %6895 = vmatpush1.msra.mxu0 0.0
      %6896 = vmatprep.subr.mxu0 0.0
      %6897 = vmatpush1.msra.mxu0 0.0
      %6898 = vmatprep.subr.mxu0 0.0
      %6899 = vmatpush1.msra.mxu0 %v6777
      %6900 = vmatprep.subr.mxu0 0.0
      %6901 = vmatpush1.msra.mxu0 %v6776
      %6902 = vmatprep.subr.mxu0 0.0
      %6903 = vmatpush1.msra.mxu0 %v6775
      %6904 = vmatprep.subr.mxu0 0.0
      %6905 = vmatpush1.msra.mxu0 %v6774
      %6906 = vmatprep.subr.mxu0 0.0
      %6907 = vmatpush2.msra.mxu0 0.0
      %6908 = vmatprep.subr.mxu0 0.0
      %6909 = vmatpush2.msra.mxu0 0.0
      %6910 = vmatprep.subr.mxu0 0.0
      %6911 = vmatpush2.msra.mxu0 0.0
      %6912 = vmatprep.subr.mxu0 0.0
      %6913 = vmatpush2.msra.mxu0 0.0
      %6914 = vmatprep.subr.mxu0 0.0
      %6915 = vmatpush2.msra.mxu0 0.0
      %6916 = vmatprep.subr.mxu0 0.0
      %6917 = vmatpush2.msra.mxu0 0.0
      %6918 = vmatprep.subr.mxu0 0.0
      %6919 = vmatpush2.msra.mxu0 0.0
      %6920 = vmatprep.subr.mxu0 0.0
      %6921 = vmatpush2.msra.mxu0 0.0
      %6922 = vmatprep.subr.mxu0 0.0
      %6923 = vmatpush2.msra.mxu0 0.0
      %6924 = vmatprep.subr.mxu0 0.0
      %6925 = vmatpush2.msra.mxu0 0.0
      %6926 = vmatprep.subr.mxu0 0.0
      %6927 = vmatpush2.msra.mxu0 0.0
      %6928 = vmatprep.subr.mxu0 0.0
      %6929 = vmatpush2.msra.mxu0 0.0
      %6930 = vmatprep.subr.mxu0 0.0
      %6931 = vmatpush2.msra.mxu0 0.0
      %6932 = vmatprep.subr.mxu0 0.0
      %6933 = vmatpush2.msra.mxu0 0.0
      %6934 = vmatprep.subr.mxu0 0.0
      %6935 = vmatpush2.msra.mxu0 0.0
      %6936 = vmatprep.subr.mxu0 0.0
      %6937 = vmatpush2.msra.mxu0 0.0
      %6938 = vmatprep.mubr.f32.mxu0 0.0
      %6939 = vmatmul.mubr.f32.gmra.mxu0 %v2574
      %v6940 = vpop.f32.mrf.mxu0
      %v6941 = vadd.f32 %v6872, %v6940
      %v6942 = vpop.f32.mrf.mxu0
      %6943 = vmatprep.mubr.f32.mxu0 0.0
      %6944 = vmatmul.mubr.f32.gmra.mxu0 %v2577
      %v6945 = vpop.f32.mrf.mxu0
      %v6946 = vadd.f32 %v6872, %v6945
      %v6947 = vpop.f32.mrf.mxu0
      %6948 = vdwg.mxu0
      %v6950 = vlaneseq
      %v6951 = vshrl.u32 %v6950, 7
      %v6952 = vsub.s32 0, %v6951
      %v6953 = vrot.slane %v6788, %v6952
      %6955 = vmatprep.subr.mxu0 0.0
      %6956 = vmatpush1.msra.mxu0 0.0
      %6957 = vmatprep.subr.mxu0 0.0
      %6958 = vmatpush1.msra.mxu0 0.0
      %6959 = vmatprep.subr.mxu0 0.0
      %6960 = vmatpush1.msra.mxu0 0.0
      %6961 = vmatprep.subr.mxu0 0.0
      %6962 = vmatpush1.msra.mxu0 0.0
      %6963 = vmatprep.subr.mxu0 0.0
      %6964 = vmatpush1.msra.mxu0 0.0
      %6965 = vmatprep.subr.mxu0 0.0
      %6966 = vmatpush1.msra.mxu0 0.0
      %6967 = vmatprep.subr.mxu0 0.0
      %6968 = vmatpush1.msra.mxu0 0.0
      %6969 = vmatprep.subr.mxu0 0.0
      %6970 = vmatpush1.msra.mxu0 0.0
      %6971 = vmatprep.subr.mxu0 0.0
      %6972 = vmatpush1.msra.mxu0 0.0
      %6973 = vmatprep.subr.mxu0 0.0
      %6974 = vmatpush1.msra.mxu0 0.0
      %6975 = vmatprep.subr.mxu0 0.0
      %6976 = vmatpush1.msra.mxu0 0.0
      %6977 = vmatprep.subr.mxu0 0.0
      %6978 = vmatpush1.msra.mxu0 0.0
      %6979 = vmatprep.subr.mxu0 0.0
      %6980 = vmatpush1.msra.mxu0 %v6782
      %6981 = vmatprep.subr.mxu0 0.0
      %6982 = vmatpush1.msra.mxu0 %v6781
      %6983 = vmatprep.subr.mxu0 0.0
      %6984 = vmatpush1.msra.mxu0 %v6780
      %6985 = vmatprep.subr.mxu0 0.0
      %6986 = vmatpush1.msra.mxu0 %v6779
      %6987 = vmatprep.subr.mxu0 0.0
      %6988 = vmatpush2.msra.mxu0 0.0
      %6989 = vmatprep.subr.mxu0 0.0
      %6990 = vmatpush2.msra.mxu0 0.0
      %6991 = vmatprep.subr.mxu0 0.0
      %6992 = vmatpush2.msra.mxu0 0.0
      %6993 = vmatprep.subr.mxu0 0.0
      %6994 = vmatpush2.msra.mxu0 0.0
      %6995 = vmatprep.subr.mxu0 0.0
      %6996 = vmatpush2.msra.mxu0 0.0
      %6997 = vmatprep.subr.mxu0 0.0
      %6998 = vmatpush2.msra.mxu0 0.0
      %6999 = vmatprep.subr.mxu0 0.0
      %7000 = vmatpush2.msra.mxu0 0.0
      %7001 = vmatprep.subr.mxu0 0.0
      %7002 = vmatpush2.msra.mxu0 0.0
      %7003 = vmatprep.subr.mxu0 0.0
      %7004 = vmatpush2.msra.mxu0 0.0
      %7005 = vmatprep.subr.mxu0 0.0
      %7006 = vmatpush2.msra.mxu0 0.0
      %7007 = vmatprep.subr.mxu0 0.0
      %7008 = vmatpush2.msra.mxu0 0.0
      %7009 = vmatprep.subr.mxu0 0.0
      %7010 = vmatpush2.msra.mxu0 0.0
      %7011 = vmatprep.subr.mxu0 0.0
      %7012 = vmatpush2.msra.mxu0 0.0
      %7013 = vmatprep.subr.mxu0 0.0
      %7014 = vmatpush2.msra.mxu0 0.0
      %7015 = vmatprep.subr.mxu0 0.0
      %7016 = vmatpush2.msra.mxu0 0.0
      %7017 = vmatprep.subr.mxu0 0.0
      %7018 = vmatpush2.msra.mxu0 0.0
      %7019 = vmatprep.mubr.f32.mxu0 0.0
      %7020 = vmatmul.mubr.f32.gmra.mxu0 %v2574
      %v7021 = vpop.f32.mrf.mxu0
      %v7022 = vadd.f32 %v6953, %v7021
      %v7023 = vpop.f32.mrf.mxu0
      %7024 = vmatprep.mubr.f32.mxu0 0.0
      %7025 = vmatmul.mubr.f32.gmra.mxu0 %v2577
      %v7026 = vpop.f32.mrf.mxu0
      %v7027 = vadd.f32 %v6953, %v7026
      %v7028 = vpop.f32.mrf.mxu0
      %7029 = vdwg.mxu0
      %v7031 = vsel %vm688, %v6865, 0
      %v7034 = vsel %vm688, %v6941, 0
      %v7037 = vsel %vm688, %v6946, 0
      %7039 = vmatprep.subr.mxu0 0.0
      %7040 = vmatpush1.xpose.msra.mxu0 0.0
      %7041 = vmatprep.subr.mxu0 0.0
      %7042 = vmatpush1.xpose.msra.mxu0 0.0
      %7043 = vmatprep.subr.mxu0 0.0
      %7044 = vmatpush1.xpose.msra.mxu0 0.0
      %7045 = vmatprep.subr.mxu0 0.0
      %7046 = vmatpush1.xpose.msra.mxu0 0.0
      %7047 = vmatprep.subr.mxu0 0.0
      %7048 = vmatpush1.xpose.msra.mxu0 0.0
      %7049 = vmatprep.subr.mxu0 0.0
      %7050 = vmatpush1.xpose.msra.mxu0 0.0
      %7051 = vmatprep.subr.mxu0 0.0
      %7052 = vmatpush1.xpose.msra.mxu0 0.0
      %7053 = vmatprep.subr.mxu0 0.0
      %7054 = vmatpush1.xpose.msra.mxu0 0.0
      %7055 = vmatprep.subr.mxu0 0.0
      %7056 = vmatpush1.xpose.msra.mxu0 0.0
      %7057 = vmatprep.subr.mxu0 0.0
      %7058 = vmatpush1.xpose.msra.mxu0 0.0
      %7059 = vmatprep.subr.mxu0 0.0
      %7060 = vmatpush1.xpose.msra.mxu0 0.0
      %7061 = vmatprep.subr.mxu0 0.0
      %7062 = vmatpush1.xpose.msra.mxu0 0.0
      %7063 = vmatprep.subr.mxu0 0.0
      %7064 = vmatpush1.xpose.msra.mxu0 0.0
      %7065 = vmatprep.subr.mxu0 0.0
      %7066 = vmatpush1.xpose.msra.mxu0 0.0
      %7067 = vmatprep.subr.mxu0 0.0
      %7068 = vmatpush1.xpose.msra.mxu0 %v7037
      %7069 = vmatprep.subr.mxu0 0.0
      %7070 = vmatpush1.xpose.msra.mxu0 %v7034
      %7071 = vmatprep.subr.mxu0 0.0
      %7072 = vmatpush2.xpose.msra.mxu0 0.0
      %7073 = vmatprep.subr.mxu0 0.0
      %7074 = vmatpush2.xpose.msra.mxu0 0.0
      %7075 = vmatprep.subr.mxu0 0.0
      %7076 = vmatpush2.xpose.msra.mxu0 0.0
      %7077 = vmatprep.subr.mxu0 0.0
      %7078 = vmatpush2.xpose.msra.mxu0 0.0
      %7079 = vmatprep.subr.mxu0 0.0
      %7080 = vmatpush2.xpose.msra.mxu0 0.0
      %7081 = vmatprep.subr.mxu0 0.0
      %7082 = vmatpush2.xpose.msra.mxu0 0.0
      %7083 = vmatprep.subr.mxu0 0.0
      %7084 = vmatpush2.xpose.msra.mxu0 0.0
      %7085 = vmatprep.subr.mxu0 0.0
      %7086 = vmatpush2.xpose.msra.mxu0 0.0
      %7087 = vmatprep.subr.mxu0 0.0
      %7088 = vmatpush2.xpose.msra.mxu0 0.0
      %7089 = vmatprep.subr.mxu0 0.0
      %7090 = vmatpush2.xpose.msra.mxu0 0.0
      %7091 = vmatprep.subr.mxu0 0.0
      %7092 = vmatpush2.xpose.msra.mxu0 0.0
      %7093 = vmatprep.subr.mxu0 0.0
      %7094 = vmatpush2.xpose.msra.mxu0 0.0
      %7095 = vmatprep.subr.mxu0 0.0
      %7096 = vmatpush2.xpose.msra.mxu0 0.0
      %7097 = vmatprep.subr.mxu0 0.0
      %7098 = vmatpush2.xpose.msra.mxu0 0.0
      %7099 = vmatprep.subr.mxu0 0.0
      %7100 = vmatpush2.xpose.msra.mxu0 0.0
      %7101 = vmatprep.subr.mxu0 0.0
      %7102 = vmatpush2.xpose.msra.mxu0 0.0
      %7103 = vmatprep.mubr.f32.mxu0 0.0
      %7104 = vmatmul.mubr.f32.gmra.mxu0 %v7031
      %v7105 = vpop.f32.mrf.mxu0
      %v7106 = vadd.f32 0.0, %v7105
      %v7107 = vpop.f32.mrf.mxu0
      %7108 = vdwg.mxu0
      %v7109 = vsel %vm2814, %v7106, -inf
      %7110 = vmax.xlane.f32.xlu0 %v7109
      %v7111 = vpop.xlane.xlu0 %7110
      %v7112 = vsub.f32 %v7106, %v7111
      %v7113 = vmul.f32 %v7112, 1.442695
      %v7114 = vpow.pop %v7113
      %v7115 = vsel %vm2814, %v7114, 0.0
      %7116 = vadd.xlane.f32.xlu0 %v7115
      %v7117 = vpop.xlane.xlu0 %7116
      %v7118 = vrcp.pop %v7117
      %v7119 = vmul.f32 %v7114, %v7118
      %v7121 = vsel %vm2814, %v7119, 0
      %v7124 = vsel %vm2829, %v7027, 0
      %7126 = vmatprep.subr.mxu0 0.0
      %7127 = vmatpush1.msra.mxu0 0.0
      %7128 = vmatprep.subr.mxu0 0.0
      %7129 = vmatpush1.msra.mxu0 0.0
      %7130 = vmatprep.subr.mxu0 0.0
      %7131 = vmatpush1.msra.mxu0 0.0
      %7132 = vmatprep.subr.mxu0 0.0
      %7133 = vmatpush1.msra.mxu0 0.0
      %7134 = vmatprep.subr.mxu0 0.0
      %7135 = vmatpush1.msra.mxu0 0.0
      %7136 = vmatprep.subr.mxu0 0.0
      %7137 = vmatpush1.msra.mxu0 0.0
      %7138 = vmatprep.subr.mxu0 0.0
      %7139 = vmatpush1.msra.mxu0 0.0
      %7140 = vmatprep.subr.mxu0 0.0
      %7141 = vmatpush1.msra.mxu0 0.0
      %7142 = vmatprep.subr.mxu0 0.0
      %7143 = vmatpush1.msra.mxu0 0.0
      %7144 = vmatprep.subr.mxu0 0.0
      %7145 = vmatpush1.msra.mxu0 0.0
      %7146 = vmatprep.subr.mxu0 0.0
      %7147 = vmatpush1.msra.mxu0 0.0
      %7148 = vmatprep.subr.mxu0 0.0
      %7149 = vmatpush1.msra.mxu0 0.0
      %7150 = vmatprep.subr.mxu0 0.0
      %7151 = vmatpush1.msra.mxu0 0.0
      %7152 = vmatprep.subr.mxu0 0.0
      %7153 = vmatpush1.msra.mxu0 0.0
      %7154 = vmatprep.subr.mxu0 0.0
      %7155 = vmatpush1.msra.mxu0 %v7124
      %7156 = vmatprep.subr.mxu0 0.0
      %7157 = vmatpush1.msra.mxu0 %v7022
      %7158 = vmatprep.subr.mxu0 0.0
      %7159 = vmatpush2.msra.mxu0 0.0
      %7160 = vmatprep.subr.mxu0 0.0
      %7161 = vmatpush2.msra.mxu0 0.0
      %7162 = vmatprep.subr.mxu0 0.0
      %7163 = vmatpush2.msra.mxu0 0.0
      %7164 = vmatprep.subr.mxu0 0.0
      %7165 = vmatpush2.msra.mxu0 0.0
      %7166 = vmatprep.subr.mxu0 0.0
      %7167 = vmatpush2.msra.mxu0 0.0
      %7168 = vmatprep.subr.mxu0 0.0
      %7169 = vmatpush2.msra.mxu0 0.0
      %7170 = vmatprep.subr.mxu0 0.0
      %7171 = vmatpush2.msra.mxu0 0.0
      %7172 = vmatprep.subr.mxu0 0.0
      %7173 = vmatpush2.msra.mxu0 0.0
      %7174 = vmatprep.subr.mxu0 0.0
      %7175 = vmatpush2.msra.mxu0 0.0
      %7176 = vmatprep.subr.mxu0 0.0
      %7177 = vmatpush2.msra.mxu0 0.0
      %7178 = vmatprep.subr.mxu0 0.0
      %7179 = vmatpush2.msra.mxu0 0.0
      %7180 = vmatprep.subr.mxu0 0.0
      %7181 = vmatpush2.msra.mxu0 0.0
      %7182 = vmatprep.subr.mxu0 0.0
      %7183 = vmatpush2.msra.mxu0 0.0
      %7184 = vmatprep.subr.mxu0 0.0
      %7185 = vmatpush2.msra.mxu0 0.0
      %7186 = vmatprep.subr.mxu0 0.0
      %7187 = vmatpush2.msra.mxu0 0.0
      %7188 = vmatprep.subr.mxu0 0.0
      %7189 = vmatpush2.msra.mxu0 0.0
      %7190 = vmatprep.mubr.f32.mxu0 0.0
      %7191 = vmatmul.mubr.f32.gmra.mxu0 %v7121
      %v7192 = vpop.f32.mrf.mxu0
      %v7193 = vadd.f32 0.0, %v7192
      %v7194 = vpop.f32.mrf.mxu0
      %7195 = vdwg.mxu0
      %s7196 = scalar_lea.vmem %s3, 1184
      %v7197 = vld [vmem:[%s7196] sm:$0xff]
      %v7198 = vld [vmem:[%s7196 + $0x8] sm:$0xff]
      %v7199 = vld [vmem:[%s7196 + $0x10] sm:$0xff]
      %v7200 = vld [vmem:[%s7196 + $0x18] sm:$0xff]
      %s7201 = scalar_lea.vmem %s3, 1312
      %v7202 = vld [vmem:[%s7201] sm:$0xff]
      %v7203 = vld [vmem:[%s7201 + $0x8] sm:$0xff]
      %v7204 = vld [vmem:[%s7201 + $0x10] sm:$0xff]
      %v7205 = vld [vmem:[%s7201 + $0x18] sm:$0xff]
      %s7206 = scalar_lea.vmem %s3, 1440
      %v7207 = vld [vmem:[%s7206] sm:$0xff]
      %v7208 = vld [vmem:[%s7206 + $0x8] sm:$0xff]
      %v7209 = vld [vmem:[%s7206 + $0x10] sm:$0xff]
      %v7210 = vld [vmem:[%s7206 + $0x18] sm:$0xff]
      %s7211 = scalar_lea.vmem %s4, 37
      %v7212 = vld [vmem:[%s7211] sm:$0x1]
      %s7213 = scalar_lea.vmem %s4, 41
      %v7214 = vld [vmem:[%s7213] sm:$0x1]
      %s7215 = scalar_lea.vmem %s4, 45
      %v7216 = vld [vmem:[%s7215] sm:$0x1]
      %v7218 = vlaneseq
      %v7219 = vshrl.u32 %v7218, 7
      %v7220 = vsub.s32 0, %v7219
      %v7221 = vrot.slane %v7212, %v7220
      %7223 = vmatprep.subr.mxu0 0.0
      %7224 = vmatpush1.msra.mxu0 0.0
      %7225 = vmatprep.subr.mxu0 0.0
      %7226 = vmatpush1.msra.mxu0 0.0
      %7227 = vmatprep.subr.mxu0 0.0
      %7228 = vmatpush1.msra.mxu0 0.0
      %7229 = vmatprep.subr.mxu0 0.0
      %7230 = vmatpush1.msra.mxu0 0.0
      %7231 = vmatprep.subr.mxu0 0.0
      %7232 = vmatpush1.msra.mxu0 0.0
      %7233 = vmatprep.subr.mxu0 0.0
      %7234 = vmatpush1.msra.mxu0 0.0
      %7235 = vmatprep.subr.mxu0 0.0
      %7236 = vmatpush1.msra.mxu0 0.0
      %7237 = vmatprep.subr.mxu0 0.0
      %7238 = vmatpush1.msra.mxu0 0.0
      %7239 = vmatprep.subr.mxu0 0.0
      %7240 = vmatpush1.msra.mxu0 0.0
      %7241 = vmatprep.subr.mxu0 0.0
      %7242 = vmatpush1.msra.mxu0 0.0
      %7243 = vmatprep.subr.mxu0 0.0
      %7244 = vmatpush1.msra.mxu0 0.0
      %7245 = vmatprep.subr.mxu0 0.0
      %7246 = vmatpush1.msra.mxu0 0.0
      %7247 = vmatprep.subr.mxu0 0.0
      %7248 = vmatpush1.msra.mxu0 %v7200
      %7249 = vmatprep.subr.mxu0 0.0
      %7250 = vmatpush1.msra.mxu0 %v7199
      %7251 = vmatprep.subr.mxu0 0.0
      %7252 = vmatpush1.msra.mxu0 %v7198
      %7253 = vmatprep.subr.mxu0 0.0
      %7254 = vmatpush1.msra.mxu0 %v7197
      %7255 = vmatprep.subr.mxu0 0.0
      %7256 = vmatpush2.msra.mxu0 0.0
      %7257 = vmatprep.subr.mxu0 0.0
      %7258 = vmatpush2.msra.mxu0 0.0
      %7259 = vmatprep.subr.mxu0 0.0
      %7260 = vmatpush2.msra.mxu0 0.0
      %7261 = vmatprep.subr.mxu0 0.0
      %7262 = vmatpush2.msra.mxu0 0.0
      %7263 = vmatprep.subr.mxu0 0.0
      %7264 = vmatpush2.msra.mxu0 0.0
      %7265 = vmatprep.subr.mxu0 0.0
      %7266 = vmatpush2.msra.mxu0 0.0
      %7267 = vmatprep.subr.mxu0 0.0
      %7268 = vmatpush2.msra.mxu0 0.0
      %7269 = vmatprep.subr.mxu0 0.0
      %7270 = vmatpush2.msra.mxu0 0.0
      %7271 = vmatprep.subr.mxu0 0.0
      %7272 = vmatpush2.msra.mxu0 0.0
      %7273 = vmatprep.subr.mxu0 0.0
      %7274 = vmatpush2.msra.mxu0 0.0
      %7275 = vmatprep.subr.mxu0 0.0
      %7276 = vmatpush2.msra.mxu0 0.0
      %7277 = vmatprep.subr.mxu0 0.0
      %7278 = vmatpush2.msra.mxu0 0.0
      %7279 = vmatprep.subr.mxu0 0.0
      %7280 = vmatpush2.msra.mxu0 0.0
      %7281 = vmatprep.subr.mxu0 0.0
      %7282 = vmatpush2.msra.mxu0 0.0
      %7283 = vmatprep.subr.mxu0 0.0
      %7284 = vmatpush2.msra.mxu0 0.0
      %7285 = vmatprep.subr.mxu0 0.0
      %7286 = vmatpush2.msra.mxu0 0.0
      %7287 = vmatprep.mubr.f32.mxu0 0.0
      %7288 = vmatmul.mubr.f32.gmra.mxu0 %v6796
      %v7289 = vpop.f32.mrf.mxu0
      %v7290 = vadd.f32 %v7221, %v7289
      %v7291 = vpop.f32.mrf.mxu0
      %7292 = vdwg.mxu0
      %v7294 = vlaneseq
      %v7295 = vshrl.u32 %v7294, 7
      %v7296 = vsub.s32 0, %v7295
      %v7297 = vrot.slane %v7214, %v7296
      %7299 = vmatprep.subr.mxu0 0.0
      %7300 = vmatpush1.msra.mxu0 0.0
      %7301 = vmatprep.subr.mxu0 0.0
      %7302 = vmatpush1.msra.mxu0 0.0
      %7303 = vmatprep.subr.mxu0 0.0
      %7304 = vmatpush1.msra.mxu0 0.0
      %7305 = vmatprep.subr.mxu0 0.0
      %7306 = vmatpush1.msra.mxu0 0.0
      %7307 = vmatprep.subr.mxu0 0.0
      %7308 = vmatpush1.msra.mxu0 0.0
      %7309 = vmatprep.subr.mxu0 0.0
      %7310 = vmatpush1.msra.mxu0 0.0
      %7311 = vmatprep.subr.mxu0 0.0
      %7312 = vmatpush1.msra.mxu0 0.0
      %7313 = vmatprep.subr.mxu0 0.0
      %7314 = vmatpush1.msra.mxu0 0.0
      %7315 = vmatprep.subr.mxu0 0.0
      %7316 = vmatpush1.msra.mxu0 0.0
      %7317 = vmatprep.subr.mxu0 0.0
      %7318 = vmatpush1.msra.mxu0 0.0
      %7319 = vmatprep.subr.mxu0 0.0
      %7320 = vmatpush1.msra.mxu0 0.0
      %7321 = vmatprep.subr.mxu0 0.0
      %7322 = vmatpush1.msra.mxu0 0.0
      %7323 = vmatprep.subr.mxu0 0.0
      %7324 = vmatpush1.msra.mxu0 %v7205
      %7325 = vmatprep.subr.mxu0 0.0
      %7326 = vmatpush1.msra.mxu0 %v7204
      %7327 = vmatprep.subr.mxu0 0.0
      %7328 = vmatpush1.msra.mxu0 %v7203
      %7329 = vmatprep.subr.mxu0 0.0
      %7330 = vmatpush1.msra.mxu0 %v7202
      %7331 = vmatprep.subr.mxu0 0.0
      %7332 = vmatpush2.msra.mxu0 0.0
      %7333 = vmatprep.subr.mxu0 0.0
      %7334 = vmatpush2.msra.mxu0 0.0
      %7335 = vmatprep.subr.mxu0 0.0
      %7336 = vmatpush2.msra.mxu0 0.0
      %7337 = vmatprep.subr.mxu0 0.0
      %7338 = vmatpush2.msra.mxu0 0.0
      %7339 = vmatprep.subr.mxu0 0.0
      %7340 = vmatpush2.msra.mxu0 0.0
      %7341 = vmatprep.subr.mxu0 0.0
      %7342 = vmatpush2.msra.mxu0 0.0
      %7343 = vmatprep.subr.mxu0 0.0
      %7344 = vmatpush2.msra.mxu0 0.0
      %7345 = vmatprep.subr.mxu0 0.0
      %7346 = vmatpush2.msra.mxu0 0.0
      %7347 = vmatprep.subr.mxu0 0.0
      %7348 = vmatpush2.msra.mxu0 0.0
      %7349 = vmatprep.subr.mxu0 0.0
      %7350 = vmatpush2.msra.mxu0 0.0
      %7351 = vmatprep.subr.mxu0 0.0
      %7352 = vmatpush2.msra.mxu0 0.0
      %7353 = vmatprep.subr.mxu0 0.0
      %7354 = vmatpush2.msra.mxu0 0.0
      %7355 = vmatprep.subr.mxu0 0.0
      %7356 = vmatpush2.msra.mxu0 0.0
      %7357 = vmatprep.subr.mxu0 0.0
      %7358 = vmatpush2.msra.mxu0 0.0
      %7359 = vmatprep.subr.mxu0 0.0
      %7360 = vmatpush2.msra.mxu0 0.0
      %7361 = vmatprep.subr.mxu0 0.0
      %7362 = vmatpush2.msra.mxu0 0.0
      %7363 = vmatprep.mubr.f32.mxu0 0.0
      %7364 = vmatmul.mubr.f32.gmra.mxu0 %v2574
      %v7365 = vpop.f32.mrf.mxu0
      %v7366 = vadd.f32 %v7297, %v7365
      %v7367 = vpop.f32.mrf.mxu0
      %7368 = vmatprep.mubr.f32.mxu0 0.0
      %7369 = vmatmul.mubr.f32.gmra.mxu0 %v2577
      %v7370 = vpop.f32.mrf.mxu0
      %v7371 = vadd.f32 %v7297, %v7370
      %v7372 = vpop.f32.mrf.mxu0
      %7373 = vdwg.mxu0
      %v7375 = vlaneseq
      %v7376 = vshrl.u32 %v7375, 7
      %v7377 = vsub.s32 0, %v7376
      %v7378 = vrot.slane %v7216, %v7377
      %7380 = vmatprep.subr.mxu0 0.0
      %7381 = vmatpush1.msra.mxu0 0.0
      %7382 = vmatprep.subr.mxu0 0.0
      %7383 = vmatpush1.msra.mxu0 0.0
      %7384 = vmatprep.subr.mxu0 0.0
      %7385 = vmatpush1.msra.mxu0 0.0
      %7386 = vmatprep.subr.mxu0 0.0
      %7387 = vmatpush1.msra.mxu0 0.0
      %7388 = vmatprep.subr.mxu0 0.0
      %7389 = vmatpush1.msra.mxu0 0.0
      %7390 = vmatprep.subr.mxu0 0.0
      %7391 = vmatpush1.msra.mxu0 0.0
      %7392 = vmatprep.subr.mxu0 0.0
      %7393 = vmatpush1.msra.mxu0 0.0
      %7394 = vmatprep.subr.mxu0 0.0
      %7395 = vmatpush1.msra.mxu0 0.0
      %7396 = vmatprep.subr.mxu0 0.0
      %7397 = vmatpush1.msra.mxu0 0.0
      %7398 = vmatprep.subr.mxu0 0.0
      %7399 = vmatpush1.msra.mxu0 0.0
      %7400 = vmatprep.subr.mxu0 0.0
      %7401 = vmatpush1.msra.mxu0 0.0
      %7402 = vmatprep.subr.mxu0 0.0
      %7403 = vmatpush1.msra.mxu0 0.0
      %7404 = vmatprep.subr.mxu0 0.0
      %7405 = vmatpush1.msra.mxu0 %v7210
      %7406 = vmatprep.subr.mxu0 0.0
      %7407 = vmatpush1.msra.mxu0 %v7209
      %7408 = vmatprep.subr.mxu0 0.0
      %7409 = vmatpush1.msra.mxu0 %v7208
      %7410 = vmatprep.subr.mxu0 0.0
      %7411 = vmatpush1.msra.mxu0 %v7207
      %7412 = vmatprep.subr.mxu0 0.0
      %7413 = vmatpush2.msra.mxu0 0.0
      %7414 = vmatprep.subr.mxu0 0.0
      %7415 = vmatpush2.msra.mxu0 0.0
      %7416 = vmatprep.subr.mxu0 0.0
      %7417 = vmatpush2.msra.mxu0 0.0
      %7418 = vmatprep.subr.mxu0 0.0
      %7419 = vmatpush2.msra.mxu0 0.0
      %7420 = vmatprep.subr.mxu0 0.0
      %7421 = vmatpush2.msra.mxu0 0.0
      %7422 = vmatprep.subr.mxu0 0.0
      %7423 = vmatpush2.msra.mxu0 0.0
      %7424 = vmatprep.subr.mxu0 0.0
      %7425 = vmatpush2.msra.mxu0 0.0
      %7426 = vmatprep.subr.mxu0 0.0
      %7427 = vmatpush2.msra.mxu0 0.0
      %7428 = vmatprep.subr.mxu0 0.0
      %7429 = vmatpush2.msra.mxu0 0.0
      %7430 = vmatprep.subr.mxu0 0.0
      %7431 = vmatpush2.msra.mxu0 0.0
      %7432 = vmatprep.subr.mxu0 0.0
      %7433 = vmatpush2.msra.mxu0 0.0
      %7434 = vmatprep.subr.mxu0 0.0
      %7435 = vmatpush2.msra.mxu0 0.0
      %7436 = vmatprep.subr.mxu0 0.0
      %7437 = vmatpush2.msra.mxu0 0.0
      %7438 = vmatprep.subr.mxu0 0.0
      %7439 = vmatpush2.msra.mxu0 0.0
      %7440 = vmatprep.subr.mxu0 0.0
      %7441 = vmatpush2.msra.mxu0 0.0
      %7442 = vmatprep.subr.mxu0 0.0
      %7443 = vmatpush2.msra.mxu0 0.0
      %7444 = vmatprep.mubr.f32.mxu0 0.0
      %7445 = vmatmul.mubr.f32.gmra.mxu0 %v2574
      %v7446 = vpop.f32.mrf.mxu0
      %v7447 = vadd.f32 %v7378, %v7446
      %v7448 = vpop.f32.mrf.mxu0
      %7449 = vmatprep.mubr.f32.mxu0 0.0
      %7450 = vmatmul.mubr.f32.gmra.mxu0 %v2577
      %v7451 = vpop.f32.mrf.mxu0
      %v7452 = vadd.f32 %v7378, %v7451
      %v7453 = vpop.f32.mrf.mxu0
      %7454 = vdwg.mxu0
      %v7456 = vsel %vm688, %v7290, 0
      %v7459 = vsel %vm688, %v7366, 0
      %v7462 = vsel %vm688, %v7371, 0
      %7464 = vmatprep.subr.mxu0 0.0
      %7465 = vmatpush1.xpose.msra.mxu0 0.0
      %7466 = vmatprep.subr.mxu0 0.0
      %7467 = vmatpush1.xpose.msra.mxu0 0.0
      %7468 = vmatprep.subr.mxu0 0.0
      %7469 = vmatpush1.xpose.msra.mxu0 0.0
      %7470 = vmatprep.subr.mxu0 0.0
      %7471 = vmatpush1.xpose.msra.mxu0 0.0
      %7472 = vmatprep.subr.mxu0 0.0
      %7473 = vmatpush1.xpose.msra.mxu0 0.0
      %7474 = vmatprep.subr.mxu0 0.0
      %7475 = vmatpush1.xpose.msra.mxu0 0.0
      %7476 = vmatprep.subr.mxu0 0.0
      %7477 = vmatpush1.xpose.msra.mxu0 0.0
      %7478 = vmatprep.subr.mxu0 0.0
      %7479 = vmatpush1.xpose.msra.mxu0 0.0
      %7480 = vmatprep.subr.mxu0 0.0
      %7481 = vmatpush1.xpose.msra.mxu0 0.0
      %7482 = vmatprep.subr.mxu0 0.0
      %7483 = vmatpush1.xpose.msra.mxu0 0.0
      %7484 = vmatprep.subr.mxu0 0.0
      %7485 = vmatpush1.xpose.msra.mxu0 0.0
      %7486 = vmatprep.subr.mxu0 0.0
      %7487 = vmatpush1.xpose.msra.mxu0 0.0
      %7488 = vmatprep.subr.mxu0 0.0
      %7489 = vmatpush1.xpose.msra.mxu0 0.0
      %7490 = vmatprep.subr.mxu0 0.0
      %7491 = vmatpush1.xpose.msra.mxu0 0.0
      %7492 = vmatprep.subr.mxu0 0.0
      %7493 = vmatpush1.xpose.msra.mxu0 %v7462
      %7494 = vmatprep.subr.mxu0 0.0
      %7495 = vmatpush1.xpose.msra.mxu0 %v7459
      %7496 = vmatprep.subr.mxu0 0.0
      %7497 = vmatpush2.xpose.msra.mxu0 0.0
      %7498 = vmatprep.subr.mxu0 0.0
      %7499 = vmatpush2.xpose.msra.mxu0 0.0
      %7500 = vmatprep.subr.mxu0 0.0
      %7501 = vmatpush2.xpose.msra.mxu0 0.0
      %7502 = vmatprep.subr.mxu0 0.0
      %7503 = vmatpush2.xpose.msra.mxu0 0.0
      %7504 = vmatprep.subr.mxu0 0.0
      %7505 = vmatpush2.xpose.msra.mxu0 0.0
      %7506 = vmatprep.subr.mxu0 0.0
      %7507 = vmatpush2.xpose.msra.mxu0 0.0
      %7508 = vmatprep.subr.mxu0 0.0
      %7509 = vmatpush2.xpose.msra.mxu0 0.0
      %7510 = vmatprep.subr.mxu0 0.0
      %7511 = vmatpush2.xpose.msra.mxu0 0.0
      %7512 = vmatprep.subr.mxu0 0.0
      %7513 = vmatpush2.xpose.msra.mxu0 0.0
      %7514 = vmatprep.subr.mxu0 0.0
      %7515 = vmatpush2.xpose.msra.mxu0 0.0
      %7516 = vmatprep.subr.mxu0 0.0
      %7517 = vmatpush2.xpose.msra.mxu0 0.0
      %7518 = vmatprep.subr.mxu0 0.0
      %7519 = vmatpush2.xpose.msra.mxu0 0.0
      %7520 = vmatprep.subr.mxu0 0.0
      %7521 = vmatpush2.xpose.msra.mxu0 0.0
      %7522 = vmatprep.subr.mxu0 0.0
      %7523 = vmatpush2.xpose.msra.mxu0 0.0
      %7524 = vmatprep.subr.mxu0 0.0
      %7525 = vmatpush2.xpose.msra.mxu0 0.0
      %7526 = vmatprep.subr.mxu0 0.0
      %7527 = vmatpush2.xpose.msra.mxu0 0.0
      %7528 = vmatprep.mubr.f32.mxu0 0.0
      %7529 = vmatmul.mubr.f32.gmra.mxu0 %v7456
      %v7530 = vpop.f32.mrf.mxu0
      %v7531 = vadd.f32 0.0, %v7530
      %v7532 = vpop.f32.mrf.mxu0
      %7533 = vdwg.mxu0
      %v7534 = vsel %vm2814, %v7531, -inf
      %7535 = vmax.xlane.f32.xlu0 %v7534
      %v7536 = vpop.xlane.xlu0 %7535
      %v7537 = vsub.f32 %v7531, %v7536
      %v7538 = vmul.f32 %v7537, 1.442695
      %v7539 = vpow.pop %v7538
      %v7540 = vsel %vm2814, %v7539, 0.0
      %7541 = vadd.xlane.f32.xlu0 %v7540
      %v7542 = vpop.xlane.xlu0 %7541
      %v7543 = vrcp.pop %v7542
      %v7544 = vmul.f32 %v7539, %v7543
      %v7546 = vsel %vm2814, %v7544, 0
      %v7549 = vsel %vm2829, %v7452, 0
      %7551 = vmatprep.subr.mxu0 0.0
      %7552 = vmatpush1.msra.mxu0 0.0
      %7553 = vmatprep.subr.mxu0 0.0
      %7554 = vmatpush1.msra.mxu0 0.0
      %7555 = vmatprep.subr.mxu0 0.0
      %7556 = vmatpush1.msra.mxu0 0.0
      %7557 = vmatprep.subr.mxu0 0.0
      %7558 = vmatpush1.msra.mxu0 0.0
      %7559 = vmatprep.subr.mxu0 0.0
      %7560 = vmatpush1.msra.mxu0 0.0
      %7561 = vmatprep.subr.mxu0 0.0
      %7562 = vmatpush1.msra.mxu0 0.0
      %7563 = vmatprep.subr.mxu0 0.0
      %7564 = vmatpush1.msra.mxu0 0.0
      %7565 = vmatprep.subr.mxu0 0.0
      %7566 = vmatpush1.msra.mxu0 0.0
      %7567 = vmatprep.subr.mxu0 0.0
      %7568 = vmatpush1.msra.mxu0 0.0
      %7569 = vmatprep.subr.mxu0 0.0
      %7570 = vmatpush1.msra.mxu0 0.0
      %7571 = vmatprep.subr.mxu0 0.0
      %7572 = vmatpush1.msra.mxu0 0.0
      %7573 = vmatprep.subr.mxu0 0.0
      %7574 = vmatpush1.msra.mxu0 0.0
      %7575 = vmatprep.subr.mxu0 0.0
      %7576 = vmatpush1.msra.mxu0 0.0
      %7577 = vmatprep.subr.mxu0 0.0
      %7578 = vmatpush1.msra.mxu0 0.0
      %7579 = vmatprep.subr.mxu0 0.0
      %7580 = vmatpush1.msra.mxu0 %v7549
      %7581 = vmatprep.subr.mxu0 0.0
      %7582 = vmatpush1.msra.mxu0 %v7447
      %7583 = vmatprep.subr.mxu0 0.0
      %7584 = vmatpush2.msra.mxu0 0.0
      %7585 = vmatprep.subr.mxu0 0.0
      %7586 = vmatpush2.msra.mxu0 0.0
      %7587 = vmatprep.subr.mxu0 0.0
      %7588 = vmatpush2.msra.mxu0 0.0
      %7589 = vmatprep.subr.mxu0 0.0
      %7590 = vmatpush2.msra.mxu0 0.0
      %7591 = vmatprep.subr.mxu0 0.0
      %7592 = vmatpush2.msra.mxu0 0.0
      %7593 = vmatprep.subr.mxu0 0.0
      %7594 = vmatpush2.msra.mxu0 0.0
      %7595 = vmatprep.subr.mxu0 0.0
      %7596 = vmatpush2.msra.mxu0 0.0
      %7597 = vmatprep.subr.mxu0 0.0
      %7598 = vmatpush2.msra.mxu0 0.0
      %7599 = vmatprep.subr.mxu0 0.0
      %7600 = vmatpush2.msra.mxu0 0.0
      %7601 = vmatprep.subr.mxu0 0.0
      %7602 = vmatpush2.msra.mxu0 0.0
      %7603 = vmatprep.subr.mxu0 0.0
      %7604 = vmatpush2.msra.mxu0 0.0
      %7605 = vmatprep.subr.mxu0 0.0
      %7606 = vmatpush2.msra.mxu0 0.0
      %7607 = vmatprep.subr.mxu0 0.0
      %7608 = vmatpush2.msra.mxu0 0.0
      %7609 = vmatprep.subr.mxu0 0.0
      %7610 = vmatpush2.msra.mxu0 0.0
      %7611 = vmatprep.subr.mxu0 0.0
      %7612 = vmatpush2.msra.mxu0 0.0
      %7613 = vmatprep.subr.mxu0 0.0
      %7614 = vmatpush2.msra.mxu0 0.0
      %7615 = vmatprep.mubr.f32.mxu0 0.0
      %7616 = vmatmul.mubr.f32.gmra.mxu0 %v7546
      %v7617 = vpop.f32.mrf.mxu0
      %v7618 = vadd.f32 0.0, %v7617
      %v7619 = vpop.f32.mrf.mxu0
      %7620 = vdwg.mxu0
      %v7622 = vsel %vm688, %v7618, 0
      %7624 = vmatprep.subr.mxu0 0.0
      %7625 = vmatpush1.msra.mxu0 0.0
      %7626 = vmatprep.subr.mxu0 0.0
      %7627 = vmatpush1.msra.mxu0 0.0
      %7628 = vmatprep.subr.mxu0 0.0
      %7629 = vmatpush1.msra.mxu0 0.0
      %7630 = vmatprep.subr.mxu0 0.0
      %7631 = vmatpush1.msra.mxu0 0.0
      %7632 = vmatprep.subr.mxu0 0.0
      %7633 = vmatpush1.msra.mxu0 0.0
      %7634 = vmatprep.subr.mxu0 0.0
      %7635 = vmatpush1.msra.mxu0 0.0
      %7636 = vmatprep.subr.mxu0 0.0
      %7637 = vmatpush1.msra.mxu0 0.0
      %7638 = vmatprep.subr.mxu0 0.0
      %7639 = vmatpush1.msra.mxu0 0.0
      %7640 = vmatprep.subr.mxu0 0.0
      %7641 = vmatpush1.msra.mxu0 0.0
      %7642 = vmatprep.subr.mxu0 0.0
      %7643 = vmatpush1.msra.mxu0 0.0
      %7644 = vmatprep.subr.mxu0 0.0
      %7645 = vmatpush1.msra.mxu0 0.0
      %7646 = vmatprep.subr.mxu0 0.0
      %7647 = vmatpush1.msra.mxu0 0.0
      %7648 = vmatprep.subr.mxu0 0.0
      %7649 = vmatpush1.msra.mxu0 0.0
      %7650 = vmatprep.subr.mxu0 0.0
      %7651 = vmatpush1.msra.mxu0 0.0
      %7652 = vmatprep.subr.mxu0 0.0
      %7653 = vmatpush1.msra.mxu0 0.0
      %7654 = vmatprep.subr.mxu0 0.0
      %7655 = vmatpush1.msra.mxu0 %v6765
      %7656 = vmatprep.subr.mxu0 0.0
      %7657 = vmatpush2.msra.mxu0 0.0
      %7658 = vmatprep.subr.mxu0 0.0
      %7659 = vmatpush2.msra.mxu0 0.0
      %7660 = vmatprep.subr.mxu0 0.0
      %7661 = vmatpush2.msra.mxu0 0.0
      %7662 = vmatprep.subr.mxu0 0.0
      %7663 = vmatpush2.msra.mxu0 0.0
      %7664 = vmatprep.subr.mxu0 0.0
      %7665 = vmatpush2.msra.mxu0 0.0
      %7666 = vmatprep.subr.mxu0 0.0
      %7667 = vmatpush2.msra.mxu0 0.0
      %7668 = vmatprep.subr.mxu0 0.0
      %7669 = vmatpush2.msra.mxu0 0.0
      %7670 = vmatprep.subr.mxu0 0.0
      %7671 = vmatpush2.msra.mxu0 0.0
      %7672 = vmatprep.subr.mxu0 0.0
      %7673 = vmatpush2.msra.mxu0 0.0
      %7674 = vmatprep.subr.mxu0 0.0
      %7675 = vmatpush2.msra.mxu0 0.0
      %7676 = vmatprep.subr.mxu0 0.0
      %7677 = vmatpush2.msra.mxu0 0.0
      %7678 = vmatprep.subr.mxu0 0.0
      %7679 = vmatpush2.msra.mxu0 0.0
      %7680 = vmatprep.subr.mxu0 0.0
      %7681 = vmatpush2.msra.mxu0 0.0
      %7682 = vmatprep.subr.mxu0 0.0
      %7683 = vmatpush2.msra.mxu0 0.0
      %7684 = vmatprep.subr.mxu0 0.0
      %7685 = vmatpush2.msra.mxu0 0.0
      %7686 = vmatprep.subr.mxu0 0.0
      %7687 = vmatpush2.msra.mxu0 0.0
      %7688 = vmatprep.mubr.f32.mxu0 0.0
      %7689 = vmatmul.mubr.f32.gmra.mxu0 %v7622
      %v7690 = vpop.f32.mrf.mxu0
      %v7691 = vadd.f32 0.0, %v7690
      %v7692 = vpop.f32.mrf.mxu0
      %7693 = vdwg.mxu0
      %v7695 = vsel %vm688, %v7193, 0
      %7697 = vmatprep.subr.mxu0 0.0
      %7698 = vmatpush1.msra.mxu0 0.0
      %7699 = vmatprep.subr.mxu0 0.0
      %7700 = vmatpush1.msra.mxu0 0.0
      %7701 = vmatprep.subr.mxu0 0.0
      %7702 = vmatpush1.msra.mxu0 0.0
      %7703 = vmatprep.subr.mxu0 0.0
      %7704 = vmatpush1.msra.mxu0 0.0
      %7705 = vmatprep.subr.mxu0 0.0
      %7706 = vmatpush1.msra.mxu0 0.0
      %7707 = vmatprep.subr.mxu0 0.0
      %7708 = vmatpush1.msra.mxu0 0.0
      %7709 = vmatprep.subr.mxu0 0.0
      %7710 = vmatpush1.msra.mxu0 0.0
      %7711 = vmatprep.subr.mxu0 0.0
      %7712 = vmatpush1.msra.mxu0 0.0
      %7713 = vmatprep.subr.mxu0 0.0
      %7714 = vmatpush1.msra.mxu0 0.0
      %7715 = vmatprep.subr.mxu0 0.0
      %7716 = vmatpush1.msra.mxu0 0.0
      %7717 = vmatprep.subr.mxu0 0.0
      %7718 = vmatpush1.msra.mxu0 0.0
      %7719 = vmatprep.subr.mxu0 0.0
      %7720 = vmatpush1.msra.mxu0 0.0
      %7721 = vmatprep.subr.mxu0 0.0
      %7722 = vmatpush1.msra.mxu0 0.0
      %7723 = vmatprep.subr.mxu0 0.0
      %7724 = vmatpush1.msra.mxu0 0.0
      %7725 = vmatprep.subr.mxu0 0.0
      %7726 = vmatpush1.msra.mxu0 0.0
      %7727 = vmatprep.subr.mxu0 0.0
      %7728 = vmatpush1.msra.mxu0 %v6764
      %7729 = vmatprep.subr.mxu0 0.0
      %7730 = vmatpush2.msra.mxu0 0.0
      %7731 = vmatprep.subr.mxu0 0.0
      %7732 = vmatpush2.msra.mxu0 0.0
      %7733 = vmatprep.subr.mxu0 0.0
      %7734 = vmatpush2.msra.mxu0 0.0
      %7735 = vmatprep.subr.mxu0 0.0
      %7736 = vmatpush2.msra.mxu0 0.0
      %7737 = vmatprep.subr.mxu0 0.0
      %7738 = vmatpush2.msra.mxu0 0.0
      %7739 = vmatprep.subr.mxu0 0.0
      %7740 = vmatpush2.msra.mxu0 0.0
      %7741 = vmatprep.subr.mxu0 0.0
      %7742 = vmatpush2.msra.mxu0 0.0
      %7743 = vmatprep.subr.mxu0 0.0
      %7744 = vmatpush2.msra.mxu0 0.0
      %7745 = vmatprep.subr.mxu0 0.0
      %7746 = vmatpush2.msra.mxu0 0.0
      %7747 = vmatprep.subr.mxu0 0.0
      %7748 = vmatpush2.msra.mxu0 0.0
      %7749 = vmatprep.subr.mxu0 0.0
      %7750 = vmatpush2.msra.mxu0 0.0
      %7751 = vmatprep.subr.mxu0 0.0
      %7752 = vmatpush2.msra.mxu0 0.0
      %7753 = vmatprep.subr.mxu0 0.0
      %7754 = vmatpush2.msra.mxu0 0.0
      %7755 = vmatprep.subr.mxu0 0.0
      %7756 = vmatpush2.msra.mxu0 0.0
      %7757 = vmatprep.subr.mxu0 0.0
      %7758 = vmatpush2.msra.mxu0 0.0
      %7759 = vmatprep.subr.mxu0 0.0
      %7760 = vmatpush2.msra.mxu0 0.0
      %7761 = vmatprep.mubr.f32.mxu0 0.0
      %7762 = vmatmul.mubr.f32.gmra.mxu0 %v7695
      %v7763 = vpop.f32.mrf.mxu0
      %v7764 = vadd.f32 %v7691, %v7763
      %v7765 = vpop.f32.mrf.mxu0
      %7766 = vdwg.mxu0
      %s7767 = scalar_lea.vmem %s3, 1216
      %v7768 = vld [vmem:[%s7767] sm:$0xff]
      %v7769 = vld [vmem:[%s7767 + $0x8] sm:$0xff]
      %v7770 = vld [vmem:[%s7767 + $0x10] sm:$0xff]
      %v7771 = vld [vmem:[%s7767 + $0x18] sm:$0xff]
      %s7772 = scalar_lea.vmem %s3, 1344
      %v7773 = vld [vmem:[%s7772] sm:$0xff]
      %v7774 = vld [vmem:[%s7772 + $0x8] sm:$0xff]
      %v7775 = vld [vmem:[%s7772 + $0x10] sm:$0xff]
      %v7776 = vld [vmem:[%s7772 + $0x18] sm:$0xff]
      %s7777 = scalar_lea.vmem %s3, 1472
      %v7778 = vld [vmem:[%s7777] sm:$0xff]
      %v7779 = vld [vmem:[%s7777 + $0x8] sm:$0xff]
      %v7780 = vld [vmem:[%s7777 + $0x10] sm:$0xff]
      %v7781 = vld [vmem:[%s7777 + $0x18] sm:$0xff]
      %s7782 = scalar_lea.vmem %s4, 38
      %v7783 = vld [vmem:[%s7782] sm:$0x1]
      %s7784 = scalar_lea.vmem %s4, 42
      %v7785 = vld [vmem:[%s7784] sm:$0x1]
      %s7786 = scalar_lea.vmem %s4, 46
      %v7787 = vld [vmem:[%s7786] sm:$0x1]
      %v7789 = vlaneseq
      %v7790 = vshrl.u32 %v7789, 7
      %v7791 = vsub.s32 0, %v7790
      %v7792 = vrot.slane %v7783, %v7791
      %7794 = vmatprep.subr.mxu0 0.0
      %7795 = vmatpush1.msra.mxu0 0.0
      %7796 = vmatprep.subr.mxu0 0.0
      %7797 = vmatpush1.msra.mxu0 0.0
      %7798 = vmatprep.subr.mxu0 0.0
      %7799 = vmatpush1.msra.mxu0 0.0
      %7800 = vmatprep.subr.mxu0 0.0
      %7801 = vmatpush1.msra.mxu0 0.0
      %7802 = vmatprep.subr.mxu0 0.0
      %7803 = vmatpush1.msra.mxu0 0.0
      %7804 = vmatprep.subr.mxu0 0.0
      %7805 = vmatpush1.msra.mxu0 0.0
      %7806 = vmatprep.subr.mxu0 0.0
      %7807 = vmatpush1.msra.mxu0 0.0
      %7808 = vmatprep.subr.mxu0 0.0
      %7809 = vmatpush1.msra.mxu0 0.0
      %7810 = vmatprep.subr.mxu0 0.0
      %7811 = vmatpush1.msra.mxu0 0.0
      %7812 = vmatprep.subr.mxu0 0.0
      %7813 = vmatpush1.msra.mxu0 0.0
      %7814 = vmatprep.subr.mxu0 0.0
      %7815 = vmatpush1.msra.mxu0 0.0
      %7816 = vmatprep.subr.mxu0 0.0
      %7817 = vmatpush1.msra.mxu0 0.0
      %7818 = vmatprep.subr.mxu0 0.0
      %7819 = vmatpush1.msra.mxu0 %v7771
      %7820 = vmatprep.subr.mxu0 0.0
      %7821 = vmatpush1.msra.mxu0 %v7770
      %7822 = vmatprep.subr.mxu0 0.0
      %7823 = vmatpush1.msra.mxu0 %v7769
      %7824 = vmatprep.subr.mxu0 0.0
      %7825 = vmatpush1.msra.mxu0 %v7768
      %7826 = vmatprep.subr.mxu0 0.0
      %7827 = vmatpush2.msra.mxu0 0.0
      %7828 = vmatprep.subr.mxu0 0.0
      %7829 = vmatpush2.msra.mxu0 0.0
      %7830 = vmatprep.subr.mxu0 0.0
      %7831 = vmatpush2.msra.mxu0 0.0
      %7832 = vmatprep.subr.mxu0 0.0
      %7833 = vmatpush2.msra.mxu0 0.0
      %7834 = vmatprep.subr.mxu0 0.0
      %7835 = vmatpush2.msra.mxu0 0.0
      %7836 = vmatprep.subr.mxu0 0.0
      %7837 = vmatpush2.msra.mxu0 0.0
      %7838 = vmatprep.subr.mxu0 0.0
      %7839 = vmatpush2.msra.mxu0 0.0
      %7840 = vmatprep.subr.mxu0 0.0
      %7841 = vmatpush2.msra.mxu0 0.0
      %7842 = vmatprep.subr.mxu0 0.0
      %7843 = vmatpush2.msra.mxu0 0.0
      %7844 = vmatprep.subr.mxu0 0.0
      %7845 = vmatpush2.msra.mxu0 0.0
      %7846 = vmatprep.subr.mxu0 0.0
      %7847 = vmatpush2.msra.mxu0 0.0
      %7848 = vmatprep.subr.mxu0 0.0
      %7849 = vmatpush2.msra.mxu0 0.0
      %7850 = vmatprep.subr.mxu0 0.0
      %7851 = vmatpush2.msra.mxu0 0.0
      %7852 = vmatprep.subr.mxu0 0.0
      %7853 = vmatpush2.msra.mxu0 0.0
      %7854 = vmatprep.subr.mxu0 0.0
      %7855 = vmatpush2.msra.mxu0 0.0
      %7856 = vmatprep.subr.mxu0 0.0
      %7857 = vmatpush2.msra.mxu0 0.0
      %7858 = vmatprep.mubr.f32.mxu0 0.0
      %7859 = vmatmul.mubr.f32.gmra.mxu0 %v6796
      %v7860 = vpop.f32.mrf.mxu0
      %v7861 = vadd.f32 %v7792, %v7860
      %v7862 = vpop.f32.mrf.mxu0
      %7863 = vdwg.mxu0
      %v7865 = vlaneseq
      %v7866 = vshrl.u32 %v7865, 7
      %v7867 = vsub.s32 0, %v7866
      %v7868 = vrot.slane %v7785, %v7867
      %7870 = vmatprep.subr.mxu0 0.0
      %7871 = vmatpush1.msra.mxu0 0.0
      %7872 = vmatprep.subr.mxu0 0.0
      %7873 = vmatpush1.msra.mxu0 0.0
      %7874 = vmatprep.subr.mxu0 0.0
      %7875 = vmatpush1.msra.mxu0 0.0
      %7876 = vmatprep.subr.mxu0 0.0
      %7877 = vmatpush1.msra.mxu0 0.0
      %7878 = vmatprep.subr.mxu0 0.0
      %7879 = vmatpush1.msra.mxu0 0.0
      %7880 = vmatprep.subr.mxu0 0.0
      %7881 = vmatpush1.msra.mxu0 0.0
      %7882 = vmatprep.subr.mxu0 0.0
      %7883 = vmatpush1.msra.mxu0 0.0
      %7884 = vmatprep.subr.mxu0 0.0
      %7885 = vmatpush1.msra.mxu0 0.0
      %7886 = vmatprep.subr.mxu0 0.0
      %7887 = vmatpush1.msra.mxu0 0.0
      %7888 = vmatprep.subr.mxu0 0.0
      %7889 = vmatpush1.msra.mxu0 0.0
      %7890 = vmatprep.subr.mxu0 0.0
      %7891 = vmatpush1.msra.mxu0 0.0
      %7892 = vmatprep.subr.mxu0 0.0
      %7893 = vmatpush1.msra.mxu0 0.0
      %7894 = vmatprep.subr.mxu0 0.0
      %7895 = vmatpush1.msra.mxu0 %v7776
      %7896 = vmatprep.subr.mxu0 0.0
      %7897 = vmatpush1.msra.mxu0 %v7775
      %7898 = vmatprep.subr.mxu0 0.0
      %7899 = vmatpush1.msra.mxu0 %v7774
      %7900 = vmatprep.subr.mxu0 0.0
      %7901 = vmatpush1.msra.mxu0 %v7773
      %7902 = vmatprep.subr.mxu0 0.0
      %7903 = vmatpush2.msra.mxu0 0.0
      %7904 = vmatprep.subr.mxu0 0.0
      %7905 = vmatpush2.msra.mxu0 0.0
      %7906 = vmatprep.subr.mxu0 0.0
      %7907 = vmatpush2.msra.mxu0 0.0
      %7908 = vmatprep.subr.mxu0 0.0
      %7909 = vmatpush2.msra.mxu0 0.0
      %7910 = vmatprep.subr.mxu0 0.0
      %7911 = vmatpush2.msra.mxu0 0.0
      %7912 = vmatprep.subr.mxu0 0.0
      %7913 = vmatpush2.msra.mxu0 0.0
      %7914 = vmatprep.subr.mxu0 0.0
      %7915 = vmatpush2.msra.mxu0 0.0
      %7916 = vmatprep.subr.mxu0 0.0
      %7917 = vmatpush2.msra.mxu0 0.0
      %7918 = vmatprep.subr.mxu0 0.0
      %7919 = vmatpush2.msra.mxu0 0.0
      %7920 = vmatprep.subr.mxu0 0.0
      %7921 = vmatpush2.msra.mxu0 0.0
      %7922 = vmatprep.subr.mxu0 0.0
      %7923 = vmatpush2.msra.mxu0 0.0
      %7924 = vmatprep.subr.mxu0 0.0
      %7925 = vmatpush2.msra.mxu0 0.0
      %7926 = vmatprep.subr.mxu0 0.0
      %7927 = vmatpush2.msra.mxu0 0.0
      %7928 = vmatprep.subr.mxu0 0.0
      %7929 = vmatpush2.msra.mxu0 0.0
      %7930 = vmatprep.subr.mxu0 0.0
      %7931 = vmatpush2.msra.mxu0 0.0
      %7932 = vmatprep.subr.mxu0 0.0
      %7933 = vmatpush2.msra.mxu0 0.0
      %7934 = vmatprep.mubr.f32.mxu0 0.0
      %7935 = vmatmul.mubr.f32.gmra.mxu0 %v2574
      %v7936 = vpop.f32.mrf.mxu0
      %v7937 = vadd.f32 %v7868, %v7936
      %v7938 = vpop.f32.mrf.mxu0
      %7939 = vmatprep.mubr.f32.mxu0 0.0
      %7940 = vmatmul.mubr.f32.gmra.mxu0 %v2577
      %v7941 = vpop.f32.mrf.mxu0
      %v7942 = vadd.f32 %v7868, %v7941
      %v7943 = vpop.f32.mrf.mxu0
      %7944 = vdwg.mxu0
      %v7946 = vlaneseq
      %v7947 = vshrl.u32 %v7946, 7
      %v7948 = vsub.s32 0, %v7947
      %v7949 = vrot.slane %v7787, %v7948
      %7951 = vmatprep.subr.mxu0 0.0
      %7952 = vmatpush1.msra.mxu0 0.0
      %7953 = vmatprep.subr.mxu0 0.0
      %7954 = vmatpush1.msra.mxu0 0.0
      %7955 = vmatprep.subr.mxu0 0.0
      %7956 = vmatpush1.msra.mxu0 0.0
      %7957 = vmatprep.subr.mxu0 0.0
      %7958 = vmatpush1.msra.mxu0 0.0
      %7959 = vmatprep.subr.mxu0 0.0
      %7960 = vmatpush1.msra.mxu0 0.0
      %7961 = vmatprep.subr.mxu0 0.0
      %7962 = vmatpush1.msra.mxu0 0.0
      %7963 = vmatprep.subr.mxu0 0.0
      %7964 = vmatpush1.msra.mxu0 0.0
      %7965 = vmatprep.subr.mxu0 0.0
      %7966 = vmatpush1.msra.mxu0 0.0
      %7967 = vmatprep.subr.mxu0 0.0
      %7968 = vmatpush1.msra.mxu0 0.0
      %7969 = vmatprep.subr.mxu0 0.0
      %7970 = vmatpush1.msra.mxu0 0.0
      %7971 = vmatprep.subr.mxu0 0.0
      %7972 = vmatpush1.msra.mxu0 0.0
      %7973 = vmatprep.subr.mxu0 0.0
      %7974 = vmatpush1.msra.mxu0 0.0
      %7975 = vmatprep.subr.mxu0 0.0
      %7976 = vmatpush1.msra.mxu0 %v7781
      %7977 = vmatprep.subr.mxu0 0.0
      %7978 = vmatpush1.msra.mxu0 %v7780
      %7979 = vmatprep.subr.mxu0 0.0
      %7980 = vmatpush1.msra.mxu0 %v7779
      %7981 = vmatprep.subr.mxu0 0.0
      %7982 = vmatpush1.msra.mxu0 %v7778
      %7983 = vmatprep.subr.mxu0 0.0
      %7984 = vmatpush2.msra.mxu0 0.0
      %7985 = vmatprep.subr.mxu0 0.0
      %7986 = vmatpush2.msra.mxu0 0.0
      %7987 = vmatprep.subr.mxu0 0.0
      %7988 = vmatpush2.msra.mxu0 0.0
      %7989 = vmatprep.subr.mxu0 0.0
      %7990 = vmatpush2.msra.mxu0 0.0
      %7991 = vmatprep.subr.mxu0 0.0
      %7992 = vmatpush2.msra.mxu0 0.0
      %7993 = vmatprep.subr.mxu0 0.0
      %7994 = vmatpush2.msra.mxu0 0.0
      %7995 = vmatprep.subr.mxu0 0.0
      %7996 = vmatpush2.msra.mxu0 0.0
      %7997 = vmatprep.subr.mxu0 0.0
      %7998 = vmatpush2.msra.mxu0 0.0
      %7999 = vmatprep.subr.mxu0 0.0
      %8000 = vmatpush2.msra.mxu0 0.0
      %8001 = vmatprep.subr.mxu0 0.0
      %8002 = vmatpush2.msra.mxu0 0.0
      %8003 = vmatprep.subr.mxu0 0.0
      %8004 = vmatpush2.msra.mxu0 0.0
      %8005 = vmatprep.subr.mxu0 0.0
      %8006 = vmatpush2.msra.mxu0 0.0
      %8007 = vmatprep.subr.mxu0 0.0
      %8008 = vmatpush2.msra.mxu0 0.0
      %8009 = vmatprep.subr.mxu0 0.0
      %8010 = vmatpush2.msra.mxu0 0.0
      %8011 = vmatprep.subr.mxu0 0.0
      %8012 = vmatpush2.msra.mxu0 0.0
      %8013 = vmatprep.subr.mxu0 0.0
      %8014 = vmatpush2.msra.mxu0 0.0
      %8015 = vmatprep.mubr.f32.mxu0 0.0
      %8016 = vmatmul.mubr.f32.gmra.mxu0 %v2574
      %v8017 = vpop.f32.mrf.mxu0
      %v8018 = vadd.f32 %v7949, %v8017
      %v8019 = vpop.f32.mrf.mxu0
      %8020 = vmatprep.mubr.f32.mxu0 0.0
      %8021 = vmatmul.mubr.f32.gmra.mxu0 %v2577
      %v8022 = vpop.f32.mrf.mxu0
      %v8023 = vadd.f32 %v7949, %v8022
      %v8024 = vpop.f32.mrf.mxu0
      %8025 = vdwg.mxu0
      %v8027 = vsel %vm688, %v7861, 0
      %v8030 = vsel %vm688, %v7937, 0
      %v8033 = vsel %vm688, %v7942, 0
      %8035 = vmatprep.subr.mxu0 0.0
      %8036 = vmatpush1.xpose.msra.mxu0 0.0
      %8037 = vmatprep.subr.mxu0 0.0
      %8038 = vmatpush1.xpose.msra.mxu0 0.0
      %8039 = vmatprep.subr.mxu0 0.0
      %8040 = vmatpush1.xpose.msra.mxu0 0.0
      %8041 = vmatprep.subr.mxu0 0.0
      %8042 = vmatpush1.xpose.msra.mxu0 0.0
      %8043 = vmatprep.subr.mxu0 0.0
      %8044 = vmatpush1.xpose.msra.mxu0 0.0
      %8045 = vmatprep.subr.mxu0 0.0
      %8046 = vmatpush1.xpose.msra.mxu0 0.0
      %8047 = vmatprep.subr.mxu0 0.0
      %8048 = vmatpush1.xpose.msra.mxu0 0.0
      %8049 = vmatprep.subr.mxu0 0.0
      %8050 = vmatpush1.xpose.msra.mxu0 0.0
      %8051 = vmatprep.subr.mxu0 0.0
      %8052 = vmatpush1.xpose.msra.mxu0 0.0
      %8053 = vmatprep.subr.mxu0 0.0
      %8054 = vmatpush1.xpose.msra.mxu0 0.0
      %8055 = vmatprep.subr.mxu0 0.0
      %8056 = vmatpush1.xpose.msra.mxu0 0.0
      %8057 = vmatprep.subr.mxu0 0.0
      %8058 = vmatpush1.xpose.msra.mxu0 0.0
      %8059 = vmatprep.subr.mxu0 0.0
      %8060 = vmatpush1.xpose.msra.mxu0 0.0
      %8061 = vmatprep.subr.mxu0 0.0
      %8062 = vmatpush1.xpose.msra.mxu0 0.0
      %8063 = vmatprep.subr.mxu0 0.0
      %8064 = vmatpush1.xpose.msra.mxu0 %v8033
      %8065 = vmatprep.subr.mxu0 0.0
      %8066 = vmatpush1.xpose.msra.mxu0 %v8030
      %8067 = vmatprep.subr.mxu0 0.0
      %8068 = vmatpush2.xpose.msra.mxu0 0.0
      %8069 = vmatprep.subr.mxu0 0.0
      %8070 = vmatpush2.xpose.msra.mxu0 0.0
      %8071 = vmatprep.subr.mxu0 0.0
      %8072 = vmatpush2.xpose.msra.mxu0 0.0
      %8073 = vmatprep.subr.mxu0 0.0
      %8074 = vmatpush2.xpose.msra.mxu0 0.0
      %8075 = vmatprep.subr.mxu0 0.0
      %8076 = vmatpush2.xpose.msra.mxu0 0.0
      %8077 = vmatprep.subr.mxu0 0.0
      %8078 = vmatpush2.xpose.msra.mxu0 0.0
      %8079 = vmatprep.subr.mxu0 0.0
      %8080 = vmatpush2.xpose.msra.mxu0 0.0
      %8081 = vmatprep.subr.mxu0 0.0
      %8082 = vmatpush2.xpose.msra.mxu0 0.0
      %8083 = vmatprep.subr.mxu0 0.0
      %8084 = vmatpush2.xpose.msra.mxu0 0.0
      %8085 = vmatprep.subr.mxu0 0.0
      %8086 = vmatpush2.xpose.msra.mxu0 0.0
      %8087 = vmatprep.subr.mxu0 0.0
      %8088 = vmatpush2.xpose.msra.mxu0 0.0
      %8089 = vmatprep.subr.mxu0 0.0
      %8090 = vmatpush2.xpose.msra.mxu0 0.0
      %8091 = vmatprep.subr.mxu0 0.0
      %8092 = vmatpush2.xpose.msra.mxu0 0.0
      %8093 = vmatprep.subr.mxu0 0.0
      %8094 = vmatpush2.xpose.msra.mxu0 0.0
      %8095 = vmatprep.subr.mxu0 0.0
      %8096 = vmatpush2.xpose.msra.mxu0 0.0
      %8097 = vmatprep.subr.mxu0 0.0
      %8098 = vmatpush2.xpose.msra.mxu0 0.0
      %8099 = vmatprep.mubr.f32.mxu0 0.0
      %8100 = vmatmul.mubr.f32.gmra.mxu0 %v8027
      %v8101 = vpop.f32.mrf.mxu0
      %v8102 = vadd.f32 0.0, %v8101
      %v8103 = vpop.f32.mrf.mxu0
      %8104 = vdwg.mxu0
      %v8105 = vsel %vm2814, %v8102, -inf
      %8106 = vmax.xlane.f32.xlu0 %v8105
      %v8107 = vpop.xlane.xlu0 %8106
      %v8108 = vsub.f32 %v8102, %v8107
      %v8109 = vmul.f32 %v8108, 1.442695
      %v8110 = vpow.pop %v8109
      %v8111 = vsel %vm2814, %v8110, 0.0
      %8112 = vadd.xlane.f32.xlu0 %v8111
      %v8113 = vpop.xlane.xlu0 %8112
      %v8114 = vrcp.pop %v8113
      %v8115 = vmul.f32 %v8110, %v8114
      %v8117 = vsel %vm2814, %v8115, 0
      %v8120 = vsel %vm2829, %v8023, 0
      %8122 = vmatprep.subr.mxu0 0.0
      %8123 = vmatpush1.msra.mxu0 0.0
      %8124 = vmatprep.subr.mxu0 0.0
      %8125 = vmatpush1.msra.mxu0 0.0
      %8126 = vmatprep.subr.mxu0 0.0
      %8127 = vmatpush1.msra.mxu0 0.0
      %8128 = vmatprep.subr.mxu0 0.0
      %8129 = vmatpush1.msra.mxu0 0.0
      %8130 = vmatprep.subr.mxu0 0.0
      %8131 = vmatpush1.msra.mxu0 0.0
      %8132 = vmatprep.subr.mxu0 0.0
      %8133 = vmatpush1.msra.mxu0 0.0
      %8134 = vmatprep.subr.mxu0 0.0
      %8135 = vmatpush1.msra.mxu0 0.0
      %8136 = vmatprep.subr.mxu0 0.0
      %8137 = vmatpush1.msra.mxu0 0.0
      %8138 = vmatprep.subr.mxu0 0.0
      %8139 = vmatpush1.msra.mxu0 0.0
      %8140 = vmatprep.subr.mxu0 0.0
      %8141 = vmatpush1.msra.mxu0 0.0
      %8142 = vmatprep.subr.mxu0 0.0
      %8143 = vmatpush1.msra.mxu0 0.0
      %8144 = vmatprep.subr.mxu0 0.0
      %8145 = vmatpush1.msra.mxu0 0.0
      %8146 = vmatprep.subr.mxu0 0.0
      %8147 = vmatpush1.msra.mxu0 0.0
      %8148 = vmatprep.subr.mxu0 0.0
      %8149 = vmatpush1.msra.mxu0 0.0
      %8150 = vmatprep.subr.mxu0 0.0
      %8151 = vmatpush1.msra.mxu0 %v8120
      %8152 = vmatprep.subr.mxu0 0.0
      %8153 = vmatpush1.msra.mxu0 %v8018
      %8154 = vmatprep.subr.mxu0 0.0
      %8155 = vmatpush2.msra.mxu0 0.0
      %8156 = vmatprep.subr.mxu0 0.0
      %8157 = vmatpush2.msra.mxu0 0.0
      %8158 = vmatprep.subr.mxu0 0.0
      %8159 = vmatpush2.msra.mxu0 0.0
      %8160 = vmatprep.subr.mxu0 0.0
      %8161 = vmatpush2.msra.mxu0 0.0
      %8162 = vmatprep.subr.mxu0 0.0
      %8163 = vmatpush2.msra.mxu0 0.0
      %8164 = vmatprep.subr.mxu0 0.0
      %8165 = vmatpush2.msra.mxu0 0.0
      %8166 = vmatprep.subr.mxu0 0.0
      %8167 = vmatpush2.msra.mxu0 0.0
      %8168 = vmatprep.subr.mxu0 0.0
      %8169 = vmatpush2.msra.mxu0 0.0
      %8170 = vmatprep.subr.mxu0 0.0
      %8171 = vmatpush2.msra.mxu0 0.0
      %8172 = vmatprep.subr.mxu0 0.0
      %8173 = vmatpush2.msra.mxu0 0.0
      %8174 = vmatprep.subr.mxu0 0.0
      %8175 = vmatpush2.msra.mxu0 0.0
      %8176 = vmatprep.subr.mxu0 0.0
      %8177 = vmatpush2.msra.mxu0 0.0
      %8178 = vmatprep.subr.mxu0 0.0
      %8179 = vmatpush2.msra.mxu0 0.0
      %8180 = vmatprep.subr.mxu0 0.0
      %8181 = vmatpush2.msra.mxu0 0.0
      %8182 = vmatprep.subr.mxu0 0.0
      %8183 = vmatpush2.msra.mxu0 0.0
      %8184 = vmatprep.subr.mxu0 0.0
      %8185 = vmatpush2.msra.mxu0 0.0
      %8186 = vmatprep.mubr.f32.mxu0 0.0
      %8187 = vmatmul.mubr.f32.gmra.mxu0 %v8117
      %v8188 = vpop.f32.mrf.mxu0
      %v8189 = vadd.f32 0.0, %v8188
      %v8190 = vpop.f32.mrf.mxu0
      %8191 = vdwg.mxu0
      %v8193 = vsel %vm688, %v8189, 0
      %8195 = vmatprep.subr.mxu0 0.0
      %8196 = vmatpush1.msra.mxu0 0.0
      %8197 = vmatprep.subr.mxu0 0.0
      %8198 = vmatpush1.msra.mxu0 0.0
      %8199 = vmatprep.subr.mxu0 0.0
      %8200 = vmatpush1.msra.mxu0 0.0
      %8201 = vmatprep.subr.mxu0 0.0
      %8202 = vmatpush1.msra.mxu0 0.0
      %8203 = vmatprep.subr.mxu0 0.0
      %8204 = vmatpush1.msra.mxu0 0.0
      %8205 = vmatprep.subr.mxu0 0.0
      %8206 = vmatpush1.msra.mxu0 0.0
      %8207 = vmatprep.subr.mxu0 0.0
      %8208 = vmatpush1.msra.mxu0 0.0
      %8209 = vmatprep.subr.mxu0 0.0
      %8210 = vmatpush1.msra.mxu0 0.0
      %8211 = vmatprep.subr.mxu0 0.0
      %8212 = vmatpush1.msra.mxu0 0.0
      %8213 = vmatprep.subr.mxu0 0.0
      %8214 = vmatpush1.msra.mxu0 0.0
      %8215 = vmatprep.subr.mxu0 0.0
      %8216 = vmatpush1.msra.mxu0 0.0
      %8217 = vmatprep.subr.mxu0 0.0
      %8218 = vmatpush1.msra.mxu0 0.0
      %8219 = vmatprep.subr.mxu0 0.0
      %8220 = vmatpush1.msra.mxu0 0.0
      %8221 = vmatprep.subr.mxu0 0.0
      %8222 = vmatpush1.msra.mxu0 0.0
      %8223 = vmatprep.subr.mxu0 0.0
      %8224 = vmatpush1.msra.mxu0 0.0
      %8225 = vmatprep.subr.mxu0 0.0
      %8226 = vmatpush1.msra.mxu0 %v6766
      %8227 = vmatprep.subr.mxu0 0.0
      %8228 = vmatpush2.msra.mxu0 0.0
      %8229 = vmatprep.subr.mxu0 0.0
      %8230 = vmatpush2.msra.mxu0 0.0
      %8231 = vmatprep.subr.mxu0 0.0
      %8232 = vmatpush2.msra.mxu0 0.0
      %8233 = vmatprep.subr.mxu0 0.0
      %8234 = vmatpush2.msra.mxu0 0.0
      %8235 = vmatprep.subr.mxu0 0.0
      %8236 = vmatpush2.msra.mxu0 0.0
      %8237 = vmatprep.subr.mxu0 0.0
      %8238 = vmatpush2.msra.mxu0 0.0
      %8239 = vmatprep.subr.mxu0 0.0
      %8240 = vmatpush2.msra.mxu0 0.0
      %8241 = vmatprep.subr.mxu0 0.0
      %8242 = vmatpush2.msra.mxu0 0.0
      %8243 = vmatprep.subr.mxu0 0.0
      %8244 = vmatpush2.msra.mxu0 0.0
      %8245 = vmatprep.subr.mxu0 0.0
      %8246 = vmatpush2.msra.mxu0 0.0
      %8247 = vmatprep.subr.mxu0 0.0
      %8248 = vmatpush2.msra.mxu0 0.0
      %8249 = vmatprep.subr.mxu0 0.0
      %8250 = vmatpush2.msra.mxu0 0.0
      %8251 = vmatprep.subr.mxu0 0.0
      %8252 = vmatpush2.msra.mxu0 0.0
      %8253 = vmatprep.subr.mxu0 0.0
      %8254 = vmatpush2.msra.mxu0 0.0
      %8255 = vmatprep.subr.mxu0 0.0
      %8256 = vmatpush2.msra.mxu0 0.0
      %8257 = vmatprep.subr.mxu0 0.0
      %8258 = vmatpush2.msra.mxu0 0.0
      %8259 = vmatprep.mubr.f32.mxu0 0.0
      %8260 = vmatmul.mubr.f32.gmra.mxu0 %v8193
      %v8261 = vpop.f32.mrf.mxu0
      %v8262 = vadd.f32 0.0, %v8261
      %v8263 = vpop.f32.mrf.mxu0
      %8264 = vdwg.mxu0
      %v8265 = vadd.f32 %v7764, %v8262
      %s8266 = scalar_lea.vmem %s3, 1248
      %v8267 = vld [vmem:[%s8266] sm:$0xff]
      %v8268 = vld [vmem:[%s8266 + $0x8] sm:$0xff]
      %v8269 = vld [vmem:[%s8266 + $0x10] sm:$0xff]
      %v8270 = vld [vmem:[%s8266 + $0x18] sm:$0xff]
      %s8271 = scalar_lea.vmem %s3, 1376
      %v8272 = vld [vmem:[%s8271] sm:$0xff]
      %v8273 = vld [vmem:[%s8271 + $0x8] sm:$0xff]
      %v8274 = vld [vmem:[%s8271 + $0x10] sm:$0xff]
      %v8275 = vld [vmem:[%s8271 + $0x18] sm:$0xff]
      %s8276 = scalar_lea.vmem %s3, 1504
      %v8277 = vld [vmem:[%s8276] sm:$0xff]
      %v8278 = vld [vmem:[%s8276 + $0x8] sm:$0xff]
      %v8279 = vld [vmem:[%s8276 + $0x10] sm:$0xff]
      %v8280 = vld [vmem:[%s8276 + $0x18] sm:$0xff]
      %s8281 = scalar_lea.vmem %s4, 39
      %v8282 = vld [vmem:[%s8281] sm:$0x1]
      %s8283 = scalar_lea.vmem %s4, 43
      %v8284 = vld [vmem:[%s8283] sm:$0x1]
      %s8285 = scalar_lea.vmem %s4, 47
      %v8286 = vld [vmem:[%s8285] sm:$0x1]
      %v8288 = vlaneseq
      %v8289 = vshrl.u32 %v8288, 7
      %v8290 = vsub.s32 0, %v8289
      %v8291 = vrot.slane %v8282, %v8290
      %8293 = vmatprep.subr.mxu0 0.0
      %8294 = vmatpush1.msra.mxu0 0.0
      %8295 = vmatprep.subr.mxu0 0.0
      %8296 = vmatpush1.msra.mxu0 0.0
      %8297 = vmatprep.subr.mxu0 0.0
      %8298 = vmatpush1.msra.mxu0 0.0
      %8299 = vmatprep.subr.mxu0 0.0
      %8300 = vmatpush1.msra.mxu0 0.0
      %8301 = vmatprep.subr.mxu0 0.0
      %8302 = vmatpush1.msra.mxu0 0.0
      %8303 = vmatprep.subr.mxu0 0.0
      %8304 = vmatpush1.msra.mxu0 0.0
      %8305 = vmatprep.subr.mxu0 0.0
      %8306 = vmatpush1.msra.mxu0 0.0
      %8307 = vmatprep.subr.mxu0 0.0
      %8308 = vmatpush1.msra.mxu0 0.0
      %8309 = vmatprep.subr.mxu0 0.0
      %8310 = vmatpush1.msra.mxu0 0.0
      %8311 = vmatprep.subr.mxu0 0.0
      %8312 = vmatpush1.msra.mxu0 0.0
      %8313 = vmatprep.subr.mxu0 0.0
      %8314 = vmatpush1.msra.mxu0 0.0
      %8315 = vmatprep.subr.mxu0 0.0
      %8316 = vmatpush1.msra.mxu0 0.0
      %8317 = vmatprep.subr.mxu0 0.0
      %8318 = vmatpush1.msra.mxu0 %v8270
      %8319 = vmatprep.subr.mxu0 0.0
      %8320 = vmatpush1.msra.mxu0 %v8269
      %8321 = vmatprep.subr.mxu0 0.0
      %8322 = vmatpush1.msra.mxu0 %v8268
      %8323 = vmatprep.subr.mxu0 0.0
      %8324 = vmatpush1.msra.mxu0 %v8267
      %8325 = vmatprep.subr.mxu0 0.0
      %8326 = vmatpush2.msra.mxu0 0.0
      %8327 = vmatprep.subr.mxu0 0.0
      %8328 = vmatpush2.msra.mxu0 0.0
      %8329 = vmatprep.subr.mxu0 0.0
      %8330 = vmatpush2.msra.mxu0 0.0
      %8331 = vmatprep.subr.mxu0 0.0
      %8332 = vmatpush2.msra.mxu0 0.0
      %8333 = vmatprep.subr.mxu0 0.0
      %8334 = vmatpush2.msra.mxu0 0.0
      %8335 = vmatprep.subr.mxu0 0.0
      %8336 = vmatpush2.msra.mxu0 0.0
      %8337 = vmatprep.subr.mxu0 0.0
      %8338 = vmatpush2.msra.mxu0 0.0
      %8339 = vmatprep.subr.mxu0 0.0
      %8340 = vmatpush2.msra.mxu0 0.0
      %8341 = vmatprep.subr.mxu0 0.0
      %8342 = vmatpush2.msra.mxu0 0.0
      %8343 = vmatprep.subr.mxu0 0.0
      %8344 = vmatpush2.msra.mxu0 0.0
      %8345 = vmatprep.subr.mxu0 0.0
      %8346 = vmatpush2.msra.mxu0 0.0
      %8347 = vmatprep.subr.mxu0 0.0
      %8348 = vmatpush2.msra.mxu0 0.0
      %8349 = vmatprep.subr.mxu0 0.0
      %8350 = vmatpush2.msra.mxu0 0.0
      %8351 = vmatprep.subr.mxu0 0.0
      %8352 = vmatpush2.msra.mxu0 0.0
      %8353 = vmatprep.subr.mxu0 0.0
      %8354 = vmatpush2.msra.mxu0 0.0
      %8355 = vmatprep.subr.mxu0 0.0
      %8356 = vmatpush2.msra.mxu0 0.0
      %8357 = vmatprep.mubr.f32.mxu0 0.0
      %8358 = vmatmul.mubr.f32.gmra.mxu0 %v6796
      %v8359 = vpop.f32.mrf.mxu0
      %v8360 = vadd.f32 %v8291, %v8359
      %v8361 = vpop.f32.mrf.mxu0
      %8362 = vdwg.mxu0
      %v8364 = vlaneseq
      %v8365 = vshrl.u32 %v8364, 7
      %v8366 = vsub.s32 0, %v8365
      %v8367 = vrot.slane %v8284, %v8366
      %8369 = vmatprep.subr.mxu0 0.0
      %8370 = vmatpush1.msra.mxu0 0.0
      %8371 = vmatprep.subr.mxu0 0.0
      %8372 = vmatpush1.msra.mxu0 0.0
      %8373 = vmatprep.subr.mxu0 0.0
      %8374 = vmatpush1.msra.mxu0 0.0
      %8375 = vmatprep.subr.mxu0 0.0
      %8376 = vmatpush1.msra.mxu0 0.0
      %8377 = vmatprep.subr.mxu0 0.0
      %8378 = vmatpush1.msra.mxu0 0.0
      %8379 = vmatprep.subr.mxu0 0.0
      %8380 = vmatpush1.msra.mxu0 0.0
      %8381 = vmatprep.subr.mxu0 0.0
      %8382 = vmatpush1.msra.mxu0 0.0
      %8383 = vmatprep.subr.mxu0 0.0
      %8384 = vmatpush1.msra.mxu0 0.0
      %8385 = vmatprep.subr.mxu0 0.0
      %8386 = vmatpush1.msra.mxu0 0.0
      %8387 = vmatprep.subr.mxu0 0.0
      %8388 = vmatpush1.msra.mxu0 0.0
      %8389 = vmatprep.subr.mxu0 0.0
      %8390 = vmatpush1.msra.mxu0 0.0
      %8391 = vmatprep.subr.mxu0 0.0
      %8392 = vmatpush1.msra.mxu0 0.0
      %8393 = vmatprep.subr.mxu0 0.0
      %8394 = vmatpush1.msra.mxu0 %v8275
      %8395 = vmatprep.subr.mxu0 0.0
      %8396 = vmatpush1.msra.mxu0 %v8274
      %8397 = vmatprep.subr.mxu0 0.0
      %8398 = vmatpush1.msra.mxu0 %v8273
      %8399 = vmatprep.subr.mxu0 0.0
      %8400 = vmatpush1.msra.mxu0 %v8272
      %8401 = vmatprep.subr.mxu0 0.0
      %8402 = vmatpush2.msra.mxu0 0.0
      %8403 = vmatprep.subr.mxu0 0.0
      %8404 = vmatpush2.msra.mxu0 0.0
      %8405 = vmatprep.subr.mxu0 0.0
      %8406 = vmatpush2.msra.mxu0 0.0
      %8407 = vmatprep.subr.mxu0 0.0
      %8408 = vmatpush2.msra.mxu0 0.0
      %8409 = vmatprep.subr.mxu0 0.0
      %8410 = vmatpush2.msra.mxu0 0.0
      %8411 = vmatprep.subr.mxu0 0.0
      %8412 = vmatpush2.msra.mxu0 0.0
      %8413 = vmatprep.subr.mxu0 0.0
      %8414 = vmatpush2.msra.mxu0 0.0
      %8415 = vmatprep.subr.mxu0 0.0
      %8416 = vmatpush2.msra.mxu0 0.0
      %8417 = vmatprep.subr.mxu0 0.0
      %8418 = vmatpush2.msra.mxu0 0.0
      %8419 = vmatprep.subr.mxu0 0.0
      %8420 = vmatpush2.msra.mxu0 0.0
      %8421 = vmatprep.subr.mxu0 0.0
      %8422 = vmatpush2.msra.mxu0 0.0
      %8423 = vmatprep.subr.mxu0 0.0
      %8424 = vmatpush2.msra.mxu0 0.0
      %8425 = vmatprep.subr.mxu0 0.0
      %8426 = vmatpush2.msra.mxu0 0.0
      %8427 = vmatprep.subr.mxu0 0.0
      %8428 = vmatpush2.msra.mxu0 0.0
      %8429 = vmatprep.subr.mxu0 0.0
      %8430 = vmatpush2.msra.mxu0 0.0
      %8431 = vmatprep.subr.mxu0 0.0
      %8432 = vmatpush2.msra.mxu0 0.0
      %8433 = vmatprep.mubr.f32.mxu0 0.0
      %8434 = vmatmul.mubr.f32.gmra.mxu0 %v2574
      %v8435 = vpop.f32.mrf.mxu0
      %v8436 = vadd.f32 %v8367, %v8435
      %v8437 = vpop.f32.mrf.mxu0
      %8438 = vmatprep.mubr.f32.mxu0 0.0
      %8439 = vmatmul.mubr.f32.gmra.mxu0 %v2577
      %v8440 = vpop.f32.mrf.mxu0
      %v8441 = vadd.f32 %v8367, %v8440
      %v8442 = vpop.f32.mrf.mxu0
      %8443 = vdwg.mxu0
      %v8445 = vlaneseq
      %v8446 = vshrl.u32 %v8445, 7
      %v8447 = vsub.s32 0, %v8446
      %v8448 = vrot.slane %v8286, %v8447
      %8450 = vmatprep.subr.mxu0 0.0
      %8451 = vmatpush1.msra.mxu0 0.0
      %8452 = vmatprep.subr.mxu0 0.0
      %8453 = vmatpush1.msra.mxu0 0.0
      %8454 = vmatprep.subr.mxu0 0.0
      %8455 = vmatpush1.msra.mxu0 0.0
      %8456 = vmatprep.subr.mxu0 0.0
      %8457 = vmatpush1.msra.mxu0 0.0
      %8458 = vmatprep.subr.mxu0 0.0
      %8459 = vmatpush1.msra.mxu0 0.0
      %8460 = vmatprep.subr.mxu0 0.0
      %8461 = vmatpush1.msra.mxu0 0.0
      %8462 = vmatprep.subr.mxu0 0.0
      %8463 = vmatpush1.msra.mxu0 0.0
      %8464 = vmatprep.subr.mxu0 0.0
      %8465 = vmatpush1.msra.mxu0 0.0
      %8466 = vmatprep.subr.mxu0 0.0
      %8467 = vmatpush1.msra.mxu0 0.0
      %8468 = vmatprep.subr.mxu0 0.0
      %8469 = vmatpush1.msra.mxu0 0.0
      %8470 = vmatprep.subr.mxu0 0.0
      %8471 = vmatpush1.msra.mxu0 0.0
      %8472 = vmatprep.subr.mxu0 0.0
      %8473 = vmatpush1.msra.mxu0 0.0
      %8474 = vmatprep.subr.mxu0 0.0
      %8475 = vmatpush1.msra.mxu0 %v8280
      %8476 = vmatprep.subr.mxu0 0.0
      %8477 = vmatpush1.msra.mxu0 %v8279
      %8478 = vmatprep.subr.mxu0 0.0
      %8479 = vmatpush1.msra.mxu0 %v8278
      %8480 = vmatprep.subr.mxu0 0.0
      %8481 = vmatpush1.msra.mxu0 %v8277
      %8482 = vmatprep.subr.mxu0 0.0
      %8483 = vmatpush2.msra.mxu0 0.0
      %8484 = vmatprep.subr.mxu0 0.0
      %8485 = vmatpush2.msra.mxu0 0.0
      %8486 = vmatprep.subr.mxu0 0.0
      %8487 = vmatpush2.msra.mxu0 0.0
      %8488 = vmatprep.subr.mxu0 0.0
      %8489 = vmatpush2.msra.mxu0 0.0
      %8490 = vmatprep.subr.mxu0 0.0
      %8491 = vmatpush2.msra.mxu0 0.0
      %8492 = vmatprep.subr.mxu0 0.0
      %8493 = vmatpush2.msra.mxu0 0.0
      %8494 = vmatprep.subr.mxu0 0.0
      %8495 = vmatpush2.msra.mxu0 0.0
      %8496 = vmatprep.subr.mxu0 0.0
      %8497 = vmatpush2.msra.mxu0 0.0
      %8498 = vmatprep.subr.mxu0 0.0
      %8499 = vmatpush2.msra.mxu0 0.0
      %8500 = vmatprep.subr.mxu0 0.0
      %8501 = vmatpush2.msra.mxu0 0.0
      %8502 = vmatprep.subr.mxu0 0.0
      %8503 = vmatpush2.msra.mxu0 0.0
      %8504 = vmatprep.subr.mxu0 0.0
      %8505 = vmatpush2.msra.mxu0 0.0
      %8506 = vmatprep.subr.mxu0 0.0
      %8507 = vmatpush2.msra.mxu0 0.0
      %8508 = vmatprep.subr.mxu0 0.0
      %8509 = vmatpush2.msra.mxu0 0.0
      %8510 = vmatprep.subr.mxu0 0.0
      %8511 = vmatpush2.msra.mxu0 0.0
      %8512 = vmatprep.subr.mxu0 0.0
      %8513 = vmatpush2.msra.mxu0 0.0
      %8514 = vmatprep.mubr.f32.mxu0 0.0
      %8515 = vmatmul.mubr.f32.gmra.mxu0 %v2574
      %v8516 = vpop.f32.mrf.mxu0
      %v8517 = vadd.f32 %v8448, %v8516
      %v8518 = vpop.f32.mrf.mxu0
      %8519 = vmatprep.mubr.f32.mxu0 0.0
      %8520 = vmatmul.mubr.f32.gmra.mxu0 %v2577
      %v8521 = vpop.f32.mrf.mxu0
      %v8522 = vadd.f32 %v8448, %v8521
      %v8523 = vpop.f32.mrf.mxu0
      %8524 = vdwg.mxu0
      %v8526 = vsel %vm688, %v8360, 0
      %v8529 = vsel %vm688, %v8436, 0
      %v8532 = vsel %vm688, %v8441, 0
      %8534 = vmatprep.subr.mxu0 0.0
      %8535 = vmatpush1.xpose.msra.mxu0 0.0
      %8536 = vmatprep.subr.mxu0 0.0
      %8537 = vmatpush1.xpose.msra.mxu0 0.0
      %8538 = vmatprep.subr.mxu0 0.0
      %8539 = vmatpush1.xpose.msra.mxu0 0.0
      %8540 = vmatprep.subr.mxu0 0.0
      %8541 = vmatpush1.xpose.msra.mxu0 0.0
      %8542 = vmatprep.subr.mxu0 0.0
      %8543 = vmatpush1.xpose.msra.mxu0 0.0
      %8544 = vmatprep.subr.mxu0 0.0
      %8545 = vmatpush1.xpose.msra.mxu0 0.0
      %8546 = vmatprep.subr.mxu0 0.0
      %8547 = vmatpush1.xpose.msra.mxu0 0.0
      %8548 = vmatprep.subr.mxu0 0.0
      %8549 = vmatpush1.xpose.msra.mxu0 0.0
      %8550 = vmatprep.subr.mxu0 0.0
      %8551 = vmatpush1.xpose.msra.mxu0 0.0
      %8552 = vmatprep.subr.mxu0 0.0
      %8553 = vmatpush1.xpose.msra.mxu0 0.0
      %8554 = vmatprep.subr.mxu0 0.0
      %8555 = vmatpush1.xpose.msra.mxu0 0.0
      %8556 = vmatprep.subr.mxu0 0.0
      %8557 = vmatpush1.xpose.msra.mxu0 0.0
      %8558 = vmatprep.subr.mxu0 0.0
      %8559 = vmatpush1.xpose.msra.mxu0 0.0
      %8560 = vmatprep.subr.mxu0 0.0
      %8561 = vmatpush1.xpose.msra.mxu0 0.0
      %8562 = vmatprep.subr.mxu0 0.0
      %8563 = vmatpush1.xpose.msra.mxu0 %v8532
      %8564 = vmatprep.subr.mxu0 0.0
      %8565 = vmatpush1.xpose.msra.mxu0 %v8529
      %8566 = vmatprep.subr.mxu0 0.0
      %8567 = vmatpush2.xpose.msra.mxu0 0.0
      %8568 = vmatprep.subr.mxu0 0.0
      %8569 = vmatpush2.xpose.msra.mxu0 0.0
      %8570 = vmatprep.subr.mxu0 0.0
      %8571 = vmatpush2.xpose.msra.mxu0 0.0
      %8572 = vmatprep.subr.mxu0 0.0
      %8573 = vmatpush2.xpose.msra.mxu0 0.0
      %8574 = vmatprep.subr.mxu0 0.0
      %8575 = vmatpush2.xpose.msra.mxu0 0.0
      %8576 = vmatprep.subr.mxu0 0.0
      %8577 = vmatpush2.xpose.msra.mxu0 0.0
      %8578 = vmatprep.subr.mxu0 0.0
      %8579 = vmatpush2.xpose.msra.mxu0 0.0
      %8580 = vmatprep.subr.mxu0 0.0
      %8581 = vmatpush2.xpose.msra.mxu0 0.0
      %8582 = vmatprep.subr.mxu0 0.0
      %8583 = vmatpush2.xpose.msra.mxu0 0.0
      %8584 = vmatprep.subr.mxu0 0.0
      %8585 = vmatpush2.xpose.msra.mxu0 0.0
      %8586 = vmatprep.subr.mxu0 0.0
      %8587 = vmatpush2.xpose.msra.mxu0 0.0
      %8588 = vmatprep.subr.mxu0 0.0
      %8589 = vmatpush2.xpose.msra.mxu0 0.0
      %8590 = vmatprep.subr.mxu0 0.0
      %8591 = vmatpush2.xpose.msra.mxu0 0.0
      %8592 = vmatprep.subr.mxu0 0.0
      %8593 = vmatpush2.xpose.msra.mxu0 0.0
      %8594 = vmatprep.subr.mxu0 0.0
      %8595 = vmatpush2.xpose.msra.mxu0 0.0
      %8596 = vmatprep.subr.mxu0 0.0
      %8597 = vmatpush2.xpose.msra.mxu0 0.0
      %8598 = vmatprep.mubr.f32.mxu0 0.0
      %8599 = vmatmul.mubr.f32.gmra.mxu0 %v8526
      %v8600 = vpop.f32.mrf.mxu0
      %v8601 = vadd.f32 0.0, %v8600
      %v8602 = vpop.f32.mrf.mxu0
      %8603 = vdwg.mxu0
      %v8604 = vsel %vm2814, %v8601, -inf
      %8605 = vmax.xlane.f32.xlu0 %v8604
      %v8606 = vpop.xlane.xlu0 %8605
      %v8607 = vsub.f32 %v8601, %v8606
      %v8608 = vmul.f32 %v8607, 1.442695
      %v8609 = vpow.pop %v8608
      %v8610 = vsel %vm2814, %v8609, 0.0
      %8611 = vadd.xlane.f32.xlu0 %v8610
      %v8612 = vpop.xlane.xlu0 %8611
      %v8613 = vrcp.pop %v8612
      %v8614 = vmul.f32 %v8609, %v8613
      %v8616 = vsel %vm2814, %v8614, 0
      %v8619 = vsel %vm2829, %v8522, 0
      %8621 = vmatprep.subr.mxu0 0.0
      %8622 = vmatpush1.msra.mxu0 0.0
      %8623 = vmatprep.subr.mxu0 0.0
      %8624 = vmatpush1.msra.mxu0 0.0
      %8625 = vmatprep.subr.mxu0 0.0
      %8626 = vmatpush1.msra.mxu0 0.0
      %8627 = vmatprep.subr.mxu0 0.0
      %8628 = vmatpush1.msra.mxu0 0.0
      %8629 = vmatprep.subr.mxu0 0.0
      %8630 = vmatpush1.msra.mxu0 0.0
      %8631 = vmatprep.subr.mxu0 0.0
      %8632 = vmatpush1.msra.mxu0 0.0
      %8633 = vmatprep.subr.mxu0 0.0
      %8634 = vmatpush1.msra.mxu0 0.0
      %8635 = vmatprep.subr.mxu0 0.0
      %8636 = vmatpush1.msra.mxu0 0.0
      %8637 = vmatprep.subr.mxu0 0.0
      %8638 = vmatpush1.msra.mxu0 0.0
      %8639 = vmatprep.subr.mxu0 0.0
      %8640 = vmatpush1.msra.mxu0 0.0
      %8641 = vmatprep.subr.mxu0 0.0
      %8642 = vmatpush1.msra.mxu0 0.0
      %8643 = vmatprep.subr.mxu0 0.0
      %8644 = vmatpush1.msra.mxu0 0.0
      %8645 = vmatprep.subr.mxu0 0.0
      %8646 = vmatpush1.msra.mxu0 0.0
      %8647 = vmatprep.subr.mxu0 0.0
      %8648 = vmatpush1.msra.mxu0 0.0
      %8649 = vmatprep.subr.mxu0 0.0
      %8650 = vmatpush1.msra.mxu0 %v8619
      %8651 = vmatprep.subr.mxu0 0.0
      %8652 = vmatpush1.msra.mxu0 %v8517
      %8653 = vmatprep.subr.mxu0 0.0
      %8654 = vmatpush2.msra.mxu0 0.0
      %8655 = vmatprep.subr.mxu0 0.0
      %8656 = vmatpush2.msra.mxu0 0.0
      %8657 = vmatprep.subr.mxu0 0.0
      %8658 = vmatpush2.msra.mxu0 0.0
      %8659 = vmatprep.subr.mxu0 0.0
      %8660 = vmatpush2.msra.mxu0 0.0
      %8661 = vmatprep.subr.mxu0 0.0
      %8662 = vmatpush2.msra.mxu0 0.0
      %8663 = vmatprep.subr.mxu0 0.0
      %8664 = vmatpush2.msra.mxu0 0.0
      %8665 = vmatprep.subr.mxu0 0.0
      %8666 = vmatpush2.msra.mxu0 0.0
      %8667 = vmatprep.subr.mxu0 0.0
      %8668 = vmatpush2.msra.mxu0 0.0
      %8669 = vmatprep.subr.mxu0 0.0
      %8670 = vmatpush2.msra.mxu0 0.0
      %8671 = vmatprep.subr.mxu0 0.0
      %8672 = vmatpush2.msra.mxu0 0.0
      %8673 = vmatprep.subr.mxu0 0.0
      %8674 = vmatpush2.msra.mxu0 0.0
      %8675 = vmatprep.subr.mxu0 0.0
      %8676 = vmatpush2.msra.mxu0 0.0
      %8677 = vmatprep.subr.mxu0 0.0
      %8678 = vmatpush2.msra.mxu0 0.0
      %8679 = vmatprep.subr.mxu0 0.0
      %8680 = vmatpush2.msra.mxu0 0.0
      %8681 = vmatprep.subr.mxu0 0.0
      %8682 = vmatpush2.msra.mxu0 0.0
      %8683 = vmatprep.subr.mxu0 0.0
      %8684 = vmatpush2.msra.mxu0 0.0
      %8685 = vmatprep.mubr.f32.mxu0 0.0
      %8686 = vmatmul.mubr.f32.gmra.mxu0 %v8616
      %v8687 = vpop.f32.mrf.mxu0
      %v8688 = vadd.f32 0.0, %v8687
      %v8689 = vpop.f32.mrf.mxu0
      %8690 = vdwg.mxu0
      %v8692 = vsel %vm688, %v8688, 0
      %8694 = vmatprep.subr.mxu0 0.0
      %8695 = vmatpush1.msra.mxu0 0.0
      %8696 = vmatprep.subr.mxu0 0.0
      %8697 = vmatpush1.msra.mxu0 0.0
      %8698 = vmatprep.subr.mxu0 0.0
      %8699 = vmatpush1.msra.mxu0 0.0
      %8700 = vmatprep.subr.mxu0 0.0
      %8701 = vmatpush1.msra.mxu0 0.0
      %8702 = vmatprep.subr.mxu0 0.0
      %8703 = vmatpush1.msra.mxu0 0.0
      %8704 = vmatprep.subr.mxu0 0.0
      %8705 = vmatpush1.msra.mxu0 0.0
      %8706 = vmatprep.subr.mxu0 0.0
      %8707 = vmatpush1.msra.mxu0 0.0
      %8708 = vmatprep.subr.mxu0 0.0
      %8709 = vmatpush1.msra.mxu0 0.0
      %8710 = vmatprep.subr.mxu0 0.0
      %8711 = vmatpush1.msra.mxu0 0.0
      %8712 = vmatprep.subr.mxu0 0.0
      %8713 = vmatpush1.msra.mxu0 0.0
      %8714 = vmatprep.subr.mxu0 0.0
      %8715 = vmatpush1.msra.mxu0 0.0
      %8716 = vmatprep.subr.mxu0 0.0
      %8717 = vmatpush1.msra.mxu0 0.0
      %8718 = vmatprep.subr.mxu0 0.0
      %8719 = vmatpush1.msra.mxu0 0.0
      %8720 = vmatprep.subr.mxu0 0.0
      %8721 = vmatpush1.msra.mxu0 0.0
      %8722 = vmatprep.subr.mxu0 0.0
      %8723 = vmatpush1.msra.mxu0 0.0
      %8724 = vmatprep.subr.mxu0 0.0
      %8725 = vmatpush1.msra.mxu0 %v6767
      %8726 = vmatprep.subr.mxu0 0.0
      %8727 = vmatpush2.msra.mxu0 0.0
      %8728 = vmatprep.subr.mxu0 0.0
      %8729 = vmatpush2.msra.mxu0 0.0
      %8730 = vmatprep.subr.mxu0 0.0
      %8731 = vmatpush2.msra.mxu0 0.0
      %8732 = vmatprep.subr.mxu0 0.0
      %8733 = vmatpush2.msra.mxu0 0.0
      %8734 = vmatprep.subr.mxu0 0.0
      %8735 = vmatpush2.msra.mxu0 0.0
      %8736 = vmatprep.subr.mxu0 0.0
      %8737 = vmatpush2.msra.mxu0 0.0
      %8738 = vmatprep.subr.mxu0 0.0
      %8739 = vmatpush2.msra.mxu0 0.0
      %8740 = vmatprep.subr.mxu0 0.0
      %8741 = vmatpush2.msra.mxu0 0.0
      %8742 = vmatprep.subr.mxu0 0.0
      %8743 = vmatpush2.msra.mxu0 0.0
      %8744 = vmatprep.subr.mxu0 0.0
      %8745 = vmatpush2.msra.mxu0 0.0
      %8746 = vmatprep.subr.mxu0 0.0
      %8747 = vmatpush2.msra.mxu0 0.0
      %8748 = vmatprep.subr.mxu0 0.0
      %8749 = vmatpush2.msra.mxu0 0.0
      %8750 = vmatprep.subr.mxu0 0.0
      %8751 = vmatpush2.msra.mxu0 0.0
      %8752 = vmatprep.subr.mxu0 0.0
      %8753 = vmatpush2.msra.mxu0 0.0
      %8754 = vmatprep.subr.mxu0 0.0
      %8755 = vmatpush2.msra.mxu0 0.0
      %8756 = vmatprep.subr.mxu0 0.0
      %8757 = vmatpush2.msra.mxu0 0.0
      %8758 = vmatprep.mubr.f32.mxu0 0.0
      %8759 = vmatmul.mubr.f32.gmra.mxu0 %v8692
      %v8760 = vpop.f32.mrf.mxu0
      %v8761 = vadd.f32 0.0, %v8760
      %v8762 = vpop.f32.mrf.mxu0
      %8763 = vdwg.mxu0
      %v8764 = vadd.f32 %v8265, %v8761
      %v8766 = vlaneseq
      %v8767 = vshrl.u32 %v8766, 7
      %v8768 = vsub.s32 0, %v8767
      %v8769 = vrot.slane %v4715, %v8768
      %v8771 = vadd.f32 %v8764, %v8769
      %v8772 = vadd.f32 %v6762, %v8771
      %v8773 = vsel %vm446, %v8772, 0.0
      %8774 = vadd.xlane.f32.xlu0 %v8773
      %v8775 = vpop.xlane.xlu0 %8774
      %v8776 = vmul.f32 %v8775, %v2437
      %v8777 = vsub.f32 %v8772, %v8776
      %v8778 = vmul.f32 %v8777, %v8777
      %v8779 = vsel %vm446, %v8778, 0.0
      %8780 = vadd.xlane.f32.xlu0 %v8779
      %v8781 = vpop.xlane.xlu0 %8780
      %v8782 = vmul.f32 %v8781, %v2437
      %v8783 = vadd.f32 %v8782, 1e-05
      %v8784 = vrsqrt.pop %v8783
      %v8785 = vmul.f32 %v8777, %v8784
      %v8787 = vlaneseq
      %v8788 = vshrl.u32 %v8787, 7
      %v8789 = vsub.s32 0, %v8788
      %v8790 = vrot.slane %v4717, %v8789
      %v8792 = vmul.f32 %v8785, %v8790
      %v8794 = vlaneseq
      %v8795 = vshrl.u32 %v8794, 7
      %v8796 = vsub.s32 0, %v8795
      %v8797 = vrot.slane %v4719, %v8796
      %v8799 = vadd.f32 %v8792, %v8797
      %s8800 = scalar_lea.vmem %s7, 32
      %v8801 = vld [vmem:[%s8800] sm:$0xff]
      %v8802 = vld [vmem:[%s8800 + $0x8] sm:$0xff]
      %v8803 = vld [vmem:[%s8800 + $0x10] sm:$0xff]
      %v8804 = vld [vmem:[%s8800 + $0x18] sm:$0xff]
      %s8805 = scalar_lea.vmem %s8, 1
      %v8806 = vld [vmem:[%s8805] sm:$0x1]
      %v8808 = vlaneseq
      %v8809 = vshrl.u32 %v8808, 7
      %v8810 = vsub.s32 0, %v8809
      %v8811 = vrot.slane %v8806, %v8810
      %v8814 = vsel %vm446, %v8799, 0
      %8816 = vmatprep.subr.mxu0 0.0
      %8817 = vmatpush1.msra.mxu0 0.0
      %8818 = vmatprep.subr.mxu0 0.0
      %8819 = vmatpush1.msra.mxu0 0.0
      %8820 = vmatprep.subr.mxu0 0.0
      %8821 = vmatpush1.msra.mxu0 0.0
      %8822 = vmatprep.subr.mxu0 0.0
      %8823 = vmatpush1.msra.mxu0 0.0
      %8824 = vmatprep.subr.mxu0 0.0
      %8825 = vmatpush1.msra.mxu0 0.0
      %8826 = vmatprep.subr.mxu0 0.0
      %8827 = vmatpush1.msra.mxu0 0.0
      %8828 = vmatprep.subr.mxu0 0.0
      %8829 = vmatpush1.msra.mxu0 0.0
      %8830 = vmatprep.subr.mxu0 0.0
      %8831 = vmatpush1.msra.mxu0 0.0
      %8832 = vmatprep.subr.mxu0 0.0
      %8833 = vmatpush1.msra.mxu0 0.0
      %8834 = vmatprep.subr.mxu0 0.0
      %8835 = vmatpush1.msra.mxu0 0.0
      %8836 = vmatprep.subr.mxu0 0.0
      %8837 = vmatpush1.msra.mxu0 0.0
      %8838 = vmatprep.subr.mxu0 0.0
      %8839 = vmatpush1.msra.mxu0 0.0
      %8840 = vmatprep.subr.mxu0 0.0
      %8841 = vmatpush1.msra.mxu0 %v8804
      %8842 = vmatprep.subr.mxu0 0.0
      %8843 = vmatpush1.msra.mxu0 %v8803
      %8844 = vmatprep.subr.mxu0 0.0
      %8845 = vmatpush1.msra.mxu0 %v8802
      %8846 = vmatprep.subr.mxu0 0.0
      %8847 = vmatpush1.msra.mxu0 %v8801
      %8848 = vmatprep.subr.mxu0 0.0
      %8849 = vmatpush2.msra.mxu0 0.0
      %8850 = vmatprep.subr.mxu0 0.0
      %8851 = vmatpush2.msra.mxu0 0.0
      %8852 = vmatprep.subr.mxu0 0.0
      %8853 = vmatpush2.msra.mxu0 0.0
      %8854 = vmatprep.subr.mxu0 0.0
      %8855 = vmatpush2.msra.mxu0 0.0
      %8856 = vmatprep.subr.mxu0 0.0
      %8857 = vmatpush2.msra.mxu0 0.0
      %8858 = vmatprep.subr.mxu0 0.0
      %8859 = vmatpush2.msra.mxu0 0.0
      %8860 = vmatprep.subr.mxu0 0.0
      %8861 = vmatpush2.msra.mxu0 0.0
      %8862 = vmatprep.subr.mxu0 0.0
      %8863 = vmatpush2.msra.mxu0 0.0
      %8864 = vmatprep.subr.mxu0 0.0
      %8865 = vmatpush2.msra.mxu0 0.0
      %8866 = vmatprep.subr.mxu0 0.0
      %8867 = vmatpush2.msra.mxu0 0.0
      %8868 = vmatprep.subr.mxu0 0.0
      %8869 = vmatpush2.msra.mxu0 0.0
      %8870 = vmatprep.subr.mxu0 0.0
      %8871 = vmatpush2.msra.mxu0 0.0
      %8872 = vmatprep.subr.mxu0 0.0
      %8873 = vmatpush2.msra.mxu0 0.0
      %8874 = vmatprep.subr.mxu0 0.0
      %8875 = vmatpush2.msra.mxu0 0.0
      %8876 = vmatprep.subr.mxu0 0.0
      %8877 = vmatpush2.msra.mxu0 0.0
      %8878 = vmatprep.subr.mxu0 0.0
      %8879 = vmatpush2.msra.mxu0 0.0
      %8880 = vmatprep.mubr.f32.mxu0 0.0
      %8881 = vmatmul.mubr.f32.gmra.mxu0 %v8814
      %v8882 = vpop.f32.mrf.mxu0
      %v8883 = vadd.f32 %v8811, %v8882
      %v8884 = vpop.f32.mrf.mxu0
      %8885 = vdwg.mxu0
      %v8886 = vmax.f32 %v8883, 0.0
      %s8887 = scalar_lea.vmem %s9, 64
      %v8888 = vld [vmem:[%s8887] sm:$0xff]
      %v8889 = vld [vmem:[%s8887 + $0x8] sm:$0xff]
      %v8890 = vld [vmem:[%s8887 + $0x10] sm:$0xff]
      %v8891 = vld [vmem:[%s8887 + $0x18] sm:$0xff]
      %v8892 = vld [vmem:[%s8887 + $0x20] sm:$0xff]
      %v8893 = vld [vmem:[%s8887 + $0x28] sm:$0xff]
      %v8894 = vld [vmem:[%s8887 + $0x30] sm:$0xff]
      %v8895 = vld [vmem:[%s8887 + $0x38] sm:$0xff]
      %v8897 = vlaneseq
      %v8898 = vshrl.u32 %v8897, 7
      %v8899 = vsub.s32 0, %v8898
      %v8900 = vrot.slane %v4725, %v8899
      %v8903 = vsel %vm4606, %v8886, 0
      %8905 = vmatprep.subr.mxu0 0.0
      %8906 = vmatpush1.msra.mxu0 0.0
      %8907 = vmatprep.subr.mxu0 0.0
      %8908 = vmatpush1.msra.mxu0 0.0
      %8909 = vmatprep.subr.mxu0 0.0
      %8910 = vmatpush1.msra.mxu0 0.0
      %8911 = vmatprep.subr.mxu0 0.0
      %8912 = vmatpush1.msra.mxu0 0.0
      %8913 = vmatprep.subr.mxu0 0.0
      %8914 = vmatpush1.msra.mxu0 0.0
      %8915 = vmatprep.subr.mxu0 0.0
      %8916 = vmatpush1.msra.mxu0 0.0
      %8917 = vmatprep.subr.mxu0 0.0
      %8918 = vmatpush1.msra.mxu0 0.0
      %8919 = vmatprep.subr.mxu0 0.0
      %8920 = vmatpush1.msra.mxu0 0.0
      %8921 = vmatprep.subr.mxu0 0.0
      %8922 = vmatpush1.msra.mxu0 %v8895
      %8923 = vmatprep.subr.mxu0 0.0
      %8924 = vmatpush1.msra.mxu0 %v8894
      %8925 = vmatprep.subr.mxu0 0.0
      %8926 = vmatpush1.msra.mxu0 %v8893
      %8927 = vmatprep.subr.mxu0 0.0
      %8928 = vmatpush1.msra.mxu0 %v8892
      %8929 = vmatprep.subr.mxu0 0.0
      %8930 = vmatpush1.msra.mxu0 %v8891
      %8931 = vmatprep.subr.mxu0 0.0
      %8932 = vmatpush1.msra.mxu0 %v8890
      %8933 = vmatprep.subr.mxu0 0.0
      %8934 = vmatpush1.msra.mxu0 %v8889
      %8935 = vmatprep.subr.mxu0 0.0
      %8936 = vmatpush1.msra.mxu0 %v8888
      %8937 = vmatprep.subr.mxu0 0.0
      %8938 = vmatpush2.msra.mxu0 0.0
      %8939 = vmatprep.subr.mxu0 0.0
      %8940 = vmatpush2.msra.mxu0 0.0
      %8941 = vmatprep.subr.mxu0 0.0
      %8942 = vmatpush2.msra.mxu0 0.0
      %8943 = vmatprep.subr.mxu0 0.0
      %8944 = vmatpush2.msra.mxu0 0.0
      %8945 = vmatprep.subr.mxu0 0.0
      %8946 = vmatpush2.msra.mxu0 0.0
      %8947 = vmatprep.subr.mxu0 0.0
      %8948 = vmatpush2.msra.mxu0 0.0
      %8949 = vmatprep.subr.mxu0 0.0
      %8950 = vmatpush2.msra.mxu0 0.0
      %8951 = vmatprep.subr.mxu0 0.0
      %8952 = vmatpush2.msra.mxu0 0.0
      %8953 = vmatprep.subr.mxu0 0.0
      %8954 = vmatpush2.msra.mxu0 0.0
      %8955 = vmatprep.subr.mxu0 0.0
      %8956 = vmatpush2.msra.mxu0 0.0
      %8957 = vmatprep.subr.mxu0 0.0
      %8958 = vmatpush2.msra.mxu0 0.0
      %8959 = vmatprep.subr.mxu0 0.0
      %8960 = vmatpush2.msra.mxu0 0.0
      %8961 = vmatprep.subr.mxu0 0.0
      %8962 = vmatpush2.msra.mxu0 0.0
      %8963 = vmatprep.subr.mxu0 0.0
      %8964 = vmatpush2.msra.mxu0 0.0
      %8965 = vmatprep.subr.mxu0 0.0
      %8966 = vmatpush2.msra.mxu0 0.0
      %8967 = vmatprep.subr.mxu0 0.0
      %8968 = vmatpush2.msra.mxu0 0.0
      %8969 = vmatprep.mubr.f32.mxu0 0.0
      %8970 = vmatmul.mubr.f32.gmra.mxu0 %v8903
      %v8971 = vpop.f32.mrf.mxu0
      %v8972 = vadd.f32 %v8900, %v8971
      %v8973 = vpop.f32.mrf.mxu0
      %8974 = vdwg.mxu0
      %v8975 = vadd.f32 %v8799, %v8972
      %v8976 = vsel %vm446, %v8975, 0.0
      %8977 = vadd.xlane.f32.xlu0 %v8976
      %v8978 = vpop.xlane.xlu0 %8977
      %v8979 = vmul.f32 %v8978, %v2437
      %v8980 = vsub.f32 %v8975, %v8979
      %v8981 = vmul.f32 %v8980, %v8980
      %v8982 = vsel %vm446, %v8981, 0.0
      %8983 = vadd.xlane.f32.xlu0 %v8982
      %v8984 = vpop.xlane.xlu0 %8983
      %v8985 = vmul.f32 %v8984, %v2437
      %v8986 = vadd.f32 %v8985, 1e-05
      %v8987 = vrsqrt.pop %v8986
      %v8988 = vmul.f32 %v8980, %v8987
      %v8990 = vlaneseq
      %v8991 = vshrl.u32 %v8990, 7
      %v8992 = vsub.s32 0, %v8991
      %v8993 = vrot.slane %v4721, %v8992
      %v8995 = vmul.f32 %v8988, %v8993
      %v8997 = vlaneseq
      %v8998 = vshrl.u32 %v8997, 7
      %v8999 = vsub.s32 0, %v8998
      %v9000 = vrot.slane %v4723, %v8999
      %v9002 = vadd.f32 %v8995, %v9000
      %9003 = vst.msk [vmem:[%s394] sm:$0xff] %vm446, %v9002
      %p9004 = scmp.lt.s32.totalorder %s21, 1
      %s9005 = scalar_select %p9004, %s21, 1
      %s9006 = smul.addr %s9005, 8
      %s9007 = scalar_lea.vmem %s10, %s9006
      // Predicated region
      $region61: #{multiattn_forward.1} parent=59 // pred_check
        %p9008 = pneg %p264
      $region62: #{multiattn_forward.1} parent=59 // pred_check_branch
        %9010 = sbr.rel (%p9008) target = $region64
      $region63: #{multiattn_forward.1} parent=59 // pred_region
        _
      $region64: #{multiattn_forward.1} parent=59 // pred_fallthru
        _
    $region60: #{multiattn_forward.1} parent=5 // pred_fallthru
      _
    %p9011 = scmp.le.s32.totalorder 2, %s16
    // Predicated region
    $region65: #{multiattn_forward.1} parent=5 // pred_check
      %p9012 = pneg %p9011
    $region66: #{multiattn_forward.1} parent=5 // pred_check_branch
      %9014 = sbr.rel (%p9012) target = $region68
    $region67: #{multiattn_forward.1} parent=5 // pred_region
      %s9015 = ssub.s32 %s16, 2
      // Predicated region
      $region69: #{multiattn_forward.1} parent=67 // pred_check
        %p9016 = pneg %p270
      $region70: #{multiattn_forward.1} parent=67 // pred_check_branch
        %9018 = sbr.rel (%p9016) target = $region72
      $region71: #{multiattn_forward.1} parent=67 // pred_region
        %p9019 = scmp.lt.s32.totalorder %s22, 1
        %s9020 = scalar_select %p9019, %s22, 1
        %s9021 = smul.addr %s9020, 8
        %s9022 = scalar_lea.vmem %s10, %s9021
      $region72: #{multiattn_forward.1} parent=67 // pred_fallthru
        _
    $region68: #{multiattn_forward.1} parent=5 // pred_fallthru
      _
  $region6: #{multiattn_forward.1} parent=0 // loop_footer
    %s20 = sadd.s32 1, %s16
  $region7: #{multiattn_forward.1} parent=0 // loop_footer_branch
    %15 = sbr.rel target = $region3
  $region8: #{multiattn_forward.1} parent=0 // loop_exit
    _

</llo_original>
